<compile_context>
chip_gen: v6e
topology: v6e:2x2x1
jax: 0.10.0
libtpu: 0.0.40
codegen_flags: <defaults>
</compile_context>

<pallas_src>
import numpy as np

import jax
import jax.numpy as jnp
from jax import lax
from jax.experimental import pallas as pl
from jax.experimental.pallas import tpu as pltpu

FEATURE_VEC_SIZE = 256
FILTERS = [24, 36, 48, 64, 64]
DEFAULT_M_DIM = 4
DEFAULT_A_DIM = 1
BN_EPS = 1e-5
LANE = 128                      # lane width; all channel dims are padded to it


def _sigmoid(z):
    # Exact identity; tanh lowers to the EUP slot (no VALU divide).
    return 0.5 * (1.0 + jnp.tanh(0.5 * z))


# ------------------------------ fused kernel --------------------------------
def _fused_kernel(p1_ref, w1_ref, b1_ref,
                  w2_ref, b2_ref, s2_ref,
                  w3_ref, b3_ref, s3_ref,
                  w4_ref, b4_ref, s4_ref,
                  w5_ref, b5_ref,
                  wfc_ref, bfc_ref,
                  m_ref, wm_ref, bm_ref,
                  wih_ref, bih_ref,
                  wf1_ref, bf1_ref, wf2_ref, bf2_ref,
                  wf3_ref, bf3_ref, wf4_ref, bf4_ref,
                  o_ref):
    f32 = jnp.float32

    def dense(x, w_ref, b_ref, relu=False):
        y = jnp.dot(x, w_ref[...], preferred_element_type=f32) + b_ref[...]
        return jnp.maximum(y, 0.0) if relu else y

    def conv(x, w_ref, b_ref, s_ref):
        # x: (R_in, 128) activations, channels on lanes (padded to 128)
        # w: (128, 9*128) tap-concatenated weights, s: (9, R_out, R_in) gathers
        z = jnp.dot(x, w_ref[...], preferred_element_type=f32)   # (R_in, 9*128)
        acc = jnp.dot(s_ref[0], z[:, :LANE], preferred_element_type=f32)
        for t in range(1, 9):                                    # static unroll
            acc = acc + jnp.dot(s_ref[t], z[:, t * LANE:(t + 1) * LANE],
                                preferred_element_type=f32)
        return jnp.maximum(acc + b_ref[...], 0.0)

    a = dense(p1_ref[...], w1_ref, b1_ref, relu=True)     # conv1  (B*64, 128)
    a = conv(a, w2_ref, b2_ref, s2_ref)                   # conv2  (B*16, 128)
    a = conv(a, w3_ref, b3_ref, s3_ref)                   # conv3  (B*4,  128)
    a = conv(a, w4_ref, b4_ref, s4_ref)                   # conv4  (B,    128)
    a = dense(a, w5_ref, b5_ref, relu=True)               # conv5  (B,    128)
    f = dense(a, wfc_ref, bfc_ref, relu=True)             # enc fc (B,    256)

    # LSTM cell, single step, h0 = c0 = 0; gates [i, g, o] in one matmul,
    # sliced at 256-lane (vreg-aligned) boundaries.
    g = jnp.dot(f, wih_ref[...], preferred_element_type=f32) + bih_ref[...]
    Hd = f.shape[-1]
    i_g = _sigmoid(g[:, 0:Hd])
    g_g = jnp.tanh(g[:, Hd:2 * Hd])
    o_g = _sigmoid(g[:, 2 * Hd:3 * Hd])
    h1 = o_g * jnp.tanh(i_g * g_g)                         # == lstm out, t = -1

    attn = _sigmoid(dense(m_ref[...], wm_ref, bm_ref))     # (B, 256)
    out = h1 * attn
    out = dense(out, wf1_ref, bf1_ref, relu=True)          # (B, 128) [100 real]
    out = dense(out, wf2_ref, bf2_ref, relu=True)          # (B, 128) [ 50 real]
    out = dense(out, wf3_ref, bf3_ref, relu=True)          # (B, 128) [ 10 real]
    o_ref[...] = jnp.tanh(dense(out, wf4_ref, bf4_ref))    # (B, 128) lane-dense


# --------------------------- parameter preparation --------------------------
def _uniform(key, shape, bound):
    return jax.random.uniform(key, shape, jnp.float32, -bound, bound)


def _round_up(n):
    return ((n + LANE - 1) // LANE) * LANE


def _pad2(a, rows, cols):
    a = a.astype(jnp.float32)
    return jnp.zeros((rows, cols), jnp.float32).at[:a.shape[0], :a.shape[1]].set(a)


def _pad_mat(w_t):                      # (in, out) -> padded to multiples of 128
    return _pad2(w_t, _round_up(w_t.shape[0]), _round_up(w_t.shape[1]))


def _pad_vec(b):
    return _pad2(b.reshape(1, -1), 1, _round_up(b.shape[0]))


def _selection_matrices(B, H, W, Ho, Wo):
    """0/1 gathers realising stride-2 / pad-1 spatial indexing, per 3x3 tap."""
    r_in, r_out = B * H * W, B * Ho * Wo
    s = np.zeros((9, r_out, r_in), np.float32)
    for kh in range(3):
        for kw in range(3):
            t = kh * 3 + kw
            for b in range(B):
                for ho in range(Ho):
                    for wo in range(Wo):
                        hi, wi = 2 * ho + kh - 1, 2 * wo + kw - 1
                        if 0 <= hi < H and 0 <= wi < W:
                            s[t, b * Ho * Wo + ho * Wo + wo,
                              b * H * W + hi * W + wi] = 1.0
    return jnp.asarray(s)


def _im2col_s2p1(x, Ho, Wo):
    """im2col for conv1 only (raw NCHW input), k=3, stride=2, pad=1."""
    B, C, H, W = x.shape
    xp = jnp.pad(x, ((0, 0), (0, 0), (1, 1), (1, 1)))
    cols = [xp[:, :, kh:kh + 2 * Ho - 1:2, kw:kw + 2 * Wo - 1:2]
            for kh in range(3) for kw in range(3)]
    patches = jnp.stack(cols, axis=2)                       # (B, C, 9, Ho, Wo)
    return patches.transpose(0, 3, 4, 1, 2).reshape(B * Ho * Wo, C * 9)


def init_params(key, image_dim, m_dim, a_dim):
    """PyTorch-style raw parameters (default inits, eval-mode BN stats)."""
    keys = iter(jax.random.split(key, 64))
    p = {}
    chans = [image_dim[0]] + FILTERS
    convs = []
    for i, out_c in enumerate(FILTERS):
        in_c = chans[i]
        bound = 1.0 / float((in_c * 9) ** 0.5)
        w = _uniform(next(keys), (out_c, in_c, 3, 3), bound)
        b = _uniform(next(keys), (out_c,), bound)
        bn = dict(gamma=jnp.ones((out_c,), jnp.float32),
                  beta=jnp.zeros((out_c,), jnp.float32),
                  mean=jnp.zeros((out_c,), jnp.float32),
                  var=jnp.ones((out_c,), jnp.float32))
        convs.append((w, b, bn))
    p["convs"] = convs

    H, W = image_dim[1], image_dim[2]
    for _ in FILTERS:
        H, W = (H - 1) // 2 + 1, (W - 1) // 2 + 1
    conv_out = FILTERS[-1] * H * W
    bound = 1.0 / float(conv_out ** 0.5)
    p["enc_fc1_w"] = _uniform(next(keys), (FEATURE_VEC_SIZE, conv_out), bound)
    p["enc_fc1_b"] = _uniform(next(keys), (FEATURE_VEC_SIZE,), bound)

    Hd = FEATURE_VEC_SIZE
    bound = 1.0 / float(Hd ** 0.5)
    p["lstm_w_ih"] = _uniform(next(keys), (4 * Hd, Hd), bound)   # gates i,f,g,o
    p["lstm_b_ih"] = _uniform(next(keys), (4 * Hd,), bound)
    p["lstm_b_hh"] = _uniform(next(keys), (4 * Hd,), bound)
    # weight_hh is never used: h0 == 0 for the single-step interpretation.

    def linear(in_f, out_f):
        bnd = 1.0 / float(in_f ** 0.5)
        return (_uniform(next(keys), (out_f, in_f), bnd),
                _uniform(next(keys), (out_f,), bnd))

    p["fcm_w"], p["fcm_b"] = linear(m_dim, Hd)
    p["fc1_w"], p["fc1_b"] = linear(Hd, 100)
    p["fc2_w"], p["fc2_b"] = linear(100, 50)
    p["fc3_w"], p["fc3_b"] = linear(50, 10)
    p["fc4_w"], p["fc4_b"] = linear(10, a_dim)
    return p


def prepare_operands(p, batch, image_dim, m_dim, a_dim):
    """Fold BN, pad everything to 128 lanes, build tap weights + gathers."""
    C, H, W = image_dim
    assert C * 9 <= LANE and max(FILTERS) <= LANE
    sizes = [(H, W)]
    for _ in FILTERS:
        h, w = sizes[-1]
        sizes.append(((h - 1) // 2 + 1, (w - 1) // 2 + 1))
    # TODO(synk): fused kernel assumes the encoder spatial extent collapses to
    # 1x1 by conv4 (true for the TinyCar 16x16 / 32x32 geometries).
    assert sizes[4] == (1, 1), "fused kernel assumes 1x1 spatial after conv4"

    def fold(cw, cb, bn):
        scale = bn["gamma"] / jnp.sqrt(bn["var"] + BN_EPS)
        return cw * scale[:, None, None, None], (cb - bn["mean"]) * scale + bn["beta"]

    ops = {}
    # conv1: im2col happens in the wrapper on the raw input.
    w, b = fold(*p["convs"][0])
    ops["w1"] = _pad_mat(w.reshape(w.shape[0], -1).T)        # (128, 128)
    ops["b1"] = _pad_vec(b)

    # conv2..conv4: tap-concatenated weights + spatial gather matrices.
    for li in (1, 2, 3):
        w, b = fold(*p["convs"][li])
        taps = [_pad_mat(w[:, :, kh, kw].T) for kh in range(3) for kw in range(3)]
        ops[f"w{li + 1}"] = jnp.concatenate(taps, axis=1)    # (128, 9*128)
        ops[f"b{li + 1}"] = _pad_vec(b)
        (hi, wi), (ho, wo) = sizes[li], sizes[li + 1]
        ops[f"s{li + 1}"] = _selection_matrices(batch, hi, wi, ho, wo)

    # conv5: 1x1 -> 1x1 spatial, only the centre tap touches real data.
    w, b = fold(*p["convs"][4])
    ops["w5"] = _pad_mat(w[:, :, 1, 1].T)
    ops["b5"] = _pad_vec(b)

    ops["wfc"] = _pad_mat(p["enc_fc1_w"].T)                  # (128, 256)
    ops["bfc"] = _pad_vec(p["enc_fc1_b"])

    # LSTM single step, h0 = c0 = 0 -> forget gate is dead; keep [i, g, o].
    Hd = FEATURE_VEC_SIZE
    wih = p["lstm_w_ih"]
    bsum = p["lstm_b_ih"] + p["lstm_b_hh"]
    ops["wih"] = jnp.concatenate(
        [wih[0:Hd].T, wih[2 * Hd:3 * Hd].T, wih[3 * Hd:4 * Hd].T], axis=1)
    ops["bih"] = jnp.concatenate(
        [bsum[0:Hd], bsum[2 * Hd:3 * Hd], bsum[3 * Hd:4 * Hd]]).reshape(1, -1)

    ops["wm"] = _pad_mat(p["fcm_w"].T)                       # (128, 256)
    ops["bm"] = _pad_vec(p["fcm_b"])
    for i in (1, 2, 3, 4):
        ops[f"wf{i}"] = _pad_mat(p[f"fc{i}_w"].T)
        ops[f"bf{i}"] = _pad_vec(p[f"fc{i}_b"])
    return ops


# --------------------------------- wrapper -----------------------------------
def tinycar_combo_lstm(ops, x, m, a_dim):
    B, C, H, W = x.shape
    Ho, Wo = (H - 1) // 2 + 1, (W - 1) // 2 + 1
    p1 = _pad2(_im2col_s2p1(x.astype(jnp.float32), Ho, Wo), B * Ho * Wo, LANE)
    mp = _pad2(m.astype(jnp.float32), B, LANE)

    operands = (p1, ops["w1"], ops["b1"],
                ops["w2"], ops["b2"], ops["s2"],
                ops["w3"], ops["b3"], ops["s3"],
                ops["w4"], ops["b4"], ops["s4"],
                ops["w5"], ops["b5"],
                ops["wfc"], ops["bfc"],
                mp, ops["wm"], ops["bm"],
                ops["wih"], ops["bih"],
                ops["wf1"], ops["bf1"], ops["wf2"], ops["bf2"],
                ops["wf3"], ops["bf3"], ops["wf4"], ops["bf4"])

    out = pl.pallas_call(
        _fused_kernel,
        out_shape=jax.ShapeDtypeStruct((B, LANE), jnp.float32),
        in_specs=[pl.BlockSpec(memory_space=pltpu.MemorySpace.VMEM)
                  for _ in operands],
        out_specs=pl.BlockSpec(memory_space=pltpu.MemorySpace.VMEM),
    )(*operands)
    return out[:, :a_dim]


# -------------------------- pure-JAX reference check -------------------------
def _reference_forward(p, x, m):
    out = x
    for (w, b, bn) in p["convs"]:
        scale = bn["gamma"] / jnp.sqrt(bn["var"] + BN_EPS)
        wf = w * scale[:, None, None, None]
        bf = (b - bn["mean"]) * scale + bn["beta"]
        out = lax.conv_general_dilated(out, wf, (2, 2), ((1, 1), (1, 1)),
                                       dimension_numbers=("NCHW", "OIHW", "NCHW"))
        out = jnp.maximum(out + bf[None, :, None, None], 0.0)
    feat = jnp.maximum(out.reshape(out.shape[0], -1) @ p["enc_fc1_w"].T
                       + p["enc_fc1_b"], 0.0)
    Hd = FEATURE_VEC_SIZE
    gates = feat @ p["lstm_w_ih"].T + p["lstm_b_ih"] + p["lstm_b_hh"]
    i_g = jax.nn.sigmoid(gates[:, 0:Hd])
    g_g = jnp.tanh(gates[:, 2 * Hd:3 * Hd])
    o_g = jax.nn.sigmoid(gates[:, 3 * Hd:4 * Hd])
    h1 = o_g * jnp.tanh(i_g * g_g)
    attn = jax.nn.sigmoid(m @ p["fcm_w"].T + p["fcm_b"])
    out = h1 * attn
    out = jnp.maximum(out @ p["fc1_w"].T + p["fc1_b"], 0.0)
    out = jnp.maximum(out @ p["fc2_w"].T + p["fc2_b"], 0.0)
    out = jnp.maximum(out @ p["fc3_w"].T + p["fc3_b"], 0.0)
    return jnp.tanh(out @ p["fc4_w"].T + p["fc4_b"])


if __name__ == "__main__":
    key = jax.random.PRNGKey(0)
    pkey, xkey, mkey = jax.random.split(key, 3)

    image_dim = (4, 16, 16)     # (C, H, W)
    batch = 2
    params = init_params(pkey, image_dim, DEFAULT_M_DIM, DEFAULT_A_DIM)
    ops = prepare_operands(params, batch, image_dim, DEFAULT_M_DIM, DEFAULT_A_DIM)

    x = jax.random.normal(xkey, (batch,) + image_dim, jnp.float32)
    m = jax.random.normal(mkey, (batch, DEFAULT_M_DIM), jnp.float32)

    fwd = jax.jit(tinycar_combo_lstm, static_argnums=(3,))
    out = jax.block_until_ready(fwd(ops, x, m, DEFAULT_A_DIM))

    assert out.shape == (batch, DEFAULT_A_DIM)
    assert bool(jnp.all(jnp.isfinite(out)))

    # Loose tolerance: MXU f32 matmul pass-count / accumulation order differs
    # from the XLA reference; structural bugs would show O(1) errors.
    ref = _reference_forward(params, x, m)
    assert bool(jnp.all(jnp.abs(out - ref) < 5e-2)), (out, ref)

    print("KERNEL_OK")
</pallas_src>

<mosaic_0001>
module attributes {stable_mosaic.version = 11 : i64} {
  func.func @_fused_kernel(%arg0: memref<128x128xf32, #tpu.memory_space<vmem>>, %arg1: memref<128x128xf32, #tpu.memory_space<vmem>>, %arg2: memref<1x128xf32, #tpu.memory_space<vmem>>, %arg3: memref<128x1152xf32, #tpu.memory_space<vmem>>, %arg4: memref<1x128xf32, #tpu.memory_space<vmem>>, %arg5: memref<9x32x128xf32, #tpu.memory_space<vmem>>, %arg6: memref<128x1152xf32, #tpu.memory_space<vmem>>, %arg7: memref<1x128xf32, #tpu.memory_space<vmem>>, %arg8: memref<9x8x32xf32, #tpu.memory_space<vmem>>, %arg9: memref<128x1152xf32, #tpu.memory_space<vmem>>, %arg10: memref<1x128xf32, #tpu.memory_space<vmem>>, %arg11: memref<9x2x8xf32, #tpu.memory_space<vmem>>, %arg12: memref<128x128xf32, #tpu.memory_space<vmem>>, %arg13: memref<1x128xf32, #tpu.memory_space<vmem>>, %arg14: memref<128x256xf32, #tpu.memory_space<vmem>>, %arg15: memref<1x256xf32, #tpu.memory_space<vmem>>, %arg16: memref<2x128xf32, #tpu.memory_space<vmem>>, %arg17: memref<128x256xf32, #tpu.memory_space<vmem>>, %arg18: memref<1x256xf32, #tpu.memory_space<vmem>>, %arg19: memref<256x768xf32, #tpu.memory_space<vmem>>, %arg20: memref<1x768xf32, #tpu.memory_space<vmem>>, %arg21: memref<256x128xf32, #tpu.memory_space<vmem>>, %arg22: memref<1x128xf32, #tpu.memory_space<vmem>>, %arg23: memref<128x128xf32, #tpu.memory_space<vmem>>, %arg24: memref<1x128xf32, #tpu.memory_space<vmem>>, %arg25: memref<128x128xf32, #tpu.memory_space<vmem>>, %arg26: memref<1x128xf32, #tpu.memory_space<vmem>>, %arg27: memref<128x128xf32, #tpu.memory_space<vmem>>, %arg28: memref<1x128xf32, #tpu.memory_space<vmem>>, %arg29: memref<2x128xf32, #tpu.memory_space<vmem>>) attributes {dimension_semantics = [], scalar_prefetch = 0 : i64, scratch_operands = 0 : i64, tpu.core_type = #tpu.core_type<tc>} {
    %c0 = arith.constant 0 : index
    %c0_0 = arith.constant 0 : index
    %0 = vector.load %arg0[%c0, %c0_0] : memref<128x128xf32, #tpu.memory_space<vmem>>, vector<128x128xf32>
    %c0_1 = arith.constant 0 : index
    %c0_2 = arith.constant 0 : index
    %1 = vector.load %arg1[%c0_1, %c0_2] : memref<128x128xf32, #tpu.memory_space<vmem>>, vector<128x128xf32>
    %cst = arith.constant dense<0.000000e+00> : vector<128x128xf32>
    %2 = tpu.matmul %0, %1, %cst {dimension_numbers = #tpu.dot_dimension_numbers<[1], [0], [0], [1], [0, 0, 1, 1], [], []>} : vector<128x128xf32>, vector<128x128xf32>, vector<128x128xf32> -> vector<128x128xf32>
    %c0_3 = arith.constant 0 : index
    %c0_4 = arith.constant 0 : index
    %3 = vector.load %arg2[%c0_3, %c0_4] : memref<1x128xf32, #tpu.memory_space<vmem>>, vector<1x128xf32>
    %4 = vector.broadcast %3 : vector<1x128xf32> to vector<128x128xf32>
    %5 = arith.addf %2, %4 : vector<128x128xf32>
    %cst_5 = arith.constant 0.000000e+00 : f32
    %6 = vector.broadcast %cst_5 : f32 to vector<128x128xf32>
    %7 = arith.maximumf %5, %6 : vector<128x128xf32>
    %c0_6 = arith.constant 0 : index
    %c0_7 = arith.constant 0 : index
    %8 = vector.load %arg3[%c0_6, %c0_7] : memref<128x1152xf32, #tpu.memory_space<vmem>>, vector<128x1152xf32>
    %cst_8 = arith.constant dense<0.000000e+00> : vector<128x1152xf32>
    %9 = tpu.matmul %7, %8, %cst_8 {dimension_numbers = #tpu.dot_dimension_numbers<[1], [0], [0], [1], [0, 0, 1, 1], [], []>} : vector<128x128xf32>, vector<128x1152xf32>, vector<128x1152xf32> -> vector<128x1152xf32>
    %c0_9 = arith.constant 0 : index
    %c0_10 = arith.constant 0 : index
    %c0_11 = arith.constant 0 : index
    %10 = vector.load %arg5[%c0_9, %c0_10, %c0_11] : memref<9x32x128xf32, #tpu.memory_space<vmem>>, vector<1x32x128xf32>
    %11 = vector.shape_cast %10 : vector<1x32x128xf32> to vector<32x128xf32>
    %12 = vector.extract_strided_slice %9 {offsets = [0, 0], sizes = [128, 128], strides = [1, 1]} : vector<128x1152xf32> to vector<128x128xf32>
    %cst_12 = arith.constant dense<0.000000e+00> : vector<32x128xf32>
    %13 = tpu.matmul %11, %12, %cst_12 {dimension_numbers = #tpu.dot_dimension_numbers<[1], [0], [0], [1], [0, 0, 1, 1], [], []>} : vector<32x128xf32>, vector<128x128xf32>, vector<32x128xf32> -> vector<32x128xf32>
    %c1 = arith.constant 1 : index
    %c0_13 = arith.constant 0 : index
    %c0_14 = arith.constant 0 : index
    %14 = vector.load %arg5[%c1, %c0_13, %c0_14] : memref<9x32x128xf32, #tpu.memory_space<vmem>>, vector<1x32x128xf32>
    %15 = vector.shape_cast %14 : vector<1x32x128xf32> to vector<32x128xf32>
    %16 = vector.extract_strided_slice %9 {offsets = [0, 128], sizes = [128, 128], strides = [1, 1]} : vector<128x1152xf32> to vector<128x128xf32>
    %cst_15 = arith.constant dense<0.000000e+00> : vector<32x128xf32>
    %17 = tpu.matmul %15, %16, %cst_15 {dimension_numbers = #tpu.dot_dimension_numbers<[1], [0], [0], [1], [0, 0, 1, 1], [], []>} : vector<32x128xf32>, vector<128x128xf32>, vector<32x128xf32> -> vector<32x128xf32>
    %18 = arith.addf %13, %17 : vector<32x128xf32>
    %c2 = arith.constant 2 : index
    %c0_16 = arith.constant 0 : index
    %c0_17 = arith.constant 0 : index
    %19 = vector.load %arg5[%c2, %c0_16, %c0_17] : memref<9x32x128xf32, #tpu.memory_space<vmem>>, vector<1x32x128xf32>
    %20 = vector.shape_cast %19 : vector<1x32x128xf32> to vector<32x128xf32>
    %21 = vector.extract_strided_slice %9 {offsets = [0, 256], sizes = [128, 128], strides = [1, 1]} : vector<128x1152xf32> to vector<128x128xf32>
    %cst_18 = arith.constant dense<0.000000e+00> : vector<32x128xf32>
    %22 = tpu.matmul %20, %21, %cst_18 {dimension_numbers = #tpu.dot_dimension_numbers<[1], [0], [0], [1], [0, 0, 1, 1], [], []>} : vector<32x128xf32>, vector<128x128xf32>, vector<32x128xf32> -> vector<32x128xf32>
    %23 = arith.addf %18, %22 : vector<32x128xf32>
    %c3 = arith.constant 3 : index
    %c0_19 = arith.constant 0 : index
    %c0_20 = arith.constant 0 : index
    %24 = vector.load %arg5[%c3, %c0_19, %c0_20] : memref<9x32x128xf32, #tpu.memory_space<vmem>>, vector<1x32x128xf32>
    %25 = vector.shape_cast %24 : vector<1x32x128xf32> to vector<32x128xf32>
    %26 = vector.extract_strided_slice %9 {offsets = [0, 384], sizes = [128, 128], strides = [1, 1]} : vector<128x1152xf32> to vector<128x128xf32>
    %cst_21 = arith.constant dense<0.000000e+00> : vector<32x128xf32>
    %27 = tpu.matmul %25, %26, %cst_21 {dimension_numbers = #tpu.dot_dimension_numbers<[1], [0], [0], [1], [0, 0, 1, 1], [], []>} : vector<32x128xf32>, vector<128x128xf32>, vector<32x128xf32> -> vector<32x128xf32>
    %28 = arith.addf %23, %27 : vector<32x128xf32>
    %c4 = arith.constant 4 : index
    %c0_22 = arith.constant 0 : index
    %c0_23 = arith.constant 0 : index
    %29 = vector.load %arg5[%c4, %c0_22, %c0_23] : memref<9x32x128xf32, #tpu.memory_space<vmem>>, vector<1x32x128xf32>
    %30 = vector.shape_cast %29 : vector<1x32x128xf32> to vector<32x128xf32>
    %31 = vector.extract_strided_slice %9 {offsets = [0, 512], sizes = [128, 128], strides = [1, 1]} : vector<128x1152xf32> to vector<128x128xf32>
    %cst_24 = arith.constant dense<0.000000e+00> : vector<32x128xf32>
    %32 = tpu.matmul %30, %31, %cst_24 {dimension_numbers = #tpu.dot_dimension_numbers<[1], [0], [0], [1], [0, 0, 1, 1], [], []>} : vector<32x128xf32>, vector<128x128xf32>, vector<32x128xf32> -> vector<32x128xf32>
    %33 = arith.addf %28, %32 : vector<32x128xf32>
    %c5 = arith.constant 5 : index
    %c0_25 = arith.constant 0 : index
    %c0_26 = arith.constant 0 : index
    %34 = vector.load %arg5[%c5, %c0_25, %c0_26] : memref<9x32x128xf32, #tpu.memory_space<vmem>>, vector<1x32x128xf32>
    %35 = vector.shape_cast %34 : vector<1x32x128xf32> to vector<32x128xf32>
    %36 = vector.extract_strided_slice %9 {offsets = [0, 640], sizes = [128, 128], strides = [1, 1]} : vector<128x1152xf32> to vector<128x128xf32>
    %cst_27 = arith.constant dense<0.000000e+00> : vector<32x128xf32>
    %37 = tpu.matmul %35, %36, %cst_27 {dimension_numbers = #tpu.dot_dimension_numbers<[1], [0], [0], [1], [0, 0, 1, 1], [], []>} : vector<32x128xf32>, vector<128x128xf32>, vector<32x128xf32> -> vector<32x128xf32>
    %38 = arith.addf %33, %37 : vector<32x128xf32>
    %c6 = arith.constant 6 : index
    %c0_28 = arith.constant 0 : index
    %c0_29 = arith.constant 0 : index
    %39 = vector.load %arg5[%c6, %c0_28, %c0_29] : memref<9x32x128xf32, #tpu.memory_space<vmem>>, vector<1x32x128xf32>
    %40 = vector.shape_cast %39 : vector<1x32x128xf32> to vector<32x128xf32>
    %41 = vector.extract_strided_slice %9 {offsets = [0, 768], sizes = [128, 128], strides = [1, 1]} : vector<128x1152xf32> to vector<128x128xf32>
    %cst_30 = arith.constant dense<0.000000e+00> : vector<32x128xf32>
    %42 = tpu.matmul %40, %41, %cst_30 {dimension_numbers = #tpu.dot_dimension_numbers<[1], [0], [0], [1], [0, 0, 1, 1], [], []>} : vector<32x128xf32>, vector<128x128xf32>, vector<32x128xf32> -> vector<32x128xf32>
    %43 = arith.addf %38, %42 : vector<32x128xf32>
    %c7 = arith.constant 7 : index
    %c0_31 = arith.constant 0 : index
    %c0_32 = arith.constant 0 : index
    %44 = vector.load %arg5[%c7, %c0_31, %c0_32] : memref<9x32x128xf32, #tpu.memory_space<vmem>>, vector<1x32x128xf32>
    %45 = vector.shape_cast %44 : vector<1x32x128xf32> to vector<32x128xf32>
    %46 = vector.extract_strided_slice %9 {offsets = [0, 896], sizes = [128, 128], strides = [1, 1]} : vector<128x1152xf32> to vector<128x128xf32>
    %cst_33 = arith.constant dense<0.000000e+00> : vector<32x128xf32>
    %47 = tpu.matmul %45, %46, %cst_33 {dimension_numbers = #tpu.dot_dimension_numbers<[1], [0], [0], [1], [0, 0, 1, 1], [], []>} : vector<32x128xf32>, vector<128x128xf32>, vector<32x128xf32> -> vector<32x128xf32>
    %48 = arith.addf %43, %47 : vector<32x128xf32>
    %c8 = arith.constant 8 : index
    %c0_34 = arith.constant 0 : index
    %c0_35 = arith.constant 0 : index
    %49 = vector.load %arg5[%c8, %c0_34, %c0_35] : memref<9x32x128xf32, #tpu.memory_space<vmem>>, vector<1x32x128xf32>
    %50 = vector.shape_cast %49 : vector<1x32x128xf32> to vector<32x128xf32>
    %51 = vector.extract_strided_slice %9 {offsets = [0, 1024], sizes = [128, 128], strides = [1, 1]} : vector<128x1152xf32> to vector<128x128xf32>
    %cst_36 = arith.constant dense<0.000000e+00> : vector<32x128xf32>
    %52 = tpu.matmul %50, %51, %cst_36 {dimension_numbers = #tpu.dot_dimension_numbers<[1], [0], [0], [1], [0, 0, 1, 1], [], []>} : vector<32x128xf32>, vector<128x128xf32>, vector<32x128xf32> -> vector<32x128xf32>
    %53 = arith.addf %48, %52 : vector<32x128xf32>
    %c0_37 = arith.constant 0 : index
    %c0_38 = arith.constant 0 : index
    %54 = vector.load %arg4[%c0_37, %c0_38] : memref<1x128xf32, #tpu.memory_space<vmem>>, vector<1x128xf32>
    %55 = vector.broadcast %54 : vector<1x128xf32> to vector<32x128xf32>
    %56 = arith.addf %53, %55 : vector<32x128xf32>
    %cst_39 = arith.constant 0.000000e+00 : f32
    %57 = vector.broadcast %cst_39 : f32 to vector<32x128xf32>
    %58 = arith.maximumf %56, %57 : vector<32x128xf32>
    %c0_40 = arith.constant 0 : index
    %c0_41 = arith.constant 0 : index
    %59 = vector.load %arg6[%c0_40, %c0_41] : memref<128x1152xf32, #tpu.memory_space<vmem>>, vector<128x1152xf32>
    %cst_42 = arith.constant dense<0.000000e+00> : vector<32x1152xf32>
    %60 = tpu.matmul %58, %59, %cst_42 {dimension_numbers = #tpu.dot_dimension_numbers<[1], [0], [0], [1], [0, 0, 1, 1], [], []>} : vector<32x128xf32>, vector<128x1152xf32>, vector<32x1152xf32> -> vector<32x1152xf32>
    %c0_43 = arith.constant 0 : index
    %c0_44 = arith.constant 0 : index
    %c0_45 = arith.constant 0 : index
    %61 = vector.load %arg8[%c0_43, %c0_44, %c0_45] : memref<9x8x32xf32, #tpu.memory_space<vmem>>, vector<1x8x32xf32>
    %62 = vector.shape_cast %61 : vector<1x8x32xf32> to vector<8x32xf32>
    %63 = vector.extract_strided_slice %60 {offsets = [0, 0], sizes = [32, 128], strides = [1, 1]} : vector<32x1152xf32> to vector<32x128xf32>
    %cst_46 = arith.constant dense<0.000000e+00> : vector<8x128xf32>
    %64 = tpu.matmul %62, %63, %cst_46 {dimension_numbers = #tpu.dot_dimension_numbers<[1], [0], [0], [1], [0, 0, 1, 1], [], []>} : vector<8x32xf32>, vector<32x128xf32>, vector<8x128xf32> -> vector<8x128xf32>
    %c1_47 = arith.constant 1 : index
    %c0_48 = arith.constant 0 : index
    %c0_49 = arith.constant 0 : index
    %65 = vector.load %arg8[%c1_47, %c0_48, %c0_49] : memref<9x8x32xf32, #tpu.memory_space<vmem>>, vector<1x8x32xf32>
    %66 = vector.shape_cast %65 : vector<1x8x32xf32> to vector<8x32xf32>
    %67 = vector.extract_strided_slice %60 {offsets = [0, 128], sizes = [32, 128], strides = [1, 1]} : vector<32x1152xf32> to vector<32x128xf32>
    %cst_50 = arith.constant dense<0.000000e+00> : vector<8x128xf32>
    %68 = tpu.matmul %66, %67, %cst_50 {dimension_numbers = #tpu.dot_dimension_numbers<[1], [0], [0], [1], [0, 0, 1, 1], [], []>} : vector<8x32xf32>, vector<32x128xf32>, vector<8x128xf32> -> vector<8x128xf32>
    %69 = arith.addf %64, %68 : vector<8x128xf32>
    %c2_51 = arith.constant 2 : index
    %c0_52 = arith.constant 0 : index
    %c0_53 = arith.constant 0 : index
    %70 = vector.load %arg8[%c2_51, %c0_52, %c0_53] : memref<9x8x32xf32, #tpu.memory_space<vmem>>, vector<1x8x32xf32>
    %71 = vector.shape_cast %70 : vector<1x8x32xf32> to vector<8x32xf32>
    %72 = vector.extract_strided_slice %60 {offsets = [0, 256], sizes = [32, 128], strides = [1, 1]} : vector<32x1152xf32> to vector<32x128xf32>
    %cst_54 = arith.constant dense<0.000000e+00> : vector<8x128xf32>
    %73 = tpu.matmul %71, %72, %cst_54 {dimension_numbers = #tpu.dot_dimension_numbers<[1], [0], [0], [1], [0, 0, 1, 1], [], []>} : vector<8x32xf32>, vector<32x128xf32>, vector<8x128xf32> -> vector<8x128xf32>
    %74 = arith.addf %69, %73 : vector<8x128xf32>
    %c3_55 = arith.constant 3 : index
    %c0_56 = arith.constant 0 : index
    %c0_57 = arith.constant 0 : index
    %75 = vector.load %arg8[%c3_55, %c0_56, %c0_57] : memref<9x8x32xf32, #tpu.memory_space<vmem>>, vector<1x8x32xf32>
    %76 = vector.shape_cast %75 : vector<1x8x32xf32> to vector<8x32xf32>
    %77 = vector.extract_strided_slice %60 {offsets = [0, 384], sizes = [32, 128], strides = [1, 1]} : vector<32x1152xf32> to vector<32x128xf32>
    %cst_58 = arith.constant dense<0.000000e+00> : vector<8x128xf32>
    %78 = tpu.matmul %76, %77, %cst_58 {dimension_numbers = #tpu.dot_dimension_numbers<[1], [0], [0], [1], [0, 0, 1, 1], [], []>} : vector<8x32xf32>, vector<32x128xf32>, vector<8x128xf32> -> vector<8x128xf32>
    %79 = arith.addf %74, %78 : vector<8x128xf32>
    %c4_59 = arith.constant 4 : index
    %c0_60 = arith.constant 0 : index
    %c0_61 = arith.constant 0 : index
    %80 = vector.load %arg8[%c4_59, %c0_60, %c0_61] : memref<9x8x32xf32, #tpu.memory_space<vmem>>, vector<1x8x32xf32>
    %81 = vector.shape_cast %80 : vector<1x8x32xf32> to vector<8x32xf32>
    %82 = vector.extract_strided_slice %60 {offsets = [0, 512], sizes = [32, 128], strides = [1, 1]} : vector<32x1152xf32> to vector<32x128xf32>
    %cst_62 = arith.constant dense<0.000000e+00> : vector<8x128xf32>
    %83 = tpu.matmul %81, %82, %cst_62 {dimension_numbers = #tpu.dot_dimension_numbers<[1], [0], [0], [1], [0, 0, 1, 1], [], []>} : vector<8x32xf32>, vector<32x128xf32>, vector<8x128xf32> -> vector<8x128xf32>
    %84 = arith.addf %79, %83 : vector<8x128xf32>
    %c5_63 = arith.constant 5 : index
    %c0_64 = arith.constant 0 : index
    %c0_65 = arith.constant 0 : index
    %85 = vector.load %arg8[%c5_63, %c0_64, %c0_65] : memref<9x8x32xf32, #tpu.memory_space<vmem>>, vector<1x8x32xf32>
    %86 = vector.shape_cast %85 : vector<1x8x32xf32> to vector<8x32xf32>
    %87 = vector.extract_strided_slice %60 {offsets = [0, 640], sizes = [32, 128], strides = [1, 1]} : vector<32x1152xf32> to vector<32x128xf32>
    %cst_66 = arith.constant dense<0.000000e+00> : vector<8x128xf32>
    %88 = tpu.matmul %86, %87, %cst_66 {dimension_numbers = #tpu.dot_dimension_numbers<[1], [0], [0], [1], [0, 0, 1, 1], [], []>} : vector<8x32xf32>, vector<32x128xf32>, vector<8x128xf32> -> vector<8x128xf32>
    %89 = arith.addf %84, %88 : vector<8x128xf32>
    %c6_67 = arith.constant 6 : index
    %c0_68 = arith.constant 0 : index
    %c0_69 = arith.constant 0 : index
    %90 = vector.load %arg8[%c6_67, %c0_68, %c0_69] : memref<9x8x32xf32, #tpu.memory_space<vmem>>, vector<1x8x32xf32>
    %91 = vector.shape_cast %90 : vector<1x8x32xf32> to vector<8x32xf32>
    %92 = vector.extract_strided_slice %60 {offsets = [0, 768], sizes = [32, 128], strides = [1, 1]} : vector<32x1152xf32> to vector<32x128xf32>
    %cst_70 = arith.constant dense<0.000000e+00> : vector<8x128xf32>
    %93 = tpu.matmul %91, %92, %cst_70 {dimension_numbers = #tpu.dot_dimension_numbers<[1], [0], [0], [1], [0, 0, 1, 1], [], []>} : vector<8x32xf32>, vector<32x128xf32>, vector<8x128xf32> -> vector<8x128xf32>
    %94 = arith.addf %89, %93 : vector<8x128xf32>
    %c7_71 = arith.constant 7 : index
    %c0_72 = arith.constant 0 : index
    %c0_73 = arith.constant 0 : index
    %95 = vector.load %arg8[%c7_71, %c0_72, %c0_73] : memref<9x8x32xf32, #tpu.memory_space<vmem>>, vector<1x8x32xf32>
    %96 = vector.shape_cast %95 : vector<1x8x32xf32> to vector<8x32xf32>
    %97 = vector.extract_strided_slice %60 {offsets = [0, 896], sizes = [32, 128], strides = [1, 1]} : vector<32x1152xf32> to vector<32x128xf32>
    %cst_74 = arith.constant dense<0.000000e+00> : vector<8x128xf32>
    %98 = tpu.matmul %96, %97, %cst_74 {dimension_numbers = #tpu.dot_dimension_numbers<[1], [0], [0], [1], [0, 0, 1, 1], [], []>} : vector<8x32xf32>, vector<32x128xf32>, vector<8x128xf32> -> vector<8x128xf32>
    %99 = arith.addf %94, %98 : vector<8x128xf32>
    %c8_75 = arith.constant 8 : index
    %c0_76 = arith.constant 0 : index
    %c0_77 = arith.constant 0 : index
    %100 = vector.load %arg8[%c8_75, %c0_76, %c0_77] : memref<9x8x32xf32, #tpu.memory_space<vmem>>, vector<1x8x32xf32>
    %101 = vector.shape_cast %100 : vector<1x8x32xf32> to vector<8x32xf32>
    %102 = vector.extract_strided_slice %60 {offsets = [0, 1024], sizes = [32, 128], strides = [1, 1]} : vector<32x1152xf32> to vector<32x128xf32>
    %cst_78 = arith.constant dense<0.000000e+00> : vector<8x128xf32>
    %103 = tpu.matmul %101, %102, %cst_78 {dimension_numbers = #tpu.dot_dimension_numbers<[1], [0], [0], [1], [0, 0, 1, 1], [], []>} : vector<8x32xf32>, vector<32x128xf32>, vector<8x128xf32> -> vector<8x128xf32>
    %104 = arith.addf %99, %103 : vector<8x128xf32>
    %c0_79 = arith.constant 0 : index
    %c0_80 = arith.constant 0 : index
    %105 = vector.load %arg7[%c0_79, %c0_80] : memref<1x128xf32, #tpu.memory_space<vmem>>, vector<1x128xf32>
    %106 = vector.broadcast %105 : vector<1x128xf32> to vector<8x128xf32>
    %107 = arith.addf %104, %106 : vector<8x128xf32>
    %cst_81 = arith.constant 0.000000e+00 : f32
    %108 = vector.broadcast %cst_81 : f32 to vector<8x128xf32>
    %109 = arith.maximumf %107, %108 : vector<8x128xf32>
    %c0_82 = arith.constant 0 : index
    %c0_83 = arith.constant 0 : index
    %110 = vector.load %arg9[%c0_82, %c0_83] : memref<128x1152xf32, #tpu.memory_space<vmem>>, vector<128x1152xf32>
    %cst_84 = arith.constant dense<0.000000e+00> : vector<8x1152xf32>
    %111 = tpu.matmul %109, %110, %cst_84 {dimension_numbers = #tpu.dot_dimension_numbers<[1], [0], [0], [1], [0, 0, 1, 1], [], []>} : vector<8x128xf32>, vector<128x1152xf32>, vector<8x1152xf32> -> vector<8x1152xf32>
    %c0_85 = arith.constant 0 : index
    %c0_86 = arith.constant 0 : index
    %c0_87 = arith.constant 0 : index
    %112 = vector.load %arg11[%c0_85, %c0_86, %c0_87] : memref<9x2x8xf32, #tpu.memory_space<vmem>>, vector<1x2x8xf32>
    %113 = vector.shape_cast %112 : vector<1x2x8xf32> to vector<2x8xf32>
    %114 = vector.extract_strided_slice %111 {offsets = [0, 0], sizes = [8, 128], strides = [1, 1]} : vector<8x1152xf32> to vector<8x128xf32>
    %cst_88 = arith.constant dense<0.000000e+00> : vector<2x128xf32>
    %115 = tpu.matmul %113, %114, %cst_88 {dimension_numbers = #tpu.dot_dimension_numbers<[1], [0], [0], [1], [0, 0, 1, 1], [], []>} : vector<2x8xf32>, vector<8x128xf32>, vector<2x128xf32> -> vector<2x128xf32>
    %c1_89 = arith.constant 1 : index
    %c0_90 = arith.constant 0 : index
    %c0_91 = arith.constant 0 : index
    %116 = vector.load %arg11[%c1_89, %c0_90, %c0_91] : memref<9x2x8xf32, #tpu.memory_space<vmem>>, vector<1x2x8xf32>
    %117 = vector.shape_cast %116 : vector<1x2x8xf32> to vector<2x8xf32>
    %118 = vector.extract_strided_slice %111 {offsets = [0, 128], sizes = [8, 128], strides = [1, 1]} : vector<8x1152xf32> to vector<8x128xf32>
    %cst_92 = arith.constant dense<0.000000e+00> : vector<2x128xf32>
    %119 = tpu.matmul %117, %118, %cst_92 {dimension_numbers = #tpu.dot_dimension_numbers<[1], [0], [0], [1], [0, 0, 1, 1], [], []>} : vector<2x8xf32>, vector<8x128xf32>, vector<2x128xf32> -> vector<2x128xf32>
    %120 = arith.addf %115, %119 : vector<2x128xf32>
    %c2_93 = arith.constant 2 : index
    %c0_94 = arith.constant 0 : index
    %c0_95 = arith.constant 0 : index
    %121 = vector.load %arg11[%c2_93, %c0_94, %c0_95] : memref<9x2x8xf32, #tpu.memory_space<vmem>>, vector<1x2x8xf32>
    %122 = vector.shape_cast %121 : vector<1x2x8xf32> to vector<2x8xf32>
    %123 = vector.extract_strided_slice %111 {offsets = [0, 256], sizes = [8, 128], strides = [1, 1]} : vector<8x1152xf32> to vector<8x128xf32>
    %cst_96 = arith.constant dense<0.000000e+00> : vector<2x128xf32>
    %124 = tpu.matmul %122, %123, %cst_96 {dimension_numbers = #tpu.dot_dimension_numbers<[1], [0], [0], [1], [0, 0, 1, 1], [], []>} : vector<2x8xf32>, vector<8x128xf32>, vector<2x128xf32> -> vector<2x128xf32>
    %125 = arith.addf %120, %124 : vector<2x128xf32>
    %c3_97 = arith.constant 3 : index
    %c0_98 = arith.constant 0 : index
    %c0_99 = arith.constant 0 : index
    %126 = vector.load %arg11[%c3_97, %c0_98, %c0_99] : memref<9x2x8xf32, #tpu.memory_space<vmem>>, vector<1x2x8xf32>
    %127 = vector.shape_cast %126 : vector<1x2x8xf32> to vector<2x8xf32>
    %128 = vector.extract_strided_slice %111 {offsets = [0, 384], sizes = [8, 128], strides = [1, 1]} : vector<8x1152xf32> to vector<8x128xf32>
    %cst_100 = arith.constant dense<0.000000e+00> : vector<2x128xf32>
    %129 = tpu.matmul %127, %128, %cst_100 {dimension_numbers = #tpu.dot_dimension_numbers<[1], [0], [0], [1], [0, 0, 1, 1], [], []>} : vector<2x8xf32>, vector<8x128xf32>, vector<2x128xf32> -> vector<2x128xf32>
    %130 = arith.addf %125, %129 : vector<2x128xf32>
    %c4_101 = arith.constant 4 : index
    %c0_102 = arith.constant 0 : index
    %c0_103 = arith.constant 0 : index
    %131 = vector.load %arg11[%c4_101, %c0_102, %c0_103] : memref<9x2x8xf32, #tpu.memory_space<vmem>>, vector<1x2x8xf32>
    %132 = vector.shape_cast %131 : vector<1x2x8xf32> to vector<2x8xf32>
    %133 = vector.extract_strided_slice %111 {offsets = [0, 512], sizes = [8, 128], strides = [1, 1]} : vector<8x1152xf32> to vector<8x128xf32>
    %cst_104 = arith.constant dense<0.000000e+00> : vector<2x128xf32>
    %134 = tpu.matmul %132, %133, %cst_104 {dimension_numbers = #tpu.dot_dimension_numbers<[1], [0], [0], [1], [0, 0, 1, 1], [], []>} : vector<2x8xf32>, vector<8x128xf32>, vector<2x128xf32> -> vector<2x128xf32>
    %135 = arith.addf %130, %134 : vector<2x128xf32>
    %c5_105 = arith.constant 5 : index
    %c0_106 = arith.constant 0 : index
    %c0_107 = arith.constant 0 : index
    %136 = vector.load %arg11[%c5_105, %c0_106, %c0_107] : memref<9x2x8xf32, #tpu.memory_space<vmem>>, vector<1x2x8xf32>
    %137 = vector.shape_cast %136 : vector<1x2x8xf32> to vector<2x8xf32>
    %138 = vector.extract_strided_slice %111 {offsets = [0, 640], sizes = [8, 128], strides = [1, 1]} : vector<8x1152xf32> to vector<8x128xf32>
    %cst_108 = arith.constant dense<0.000000e+00> : vector<2x128xf32>
    %139 = tpu.matmul %137, %138, %cst_108 {dimension_numbers = #tpu.dot_dimension_numbers<[1], [0], [0], [1], [0, 0, 1, 1], [], []>} : vector<2x8xf32>, vector<8x128xf32>, vector<2x128xf32> -> vector<2x128xf32>
    %140 = arith.addf %135, %139 : vector<2x128xf32>
    %c6_109 = arith.constant 6 : index
    %c0_110 = arith.constant 0 : index
    %c0_111 = arith.constant 0 : index
    %141 = vector.load %arg11[%c6_109, %c0_110, %c0_111] : memref<9x2x8xf32, #tpu.memory_space<vmem>>, vector<1x2x8xf32>
    %142 = vector.shape_cast %141 : vector<1x2x8xf32> to vector<2x8xf32>
    %143 = vector.extract_strided_slice %111 {offsets = [0, 768], sizes = [8, 128], strides = [1, 1]} : vector<8x1152xf32> to vector<8x128xf32>
    %cst_112 = arith.constant dense<0.000000e+00> : vector<2x128xf32>
    %144 = tpu.matmul %142, %143, %cst_112 {dimension_numbers = #tpu.dot_dimension_numbers<[1], [0], [0], [1], [0, 0, 1, 1], [], []>} : vector<2x8xf32>, vector<8x128xf32>, vector<2x128xf32> -> vector<2x128xf32>
    %145 = arith.addf %140, %144 : vector<2x128xf32>
    %c7_113 = arith.constant 7 : index
    %c0_114 = arith.constant 0 : index
    %c0_115 = arith.constant 0 : index
    %146 = vector.load %arg11[%c7_113, %c0_114, %c0_115] : memref<9x2x8xf32, #tpu.memory_space<vmem>>, vector<1x2x8xf32>
    %147 = vector.shape_cast %146 : vector<1x2x8xf32> to vector<2x8xf32>
    %148 = vector.extract_strided_slice %111 {offsets = [0, 896], sizes = [8, 128], strides = [1, 1]} : vector<8x1152xf32> to vector<8x128xf32>
    %cst_116 = arith.constant dense<0.000000e+00> : vector<2x128xf32>
    %149 = tpu.matmul %147, %148, %cst_116 {dimension_numbers = #tpu.dot_dimension_numbers<[1], [0], [0], [1], [0, 0, 1, 1], [], []>} : vector<2x8xf32>, vector<8x128xf32>, vector<2x128xf32> -> vector<2x128xf32>
    %150 = arith.addf %145, %149 : vector<2x128xf32>
    %c8_117 = arith.constant 8 : index
    %c0_118 = arith.constant 0 : index
    %c0_119 = arith.constant 0 : index
    %151 = vector.load %arg11[%c8_117, %c0_118, %c0_119] : memref<9x2x8xf32, #tpu.memory_space<vmem>>, vector<1x2x8xf32>
    %152 = vector.shape_cast %151 : vector<1x2x8xf32> to vector<2x8xf32>
    %153 = vector.extract_strided_slice %111 {offsets = [0, 1024], sizes = [8, 128], strides = [1, 1]} : vector<8x1152xf32> to vector<8x128xf32>
    %cst_120 = arith.constant dense<0.000000e+00> : vector<2x128xf32>
    %154 = tpu.matmul %152, %153, %cst_120 {dimension_numbers = #tpu.dot_dimension_numbers<[1], [0], [0], [1], [0, 0, 1, 1], [], []>} : vector<2x8xf32>, vector<8x128xf32>, vector<2x128xf32> -> vector<2x128xf32>
    %155 = arith.addf %150, %154 : vector<2x128xf32>
    %c0_121 = arith.constant 0 : index
    %c0_122 = arith.constant 0 : index
    %156 = vector.load %arg10[%c0_121, %c0_122] : memref<1x128xf32, #tpu.memory_space<vmem>>, vector<1x128xf32>
    %157 = vector.broadcast %156 : vector<1x128xf32> to vector<2x128xf32>
    %158 = arith.addf %155, %157 : vector<2x128xf32>
    %cst_123 = arith.constant 0.000000e+00 : f32
    %159 = vector.broadcast %cst_123 : f32 to vector<2x128xf32>
    %160 = arith.maximumf %158, %159 : vector<2x128xf32>
    %c0_124 = arith.constant 0 : index
    %c0_125 = arith.constant 0 : index
    %161 = vector.load %arg12[%c0_124, %c0_125] : memref<128x128xf32, #tpu.memory_space<vmem>>, vector<128x128xf32>
    %cst_126 = arith.constant dense<0.000000e+00> : vector<2x128xf32>
    %162 = tpu.matmul %160, %161, %cst_126 {dimension_numbers = #tpu.dot_dimension_numbers<[1], [0], [0], [1], [0, 0, 1, 1], [], []>} : vector<2x128xf32>, vector<128x128xf32>, vector<2x128xf32> -> vector<2x128xf32>
    %c0_127 = arith.constant 0 : index
    %c0_128 = arith.constant 0 : index
    %163 = vector.load %arg13[%c0_127, %c0_128] : memref<1x128xf32, #tpu.memory_space<vmem>>, vector<1x128xf32>
    %164 = vector.broadcast %163 : vector<1x128xf32> to vector<2x128xf32>
    %165 = arith.addf %162, %164 : vector<2x128xf32>
    %cst_129 = arith.constant 0.000000e+00 : f32
    %166 = vector.broadcast %cst_129 : f32 to vector<2x128xf32>
    %167 = arith.maximumf %165, %166 : vector<2x128xf32>
    %c0_130 = arith.constant 0 : index
    %c0_131 = arith.constant 0 : index
    %168 = vector.load %arg14[%c0_130, %c0_131] : memref<128x256xf32, #tpu.memory_space<vmem>>, vector<128x256xf32>
    %cst_132 = arith.constant dense<0.000000e+00> : vector<2x256xf32>
    %169 = tpu.matmul %167, %168, %cst_132 {dimension_numbers = #tpu.dot_dimension_numbers<[1], [0], [0], [1], [0, 0, 1, 1], [], []>} : vector<2x128xf32>, vector<128x256xf32>, vector<2x256xf32> -> vector<2x256xf32>
    %c0_133 = arith.constant 0 : index
    %c0_134 = arith.constant 0 : index
    %170 = vector.load %arg15[%c0_133, %c0_134] : memref<1x256xf32, #tpu.memory_space<vmem>>, vector<1x256xf32>
    %171 = vector.broadcast %170 : vector<1x256xf32> to vector<2x256xf32>
    %172 = arith.addf %169, %171 : vector<2x256xf32>
    %cst_135 = arith.constant 0.000000e+00 : f32
    %173 = vector.broadcast %cst_135 : f32 to vector<2x256xf32>
    %174 = arith.maximumf %172, %173 : vector<2x256xf32>
    %c0_136 = arith.constant 0 : index
    %c0_137 = arith.constant 0 : index
    %175 = vector.load %arg19[%c0_136, %c0_137] : memref<256x768xf32, #tpu.memory_space<vmem>>, vector<256x768xf32>
    %cst_138 = arith.constant dense<0.000000e+00> : vector<2x768xf32>
    %176 = tpu.matmul %174, %175, %cst_138 {dimension_numbers = #tpu.dot_dimension_numbers<[1], [0], [0], [1], [0, 0, 1, 1], [], []>} : vector<2x256xf32>, vector<256x768xf32>, vector<2x768xf32> -> vector<2x768xf32>
    %c0_139 = arith.constant 0 : index
    %c0_140 = arith.constant 0 : index
    %177 = vector.load %arg20[%c0_139, %c0_140] : memref<1x768xf32, #tpu.memory_space<vmem>>, vector<1x768xf32>
    %178 = vector.broadcast %177 : vector<1x768xf32> to vector<2x768xf32>
    %179 = arith.addf %176, %178 : vector<2x768xf32>
    %180 = vector.extract_strided_slice %179 {offsets = [0, 0], sizes = [2, 256], strides = [1, 1]} : vector<2x768xf32> to vector<2x256xf32>
    %cst_141 = arith.constant 5.000000e-01 : f32
    %181 = vector.broadcast %cst_141 : f32 to vector<2x256xf32>
    %182 = arith.mulf %181, %180 : vector<2x256xf32>
    %183 = math.tanh %182 : vector<2x256xf32>
    %cst_142 = arith.constant 1.000000e+00 : f32
    %184 = vector.broadcast %cst_142 : f32 to vector<2x256xf32>
    %185 = arith.addf %184, %183 : vector<2x256xf32>
    %cst_143 = arith.constant 5.000000e-01 : f32
    %186 = vector.broadcast %cst_143 : f32 to vector<2x256xf32>
    %187 = arith.mulf %186, %185 : vector<2x256xf32>
    %188 = vector.extract_strided_slice %179 {offsets = [0, 256], sizes = [2, 256], strides = [1, 1]} : vector<2x768xf32> to vector<2x256xf32>
    %189 = math.tanh %188 : vector<2x256xf32>
    %190 = vector.extract_strided_slice %179 {offsets = [0, 512], sizes = [2, 256], strides = [1, 1]} : vector<2x768xf32> to vector<2x256xf32>
    %cst_144 = arith.constant 5.000000e-01 : f32
    %191 = vector.broadcast %cst_144 : f32 to vector<2x256xf32>
    %192 = arith.mulf %191, %190 : vector<2x256xf32>
    %193 = math.tanh %192 : vector<2x256xf32>
    %cst_145 = arith.constant 1.000000e+00 : f32
    %194 = vector.broadcast %cst_145 : f32 to vector<2x256xf32>
    %195 = arith.addf %194, %193 : vector<2x256xf32>
    %cst_146 = arith.constant 5.000000e-01 : f32
    %196 = vector.broadcast %cst_146 : f32 to vector<2x256xf32>
    %197 = arith.mulf %196, %195 : vector<2x256xf32>
    %198 = arith.mulf %187, %189 : vector<2x256xf32>
    %199 = math.tanh %198 : vector<2x256xf32>
    %200 = arith.mulf %197, %199 : vector<2x256xf32>
    %c0_147 = arith.constant 0 : index
    %c0_148 = arith.constant 0 : index
    %201 = vector.load %arg16[%c0_147, %c0_148] : memref<2x128xf32, #tpu.memory_space<vmem>>, vector<2x128xf32>
    %c0_149 = arith.constant 0 : index
    %c0_150 = arith.constant 0 : index
    %202 = vector.load %arg17[%c0_149, %c0_150] : memref<128x256xf32, #tpu.memory_space<vmem>>, vector<128x256xf32>
    %cst_151 = arith.constant dense<0.000000e+00> : vector<2x256xf32>
    %203 = tpu.matmul %201, %202, %cst_151 {dimension_numbers = #tpu.dot_dimension_numbers<[1], [0], [0], [1], [0, 0, 1, 1], [], []>} : vector<2x128xf32>, vector<128x256xf32>, vector<2x256xf32> -> vector<2x256xf32>
    %c0_152 = arith.constant 0 : index
    %c0_153 = arith.constant 0 : index
    %204 = vector.load %arg18[%c0_152, %c0_153] : memref<1x256xf32, #tpu.memory_space<vmem>>, vector<1x256xf32>
    %205 = vector.broadcast %204 : vector<1x256xf32> to vector<2x256xf32>
    %206 = arith.addf %203, %205 : vector<2x256xf32>
    %cst_154 = arith.constant 5.000000e-01 : f32
    %207 = vector.broadcast %cst_154 : f32 to vector<2x256xf32>
    %208 = arith.mulf %207, %206 : vector<2x256xf32>
    %209 = math.tanh %208 : vector<2x256xf32>
    %cst_155 = arith.constant 1.000000e+00 : f32
    %210 = vector.broadcast %cst_155 : f32 to vector<2x256xf32>
    %211 = arith.addf %210, %209 : vector<2x256xf32>
    %cst_156 = arith.constant 5.000000e-01 : f32
    %212 = vector.broadcast %cst_156 : f32 to vector<2x256xf32>
    %213 = arith.mulf %212, %211 : vector<2x256xf32>
    %214 = arith.mulf %200, %213 : vector<2x256xf32>
    %c0_157 = arith.constant 0 : index
    %c0_158 = arith.constant 0 : index
    %215 = vector.load %arg21[%c0_157, %c0_158] : memref<256x128xf32, #tpu.memory_space<vmem>>, vector<256x128xf32>
    %cst_159 = arith.constant dense<0.000000e+00> : vector<2x128xf32>
    %216 = tpu.matmul %214, %215, %cst_159 {dimension_numbers = #tpu.dot_dimension_numbers<[1], [0], [0], [1], [0, 0, 1, 1], [], []>} : vector<2x256xf32>, vector<256x128xf32>, vector<2x128xf32> -> vector<2x128xf32>
    %c0_160 = arith.constant 0 : index
    %c0_161 = arith.constant 0 : index
    %217 = vector.load %arg22[%c0_160, %c0_161] : memref<1x128xf32, #tpu.memory_space<vmem>>, vector<1x128xf32>
    %218 = vector.broadcast %217 : vector<1x128xf32> to vector<2x128xf32>
    %219 = arith.addf %216, %218 : vector<2x128xf32>
    %cst_162 = arith.constant 0.000000e+00 : f32
    %220 = vector.broadcast %cst_162 : f32 to vector<2x128xf32>
    %221 = arith.maximumf %219, %220 : vector<2x128xf32>
    %c0_163 = arith.constant 0 : index
    %c0_164 = arith.constant 0 : index
    %222 = vector.load %arg23[%c0_163, %c0_164] : memref<128x128xf32, #tpu.memory_space<vmem>>, vector<128x128xf32>
    %cst_165 = arith.constant dense<0.000000e+00> : vector<2x128xf32>
    %223 = tpu.matmul %221, %222, %cst_165 {dimension_numbers = #tpu.dot_dimension_numbers<[1], [0], [0], [1], [0, 0, 1, 1], [], []>} : vector<2x128xf32>, vector<128x128xf32>, vector<2x128xf32> -> vector<2x128xf32>
    %c0_166 = arith.constant 0 : index
    %c0_167 = arith.constant 0 : index
    %224 = vector.load %arg24[%c0_166, %c0_167] : memref<1x128xf32, #tpu.memory_space<vmem>>, vector<1x128xf32>
    %225 = vector.broadcast %224 : vector<1x128xf32> to vector<2x128xf32>
    %226 = arith.addf %223, %225 : vector<2x128xf32>
    %cst_168 = arith.constant 0.000000e+00 : f32
    %227 = vector.broadcast %cst_168 : f32 to vector<2x128xf32>
    %228 = arith.maximumf %226, %227 : vector<2x128xf32>
    %c0_169 = arith.constant 0 : index
    %c0_170 = arith.constant 0 : index
    %229 = vector.load %arg25[%c0_169, %c0_170] : memref<128x128xf32, #tpu.memory_space<vmem>>, vector<128x128xf32>
    %cst_171 = arith.constant dense<0.000000e+00> : vector<2x128xf32>
    %230 = tpu.matmul %228, %229, %cst_171 {dimension_numbers = #tpu.dot_dimension_numbers<[1], [0], [0], [1], [0, 0, 1, 1], [], []>} : vector<2x128xf32>, vector<128x128xf32>, vector<2x128xf32> -> vector<2x128xf32>
    %c0_172 = arith.constant 0 : index
    %c0_173 = arith.constant 0 : index
    %231 = vector.load %arg26[%c0_172, %c0_173] : memref<1x128xf32, #tpu.memory_space<vmem>>, vector<1x128xf32>
    %232 = vector.broadcast %231 : vector<1x128xf32> to vector<2x128xf32>
    %233 = arith.addf %230, %232 : vector<2x128xf32>
    %cst_174 = arith.constant 0.000000e+00 : f32
    %234 = vector.broadcast %cst_174 : f32 to vector<2x128xf32>
    %235 = arith.maximumf %233, %234 : vector<2x128xf32>
    %c0_175 = arith.constant 0 : index
    %c0_176 = arith.constant 0 : index
    %236 = vector.load %arg27[%c0_175, %c0_176] : memref<128x128xf32, #tpu.memory_space<vmem>>, vector<128x128xf32>
    %cst_177 = arith.constant dense<0.000000e+00> : vector<2x128xf32>
    %237 = tpu.matmul %235, %236, %cst_177 {dimension_numbers = #tpu.dot_dimension_numbers<[1], [0], [0], [1], [0, 0, 1, 1], [], []>} : vector<2x128xf32>, vector<128x128xf32>, vector<2x128xf32> -> vector<2x128xf32>
    %c0_178 = arith.constant 0 : index
    %c0_179 = arith.constant 0 : index
    %238 = vector.load %arg28[%c0_178, %c0_179] : memref<1x128xf32, #tpu.memory_space<vmem>>, vector<1x128xf32>
    %239 = vector.broadcast %238 : vector<1x128xf32> to vector<2x128xf32>
    %240 = arith.addf %237, %239 : vector<2x128xf32>
    %241 = math.tanh %240 : vector<2x128xf32>
    %c0_180 = arith.constant 0 : index
    %c0_181 = arith.constant 0 : index
    %242 = vector.load %arg29[%c0_180, %c0_181] : memref<2x128xf32, #tpu.memory_space<vmem>>, vector<2x128xf32>
    tpu.vector_store %arg29[%c0_180, %c0_181], %241 {strides = array<i32>} : memref<2x128xf32, #tpu.memory_space<vmem>>, vector<2x128xf32>,
    return
  }
}

</mosaic_0001>

<llo_original>
// kernel: tinycar_combo_lstm.1
$region0: #{tinycar_combo_lstm.1}
  #allocation0 [shape = 'u32[]', space=smem, size = 0x4, offset = 0x4, fixed_abs, tag = 'smem constant byte address 0x4 - core index']
  #allocation1 [shape = 'u32[144,128]{1,0:T(1,128)}', space=vmem, size = 0x12000, scoped, tag = 'internal scratch']
  %s0 = inlined_call_operand.smem [shape: u32[30], index: -1, kind: input, shape index: {}]
  %s1 = sld [smem:[%s0]]
  %s2 = scalar_lea.smem %s0, 1
  %s3 = sld [smem:[%s2]]
  %s4 = scalar_lea.smem %s0, 2
  %s5 = sld [smem:[%s4]]
  %s6 = scalar_lea.smem %s0, 3
  %s7 = sld [smem:[%s6]]
  %s8 = scalar_lea.smem %s0, 4
  %s9 = sld [smem:[%s8]]
  %s10 = scalar_lea.smem %s0, 5
  %s11 = sld [smem:[%s10]]
  %s12 = scalar_lea.smem %s0, 6
  %s13 = sld [smem:[%s12]]
  %s14 = scalar_lea.smem %s0, 7
  %s15 = sld [smem:[%s14]]
  %s16 = scalar_lea.smem %s0, 8
  %s17 = sld [smem:[%s16]]
  %s18 = scalar_lea.smem %s0, 9
  %s19 = sld [smem:[%s18]]
  %s20 = scalar_lea.smem %s0, 10
  %s21 = sld [smem:[%s20]]
  %s22 = scalar_lea.smem %s0, 11
  %s23 = sld [smem:[%s22]]
  %s24 = scalar_lea.smem %s0, 12
  %s25 = sld [smem:[%s24]]
  %s26 = scalar_lea.smem %s0, 13
  %s27 = sld [smem:[%s26]]
  %s28 = scalar_lea.smem %s0, 14
  %s29 = sld [smem:[%s28]]
  %s30 = scalar_lea.smem %s0, 15
  %s31 = sld [smem:[%s30]]
  %s32 = scalar_lea.smem %s0, 16
  %s33 = sld [smem:[%s32]]
  %s34 = scalar_lea.smem %s0, 17
  %s35 = sld [smem:[%s34]]
  %s36 = scalar_lea.smem %s0, 18
  %s37 = sld [smem:[%s36]]
  %s38 = scalar_lea.smem %s0, 19
  %s39 = sld [smem:[%s38]]
  %s40 = scalar_lea.smem %s0, 20
  %s41 = sld [smem:[%s40]]
  %s42 = scalar_lea.smem %s0, 21
  %s43 = sld [smem:[%s42]]
  %s44 = scalar_lea.smem %s0, 22
  %s45 = sld [smem:[%s44]]
  %s46 = scalar_lea.smem %s0, 23
  %s47 = sld [smem:[%s46]]
  %s48 = scalar_lea.smem %s0, 24
  %s49 = sld [smem:[%s48]]
  %s50 = scalar_lea.smem %s0, 25
  %s51 = sld [smem:[%s50]]
  %s52 = scalar_lea.smem %s0, 26
  %s53 = sld [smem:[%s52]]
  %s54 = scalar_lea.smem %s0, 27
  %s55 = sld [smem:[%s54]]
  %s56 = scalar_lea.smem %s0, 28
  %s57 = sld [smem:[%s56]]
  %s58 = scalar_lea.smem %s0, 29
  %s59 = sld [smem:[%s58]]
  %s60 = sld [smem:[#allocation0]]
  $region198: #{tinycar_combo_lstm.1} parent=0
    _
  %s62 = ssub.s32 1, %s60
  %s63 = scalar_select 0, %s62, %s60
  $region1: #{tinycar_combo_lstm.1} parent=0
    #allocation2 [shape = 'u8[65536]{0}', space=vmem, size = 0x10000, scoped, tag = 'input window, operand 1, single buffered']
    #allocation3 [shape = 's32[1]{0}', space=sflag, size = 0x4, scoped, tag = 'scoped memory for tinycar_combo_lstm.1']
    #allocation4 [shape = 'u8[512]{0}', space=vmem, size = 0x400, scoped, tag = 'input window, operand 2, single buffered']
    #allocation5 [shape = 's32[1]{0}', space=sflag, size = 0x4, scoped, tag = 'scoped memory for tinycar_combo_lstm.1']
    #allocation6 [shape = 'u8[512]{0}', space=vmem, size = 0x400, scoped, tag = 'input window, operand 4, single buffered']
    #allocation7 [shape = 'u8[512]{0}', space=vmem, size = 0x400, scoped, tag = 'input window, operand 7, single buffered']
    #allocation8 [shape = 's32[1]{0}', space=sflag, size = 0x4, scoped, tag = 'scoped memory for tinycar_combo_lstm.1']
    #allocation9 [shape = 'u8[36864]{0}', space=vmem, size = 0x9000, scoped, tag = 'input window, operand 8, single buffered']
    #allocation10 [shape = 'u8[512]{0}', space=vmem, size = 0x400, scoped, tag = 'input window, operand 10, single buffered']
    #allocation11 [shape = 's32[1]{0}', space=sflag, size = 0x4, scoped, tag = 'scoped memory for tinycar_combo_lstm.1']
    #allocation12 [shape = 'u8[65536]{0}', space=vmem, size = 0x10000, scoped, tag = 'input window, operand 12, single buffered']
    #allocation13 [shape = 'u8[512]{0}', space=vmem, size = 0x400, scoped, tag = 'input window, operand 13, single buffered']
    #allocation14 [shape = 's32[1]{0}', space=sflag, size = 0x4, scoped, tag = 'scoped memory for tinycar_combo_lstm.1']
    #allocation15 [shape = 'u8[1024]{0}', space=vmem, size = 0x400, scoped, tag = 'input window, operand 18, single buffered']
    #allocation16 [shape = 'u8[3072]{0}', space=vmem, size = 0xc00, scoped, tag = 'input window, operand 20, single buffered']
    #allocation17 [shape = 's32[1]{0}', space=sflag, size = 0x4, scoped, tag = 'scoped memory for tinycar_combo_lstm.1']
    #allocation18 [shape = 'u8[131072]{0}', space=vmem, size = 0x20000, scoped, tag = 'input window, operand 21, single buffered']
    #allocation19 [shape = 'u8[512]{0}', space=vmem, size = 0x400, scoped, tag = 'input window, operand 22, single buffered']
    #allocation20 [shape = 's32[1]{0}', space=sflag, size = 0x4, scoped, tag = 'scoped memory for tinycar_combo_lstm.1']
    #allocation21 [shape = 'u8[65536]{0}', space=vmem, size = 0x10000, scoped, tag = 'input window, operand 23, single buffered']
    #allocation22 [shape = 'u8[512]{0}', space=vmem, size = 0x400, scoped, tag = 'input window, operand 24, single buffered']
    #allocation23 [shape = 's32[1]{0}', space=sflag, size = 0x4, scoped, tag = 'scoped memory for tinycar_combo_lstm.1']
    #allocation24 [shape = 'u8[65536]{0}', space=vmem, size = 0x10000, scoped, tag = 'input window, operand 25, single buffered']
    #allocation25 [shape = 'u8[512]{0}', space=vmem, size = 0x400, scoped, tag = 'input window, operand 26, single buffered']
    #allocation26 [shape = 's32[1]{0}', space=sflag, size = 0x4, scoped, tag = 'scoped memory for tinycar_combo_lstm.1']
    #allocation27 [shape = 'u8[65536]{0}', space=vmem, size = 0x10000, scoped, tag = 'input window, operand 27, single buffered']
    #allocation28 [shape = 'u8[512]{0}', space=vmem, size = 0x400, scoped, tag = 'input window, operand 28, single buffered']
    #allocation29 [shape = 's32[1]{0}', space=sflag, size = 0x4, scoped, tag = 'scoped memory for tinycar_combo_lstm.1']
    %64 = vsyncpa [#allocation3], 0
    %65 = vsyncpa [#allocation5], 0
    %66 = vsyncpa [#allocation8], 0
    %67 = vsyncpa [#allocation11], 0
    %68 = vsyncpa [#allocation14], 0
    %69 = vsyncpa [#allocation17], 0
    %70 = vsyncpa [#allocation20], 0
    %71 = vsyncpa [#allocation23], 0
    %72 = vsyncpa [#allocation26], 0
    %73 = vsyncpa [#allocation29], 0
    // Predicated region
    $region2: #{tinycar_combo_lstm.1} parent=1 // pred_check
      _
    $region3: #{tinycar_combo_lstm.1} parent=1 // pred_check_branch
      %75 = sbr.rel (0) target = $region5
    $region4: #{tinycar_combo_lstm.1} parent=1 // pred_region
      _
    $region5: #{tinycar_combo_lstm.1} parent=1 // pred_fallthru
      _
    // Predicated region
    $region6: #{tinycar_combo_lstm.1} parent=1 // pred_check
      _
    $region7: #{tinycar_combo_lstm.1} parent=1 // pred_check_branch
      %77 = sbr.rel (0) target = $region9
    $region8: #{tinycar_combo_lstm.1} parent=1 // pred_region
      %s79 = ssub.s32 2048, 2048
      %80 = vsyncadd [#allocation3], %s79
      %s81 = sshll.u32 [#allocation2], 4
      %s82 = int_to_ptr.vmem [resolvable:$true] %s81
      %87 = dma.hbm_to_vmem [thread:$0]  %s3, 2048, %s82, [#allocation3], 128, 128, 8
    $region9: #{tinycar_combo_lstm.1} parent=1 // pred_fallthru
      _
    // Predicated region
    $region10: #{tinycar_combo_lstm.1} parent=1 // pred_check
      _
    $region11: #{tinycar_combo_lstm.1} parent=1 // pred_check_branch
      %89 = sbr.rel (0) target = $region13
    $region12: #{tinycar_combo_lstm.1} parent=1 // pred_region
      %s91 = ssub.s32 16, 16
      %92 = vsyncadd [#allocation5], %s91
      %s94 = sshll.u32 [#allocation4], 4
      %s95 = int_to_ptr.vmem [resolvable:$true] %s94
      %97 = dma.hbm_to_vmem [thread:$0]  %s5, 16, %s95, [#allocation5]
    $region13: #{tinycar_combo_lstm.1} parent=1 // pred_fallthru
      _
    // Predicated region
    $region14: #{tinycar_combo_lstm.1} parent=1 // pred_check
      _
    $region15: #{tinycar_combo_lstm.1} parent=1 // pred_check_branch
      %99 = sbr.rel (0) target = $region17
    $region16: #{tinycar_combo_lstm.1} parent=1 // pred_region
      _
    $region17: #{tinycar_combo_lstm.1} parent=1 // pred_fallthru
      _
    // Predicated region
    $region18: #{tinycar_combo_lstm.1} parent=1 // pred_check
      _
    $region19: #{tinycar_combo_lstm.1} parent=1 // pred_check_branch
      %101 = sbr.rel (0) target = $region21
    $region20: #{tinycar_combo_lstm.1} parent=1 // pred_region
      %s103 = ssub.s32 16, 16
      %104 = vsyncadd [#allocation5], %s103
      %s106 = sshll.u32 [#allocation6], 4
      %s107 = int_to_ptr.vmem [resolvable:$true] %s106
      %109 = dma.hbm_to_vmem [thread:$0]  %s9, 16, %s107, [#allocation5]
    $region21: #{tinycar_combo_lstm.1} parent=1 // pred_fallthru
      _
    // Predicated region
    $region22: #{tinycar_combo_lstm.1} parent=1 // pred_check
      _
    $region23: #{tinycar_combo_lstm.1} parent=1 // pred_check_branch
      %111 = sbr.rel (0) target = $region25
    $region24: #{tinycar_combo_lstm.1} parent=1 // pred_region
      _
    $region25: #{tinycar_combo_lstm.1} parent=1 // pred_fallthru
      _
    // Predicated region
    $region26: #{tinycar_combo_lstm.1} parent=1 // pred_check
      _
    $region27: #{tinycar_combo_lstm.1} parent=1 // pred_check_branch
      %113 = sbr.rel (0) target = $region29
    $region28: #{tinycar_combo_lstm.1} parent=1 // pred_region
      _
    $region29: #{tinycar_combo_lstm.1} parent=1 // pred_fallthru
      _
    // Predicated region
    $region30: #{tinycar_combo_lstm.1} parent=1 // pred_check
      _
    $region31: #{tinycar_combo_lstm.1} parent=1 // pred_check_branch
      %115 = sbr.rel (0) target = $region33
    $region32: #{tinycar_combo_lstm.1} parent=1 // pred_region
      %s117 = ssub.s32 16, 16
      %118 = vsyncadd [#allocation8], %s117
      %s120 = sshll.u32 [#allocation7], 4
      %s121 = int_to_ptr.vmem [resolvable:$true] %s120
      %123 = dma.hbm_to_vmem [thread:$0]  %s15, 16, %s121, [#allocation8]
    $region33: #{tinycar_combo_lstm.1} parent=1 // pred_fallthru
      _
    // Predicated region
    $region34: #{tinycar_combo_lstm.1} parent=1 // pred_check
      _
    $region35: #{tinycar_combo_lstm.1} parent=1 // pred_check_branch
      %125 = sbr.rel (0) target = $region37
    $region36: #{tinycar_combo_lstm.1} parent=1 // pred_region
      %s127 = ssub.s32 1152, 1152
      %128 = vsyncadd [#allocation8], %s127
      %s129 = sshll.u32 [#allocation9], 4
      %s130 = int_to_ptr.vmem [resolvable:$true] %s129
      %135 = dma.hbm_to_vmem [thread:$0]  %s17, 1152, %s130, [#allocation8], 128, 128, 8
    $region37: #{tinycar_combo_lstm.1} parent=1 // pred_fallthru
      _
    // Predicated region
    $region38: #{tinycar_combo_lstm.1} parent=1 // pred_check
      _
    $region39: #{tinycar_combo_lstm.1} parent=1 // pred_check_branch
      %137 = sbr.rel (0) target = $region41
    $region40: #{tinycar_combo_lstm.1} parent=1 // pred_region
      _
    $region41: #{tinycar_combo_lstm.1} parent=1 // pred_fallthru
      _
    // Predicated region
    $region42: #{tinycar_combo_lstm.1} parent=1 // pred_check
      _
    $region43: #{tinycar_combo_lstm.1} parent=1 // pred_check_branch
      %139 = sbr.rel (0) target = $region45
    $region44: #{tinycar_combo_lstm.1} parent=1 // pred_region
      %s141 = ssub.s32 16, 16
      %142 = vsyncadd [#allocation11], %s141
      %s144 = sshll.u32 [#allocation10], 4
      %s145 = int_to_ptr.vmem [resolvable:$true] %s144
      %147 = dma.hbm_to_vmem [thread:$0]  %s21, 16, %s145, [#allocation11]
    $region45: #{tinycar_combo_lstm.1} parent=1 // pred_fallthru
      _
    // Predicated region
    $region46: #{tinycar_combo_lstm.1} parent=1 // pred_check
      _
    $region47: #{tinycar_combo_lstm.1} parent=1 // pred_check_branch
      %149 = sbr.rel (0) target = $region49
    $region48: #{tinycar_combo_lstm.1} parent=1 // pred_region
      _
    $region49: #{tinycar_combo_lstm.1} parent=1 // pred_fallthru
      _
    // Predicated region
    $region50: #{tinycar_combo_lstm.1} parent=1 // pred_check
      _
    $region51: #{tinycar_combo_lstm.1} parent=1 // pred_check_branch
      %151 = sbr.rel (0) target = $region53
    $region52: #{tinycar_combo_lstm.1} parent=1 // pred_region
      %s153 = ssub.s32 2048, 2048
      %154 = vsyncadd [#allocation11], %s153
      %s155 = sshll.u32 [#allocation12], 4
      %s156 = int_to_ptr.vmem [resolvable:$true] %s155
      %161 = dma.hbm_to_vmem [thread:$0]  %s25, 2048, %s156, [#allocation11], 128, 128, 8
    $region53: #{tinycar_combo_lstm.1} parent=1 // pred_fallthru
      _
    // Predicated region
    $region54: #{tinycar_combo_lstm.1} parent=1 // pred_check
      _
    $region55: #{tinycar_combo_lstm.1} parent=1 // pred_check_branch
      %163 = sbr.rel (0) target = $region57
    $region56: #{tinycar_combo_lstm.1} parent=1 // pred_region
      %s165 = ssub.s32 16, 16
      %166 = vsyncadd [#allocation14], %s165
      %s168 = sshll.u32 [#allocation13], 4
      %s169 = int_to_ptr.vmem [resolvable:$true] %s168
      %171 = dma.hbm_to_vmem [thread:$0]  %s27, 16, %s169, [#allocation14]
    $region57: #{tinycar_combo_lstm.1} parent=1 // pred_fallthru
      _
    // Predicated region
    $region58: #{tinycar_combo_lstm.1} parent=1 // pred_check
      _
    $region59: #{tinycar_combo_lstm.1} parent=1 // pred_check_branch
      %173 = sbr.rel (0) target = $region61
    $region60: #{tinycar_combo_lstm.1} parent=1 // pred_region
      _
    $region61: #{tinycar_combo_lstm.1} parent=1 // pred_fallthru
      _
    // Predicated region
    $region62: #{tinycar_combo_lstm.1} parent=1 // pred_check
      _
    $region63: #{tinycar_combo_lstm.1} parent=1 // pred_check_branch
      %175 = sbr.rel (0) target = $region65
    $region64: #{tinycar_combo_lstm.1} parent=1 // pred_region
      _
    $region65: #{tinycar_combo_lstm.1} parent=1 // pred_fallthru
      _
    // Predicated region
    $region66: #{tinycar_combo_lstm.1} parent=1 // pred_check
      _
    $region67: #{tinycar_combo_lstm.1} parent=1 // pred_check_branch
      %177 = sbr.rel (0) target = $region69
    $region68: #{tinycar_combo_lstm.1} parent=1 // pred_region
      _
    $region69: #{tinycar_combo_lstm.1} parent=1 // pred_fallthru
      _
    // Predicated region
    $region70: #{tinycar_combo_lstm.1} parent=1 // pred_check
      _
    $region71: #{tinycar_combo_lstm.1} parent=1 // pred_check_branch
      %179 = sbr.rel (0) target = $region73
    $region72: #{tinycar_combo_lstm.1} parent=1 // pred_region
      _
    $region73: #{tinycar_combo_lstm.1} parent=1 // pred_fallthru
      _
    // Predicated region
    $region74: #{tinycar_combo_lstm.1} parent=1 // pred_check
      _
    $region75: #{tinycar_combo_lstm.1} parent=1 // pred_check_branch
      %181 = sbr.rel (0) target = $region77
    $region76: #{tinycar_combo_lstm.1} parent=1 // pred_region
      %s183 = ssub.s32 32, 32
      %184 = vsyncadd [#allocation14], %s183
      %s186 = sshll.u32 [#allocation15], 4
      %s187 = int_to_ptr.vmem [resolvable:$true] %s186
      %189 = dma.hbm_to_vmem [thread:$0]  %s37, 32, %s187, [#allocation14]
    $region77: #{tinycar_combo_lstm.1} parent=1 // pred_fallthru
      _
    // Predicated region
    $region78: #{tinycar_combo_lstm.1} parent=1 // pred_check
      _
    $region79: #{tinycar_combo_lstm.1} parent=1 // pred_check_branch
      %191 = sbr.rel (0) target = $region81
    $region80: #{tinycar_combo_lstm.1} parent=1 // pred_region
      _
    $region81: #{tinycar_combo_lstm.1} parent=1 // pred_fallthru
      _
    // Predicated region
    $region82: #{tinycar_combo_lstm.1} parent=1 // pred_check
      _
    $region83: #{tinycar_combo_lstm.1} parent=1 // pred_check_branch
      %193 = sbr.rel (0) target = $region85
    $region84: #{tinycar_combo_lstm.1} parent=1 // pred_region
      %s195 = ssub.s32 96, 96
      %196 = vsyncadd [#allocation17], %s195
      %s198 = sshll.u32 [#allocation16], 4
      %s199 = int_to_ptr.vmem [resolvable:$true] %s198
      %201 = dma.hbm_to_vmem [thread:$0]  %s41, 96, %s199, [#allocation17]
    $region85: #{tinycar_combo_lstm.1} parent=1 // pred_fallthru
      _
    // Predicated region
    $region86: #{tinycar_combo_lstm.1} parent=1 // pred_check
      _
    $region87: #{tinycar_combo_lstm.1} parent=1 // pred_check_branch
      %203 = sbr.rel (0) target = $region89
    $region88: #{tinycar_combo_lstm.1} parent=1 // pred_region
      %s205 = ssub.s32 4096, 4096
      %206 = vsyncadd [#allocation17], %s205
      %s207 = sshll.u32 [#allocation18], 4
      %s208 = int_to_ptr.vmem [resolvable:$true] %s207
      %213 = dma.hbm_to_vmem [thread:$0]  %s43, 4096, %s208, [#allocation17], 128, 128, 8
    $region89: #{tinycar_combo_lstm.1} parent=1 // pred_fallthru
      _
    // Predicated region
    $region90: #{tinycar_combo_lstm.1} parent=1 // pred_check
      _
    $region91: #{tinycar_combo_lstm.1} parent=1 // pred_check_branch
      %215 = sbr.rel (0) target = $region93
    $region92: #{tinycar_combo_lstm.1} parent=1 // pred_region
      %s217 = ssub.s32 16, 16
      %218 = vsyncadd [#allocation20], %s217
      %s220 = sshll.u32 [#allocation19], 4
      %s221 = int_to_ptr.vmem [resolvable:$true] %s220
      %223 = dma.hbm_to_vmem [thread:$0]  %s45, 16, %s221, [#allocation20]
    $region93: #{tinycar_combo_lstm.1} parent=1 // pred_fallthru
      _
    // Predicated region
    $region94: #{tinycar_combo_lstm.1} parent=1 // pred_check
      _
    $region95: #{tinycar_combo_lstm.1} parent=1 // pred_check_branch
      %225 = sbr.rel (0) target = $region97
    $region96: #{tinycar_combo_lstm.1} parent=1 // pred_region
      %s227 = ssub.s32 2048, 2048
      %228 = vsyncadd [#allocation20], %s227
      %s229 = sshll.u32 [#allocation21], 4
      %s230 = int_to_ptr.vmem [resolvable:$true] %s229
      %235 = dma.hbm_to_vmem [thread:$0]  %s47, 2048, %s230, [#allocation20], 128, 128, 8
    $region97: #{tinycar_combo_lstm.1} parent=1 // pred_fallthru
      _
    // Predicated region
    $region98: #{tinycar_combo_lstm.1} parent=1 // pred_check
      _
    $region99: #{tinycar_combo_lstm.1} parent=1 // pred_check_branch
      %237 = sbr.rel (0) target = $region101
    $region100: #{tinycar_combo_lstm.1} parent=1 // pred_region
      %s239 = ssub.s32 16, 16
      %240 = vsyncadd [#allocation23], %s239
      %s242 = sshll.u32 [#allocation22], 4
      %s243 = int_to_ptr.vmem [resolvable:$true] %s242
      %245 = dma.hbm_to_vmem [thread:$0]  %s49, 16, %s243, [#allocation23]
    $region101: #{tinycar_combo_lstm.1} parent=1 // pred_fallthru
      _
    // Predicated region
    $region102: #{tinycar_combo_lstm.1} parent=1 // pred_check
      _
    $region103: #{tinycar_combo_lstm.1} parent=1 // pred_check_branch
      %247 = sbr.rel (0) target = $region105
    $region104: #{tinycar_combo_lstm.1} parent=1 // pred_region
      %s249 = ssub.s32 2048, 2048
      %250 = vsyncadd [#allocation23], %s249
      %s251 = sshll.u32 [#allocation24], 4
      %s252 = int_to_ptr.vmem [resolvable:$true] %s251
      %257 = dma.hbm_to_vmem [thread:$0]  %s51, 2048, %s252, [#allocation23], 128, 128, 8
    $region105: #{tinycar_combo_lstm.1} parent=1 // pred_fallthru
      _
    // Predicated region
    $region106: #{tinycar_combo_lstm.1} parent=1 // pred_check
      _
    $region107: #{tinycar_combo_lstm.1} parent=1 // pred_check_branch
      %259 = sbr.rel (0) target = $region109
    $region108: #{tinycar_combo_lstm.1} parent=1 // pred_region
      %s261 = ssub.s32 16, 16
      %262 = vsyncadd [#allocation26], %s261
      %s264 = sshll.u32 [#allocation25], 4
      %s265 = int_to_ptr.vmem [resolvable:$true] %s264
      %267 = dma.hbm_to_vmem [thread:$0]  %s53, 16, %s265, [#allocation26]
    $region109: #{tinycar_combo_lstm.1} parent=1 // pred_fallthru
      _
    // Predicated region
    $region110: #{tinycar_combo_lstm.1} parent=1 // pred_check
      _
    $region111: #{tinycar_combo_lstm.1} parent=1 // pred_check_branch
      %269 = sbr.rel (0) target = $region113
    $region112: #{tinycar_combo_lstm.1} parent=1 // pred_region
      %s271 = ssub.s32 2048, 2048
      %272 = vsyncadd [#allocation26], %s271
      %s273 = sshll.u32 [#allocation27], 4
      %s274 = int_to_ptr.vmem [resolvable:$true] %s273
      %279 = dma.hbm_to_vmem [thread:$0]  %s55, 2048, %s274, [#allocation26], 128, 128, 8
    $region113: #{tinycar_combo_lstm.1} parent=1 // pred_fallthru
      _
    // Predicated region
    $region114: #{tinycar_combo_lstm.1} parent=1 // pred_check
      _
    $region115: #{tinycar_combo_lstm.1} parent=1 // pred_check_branch
      %281 = sbr.rel (0) target = $region117
    $region116: #{tinycar_combo_lstm.1} parent=1 // pred_region
      %s283 = ssub.s32 16, 16
      %284 = vsyncadd [#allocation29], %s283
      %s286 = sshll.u32 [#allocation28], 4
      %s287 = int_to_ptr.vmem [resolvable:$true] %s286
      %289 = dma.hbm_to_vmem [thread:$0]  %s57, 16, %s287, [#allocation29]
    $region117: #{tinycar_combo_lstm.1} parent=1 // pred_fallthru
      _
    // Predicated region
    $region118: #{tinycar_combo_lstm.1} parent=1 // pred_check
      _
    $region119: #{tinycar_combo_lstm.1} parent=1 // pred_check_branch
      %291 = sbr.rel (0) target = $region121
    $region120: #{tinycar_combo_lstm.1} parent=1 // pred_region
      %292 = dma.done [#allocation3], 2048
    $region121: #{tinycar_combo_lstm.1} parent=1 // pred_fallthru
      _
    // Predicated region
    $region122: #{tinycar_combo_lstm.1} parent=1 // pred_check
      _
    $region123: #{tinycar_combo_lstm.1} parent=1 // pred_check_branch
      %294 = sbr.rel (0) target = $region125
    $region124: #{tinycar_combo_lstm.1} parent=1 // pred_region
      %295 = dma.done [#allocation5], 16
    $region125: #{tinycar_combo_lstm.1} parent=1 // pred_fallthru
      _
    // Predicated region
    $region126: #{tinycar_combo_lstm.1} parent=1 // pred_check
      _
    $region127: #{tinycar_combo_lstm.1} parent=1 // pred_check_branch
      %297 = sbr.rel (0) target = $region129
    $region128: #{tinycar_combo_lstm.1} parent=1 // pred_region
      %298 = dma.done [#allocation5], 16
    $region129: #{tinycar_combo_lstm.1} parent=1 // pred_fallthru
      _
    // Predicated region
    $region130: #{tinycar_combo_lstm.1} parent=1 // pred_check
      _
    $region131: #{tinycar_combo_lstm.1} parent=1 // pred_check_branch
      %300 = sbr.rel (0) target = $region133
    $region132: #{tinycar_combo_lstm.1} parent=1 // pred_region
      %301 = dma.done [#allocation8], 16
    $region133: #{tinycar_combo_lstm.1} parent=1 // pred_fallthru
      _
    // Predicated region
    $region134: #{tinycar_combo_lstm.1} parent=1 // pred_check
      _
    $region135: #{tinycar_combo_lstm.1} parent=1 // pred_check_branch
      %303 = sbr.rel (0) target = $region137
    $region136: #{tinycar_combo_lstm.1} parent=1 // pred_region
      %304 = dma.done [#allocation8], 1152
    $region137: #{tinycar_combo_lstm.1} parent=1 // pred_fallthru
      _
    // Predicated region
    $region138: #{tinycar_combo_lstm.1} parent=1 // pred_check
      _
    $region139: #{tinycar_combo_lstm.1} parent=1 // pred_check_branch
      %306 = sbr.rel (0) target = $region141
    $region140: #{tinycar_combo_lstm.1} parent=1 // pred_region
      %307 = dma.done [#allocation11], 16
    $region141: #{tinycar_combo_lstm.1} parent=1 // pred_fallthru
      _
    // Predicated region
    $region142: #{tinycar_combo_lstm.1} parent=1 // pred_check
      _
    $region143: #{tinycar_combo_lstm.1} parent=1 // pred_check_branch
      %309 = sbr.rel (0) target = $region145
    $region144: #{tinycar_combo_lstm.1} parent=1 // pred_region
      %310 = dma.done [#allocation11], 2048
    $region145: #{tinycar_combo_lstm.1} parent=1 // pred_fallthru
      _
    // Predicated region
    $region146: #{tinycar_combo_lstm.1} parent=1 // pred_check
      _
    $region147: #{tinycar_combo_lstm.1} parent=1 // pred_check_branch
      %312 = sbr.rel (0) target = $region149
    $region148: #{tinycar_combo_lstm.1} parent=1 // pred_region
      %313 = dma.done [#allocation14], 16
    $region149: #{tinycar_combo_lstm.1} parent=1 // pred_fallthru
      _
    // Predicated region
    $region150: #{tinycar_combo_lstm.1} parent=1 // pred_check
      _
    $region151: #{tinycar_combo_lstm.1} parent=1 // pred_check_branch
      %315 = sbr.rel (0) target = $region153
    $region152: #{tinycar_combo_lstm.1} parent=1 // pred_region
      %316 = dma.done [#allocation14], 32
    $region153: #{tinycar_combo_lstm.1} parent=1 // pred_fallthru
      _
    // Predicated region
    $region154: #{tinycar_combo_lstm.1} parent=1 // pred_check
      _
    $region155: #{tinycar_combo_lstm.1} parent=1 // pred_check_branch
      %318 = sbr.rel (0) target = $region157
    $region156: #{tinycar_combo_lstm.1} parent=1 // pred_region
      %319 = dma.done [#allocation17], 96
    $region157: #{tinycar_combo_lstm.1} parent=1 // pred_fallthru
      _
    // Predicated region
    $region158: #{tinycar_combo_lstm.1} parent=1 // pred_check
      _
    $region159: #{tinycar_combo_lstm.1} parent=1 // pred_check_branch
      %321 = sbr.rel (0) target = $region161
    $region160: #{tinycar_combo_lstm.1} parent=1 // pred_region
      %322 = dma.done [#allocation17], 4096
    $region161: #{tinycar_combo_lstm.1} parent=1 // pred_fallthru
      _
    // Predicated region
    $region162: #{tinycar_combo_lstm.1} parent=1 // pred_check
      _
    $region163: #{tinycar_combo_lstm.1} parent=1 // pred_check_branch
      %324 = sbr.rel (0) target = $region165
    $region164: #{tinycar_combo_lstm.1} parent=1 // pred_region
      %325 = dma.done [#allocation20], 16
    $region165: #{tinycar_combo_lstm.1} parent=1 // pred_fallthru
      _
    // Predicated region
    $region166: #{tinycar_combo_lstm.1} parent=1 // pred_check
      _
    $region167: #{tinycar_combo_lstm.1} parent=1 // pred_check_branch
      %327 = sbr.rel (0) target = $region169
    $region168: #{tinycar_combo_lstm.1} parent=1 // pred_region
      %328 = dma.done [#allocation20], 2048
    $region169: #{tinycar_combo_lstm.1} parent=1 // pred_fallthru
      _
    // Predicated region
    $region170: #{tinycar_combo_lstm.1} parent=1 // pred_check
      _
    $region171: #{tinycar_combo_lstm.1} parent=1 // pred_check_branch
      %330 = sbr.rel (0) target = $region173
    $region172: #{tinycar_combo_lstm.1} parent=1 // pred_region
      %331 = dma.done [#allocation23], 16
    $region173: #{tinycar_combo_lstm.1} parent=1 // pred_fallthru
      _
    // Predicated region
    $region174: #{tinycar_combo_lstm.1} parent=1 // pred_check
      _
    $region175: #{tinycar_combo_lstm.1} parent=1 // pred_check_branch
      %333 = sbr.rel (0) target = $region177
    $region176: #{tinycar_combo_lstm.1} parent=1 // pred_region
      %334 = dma.done [#allocation23], 2048
    $region177: #{tinycar_combo_lstm.1} parent=1 // pred_fallthru
      _
    // Predicated region
    $region178: #{tinycar_combo_lstm.1} parent=1 // pred_check
      _
    $region179: #{tinycar_combo_lstm.1} parent=1 // pred_check_branch
      %336 = sbr.rel (0) target = $region181
    $region180: #{tinycar_combo_lstm.1} parent=1 // pred_region
      %337 = dma.done [#allocation26], 16
    $region181: #{tinycar_combo_lstm.1} parent=1 // pred_fallthru
      _
    // Predicated region
    $region182: #{tinycar_combo_lstm.1} parent=1 // pred_check
      _
    $region183: #{tinycar_combo_lstm.1} parent=1 // pred_check_branch
      %339 = sbr.rel (0) target = $region185
    $region184: #{tinycar_combo_lstm.1} parent=1 // pred_region
      %340 = dma.done [#allocation26], 2048
    $region185: #{tinycar_combo_lstm.1} parent=1 // pred_fallthru
      _
    // Predicated region
    $region186: #{tinycar_combo_lstm.1} parent=1 // pred_check
      _
    $region187: #{tinycar_combo_lstm.1} parent=1 // pred_check_branch
      %342 = sbr.rel (0) target = $region189
    $region188: #{tinycar_combo_lstm.1} parent=1 // pred_region
      %343 = dma.done [#allocation29], 16
    $region189: #{tinycar_combo_lstm.1} parent=1 // pred_fallthru
      _
    %v344 = vld [vmem:[%s1] sm:$0xff]
    %v345 = vld [vmem:[%s1 + $0x8] sm:$0xff]
    %v346 = vld [vmem:[%s1 + $0x10] sm:$0xff]
    %v347 = vld [vmem:[%s1 + $0x18] sm:$0xff]
    %v348 = vld [vmem:[%s1 + $0x20] sm:$0xff]
    %v349 = vld [vmem:[%s1 + $0x28] sm:$0xff]
    %v350 = vld [vmem:[%s1 + $0x30] sm:$0xff]
    %v351 = vld [vmem:[%s1 + $0x38] sm:$0xff]
    %v352 = vld [vmem:[%s1 + $0x40] sm:$0xff]
    %v353 = vld [vmem:[%s1 + $0x48] sm:$0xff]
    %v354 = vld [vmem:[%s1 + $0x50] sm:$0xff]
    %v355 = vld [vmem:[%s1 + $0x58] sm:$0xff]
    %v356 = vld [vmem:[%s1 + $0x60] sm:$0xff]
    %v357 = vld [vmem:[%s1 + $0x68] sm:$0xff]
    %v358 = vld [vmem:[%s1 + $0x70] sm:$0xff]
    %v359 = vld [vmem:[%s1 + $0x78] sm:$0xff]
    %v360 = vld [vmem:[#allocation2] sm:$0xff]
    %v361 = vld [vmem:[#allocation2 + $0x8] sm:$0xff]
    %v362 = vld [vmem:[#allocation2 + $0x10] sm:$0xff]
    %v363 = vld [vmem:[#allocation2 + $0x18] sm:$0xff]
    %v364 = vld [vmem:[#allocation2 + $0x20] sm:$0xff]
    %v365 = vld [vmem:[#allocation2 + $0x28] sm:$0xff]
    %v366 = vld [vmem:[#allocation2 + $0x30] sm:$0xff]
    %v367 = vld [vmem:[#allocation2 + $0x38] sm:$0xff]
    %v368 = vld [vmem:[#allocation2 + $0x40] sm:$0xff]
    %v369 = vld [vmem:[#allocation2 + $0x48] sm:$0xff]
    %v370 = vld [vmem:[#allocation2 + $0x50] sm:$0xff]
    %v371 = vld [vmem:[#allocation2 + $0x58] sm:$0xff]
    %v372 = vld [vmem:[#allocation2 + $0x60] sm:$0xff]
    %v373 = vld [vmem:[#allocation2 + $0x68] sm:$0xff]
    %v374 = vld [vmem:[#allocation2 + $0x70] sm:$0xff]
    %v375 = vld [vmem:[#allocation2 + $0x78] sm:$0xff]
    %v376 = vld [vmem:[#allocation4] sm:$0x1]
    %v378 = vlaneseq
    %v379 = vshrl.u32 %v378, 7
    %v380 = vsub.s32 0, %v379
    %v381 = vrot.slane %v376, %v380
    %383 = vmatprep.subr.mxu0 0.0
    %384 = vmatpush1.msra.mxu0 %v375
    %385 = vmatprep.subr.mxu0 0.0
    %386 = vmatpush1.msra.mxu0 %v374
    %387 = vmatprep.subr.mxu0 0.0
    %388 = vmatpush1.msra.mxu0 %v373
    %389 = vmatprep.subr.mxu0 0.0
    %390 = vmatpush1.msra.mxu0 %v372
    %391 = vmatprep.subr.mxu0 0.0
    %392 = vmatpush1.msra.mxu0 %v371
    %393 = vmatprep.subr.mxu0 0.0
    %394 = vmatpush1.msra.mxu0 %v370
    %395 = vmatprep.subr.mxu0 0.0
    %396 = vmatpush1.msra.mxu0 %v369
    %397 = vmatprep.subr.mxu0 0.0
    %398 = vmatpush1.msra.mxu0 %v368
    %399 = vmatprep.subr.mxu0 0.0
    %400 = vmatpush1.msra.mxu0 %v367
    %401 = vmatprep.subr.mxu0 0.0
    %402 = vmatpush1.msra.mxu0 %v366
    %403 = vmatprep.subr.mxu0 0.0
    %404 = vmatpush1.msra.mxu0 %v365
    %405 = vmatprep.subr.mxu0 0.0
    %406 = vmatpush1.msra.mxu0 %v364
    %407 = vmatprep.subr.mxu0 0.0
    %408 = vmatpush1.msra.mxu0 %v363
    %409 = vmatprep.subr.mxu0 0.0
    %410 = vmatpush1.msra.mxu0 %v362
    %411 = vmatprep.subr.mxu0 0.0
    %412 = vmatpush1.msra.mxu0 %v361
    %413 = vmatprep.subr.mxu0 0.0
    %414 = vmatpush1.msra.mxu0 %v360
    %415 = vmatprep.subr.mxu0 0.0
    %416 = vmatpush2.msra.mxu0 0.0
    %417 = vmatprep.subr.mxu0 0.0
    %418 = vmatpush2.msra.mxu0 0.0
    %419 = vmatprep.subr.mxu0 0.0
    %420 = vmatpush2.msra.mxu0 0.0
    %421 = vmatprep.subr.mxu0 0.0
    %422 = vmatpush2.msra.mxu0 0.0
    %423 = vmatprep.subr.mxu0 0.0
    %424 = vmatpush2.msra.mxu0 0.0
    %425 = vmatprep.subr.mxu0 0.0
    %426 = vmatpush2.msra.mxu0 0.0
    %427 = vmatprep.subr.mxu0 0.0
    %428 = vmatpush2.msra.mxu0 0.0
    %429 = vmatprep.subr.mxu0 0.0
    %430 = vmatpush2.msra.mxu0 0.0
    %431 = vmatprep.subr.mxu0 0.0
    %432 = vmatpush2.msra.mxu0 0.0
    %433 = vmatprep.subr.mxu0 0.0
    %434 = vmatpush2.msra.mxu0 0.0
    %435 = vmatprep.subr.mxu0 0.0
    %436 = vmatpush2.msra.mxu0 0.0
    %437 = vmatprep.subr.mxu0 0.0
    %438 = vmatpush2.msra.mxu0 0.0
    %439 = vmatprep.subr.mxu0 0.0
    %440 = vmatpush2.msra.mxu0 0.0
    %441 = vmatprep.subr.mxu0 0.0
    %442 = vmatpush2.msra.mxu0 0.0
    %443 = vmatprep.subr.mxu0 0.0
    %444 = vmatpush2.msra.mxu0 0.0
    %445 = vmatprep.subr.mxu0 0.0
    %446 = vmatpush2.msra.mxu0 0.0
    %447 = vmatprep.mubr.f32.mxu0 0.0
    %448 = vmatmul.mubr.f32.gmra.mxu0 %v344
    %v449 = vpop.f32.mrf.mxu0
    %v450 = vadd.f32 %v381, %v449
    %v451 = vpop.f32.mrf.mxu0
    %452 = vmatprep.mubr.f32.mxu0 0.0
    %453 = vmatmul.mubr.f32.gmra.mxu0 %v345
    %v454 = vpop.f32.mrf.mxu0
    %v455 = vadd.f32 %v381, %v454
    %v456 = vpop.f32.mrf.mxu0
    %457 = vmatprep.mubr.f32.mxu0 0.0
    %458 = vmatmul.mubr.f32.gmra.mxu0 %v346
    %v459 = vpop.f32.mrf.mxu0
    %v460 = vadd.f32 %v381, %v459
    %v461 = vpop.f32.mrf.mxu0
    %462 = vmatprep.mubr.f32.mxu0 0.0
    %463 = vmatmul.mubr.f32.gmra.mxu0 %v347
    %v464 = vpop.f32.mrf.mxu0
    %v465 = vadd.f32 %v381, %v464
    %v466 = vpop.f32.mrf.mxu0
    %467 = vmatprep.mubr.f32.mxu0 0.0
    %468 = vmatmul.mubr.f32.gmra.mxu0 %v348
    %v469 = vpop.f32.mrf.mxu0
    %v470 = vadd.f32 %v381, %v469
    %v471 = vpop.f32.mrf.mxu0
    %472 = vmatprep.mubr.f32.mxu0 0.0
    %473 = vmatmul.mubr.f32.gmra.mxu0 %v349
    %v474 = vpop.f32.mrf.mxu0
    %v475 = vadd.f32 %v381, %v474
    %v476 = vpop.f32.mrf.mxu0
    %477 = vmatprep.mubr.f32.mxu0 0.0
    %478 = vmatmul.mubr.f32.gmra.mxu0 %v350
    %v479 = vpop.f32.mrf.mxu0
    %v480 = vadd.f32 %v381, %v479
    %v481 = vpop.f32.mrf.mxu0
    %482 = vmatprep.mubr.f32.mxu0 0.0
    %483 = vmatmul.mubr.f32.gmra.mxu0 %v351
    %v484 = vpop.f32.mrf.mxu0
    %v485 = vadd.f32 %v381, %v484
    %v486 = vpop.f32.mrf.mxu0
    %487 = vmatprep.mubr.f32.mxu0 0.0
    %488 = vmatmul.mubr.f32.gmra.mxu0 %v352
    %v489 = vpop.f32.mrf.mxu0
    %v490 = vadd.f32 %v381, %v489
    %v491 = vpop.f32.mrf.mxu0
    %492 = vmatprep.mubr.f32.mxu0 0.0
    %493 = vmatmul.mubr.f32.gmra.mxu0 %v353
    %v494 = vpop.f32.mrf.mxu0
    %v495 = vadd.f32 %v381, %v494
    %v496 = vpop.f32.mrf.mxu0
    %497 = vmatprep.mubr.f32.mxu0 0.0
    %498 = vmatmul.mubr.f32.gmra.mxu0 %v354
    %v499 = vpop.f32.mrf.mxu0
    %v500 = vadd.f32 %v381, %v499
    %v501 = vpop.f32.mrf.mxu0
    %502 = vmatprep.mubr.f32.mxu0 0.0
    %503 = vmatmul.mubr.f32.gmra.mxu0 %v355
    %v504 = vpop.f32.mrf.mxu0
    %v505 = vadd.f32 %v381, %v504
    %v506 = vpop.f32.mrf.mxu0
    %507 = vmatprep.mubr.f32.mxu0 0.0
    %508 = vmatmul.mubr.f32.gmra.mxu0 %v356
    %v509 = vpop.f32.mrf.mxu0
    %v510 = vadd.f32 %v381, %v509
    %v511 = vpop.f32.mrf.mxu0
    %512 = vmatprep.mubr.f32.mxu0 0.0
    %513 = vmatmul.mubr.f32.gmra.mxu0 %v357
    %v514 = vpop.f32.mrf.mxu0
    %v515 = vadd.f32 %v381, %v514
    %v516 = vpop.f32.mrf.mxu0
    %517 = vmatprep.mubr.f32.mxu0 0.0
    %518 = vmatmul.mubr.f32.gmra.mxu0 %v358
    %v519 = vpop.f32.mrf.mxu0
    %v520 = vadd.f32 %v381, %v519
    %v521 = vpop.f32.mrf.mxu0
    %522 = vmatprep.mubr.f32.mxu0 0.0
    %523 = vmatmul.mubr.f32.gmra.mxu0 %v359
    %v524 = vpop.f32.mrf.mxu0
    %v525 = vadd.f32 %v381, %v524
    %v526 = vpop.f32.mrf.mxu0
    %527 = vdwg.mxu0
    %v528 = vmax.f32 %v450, 0.0
    %v529 = vmax.f32 %v455, 0.0
    %v530 = vmax.f32 %v460, 0.0
    %v531 = vmax.f32 %v465, 0.0
    %v532 = vmax.f32 %v470, 0.0
    %v533 = vmax.f32 %v475, 0.0
    %v534 = vmax.f32 %v480, 0.0
    %v535 = vmax.f32 %v485, 0.0
    %v536 = vmax.f32 %v490, 0.0
    %v537 = vmax.f32 %v495, 0.0
    %v538 = vmax.f32 %v500, 0.0
    %v539 = vmax.f32 %v505, 0.0
    %v540 = vmax.f32 %v510, 0.0
    %v541 = vmax.f32 %v515, 0.0
    %v542 = vmax.f32 %v520, 0.0
    %v543 = vmax.f32 %v525, 0.0
    %v544 = vld [vmem:[%s7] sm:$0xff]
    %v545 = vld [vmem:[%s7 + $0x8] sm:$0xff]
    %v546 = vld [vmem:[%s7 + $0x10] sm:$0xff]
    %v547 = vld [vmem:[%s7 + $0x18] sm:$0xff]
    %v548 = vld [vmem:[%s7 + $0x20] sm:$0xff]
    %v549 = vld [vmem:[%s7 + $0x28] sm:$0xff]
    %v550 = vld [vmem:[%s7 + $0x30] sm:$0xff]
    %v551 = vld [vmem:[%s7 + $0x38] sm:$0xff]
    %v552 = vld [vmem:[%s7 + $0x40] sm:$0xff]
    %v553 = vld [vmem:[%s7 + $0x48] sm:$0xff]
    %v554 = vld [vmem:[%s7 + $0x50] sm:$0xff]
    %v555 = vld [vmem:[%s7 + $0x58] sm:$0xff]
    %v556 = vld [vmem:[%s7 + $0x60] sm:$0xff]
    %v557 = vld [vmem:[%s7 + $0x68] sm:$0xff]
    %v558 = vld [vmem:[%s7 + $0x70] sm:$0xff]
    %v559 = vld [vmem:[%s7 + $0x78] sm:$0xff]
    %v560 = vld [vmem:[%s7 + $0x80] sm:$0xff]
    %v561 = vld [vmem:[%s7 + $0x88] sm:$0xff]
    %v562 = vld [vmem:[%s7 + $0x90] sm:$0xff]
    %v563 = vld [vmem:[%s7 + $0x98] sm:$0xff]
    %v564 = vld [vmem:[%s7 + $0xa0] sm:$0xff]
    %v565 = vld [vmem:[%s7 + $0xa8] sm:$0xff]
    %v566 = vld [vmem:[%s7 + $0xb0] sm:$0xff]
    %v567 = vld [vmem:[%s7 + $0xb8] sm:$0xff]
    %v568 = vld [vmem:[%s7 + $0xc0] sm:$0xff]
    %v569 = vld [vmem:[%s7 + $0xc8] sm:$0xff]
    %v570 = vld [vmem:[%s7 + $0xd0] sm:$0xff]
    %v571 = vld [vmem:[%s7 + $0xd8] sm:$0xff]
    %v572 = vld [vmem:[%s7 + $0xe0] sm:$0xff]
    %v573 = vld [vmem:[%s7 + $0xe8] sm:$0xff]
    %v574 = vld [vmem:[%s7 + $0xf0] sm:$0xff]
    %v575 = vld [vmem:[%s7 + $0xf8] sm:$0xff]
    %v576 = vld [vmem:[%s7 + $0x100] sm:$0xff]
    %v577 = vld [vmem:[%s7 + $0x108] sm:$0xff]
    %v578 = vld [vmem:[%s7 + $0x110] sm:$0xff]
    %v579 = vld [vmem:[%s7 + $0x118] sm:$0xff]
    %v580 = vld [vmem:[%s7 + $0x120] sm:$0xff]
    %v581 = vld [vmem:[%s7 + $0x128] sm:$0xff]
    %v582 = vld [vmem:[%s7 + $0x130] sm:$0xff]
    %v583 = vld [vmem:[%s7 + $0x138] sm:$0xff]
    %v584 = vld [vmem:[%s7 + $0x140] sm:$0xff]
    %v585 = vld [vmem:[%s7 + $0x148] sm:$0xff]
    %v586 = vld [vmem:[%s7 + $0x150] sm:$0xff]
    %v587 = vld [vmem:[%s7 + $0x158] sm:$0xff]
    %v588 = vld [vmem:[%s7 + $0x160] sm:$0xff]
    %v589 = vld [vmem:[%s7 + $0x168] sm:$0xff]
    %v590 = vld [vmem:[%s7 + $0x170] sm:$0xff]
    %v591 = vld [vmem:[%s7 + $0x178] sm:$0xff]
    %v592 = vld [vmem:[%s7 + $0x180] sm:$0xff]
    %v593 = vld [vmem:[%s7 + $0x188] sm:$0xff]
    %v594 = vld [vmem:[%s7 + $0x190] sm:$0xff]
    %v595 = vld [vmem:[%s7 + $0x198] sm:$0xff]
    %v596 = vld [vmem:[%s7 + $0x1a0] sm:$0xff]
    %v597 = vld [vmem:[%s7 + $0x1a8] sm:$0xff]
    %v598 = vld [vmem:[%s7 + $0x1b0] sm:$0xff]
    %v599 = vld [vmem:[%s7 + $0x1b8] sm:$0xff]
    %v600 = vld [vmem:[%s7 + $0x1c0] sm:$0xff]
    %v601 = vld [vmem:[%s7 + $0x1c8] sm:$0xff]
    %v602 = vld [vmem:[%s7 + $0x1d0] sm:$0xff]
    %v603 = vld [vmem:[%s7 + $0x1d8] sm:$0xff]
    %v604 = vld [vmem:[%s7 + $0x1e0] sm:$0xff]
    %v605 = vld [vmem:[%s7 + $0x1e8] sm:$0xff]
    %v606 = vld [vmem:[%s7 + $0x1f0] sm:$0xff]
    %v607 = vld [vmem:[%s7 + $0x1f8] sm:$0xff]
    %v608 = vld [vmem:[%s7 + $0x200] sm:$0xff]
    %v609 = vld [vmem:[%s7 + $0x208] sm:$0xff]
    %v610 = vld [vmem:[%s7 + $0x210] sm:$0xff]
    %v611 = vld [vmem:[%s7 + $0x218] sm:$0xff]
    %v612 = vld [vmem:[%s7 + $0x220] sm:$0xff]
    %v613 = vld [vmem:[%s7 + $0x228] sm:$0xff]
    %v614 = vld [vmem:[%s7 + $0x230] sm:$0xff]
    %v615 = vld [vmem:[%s7 + $0x238] sm:$0xff]
    %v616 = vld [vmem:[%s7 + $0x240] sm:$0xff]
    %v617 = vld [vmem:[%s7 + $0x248] sm:$0xff]
    %v618 = vld [vmem:[%s7 + $0x250] sm:$0xff]
    %v619 = vld [vmem:[%s7 + $0x258] sm:$0xff]
    %v620 = vld [vmem:[%s7 + $0x260] sm:$0xff]
    %v621 = vld [vmem:[%s7 + $0x268] sm:$0xff]
    %v622 = vld [vmem:[%s7 + $0x270] sm:$0xff]
    %v623 = vld [vmem:[%s7 + $0x278] sm:$0xff]
    %v624 = vld [vmem:[%s7 + $0x280] sm:$0xff]
    %v625 = vld [vmem:[%s7 + $0x288] sm:$0xff]
    %v626 = vld [vmem:[%s7 + $0x290] sm:$0xff]
    %v627 = vld [vmem:[%s7 + $0x298] sm:$0xff]
    %v628 = vld [vmem:[%s7 + $0x2a0] sm:$0xff]
    %v629 = vld [vmem:[%s7 + $0x2a8] sm:$0xff]
    %v630 = vld [vmem:[%s7 + $0x2b0] sm:$0xff]
    %v631 = vld [vmem:[%s7 + $0x2b8] sm:$0xff]
    %v632 = vld [vmem:[%s7 + $0x2c0] sm:$0xff]
    %v633 = vld [vmem:[%s7 + $0x2c8] sm:$0xff]
    %v634 = vld [vmem:[%s7 + $0x2d0] sm:$0xff]
    %v635 = vld [vmem:[%s7 + $0x2d8] sm:$0xff]
    %v636 = vld [vmem:[%s7 + $0x2e0] sm:$0xff]
    %v637 = vld [vmem:[%s7 + $0x2e8] sm:$0xff]
    %v638 = vld [vmem:[%s7 + $0x2f0] sm:$0xff]
    %v639 = vld [vmem:[%s7 + $0x2f8] sm:$0xff]
    %v640 = vld [vmem:[%s7 + $0x300] sm:$0xff]
    %v641 = vld [vmem:[%s7 + $0x308] sm:$0xff]
    %v642 = vld [vmem:[%s7 + $0x310] sm:$0xff]
    %v643 = vld [vmem:[%s7 + $0x318] sm:$0xff]
    %v644 = vld [vmem:[%s7 + $0x320] sm:$0xff]
    %v645 = vld [vmem:[%s7 + $0x328] sm:$0xff]
    %v646 = vld [vmem:[%s7 + $0x330] sm:$0xff]
    %v647 = vld [vmem:[%s7 + $0x338] sm:$0xff]
    %v648 = vld [vmem:[%s7 + $0x340] sm:$0xff]
    %v649 = vld [vmem:[%s7 + $0x348] sm:$0xff]
    %v650 = vld [vmem:[%s7 + $0x350] sm:$0xff]
    %v651 = vld [vmem:[%s7 + $0x358] sm:$0xff]
    %v652 = vld [vmem:[%s7 + $0x360] sm:$0xff]
    %v653 = vld [vmem:[%s7 + $0x368] sm:$0xff]
    %v654 = vld [vmem:[%s7 + $0x370] sm:$0xff]
    %v655 = vld [vmem:[%s7 + $0x378] sm:$0xff]
    %v656 = vld [vmem:[%s7 + $0x380] sm:$0xff]
    %v657 = vld [vmem:[%s7 + $0x388] sm:$0xff]
    %v658 = vld [vmem:[%s7 + $0x390] sm:$0xff]
    %v659 = vld [vmem:[%s7 + $0x398] sm:$0xff]
    %v660 = vld [vmem:[%s7 + $0x3a0] sm:$0xff]
    %v661 = vld [vmem:[%s7 + $0x3a8] sm:$0xff]
    %v662 = vld [vmem:[%s7 + $0x3b0] sm:$0xff]
    %v663 = vld [vmem:[%s7 + $0x3b8] sm:$0xff]
    %v664 = vld [vmem:[%s7 + $0x3c0] sm:$0xff]
    %v665 = vld [vmem:[%s7 + $0x3c8] sm:$0xff]
    %v666 = vld [vmem:[%s7 + $0x3d0] sm:$0xff]
    %v667 = vld [vmem:[%s7 + $0x3d8] sm:$0xff]
    %v668 = vld [vmem:[%s7 + $0x3e0] sm:$0xff]
    %v669 = vld [vmem:[%s7 + $0x3e8] sm:$0xff]
    %v670 = vld [vmem:[%s7 + $0x3f0] sm:$0xff]
    %v671 = vld [vmem:[%s7 + $0x3f8] sm:$0xff]
    %v672 = vld [vmem:[%s7 + $0x400] sm:$0xff]
    %v673 = vld [vmem:[%s7 + $0x408] sm:$0xff]
    %v674 = vld [vmem:[%s7 + $0x410] sm:$0xff]
    %v675 = vld [vmem:[%s7 + $0x418] sm:$0xff]
    %v676 = vld [vmem:[%s7 + $0x420] sm:$0xff]
    %v677 = vld [vmem:[%s7 + $0x428] sm:$0xff]
    %v678 = vld [vmem:[%s7 + $0x430] sm:$0xff]
    %v679 = vld [vmem:[%s7 + $0x438] sm:$0xff]
    %v680 = vld [vmem:[%s7 + $0x440] sm:$0xff]
    %v681 = vld [vmem:[%s7 + $0x448] sm:$0xff]
    %v682 = vld [vmem:[%s7 + $0x450] sm:$0xff]
    %v683 = vld [vmem:[%s7 + $0x458] sm:$0xff]
    %v684 = vld [vmem:[%s7 + $0x460] sm:$0xff]
    %v685 = vld [vmem:[%s7 + $0x468] sm:$0xff]
    %v686 = vld [vmem:[%s7 + $0x470] sm:$0xff]
    %v687 = vld [vmem:[%s7 + $0x478] sm:$0xff]
    %688 = vmatprep.subr.mxu0 %v680
    %689 = vmatpush1.msra.mxu0 %v679
    %690 = vmatprep.subr.mxu0 %v671
    %691 = vmatpush1.msra.mxu0 %v670
    %692 = vmatprep.subr.mxu0 %v662
    %693 = vmatpush1.msra.mxu0 %v661
    %694 = vmatprep.subr.mxu0 %v653
    %695 = vmatpush1.msra.mxu0 %v652
    %696 = vmatprep.subr.mxu0 %v644
    %697 = vmatpush1.msra.mxu0 %v643
    %698 = vmatprep.subr.mxu0 %v635
    %699 = vmatpush1.msra.mxu0 %v634
    %700 = vmatprep.subr.mxu0 %v626
    %701 = vmatpush1.msra.mxu0 %v625
    %702 = vmatprep.subr.mxu0 %v617
    %703 = vmatpush1.msra.mxu0 %v616
    %704 = vmatprep.subr.mxu0 %v608
    %705 = vmatpush1.msra.mxu0 %v607
    %706 = vmatprep.subr.mxu0 %v599
    %707 = vmatpush1.msra.mxu0 %v598
    %708 = vmatprep.subr.mxu0 %v590
    %709 = vmatpush1.msra.mxu0 %v589
    %710 = vmatprep.subr.mxu0 %v581
    %711 = vmatpush1.msra.mxu0 %v580
    %712 = vmatprep.subr.mxu0 %v572
    %713 = vmatpush1.msra.mxu0 %v571
    %714 = vmatprep.subr.mxu0 %v563
    %715 = vmatpush1.msra.mxu0 %v562
    %716 = vmatprep.subr.mxu0 %v554
    %717 = vmatpush1.msra.mxu0 %v553
    %718 = vmatprep.subr.mxu0 %v545
    %719 = vmatpush1.msra.mxu0 %v544
    %720 = vmatprep.subr.mxu0 0.0
    %721 = vmatpush2.msra.mxu0 0.0
    %722 = vmatprep.subr.mxu0 0.0
    %723 = vmatpush2.msra.mxu0 0.0
    %724 = vmatprep.subr.mxu0 0.0
    %725 = vmatpush2.msra.mxu0 0.0
    %726 = vmatprep.subr.mxu0 0.0
    %727 = vmatpush2.msra.mxu0 0.0
    %728 = vmatprep.subr.mxu0 0.0
    %729 = vmatpush2.msra.mxu0 0.0
    %730 = vmatprep.subr.mxu0 0.0
    %731 = vmatpush2.msra.mxu0 0.0
    %732 = vmatprep.subr.mxu0 0.0
    %733 = vmatpush2.msra.mxu0 0.0
    %734 = vmatprep.subr.mxu0 0.0
    %735 = vmatpush2.msra.mxu0 0.0
    %736 = vmatprep.subr.mxu0 0.0
    %737 = vmatpush2.msra.mxu0 0.0
    %738 = vmatprep.subr.mxu0 0.0
    %739 = vmatpush2.msra.mxu0 0.0
    %740 = vmatprep.subr.mxu0 0.0
    %741 = vmatpush2.msra.mxu0 0.0
    %742 = vmatprep.subr.mxu0 0.0
    %743 = vmatpush2.msra.mxu0 0.0
    %744 = vmatprep.subr.mxu0 0.0
    %745 = vmatpush2.msra.mxu0 0.0
    %746 = vmatprep.subr.mxu0 0.0
    %747 = vmatpush2.msra.mxu0 0.0
    %748 = vmatprep.subr.mxu0 0.0
    %749 = vmatpush2.msra.mxu0 0.0
    %750 = vmatprep.subr.mxu0 0.0
    %751 = vmatpush2.msra.mxu0 0.0
    %752 = vmatprep.mubr.f32.mxu0 0.0
    %753 = vmatmul.mubr.f32.gmra.mxu0 %v528
    %v754 = vpop.f32.mrf.mxu0
    %v755 = vadd.f32 0.0, %v754
    %v756 = vpop.f32.mrf.mxu0
    %v757 = vadd.f32 0.0, %v756
    %758 = vmatprep.mubr.f32.mxu0 0.0
    %759 = vmatmul.mubr.f32.gmra.mxu0 %v529
    %v760 = vpop.f32.mrf.mxu0
    %v761 = vadd.f32 0.0, %v760
    %v762 = vpop.f32.mrf.mxu0
    %v763 = vadd.f32 0.0, %v762
    %764 = vmatprep.mubr.f32.mxu0 0.0
    %765 = vmatmul.mubr.f32.gmra.mxu0 %v530
    %v766 = vpop.f32.mrf.mxu0
    %v767 = vadd.f32 0.0, %v766
    %v768 = vpop.f32.mrf.mxu0
    %v769 = vadd.f32 0.0, %v768
    %770 = vmatprep.mubr.f32.mxu0 0.0
    %771 = vmatmul.mubr.f32.gmra.mxu0 %v531
    %v772 = vpop.f32.mrf.mxu0
    %v773 = vadd.f32 0.0, %v772
    %v774 = vpop.f32.mrf.mxu0
    %v775 = vadd.f32 0.0, %v774
    %776 = vmatprep.mubr.f32.mxu0 0.0
    %777 = vmatmul.mubr.f32.gmra.mxu0 %v532
    %v778 = vpop.f32.mrf.mxu0
    %v779 = vadd.f32 0.0, %v778
    %v780 = vpop.f32.mrf.mxu0
    %v781 = vadd.f32 0.0, %v780
    %782 = vmatprep.mubr.f32.mxu0 0.0
    %783 = vmatmul.mubr.f32.gmra.mxu0 %v533
    %v784 = vpop.f32.mrf.mxu0
    %v785 = vadd.f32 0.0, %v784
    %v786 = vpop.f32.mrf.mxu0
    %v787 = vadd.f32 0.0, %v786
    %788 = vmatprep.mubr.f32.mxu0 0.0
    %789 = vmatmul.mubr.f32.gmra.mxu0 %v534
    %v790 = vpop.f32.mrf.mxu0
    %v791 = vadd.f32 0.0, %v790
    %v792 = vpop.f32.mrf.mxu0
    %v793 = vadd.f32 0.0, %v792
    %794 = vmatprep.mubr.f32.mxu0 0.0
    %795 = vmatmul.mubr.f32.gmra.mxu0 %v535
    %v796 = vpop.f32.mrf.mxu0
    %v797 = vadd.f32 0.0, %v796
    %v798 = vpop.f32.mrf.mxu0
    %v799 = vadd.f32 0.0, %v798
    %800 = vmatprep.mubr.f32.mxu0 0.0
    %801 = vmatmul.mubr.f32.gmra.mxu0 %v536
    %v802 = vpop.f32.mrf.mxu0
    %v803 = vadd.f32 0.0, %v802
    %v804 = vpop.f32.mrf.mxu0
    %v805 = vadd.f32 0.0, %v804
    %806 = vmatprep.mubr.f32.mxu0 0.0
    %807 = vmatmul.mubr.f32.gmra.mxu0 %v537
    %v808 = vpop.f32.mrf.mxu0
    %v809 = vadd.f32 0.0, %v808
    %v810 = vpop.f32.mrf.mxu0
    %v811 = vadd.f32 0.0, %v810
    %812 = vmatprep.mubr.f32.mxu0 0.0
    %813 = vmatmul.mubr.f32.gmra.mxu0 %v538
    %v814 = vpop.f32.mrf.mxu0
    %v815 = vadd.f32 0.0, %v814
    %v816 = vpop.f32.mrf.mxu0
    %v817 = vadd.f32 0.0, %v816
    %818 = vmatprep.mubr.f32.mxu0 0.0
    %819 = vmatmul.mubr.f32.gmra.mxu0 %v539
    %v820 = vpop.f32.mrf.mxu0
    %v821 = vadd.f32 0.0, %v820
    %v822 = vpop.f32.mrf.mxu0
    %v823 = vadd.f32 0.0, %v822
    %824 = vmatprep.mubr.f32.mxu0 0.0
    %825 = vmatmul.mubr.f32.gmra.mxu0 %v540
    %v826 = vpop.f32.mrf.mxu0
    %v827 = vadd.f32 0.0, %v826
    %v828 = vpop.f32.mrf.mxu0
    %v829 = vadd.f32 0.0, %v828
    %830 = vmatprep.mubr.f32.mxu0 0.0
    %831 = vmatmul.mubr.f32.gmra.mxu0 %v541
    %v832 = vpop.f32.mrf.mxu0
    %v833 = vadd.f32 0.0, %v832
    %v834 = vpop.f32.mrf.mxu0
    %v835 = vadd.f32 0.0, %v834
    %836 = vmatprep.mubr.f32.mxu0 0.0
    %837 = vmatmul.mubr.f32.gmra.mxu0 %v542
    %v838 = vpop.f32.mrf.mxu0
    %v839 = vadd.f32 0.0, %v838
    %v840 = vpop.f32.mrf.mxu0
    %v841 = vadd.f32 0.0, %v840
    %842 = vmatprep.mubr.f32.mxu0 0.0
    %843 = vmatmul.mubr.f32.gmra.mxu0 %v543
    %v844 = vpop.f32.mrf.mxu0
    %v845 = vadd.f32 0.0, %v844
    %v846 = vpop.f32.mrf.mxu0
    %v847 = vadd.f32 0.0, %v846
    %848 = vdwg.mxu0
    %849 = vmatprep.subr.mxu0 %v682
    %850 = vmatpush1.msra.mxu0 %v681
    %851 = vmatprep.subr.mxu0 %v673
    %852 = vmatpush1.msra.mxu0 %v672
    %853 = vmatprep.subr.mxu0 %v664
    %854 = vmatpush1.msra.mxu0 %v663
    %855 = vmatprep.subr.mxu0 %v655
    %856 = vmatpush1.msra.mxu0 %v654
    %857 = vmatprep.subr.mxu0 %v646
    %858 = vmatpush1.msra.mxu0 %v645
    %859 = vmatprep.subr.mxu0 %v637
    %860 = vmatpush1.msra.mxu0 %v636
    %861 = vmatprep.subr.mxu0 %v628
    %862 = vmatpush1.msra.mxu0 %v627
    %863 = vmatprep.subr.mxu0 %v619
    %864 = vmatpush1.msra.mxu0 %v618
    %865 = vmatprep.subr.mxu0 %v610
    %866 = vmatpush1.msra.mxu0 %v609
    %867 = vmatprep.subr.mxu0 %v601
    %868 = vmatpush1.msra.mxu0 %v600
    %869 = vmatprep.subr.mxu0 %v592
    %870 = vmatpush1.msra.mxu0 %v591
    %871 = vmatprep.subr.mxu0 %v583
    %872 = vmatpush1.msra.mxu0 %v582
    %873 = vmatprep.subr.mxu0 %v574
    %874 = vmatpush1.msra.mxu0 %v573
    %875 = vmatprep.subr.mxu0 %v565
    %876 = vmatpush1.msra.mxu0 %v564
    %877 = vmatprep.subr.mxu0 %v556
    %878 = vmatpush1.msra.mxu0 %v555
    %879 = vmatprep.subr.mxu0 %v547
    %880 = vmatpush1.msra.mxu0 %v546
    %881 = vmatprep.subr.mxu0 0.0
    %882 = vmatpush2.msra.mxu0 0.0
    %883 = vmatprep.subr.mxu0 0.0
    %884 = vmatpush2.msra.mxu0 0.0
    %885 = vmatprep.subr.mxu0 0.0
    %886 = vmatpush2.msra.mxu0 0.0
    %887 = vmatprep.subr.mxu0 0.0
    %888 = vmatpush2.msra.mxu0 0.0
    %889 = vmatprep.subr.mxu0 0.0
    %890 = vmatpush2.msra.mxu0 0.0
    %891 = vmatprep.subr.mxu0 0.0
    %892 = vmatpush2.msra.mxu0 0.0
    %893 = vmatprep.subr.mxu0 0.0
    %894 = vmatpush2.msra.mxu0 0.0
    %895 = vmatprep.subr.mxu0 0.0
    %896 = vmatpush2.msra.mxu0 0.0
    %897 = vmatprep.subr.mxu0 0.0
    %898 = vmatpush2.msra.mxu0 0.0
    %899 = vmatprep.subr.mxu0 0.0
    %900 = vmatpush2.msra.mxu0 0.0
    %901 = vmatprep.subr.mxu0 0.0
    %902 = vmatpush2.msra.mxu0 0.0
    %903 = vmatprep.subr.mxu0 0.0
    %904 = vmatpush2.msra.mxu0 0.0
    %905 = vmatprep.subr.mxu0 0.0
    %906 = vmatpush2.msra.mxu0 0.0
    %907 = vmatprep.subr.mxu0 0.0
    %908 = vmatpush2.msra.mxu0 0.0
    %909 = vmatprep.subr.mxu0 0.0
    %910 = vmatpush2.msra.mxu0 0.0
    %911 = vmatprep.subr.mxu0 0.0
    %912 = vmatpush2.msra.mxu0 0.0
    %913 = vmatprep.mubr.f32.mxu0 0.0
    %914 = vmatmul.mubr.f32.gmra.mxu0 %v528
    %v915 = vpop.f32.mrf.mxu0
    %v916 = vadd.f32 0.0, %v915
    %v917 = vpop.f32.mrf.mxu0
    %v918 = vadd.f32 0.0, %v917
    %919 = vmatprep.mubr.f32.mxu0 0.0
    %920 = vmatmul.mubr.f32.gmra.mxu0 %v529
    %v921 = vpop.f32.mrf.mxu0
    %v922 = vadd.f32 0.0, %v921
    %v923 = vpop.f32.mrf.mxu0
    %v924 = vadd.f32 0.0, %v923
    %925 = vmatprep.mubr.f32.mxu0 0.0
    %926 = vmatmul.mubr.f32.gmra.mxu0 %v530
    %v927 = vpop.f32.mrf.mxu0
    %v928 = vadd.f32 0.0, %v927
    %v929 = vpop.f32.mrf.mxu0
    %v930 = vadd.f32 0.0, %v929
    %931 = vmatprep.mubr.f32.mxu0 0.0
    %932 = vmatmul.mubr.f32.gmra.mxu0 %v531
    %v933 = vpop.f32.mrf.mxu0
    %v934 = vadd.f32 0.0, %v933
    %v935 = vpop.f32.mrf.mxu0
    %v936 = vadd.f32 0.0, %v935
    %937 = vmatprep.mubr.f32.mxu0 0.0
    %938 = vmatmul.mubr.f32.gmra.mxu0 %v532
    %v939 = vpop.f32.mrf.mxu0
    %v940 = vadd.f32 0.0, %v939
    %v941 = vpop.f32.mrf.mxu0
    %v942 = vadd.f32 0.0, %v941
    %943 = vmatprep.mubr.f32.mxu0 0.0
    %944 = vmatmul.mubr.f32.gmra.mxu0 %v533
    %v945 = vpop.f32.mrf.mxu0
    %v946 = vadd.f32 0.0, %v945
    %v947 = vpop.f32.mrf.mxu0
    %v948 = vadd.f32 0.0, %v947
    %949 = vmatprep.mubr.f32.mxu0 0.0
    %950 = vmatmul.mubr.f32.gmra.mxu0 %v534
    %v951 = vpop.f32.mrf.mxu0
    %v952 = vadd.f32 0.0, %v951
    %v953 = vpop.f32.mrf.mxu0
    %v954 = vadd.f32 0.0, %v953
    %955 = vmatprep.mubr.f32.mxu0 0.0
    %956 = vmatmul.mubr.f32.gmra.mxu0 %v535
    %v957 = vpop.f32.mrf.mxu0
    %v958 = vadd.f32 0.0, %v957
    %v959 = vpop.f32.mrf.mxu0
    %v960 = vadd.f32 0.0, %v959
    %961 = vmatprep.mubr.f32.mxu0 0.0
    %962 = vmatmul.mubr.f32.gmra.mxu0 %v536
    %v963 = vpop.f32.mrf.mxu0
    %v964 = vadd.f32 0.0, %v963
    %v965 = vpop.f32.mrf.mxu0
    %v966 = vadd.f32 0.0, %v965
    %967 = vmatprep.mubr.f32.mxu0 0.0
    %968 = vmatmul.mubr.f32.gmra.mxu0 %v537
    %v969 = vpop.f32.mrf.mxu0
    %v970 = vadd.f32 0.0, %v969
    %v971 = vpop.f32.mrf.mxu0
    %v972 = vadd.f32 0.0, %v971
    %973 = vmatprep.mubr.f32.mxu0 0.0
    %974 = vmatmul.mubr.f32.gmra.mxu0 %v538
    %v975 = vpop.f32.mrf.mxu0
    %v976 = vadd.f32 0.0, %v975
    %v977 = vpop.f32.mrf.mxu0
    %v978 = vadd.f32 0.0, %v977
    %979 = vmatprep.mubr.f32.mxu0 0.0
    %980 = vmatmul.mubr.f32.gmra.mxu0 %v539
    %v981 = vpop.f32.mrf.mxu0
    %v982 = vadd.f32 0.0, %v981
    %v983 = vpop.f32.mrf.mxu0
    %v984 = vadd.f32 0.0, %v983
    %985 = vmatprep.mubr.f32.mxu0 0.0
    %986 = vmatmul.mubr.f32.gmra.mxu0 %v540
    %v987 = vpop.f32.mrf.mxu0
    %v988 = vadd.f32 0.0, %v987
    %v989 = vpop.f32.mrf.mxu0
    %v990 = vadd.f32 0.0, %v989
    %991 = vmatprep.mubr.f32.mxu0 0.0
    %992 = vmatmul.mubr.f32.gmra.mxu0 %v541
    %v993 = vpop.f32.mrf.mxu0
    %v994 = vadd.f32 0.0, %v993
    %v995 = vpop.f32.mrf.mxu0
    %v996 = vadd.f32 0.0, %v995
    %997 = vmatprep.mubr.f32.mxu0 0.0
    %998 = vmatmul.mubr.f32.gmra.mxu0 %v542
    %v999 = vpop.f32.mrf.mxu0
    %v1000 = vadd.f32 0.0, %v999
    %v1001 = vpop.f32.mrf.mxu0
    %v1002 = vadd.f32 0.0, %v1001
    %1003 = vmatprep.mubr.f32.mxu0 0.0
    %1004 = vmatmul.mubr.f32.gmra.mxu0 %v543
    %v1005 = vpop.f32.mrf.mxu0
    %v1006 = vadd.f32 0.0, %v1005
    %v1007 = vpop.f32.mrf.mxu0
    %v1008 = vadd.f32 0.0, %v1007
    %1009 = vdwg.mxu0
    %1010 = vmatprep.subr.mxu0 %v684
    %1011 = vmatpush1.msra.mxu0 %v683
    %1012 = vmatprep.subr.mxu0 %v675
    %1013 = vmatpush1.msra.mxu0 %v674
    %1014 = vmatprep.subr.mxu0 %v666
    %1015 = vmatpush1.msra.mxu0 %v665
    %1016 = vmatprep.subr.mxu0 %v657
    %1017 = vmatpush1.msra.mxu0 %v656
    %1018 = vmatprep.subr.mxu0 %v648
    %1019 = vmatpush1.msra.mxu0 %v647
    %1020 = vmatprep.subr.mxu0 %v639
    %1021 = vmatpush1.msra.mxu0 %v638
    %1022 = vmatprep.subr.mxu0 %v630
    %1023 = vmatpush1.msra.mxu0 %v629
    %1024 = vmatprep.subr.mxu0 %v621
    %1025 = vmatpush1.msra.mxu0 %v620
    %1026 = vmatprep.subr.mxu0 %v612
    %1027 = vmatpush1.msra.mxu0 %v611
    %1028 = vmatprep.subr.mxu0 %v603
    %1029 = vmatpush1.msra.mxu0 %v602
    %1030 = vmatprep.subr.mxu0 %v594
    %1031 = vmatpush1.msra.mxu0 %v593
    %1032 = vmatprep.subr.mxu0 %v585
    %1033 = vmatpush1.msra.mxu0 %v584
    %1034 = vmatprep.subr.mxu0 %v576
    %1035 = vmatpush1.msra.mxu0 %v575
    %1036 = vmatprep.subr.mxu0 %v567
    %1037 = vmatpush1.msra.mxu0 %v566
    %1038 = vmatprep.subr.mxu0 %v558
    %1039 = vmatpush1.msra.mxu0 %v557
    %1040 = vmatprep.subr.mxu0 %v549
    %1041 = vmatpush1.msra.mxu0 %v548
    %1042 = vmatprep.subr.mxu0 0.0
    %1043 = vmatpush2.msra.mxu0 0.0
    %1044 = vmatprep.subr.mxu0 0.0
    %1045 = vmatpush2.msra.mxu0 0.0
    %1046 = vmatprep.subr.mxu0 0.0
    %1047 = vmatpush2.msra.mxu0 0.0
    %1048 = vmatprep.subr.mxu0 0.0
    %1049 = vmatpush2.msra.mxu0 0.0
    %1050 = vmatprep.subr.mxu0 0.0
    %1051 = vmatpush2.msra.mxu0 0.0
    %1052 = vmatprep.subr.mxu0 0.0
    %1053 = vmatpush2.msra.mxu0 0.0
    %1054 = vmatprep.subr.mxu0 0.0
    %1055 = vmatpush2.msra.mxu0 0.0
    %1056 = vmatprep.subr.mxu0 0.0
    %1057 = vmatpush2.msra.mxu0 0.0
    %1058 = vmatprep.subr.mxu0 0.0
    %1059 = vmatpush2.msra.mxu0 0.0
    %1060 = vmatprep.subr.mxu0 0.0
    %1061 = vmatpush2.msra.mxu0 0.0
    %1062 = vmatprep.subr.mxu0 0.0
    %1063 = vmatpush2.msra.mxu0 0.0
    %1064 = vmatprep.subr.mxu0 0.0
    %1065 = vmatpush2.msra.mxu0 0.0
    %1066 = vmatprep.subr.mxu0 0.0
    %1067 = vmatpush2.msra.mxu0 0.0
    %1068 = vmatprep.subr.mxu0 0.0
    %1069 = vmatpush2.msra.mxu0 0.0
    %1070 = vmatprep.subr.mxu0 0.0
    %1071 = vmatpush2.msra.mxu0 0.0
    %1072 = vmatprep.subr.mxu0 0.0
    %1073 = vmatpush2.msra.mxu0 0.0
    %1074 = vmatprep.mubr.f32.mxu0 0.0
    %1075 = vmatmul.mubr.f32.gmra.mxu0 %v528
    %v1076 = vpop.f32.mrf.mxu0
    %v1077 = vadd.f32 0.0, %v1076
    %v1078 = vpop.f32.mrf.mxu0
    %v1079 = vadd.f32 0.0, %v1078
    %1080 = vmatprep.mubr.f32.mxu0 0.0
    %1081 = vmatmul.mubr.f32.gmra.mxu0 %v529
    %v1082 = vpop.f32.mrf.mxu0
    %v1083 = vadd.f32 0.0, %v1082
    %v1084 = vpop.f32.mrf.mxu0
    %v1085 = vadd.f32 0.0, %v1084
    %1086 = vmatprep.mubr.f32.mxu0 0.0
    %1087 = vmatmul.mubr.f32.gmra.mxu0 %v530
    %v1088 = vpop.f32.mrf.mxu0
    %v1089 = vadd.f32 0.0, %v1088
    %v1090 = vpop.f32.mrf.mxu0
    %v1091 = vadd.f32 0.0, %v1090
    %1092 = vmatprep.mubr.f32.mxu0 0.0
    %1093 = vmatmul.mubr.f32.gmra.mxu0 %v531
    %v1094 = vpop.f32.mrf.mxu0
    %v1095 = vadd.f32 0.0, %v1094
    %v1096 = vpop.f32.mrf.mxu0
    %v1097 = vadd.f32 0.0, %v1096
    %1098 = vmatprep.mubr.f32.mxu0 0.0
    %1099 = vmatmul.mubr.f32.gmra.mxu0 %v532
    %v1100 = vpop.f32.mrf.mxu0
    %v1101 = vadd.f32 0.0, %v1100
    %v1102 = vpop.f32.mrf.mxu0
    %v1103 = vadd.f32 0.0, %v1102
    %1104 = vmatprep.mubr.f32.mxu0 0.0
    %1105 = vmatmul.mubr.f32.gmra.mxu0 %v533
    %v1106 = vpop.f32.mrf.mxu0
    %v1107 = vadd.f32 0.0, %v1106
    %v1108 = vpop.f32.mrf.mxu0
    %v1109 = vadd.f32 0.0, %v1108
    %1110 = vmatprep.mubr.f32.mxu0 0.0
    %1111 = vmatmul.mubr.f32.gmra.mxu0 %v534
    %v1112 = vpop.f32.mrf.mxu0
    %v1113 = vadd.f32 0.0, %v1112
    %v1114 = vpop.f32.mrf.mxu0
    %v1115 = vadd.f32 0.0, %v1114
    %1116 = vmatprep.mubr.f32.mxu0 0.0
    %1117 = vmatmul.mubr.f32.gmra.mxu0 %v535
    %v1118 = vpop.f32.mrf.mxu0
    %v1119 = vadd.f32 0.0, %v1118
    %v1120 = vpop.f32.mrf.mxu0
    %v1121 = vadd.f32 0.0, %v1120
    %1122 = vmatprep.mubr.f32.mxu0 0.0
    %1123 = vmatmul.mubr.f32.gmra.mxu0 %v536
    %v1124 = vpop.f32.mrf.mxu0
    %v1125 = vadd.f32 0.0, %v1124
    %v1126 = vpop.f32.mrf.mxu0
    %v1127 = vadd.f32 0.0, %v1126
    %1128 = vmatprep.mubr.f32.mxu0 0.0
    %1129 = vmatmul.mubr.f32.gmra.mxu0 %v537
    %v1130 = vpop.f32.mrf.mxu0
    %v1131 = vadd.f32 0.0, %v1130
    %v1132 = vpop.f32.mrf.mxu0
    %v1133 = vadd.f32 0.0, %v1132
    %1134 = vmatprep.mubr.f32.mxu0 0.0
    %1135 = vmatmul.mubr.f32.gmra.mxu0 %v538
    %v1136 = vpop.f32.mrf.mxu0
    %v1137 = vadd.f32 0.0, %v1136
    %v1138 = vpop.f32.mrf.mxu0
    %v1139 = vadd.f32 0.0, %v1138
    %1140 = vmatprep.mubr.f32.mxu0 0.0
    %1141 = vmatmul.mubr.f32.gmra.mxu0 %v539
    %v1142 = vpop.f32.mrf.mxu0
    %v1143 = vadd.f32 0.0, %v1142
    %v1144 = vpop.f32.mrf.mxu0
    %v1145 = vadd.f32 0.0, %v1144
    %1146 = vmatprep.mubr.f32.mxu0 0.0
    %1147 = vmatmul.mubr.f32.gmra.mxu0 %v540
    %v1148 = vpop.f32.mrf.mxu0
    %v1149 = vadd.f32 0.0, %v1148
    %v1150 = vpop.f32.mrf.mxu0
    %v1151 = vadd.f32 0.0, %v1150
    %1152 = vmatprep.mubr.f32.mxu0 0.0
    %1153 = vmatmul.mubr.f32.gmra.mxu0 %v541
    %v1154 = vpop.f32.mrf.mxu0
    %v1155 = vadd.f32 0.0, %v1154
    %v1156 = vpop.f32.mrf.mxu0
    %v1157 = vadd.f32 0.0, %v1156
    %1158 = vmatprep.mubr.f32.mxu0 0.0
    %1159 = vmatmul.mubr.f32.gmra.mxu0 %v542
    %v1160 = vpop.f32.mrf.mxu0
    %v1161 = vadd.f32 0.0, %v1160
    %v1162 = vpop.f32.mrf.mxu0
    %v1163 = vadd.f32 0.0, %v1162
    %1164 = vmatprep.mubr.f32.mxu0 0.0
    %1165 = vmatmul.mubr.f32.gmra.mxu0 %v543
    %v1166 = vpop.f32.mrf.mxu0
    %v1167 = vadd.f32 0.0, %v1166
    %v1168 = vpop.f32.mrf.mxu0
    %v1169 = vadd.f32 0.0, %v1168
    %1170 = vdwg.mxu0
    %1171 = vmatprep.subr.mxu0 %v686
    %1172 = vmatpush1.msra.mxu0 %v685
    %1173 = vmatprep.subr.mxu0 %v677
    %1174 = vmatpush1.msra.mxu0 %v676
    %1175 = vmatprep.subr.mxu0 %v668
    %1176 = vmatpush1.msra.mxu0 %v667
    %1177 = vmatprep.subr.mxu0 %v659
    %1178 = vmatpush1.msra.mxu0 %v658
    %1179 = vmatprep.subr.mxu0 %v650
    %1180 = vmatpush1.msra.mxu0 %v649
    %1181 = vmatprep.subr.mxu0 %v641
    %1182 = vmatpush1.msra.mxu0 %v640
    %1183 = vmatprep.subr.mxu0 %v632
    %1184 = vmatpush1.msra.mxu0 %v631
    %1185 = vmatprep.subr.mxu0 %v623
    %1186 = vmatpush1.msra.mxu0 %v622
    %1187 = vmatprep.subr.mxu0 %v614
    %1188 = vmatpush1.msra.mxu0 %v613
    %1189 = vmatprep.subr.mxu0 %v605
    %1190 = vmatpush1.msra.mxu0 %v604
    %1191 = vmatprep.subr.mxu0 %v596
    %1192 = vmatpush1.msra.mxu0 %v595
    %1193 = vmatprep.subr.mxu0 %v587
    %1194 = vmatpush1.msra.mxu0 %v586
    %1195 = vmatprep.subr.mxu0 %v578
    %1196 = vmatpush1.msra.mxu0 %v577
    %1197 = vmatprep.subr.mxu0 %v569
    %1198 = vmatpush1.msra.mxu0 %v568
    %1199 = vmatprep.subr.mxu0 %v560
    %1200 = vmatpush1.msra.mxu0 %v559
    %1201 = vmatprep.subr.mxu0 %v551
    %1202 = vmatpush1.msra.mxu0 %v550
    %1203 = vmatprep.subr.mxu0 0.0
    %1204 = vmatpush2.msra.mxu0 0.0
    %1205 = vmatprep.subr.mxu0 0.0
    %1206 = vmatpush2.msra.mxu0 0.0
    %1207 = vmatprep.subr.mxu0 0.0
    %1208 = vmatpush2.msra.mxu0 0.0
    %1209 = vmatprep.subr.mxu0 0.0
    %1210 = vmatpush2.msra.mxu0 0.0
    %1211 = vmatprep.subr.mxu0 0.0
    %1212 = vmatpush2.msra.mxu0 0.0
    %1213 = vmatprep.subr.mxu0 0.0
    %1214 = vmatpush2.msra.mxu0 0.0
    %1215 = vmatprep.subr.mxu0 0.0
    %1216 = vmatpush2.msra.mxu0 0.0
    %1217 = vmatprep.subr.mxu0 0.0
    %1218 = vmatpush2.msra.mxu0 0.0
    %1219 = vmatprep.subr.mxu0 0.0
    %1220 = vmatpush2.msra.mxu0 0.0
    %1221 = vmatprep.subr.mxu0 0.0
    %1222 = vmatpush2.msra.mxu0 0.0
    %1223 = vmatprep.subr.mxu0 0.0
    %1224 = vmatpush2.msra.mxu0 0.0
    %1225 = vmatprep.subr.mxu0 0.0
    %1226 = vmatpush2.msra.mxu0 0.0
    %1227 = vmatprep.subr.mxu0 0.0
    %1228 = vmatpush2.msra.mxu0 0.0
    %1229 = vmatprep.subr.mxu0 0.0
    %1230 = vmatpush2.msra.mxu0 0.0
    %1231 = vmatprep.subr.mxu0 0.0
    %1232 = vmatpush2.msra.mxu0 0.0
    %1233 = vmatprep.subr.mxu0 0.0
    %1234 = vmatpush2.msra.mxu0 0.0
    %1235 = vmatprep.mubr.f32.mxu0 0.0
    %1236 = vmatmul.mubr.f32.gmra.mxu0 %v528
    %v1237 = vpop.f32.mrf.mxu0
    %v1238 = vadd.f32 0.0, %v1237
    %v1239 = vpop.f32.mrf.mxu0
    %v1240 = vadd.f32 0.0, %v1239
    %1241 = vmatprep.mubr.f32.mxu0 0.0
    %1242 = vmatmul.mubr.f32.gmra.mxu0 %v529
    %v1243 = vpop.f32.mrf.mxu0
    %v1244 = vadd.f32 0.0, %v1243
    %v1245 = vpop.f32.mrf.mxu0
    %v1246 = vadd.f32 0.0, %v1245
    %1247 = vmatprep.mubr.f32.mxu0 0.0
    %1248 = vmatmul.mubr.f32.gmra.mxu0 %v530
    %v1249 = vpop.f32.mrf.mxu0
    %v1250 = vadd.f32 0.0, %v1249
    %v1251 = vpop.f32.mrf.mxu0
    %v1252 = vadd.f32 0.0, %v1251
    %1253 = vmatprep.mubr.f32.mxu0 0.0
    %1254 = vmatmul.mubr.f32.gmra.mxu0 %v531
    %v1255 = vpop.f32.mrf.mxu0
    %v1256 = vadd.f32 0.0, %v1255
    %v1257 = vpop.f32.mrf.mxu0
    %v1258 = vadd.f32 0.0, %v1257
    %1259 = vmatprep.mubr.f32.mxu0 0.0
    %1260 = vmatmul.mubr.f32.gmra.mxu0 %v532
    %v1261 = vpop.f32.mrf.mxu0
    %v1262 = vadd.f32 0.0, %v1261
    %v1263 = vpop.f32.mrf.mxu0
    %v1264 = vadd.f32 0.0, %v1263
    %1265 = vmatprep.mubr.f32.mxu0 0.0
    %1266 = vmatmul.mubr.f32.gmra.mxu0 %v533
    %v1267 = vpop.f32.mrf.mxu0
    %v1268 = vadd.f32 0.0, %v1267
    %v1269 = vpop.f32.mrf.mxu0
    %v1270 = vadd.f32 0.0, %v1269
    %1271 = vmatprep.mubr.f32.mxu0 0.0
    %1272 = vmatmul.mubr.f32.gmra.mxu0 %v534
    %v1273 = vpop.f32.mrf.mxu0
    %v1274 = vadd.f32 0.0, %v1273
    %v1275 = vpop.f32.mrf.mxu0
    %v1276 = vadd.f32 0.0, %v1275
    %1277 = vmatprep.mubr.f32.mxu0 0.0
    %1278 = vmatmul.mubr.f32.gmra.mxu0 %v535
    %v1279 = vpop.f32.mrf.mxu0
    %v1280 = vadd.f32 0.0, %v1279
    %v1281 = vpop.f32.mrf.mxu0
    %v1282 = vadd.f32 0.0, %v1281
    %1283 = vmatprep.mubr.f32.mxu0 0.0
    %1284 = vmatmul.mubr.f32.gmra.mxu0 %v536
    %v1285 = vpop.f32.mrf.mxu0
    %v1286 = vadd.f32 0.0, %v1285
    %v1287 = vpop.f32.mrf.mxu0
    %v1288 = vadd.f32 0.0, %v1287
    %1289 = vmatprep.mubr.f32.mxu0 0.0
    %1290 = vmatmul.mubr.f32.gmra.mxu0 %v537
    %v1291 = vpop.f32.mrf.mxu0
    %v1292 = vadd.f32 0.0, %v1291
    %v1293 = vpop.f32.mrf.mxu0
    %v1294 = vadd.f32 0.0, %v1293
    %1295 = vmatprep.mubr.f32.mxu0 0.0
    %1296 = vmatmul.mubr.f32.gmra.mxu0 %v538
    %v1297 = vpop.f32.mrf.mxu0
    %v1298 = vadd.f32 0.0, %v1297
    %v1299 = vpop.f32.mrf.mxu0
    %v1300 = vadd.f32 0.0, %v1299
    %1301 = vmatprep.mubr.f32.mxu0 0.0
    %1302 = vmatmul.mubr.f32.gmra.mxu0 %v539
    %v1303 = vpop.f32.mrf.mxu0
    %v1304 = vadd.f32 0.0, %v1303
    %v1305 = vpop.f32.mrf.mxu0
    %v1306 = vadd.f32 0.0, %v1305
    %1307 = vmatprep.mubr.f32.mxu0 0.0
    %1308 = vmatmul.mubr.f32.gmra.mxu0 %v540
    %v1309 = vpop.f32.mrf.mxu0
    %v1310 = vadd.f32 0.0, %v1309
    %v1311 = vpop.f32.mrf.mxu0
    %v1312 = vadd.f32 0.0, %v1311
    %1313 = vmatprep.mubr.f32.mxu0 0.0
    %1314 = vmatmul.mubr.f32.gmra.mxu0 %v541
    %v1315 = vpop.f32.mrf.mxu0
    %v1316 = vadd.f32 0.0, %v1315
    %v1317 = vpop.f32.mrf.mxu0
    %v1318 = vadd.f32 0.0, %v1317
    %1319 = vmatprep.mubr.f32.mxu0 0.0
    %1320 = vmatmul.mubr.f32.gmra.mxu0 %v542
    %v1321 = vpop.f32.mrf.mxu0
    %v1322 = vadd.f32 0.0, %v1321
    %v1323 = vpop.f32.mrf.mxu0
    %v1324 = vadd.f32 0.0, %v1323
    %1325 = vmatprep.mubr.f32.mxu0 0.0
    %1326 = vmatmul.mubr.f32.gmra.mxu0 %v543
    %v1327 = vpop.f32.mrf.mxu0
    %v1328 = vadd.f32 0.0, %v1327
    %v1329 = vpop.f32.mrf.mxu0
    %v1330 = vadd.f32 0.0, %v1329
    %1331 = vdwg.mxu0
    %1332 = vmatprep.subr.mxu0 0.0
    %1333 = vmatpush1.msra.mxu0 %v687
    %1334 = vmatprep.subr.mxu0 0.0
    %1335 = vmatpush1.msra.mxu0 %v678
    %1336 = vmatprep.subr.mxu0 0.0
    %1337 = vmatpush1.msra.mxu0 %v669
    %1338 = vmatprep.subr.mxu0 0.0
    %1339 = vmatpush1.msra.mxu0 %v660
    %1340 = vmatprep.subr.mxu0 0.0
    %1341 = vmatpush1.msra.mxu0 %v651
    %1342 = vmatprep.subr.mxu0 0.0
    %1343 = vmatpush1.msra.mxu0 %v642
    %1344 = vmatprep.subr.mxu0 0.0
    %1345 = vmatpush1.msra.mxu0 %v633
    %1346 = vmatprep.subr.mxu0 0.0
    %1347 = vmatpush1.msra.mxu0 %v624
    %1348 = vmatprep.subr.mxu0 0.0
    %1349 = vmatpush1.msra.mxu0 %v615
    %1350 = vmatprep.subr.mxu0 0.0
    %1351 = vmatpush1.msra.mxu0 %v606
    %1352 = vmatprep.subr.mxu0 0.0
    %1353 = vmatpush1.msra.mxu0 %v597
    %1354 = vmatprep.subr.mxu0 0.0
    %1355 = vmatpush1.msra.mxu0 %v588
    %1356 = vmatprep.subr.mxu0 0.0
    %1357 = vmatpush1.msra.mxu0 %v579
    %1358 = vmatprep.subr.mxu0 0.0
    %1359 = vmatpush1.msra.mxu0 %v570
    %1360 = vmatprep.subr.mxu0 0.0
    %1361 = vmatpush1.msra.mxu0 %v561
    %1362 = vmatprep.subr.mxu0 0.0
    %1363 = vmatpush1.msra.mxu0 %v552
    %1364 = vmatprep.subr.mxu0 0.0
    %1365 = vmatpush2.msra.mxu0 0.0
    %1366 = vmatprep.subr.mxu0 0.0
    %1367 = vmatpush2.msra.mxu0 0.0
    %1368 = vmatprep.subr.mxu0 0.0
    %1369 = vmatpush2.msra.mxu0 0.0
    %1370 = vmatprep.subr.mxu0 0.0
    %1371 = vmatpush2.msra.mxu0 0.0
    %1372 = vmatprep.subr.mxu0 0.0
    %1373 = vmatpush2.msra.mxu0 0.0
    %1374 = vmatprep.subr.mxu0 0.0
    %1375 = vmatpush2.msra.mxu0 0.0
    %1376 = vmatprep.subr.mxu0 0.0
    %1377 = vmatpush2.msra.mxu0 0.0
    %1378 = vmatprep.subr.mxu0 0.0
    %1379 = vmatpush2.msra.mxu0 0.0
    %1380 = vmatprep.subr.mxu0 0.0
    %1381 = vmatpush2.msra.mxu0 0.0
    %1382 = vmatprep.subr.mxu0 0.0
    %1383 = vmatpush2.msra.mxu0 0.0
    %1384 = vmatprep.subr.mxu0 0.0
    %1385 = vmatpush2.msra.mxu0 0.0
    %1386 = vmatprep.subr.mxu0 0.0
    %1387 = vmatpush2.msra.mxu0 0.0
    %1388 = vmatprep.subr.mxu0 0.0
    %1389 = vmatpush2.msra.mxu0 0.0
    %1390 = vmatprep.subr.mxu0 0.0
    %1391 = vmatpush2.msra.mxu0 0.0
    %1392 = vmatprep.subr.mxu0 0.0
    %1393 = vmatpush2.msra.mxu0 0.0
    %1394 = vmatprep.subr.mxu0 0.0
    %1395 = vmatpush2.msra.mxu0 0.0
    %1396 = vmatprep.mubr.f32.mxu0 0.0
    %1397 = vmatmul.mubr.f32.gmra.mxu0 %v528
    %v1398 = vpop.f32.mrf.mxu0
    %v1399 = vadd.f32 0.0, %v1398
    %v1400 = vpop.f32.mrf.mxu0
    %1401 = vmatprep.mubr.f32.mxu0 0.0
    %1402 = vmatmul.mubr.f32.gmra.mxu0 %v529
    %v1403 = vpop.f32.mrf.mxu0
    %v1404 = vadd.f32 0.0, %v1403
    %v1405 = vpop.f32.mrf.mxu0
    %1406 = vmatprep.mubr.f32.mxu0 0.0
    %1407 = vmatmul.mubr.f32.gmra.mxu0 %v530
    %v1408 = vpop.f32.mrf.mxu0
    %v1409 = vadd.f32 0.0, %v1408
    %v1410 = vpop.f32.mrf.mxu0
    %1411 = vmatprep.mubr.f32.mxu0 0.0
    %1412 = vmatmul.mubr.f32.gmra.mxu0 %v531
    %v1413 = vpop.f32.mrf.mxu0
    %v1414 = vadd.f32 0.0, %v1413
    %v1415 = vpop.f32.mrf.mxu0
    %1416 = vmatprep.mubr.f32.mxu0 0.0
    %1417 = vmatmul.mubr.f32.gmra.mxu0 %v532
    %v1418 = vpop.f32.mrf.mxu0
    %v1419 = vadd.f32 0.0, %v1418
    %v1420 = vpop.f32.mrf.mxu0
    %1421 = vmatprep.mubr.f32.mxu0 0.0
    %1422 = vmatmul.mubr.f32.gmra.mxu0 %v533
    %v1423 = vpop.f32.mrf.mxu0
    %v1424 = vadd.f32 0.0, %v1423
    %v1425 = vpop.f32.mrf.mxu0
    %1426 = vmatprep.mubr.f32.mxu0 0.0
    %1427 = vmatmul.mubr.f32.gmra.mxu0 %v534
    %v1428 = vpop.f32.mrf.mxu0
    %v1429 = vadd.f32 0.0, %v1428
    %v1430 = vpop.f32.mrf.mxu0
    %1431 = vmatprep.mubr.f32.mxu0 0.0
    %1432 = vmatmul.mubr.f32.gmra.mxu0 %v535
    %v1433 = vpop.f32.mrf.mxu0
    %v1434 = vadd.f32 0.0, %v1433
    %v1435 = vpop.f32.mrf.mxu0
    %1436 = vmatprep.mubr.f32.mxu0 0.0
    %1437 = vmatmul.mubr.f32.gmra.mxu0 %v536
    %v1438 = vpop.f32.mrf.mxu0
    %v1439 = vadd.f32 0.0, %v1438
    %v1440 = vpop.f32.mrf.mxu0
    %1441 = vmatprep.mubr.f32.mxu0 0.0
    %1442 = vmatmul.mubr.f32.gmra.mxu0 %v537
    %v1443 = vpop.f32.mrf.mxu0
    %v1444 = vadd.f32 0.0, %v1443
    %v1445 = vpop.f32.mrf.mxu0
    %1446 = vmatprep.mubr.f32.mxu0 0.0
    %1447 = vmatmul.mubr.f32.gmra.mxu0 %v538
    %v1448 = vpop.f32.mrf.mxu0
    %v1449 = vadd.f32 0.0, %v1448
    %v1450 = vpop.f32.mrf.mxu0
    %1451 = vmatprep.mubr.f32.mxu0 0.0
    %1452 = vmatmul.mubr.f32.gmra.mxu0 %v539
    %v1453 = vpop.f32.mrf.mxu0
    %v1454 = vadd.f32 0.0, %v1453
    %v1455 = vpop.f32.mrf.mxu0
    %1456 = vmatprep.mubr.f32.mxu0 0.0
    %1457 = vmatmul.mubr.f32.gmra.mxu0 %v540
    %v1458 = vpop.f32.mrf.mxu0
    %v1459 = vadd.f32 0.0, %v1458
    %v1460 = vpop.f32.mrf.mxu0
    %1461 = vmatprep.mubr.f32.mxu0 0.0
    %1462 = vmatmul.mubr.f32.gmra.mxu0 %v541
    %v1463 = vpop.f32.mrf.mxu0
    %v1464 = vadd.f32 0.0, %v1463
    %v1465 = vpop.f32.mrf.mxu0
    %1466 = vmatprep.mubr.f32.mxu0 0.0
    %1467 = vmatmul.mubr.f32.gmra.mxu0 %v542
    %v1468 = vpop.f32.mrf.mxu0
    %v1469 = vadd.f32 0.0, %v1468
    %v1470 = vpop.f32.mrf.mxu0
    %1471 = vmatprep.mubr.f32.mxu0 0.0
    %1472 = vmatmul.mubr.f32.gmra.mxu0 %v543
    %v1473 = vpop.f32.mrf.mxu0
    %v1474 = vadd.f32 0.0, %v1473
    %v1475 = vpop.f32.mrf.mxu0
    %1476 = vdwg.mxu0
    %v1477 = vld [vmem:[%s11] sm:$0xff]
    %v1478 = vld [vmem:[%s11 + $0x8] sm:$0xff]
    %v1479 = vld [vmem:[%s11 + $0x10] sm:$0xff]
    %v1480 = vld [vmem:[%s11 + $0x18] sm:$0xff]
    %s1481 = scalar_lea.vmem %s11, 32
    %v1482 = vld [vmem:[%s1481] sm:$0xff]
    %v1483 = vld [vmem:[%s1481 + $0x8] sm:$0xff]
    %v1484 = vld [vmem:[%s1481 + $0x10] sm:$0xff]
    %v1485 = vld [vmem:[%s1481 + $0x18] sm:$0xff]
    %1486 = vmatprep.subr.mxu0 0.0
    %1487 = vmatpush1.msra.mxu0 %v847
    %1488 = vmatprep.subr.mxu0 0.0
    %1489 = vmatpush1.msra.mxu0 %v841
    %1490 = vmatprep.subr.mxu0 0.0
    %1491 = vmatpush1.msra.mxu0 %v835
    %1492 = vmatprep.subr.mxu0 0.0
    %1493 = vmatpush1.msra.mxu0 %v829
    %1494 = vmatprep.subr.mxu0 0.0
    %1495 = vmatpush1.msra.mxu0 %v823
    %1496 = vmatprep.subr.mxu0 0.0
    %1497 = vmatpush1.msra.mxu0 %v817
    %1498 = vmatprep.subr.mxu0 0.0
    %1499 = vmatpush1.msra.mxu0 %v811
    %1500 = vmatprep.subr.mxu0 0.0
    %1501 = vmatpush1.msra.mxu0 %v805
    %1502 = vmatprep.subr.mxu0 0.0
    %1503 = vmatpush1.msra.mxu0 %v799
    %1504 = vmatprep.subr.mxu0 0.0
    %1505 = vmatpush1.msra.mxu0 %v793
    %1506 = vmatprep.subr.mxu0 0.0
    %1507 = vmatpush1.msra.mxu0 %v787
    %1508 = vmatprep.subr.mxu0 0.0
    %1509 = vmatpush1.msra.mxu0 %v781
    %1510 = vmatprep.subr.mxu0 0.0
    %1511 = vmatpush1.msra.mxu0 %v775
    %1512 = vmatprep.subr.mxu0 0.0
    %1513 = vmatpush1.msra.mxu0 %v769
    %1514 = vmatprep.subr.mxu0 0.0
    %1515 = vmatpush1.msra.mxu0 %v763
    %1516 = vmatprep.subr.mxu0 0.0
    %1517 = vmatpush1.msra.mxu0 %v757
    %1518 = vmatprep.subr.mxu0 0.0
    %1519 = vmatpush2.msra.mxu0 0.0
    %1520 = vmatprep.subr.mxu0 0.0
    %1521 = vmatpush2.msra.mxu0 0.0
    %1522 = vmatprep.subr.mxu0 0.0
    %1523 = vmatpush2.msra.mxu0 0.0
    %1524 = vmatprep.subr.mxu0 0.0
    %1525 = vmatpush2.msra.mxu0 0.0
    %1526 = vmatprep.subr.mxu0 0.0
    %1527 = vmatpush2.msra.mxu0 0.0
    %1528 = vmatprep.subr.mxu0 0.0
    %1529 = vmatpush2.msra.mxu0 0.0
    %1530 = vmatprep.subr.mxu0 0.0
    %1531 = vmatpush2.msra.mxu0 0.0
    %1532 = vmatprep.subr.mxu0 0.0
    %1533 = vmatpush2.msra.mxu0 0.0
    %1534 = vmatprep.subr.mxu0 0.0
    %1535 = vmatpush2.msra.mxu0 0.0
    %1536 = vmatprep.subr.mxu0 0.0
    %1537 = vmatpush2.msra.mxu0 0.0
    %1538 = vmatprep.subr.mxu0 0.0
    %1539 = vmatpush2.msra.mxu0 0.0
    %1540 = vmatprep.subr.mxu0 0.0
    %1541 = vmatpush2.msra.mxu0 0.0
    %1542 = vmatprep.subr.mxu0 0.0
    %1543 = vmatpush2.msra.mxu0 0.0
    %1544 = vmatprep.subr.mxu0 0.0
    %1545 = vmatpush2.msra.mxu0 0.0
    %1546 = vmatprep.subr.mxu0 0.0
    %1547 = vmatpush2.msra.mxu0 0.0
    %1548 = vmatprep.subr.mxu0 0.0
    %1549 = vmatpush2.msra.mxu0 0.0
    %1550 = vmatprep.mubr.f32.mxu0 0.0
    %1551 = vmatmul.mubr.f32.gmra.mxu0 %v1482
    %v1552 = vpop.f32.mrf.mxu0
    %v1553 = vadd.f32 0.0, %v1552
    %v1554 = vpop.f32.mrf.mxu0
    %1555 = vmatprep.mubr.f32.mxu0 0.0
    %1556 = vmatmul.mubr.f32.gmra.mxu0 %v1483
    %v1557 = vpop.f32.mrf.mxu0
    %v1558 = vadd.f32 0.0, %v1557
    %v1559 = vpop.f32.mrf.mxu0
    %1560 = vmatprep.mubr.f32.mxu0 0.0
    %1561 = vmatmul.mubr.f32.gmra.mxu0 %v1484
    %v1562 = vpop.f32.mrf.mxu0
    %v1563 = vadd.f32 0.0, %v1562
    %v1564 = vpop.f32.mrf.mxu0
    %1565 = vmatprep.mubr.f32.mxu0 0.0
    %1566 = vmatmul.mubr.f32.gmra.mxu0 %v1485
    %v1567 = vpop.f32.mrf.mxu0
    %v1568 = vadd.f32 0.0, %v1567
    %v1569 = vpop.f32.mrf.mxu0
    %1570 = vdwg.mxu0
    %1571 = vmatprep.subr.mxu0 0.0
    %1572 = vmatpush1.msra.mxu0 %v845
    %1573 = vmatprep.subr.mxu0 0.0
    %1574 = vmatpush1.msra.mxu0 %v839
    %1575 = vmatprep.subr.mxu0 0.0
    %1576 = vmatpush1.msra.mxu0 %v833
    %1577 = vmatprep.subr.mxu0 0.0
    %1578 = vmatpush1.msra.mxu0 %v827
    %1579 = vmatprep.subr.mxu0 0.0
    %1580 = vmatpush1.msra.mxu0 %v821
    %1581 = vmatprep.subr.mxu0 0.0
    %1582 = vmatpush1.msra.mxu0 %v815
    %1583 = vmatprep.subr.mxu0 0.0
    %1584 = vmatpush1.msra.mxu0 %v809
    %1585 = vmatprep.subr.mxu0 0.0
    %1586 = vmatpush1.msra.mxu0 %v803
    %1587 = vmatprep.subr.mxu0 0.0
    %1588 = vmatpush1.msra.mxu0 %v797
    %1589 = vmatprep.subr.mxu0 0.0
    %1590 = vmatpush1.msra.mxu0 %v791
    %1591 = vmatprep.subr.mxu0 0.0
    %1592 = vmatpush1.msra.mxu0 %v785
    %1593 = vmatprep.subr.mxu0 0.0
    %1594 = vmatpush1.msra.mxu0 %v779
    %1595 = vmatprep.subr.mxu0 0.0
    %1596 = vmatpush1.msra.mxu0 %v773
    %1597 = vmatprep.subr.mxu0 0.0
    %1598 = vmatpush1.msra.mxu0 %v767
    %1599 = vmatprep.subr.mxu0 0.0
    %1600 = vmatpush1.msra.mxu0 %v761
    %1601 = vmatprep.subr.mxu0 0.0
    %1602 = vmatpush1.msra.mxu0 %v755
    %1603 = vmatprep.subr.mxu0 0.0
    %1604 = vmatpush2.msra.mxu0 0.0
    %1605 = vmatprep.subr.mxu0 0.0
    %1606 = vmatpush2.msra.mxu0 0.0
    %1607 = vmatprep.subr.mxu0 0.0
    %1608 = vmatpush2.msra.mxu0 0.0
    %1609 = vmatprep.subr.mxu0 0.0
    %1610 = vmatpush2.msra.mxu0 0.0
    %1611 = vmatprep.subr.mxu0 0.0
    %1612 = vmatpush2.msra.mxu0 0.0
    %1613 = vmatprep.subr.mxu0 0.0
    %1614 = vmatpush2.msra.mxu0 0.0
    %1615 = vmatprep.subr.mxu0 0.0
    %1616 = vmatpush2.msra.mxu0 0.0
    %1617 = vmatprep.subr.mxu0 0.0
    %1618 = vmatpush2.msra.mxu0 0.0
    %1619 = vmatprep.subr.mxu0 0.0
    %1620 = vmatpush2.msra.mxu0 0.0
    %1621 = vmatprep.subr.mxu0 0.0
    %1622 = vmatpush2.msra.mxu0 0.0
    %1623 = vmatprep.subr.mxu0 0.0
    %1624 = vmatpush2.msra.mxu0 0.0
    %1625 = vmatprep.subr.mxu0 0.0
    %1626 = vmatpush2.msra.mxu0 0.0
    %1627 = vmatprep.subr.mxu0 0.0
    %1628 = vmatpush2.msra.mxu0 0.0
    %1629 = vmatprep.subr.mxu0 0.0
    %1630 = vmatpush2.msra.mxu0 0.0
    %1631 = vmatprep.subr.mxu0 0.0
    %1632 = vmatpush2.msra.mxu0 0.0
    %1633 = vmatprep.subr.mxu0 0.0
    %1634 = vmatpush2.msra.mxu0 0.0
    %1635 = vmatprep.mubr.f32.mxu0 0.0
    %1636 = vmatmul.mubr.f32.gmra.mxu0 %v1477
    %v1637 = vpop.f32.mrf.mxu0
    %v1638 = vadd.f32 %v1553, %v1637
    %v1639 = vpop.f32.mrf.mxu0
    %1640 = vmatprep.mubr.f32.mxu0 0.0
    %1641 = vmatmul.mubr.f32.gmra.mxu0 %v1478
    %v1642 = vpop.f32.mrf.mxu0
    %v1643 = vadd.f32 %v1558, %v1642
    %v1644 = vpop.f32.mrf.mxu0
    %1645 = vmatprep.mubr.f32.mxu0 0.0
    %1646 = vmatmul.mubr.f32.gmra.mxu0 %v1479
    %v1647 = vpop.f32.mrf.mxu0
    %v1648 = vadd.f32 %v1563, %v1647
    %v1649 = vpop.f32.mrf.mxu0
    %1650 = vmatprep.mubr.f32.mxu0 0.0
    %1651 = vmatmul.mubr.f32.gmra.mxu0 %v1480
    %v1652 = vpop.f32.mrf.mxu0
    %v1653 = vadd.f32 %v1568, %v1652
    %v1654 = vpop.f32.mrf.mxu0
    %1655 = vdwg.mxu0
    %s1656 = scalar_lea.vmem %s11, 64
    %v1657 = vld [vmem:[%s1656] sm:$0xff]
    %v1658 = vld [vmem:[%s1656 + $0x8] sm:$0xff]
    %v1659 = vld [vmem:[%s1656 + $0x10] sm:$0xff]
    %v1660 = vld [vmem:[%s1656 + $0x18] sm:$0xff]
    %1661 = vmatprep.subr.mxu0 0.0
    %1662 = vmatpush1.msra.mxu0 %v1006
    %1663 = vmatprep.subr.mxu0 0.0
    %1664 = vmatpush1.msra.mxu0 %v1000
    %1665 = vmatprep.subr.mxu0 0.0
    %1666 = vmatpush1.msra.mxu0 %v994
    %1667 = vmatprep.subr.mxu0 0.0
    %1668 = vmatpush1.msra.mxu0 %v988
    %1669 = vmatprep.subr.mxu0 0.0
    %1670 = vmatpush1.msra.mxu0 %v982
    %1671 = vmatprep.subr.mxu0 0.0
    %1672 = vmatpush1.msra.mxu0 %v976
    %1673 = vmatprep.subr.mxu0 0.0
    %1674 = vmatpush1.msra.mxu0 %v970
    %1675 = vmatprep.subr.mxu0 0.0
    %1676 = vmatpush1.msra.mxu0 %v964
    %1677 = vmatprep.subr.mxu0 0.0
    %1678 = vmatpush1.msra.mxu0 %v958
    %1679 = vmatprep.subr.mxu0 0.0
    %1680 = vmatpush1.msra.mxu0 %v952
    %1681 = vmatprep.subr.mxu0 0.0
    %1682 = vmatpush1.msra.mxu0 %v946
    %1683 = vmatprep.subr.mxu0 0.0
    %1684 = vmatpush1.msra.mxu0 %v940
    %1685 = vmatprep.subr.mxu0 0.0
    %1686 = vmatpush1.msra.mxu0 %v934
    %1687 = vmatprep.subr.mxu0 0.0
    %1688 = vmatpush1.msra.mxu0 %v928
    %1689 = vmatprep.subr.mxu0 0.0
    %1690 = vmatpush1.msra.mxu0 %v922
    %1691 = vmatprep.subr.mxu0 0.0
    %1692 = vmatpush1.msra.mxu0 %v916
    %1693 = vmatprep.subr.mxu0 0.0
    %1694 = vmatpush2.msra.mxu0 0.0
    %1695 = vmatprep.subr.mxu0 0.0
    %1696 = vmatpush2.msra.mxu0 0.0
    %1697 = vmatprep.subr.mxu0 0.0
    %1698 = vmatpush2.msra.mxu0 0.0
    %1699 = vmatprep.subr.mxu0 0.0
    %1700 = vmatpush2.msra.mxu0 0.0
    %1701 = vmatprep.subr.mxu0 0.0
    %1702 = vmatpush2.msra.mxu0 0.0
    %1703 = vmatprep.subr.mxu0 0.0
    %1704 = vmatpush2.msra.mxu0 0.0
    %1705 = vmatprep.subr.mxu0 0.0
    %1706 = vmatpush2.msra.mxu0 0.0
    %1707 = vmatprep.subr.mxu0 0.0
    %1708 = vmatpush2.msra.mxu0 0.0
    %1709 = vmatprep.subr.mxu0 0.0
    %1710 = vmatpush2.msra.mxu0 0.0
    %1711 = vmatprep.subr.mxu0 0.0
    %1712 = vmatpush2.msra.mxu0 0.0
    %1713 = vmatprep.subr.mxu0 0.0
    %1714 = vmatpush2.msra.mxu0 0.0
    %1715 = vmatprep.subr.mxu0 0.0
    %1716 = vmatpush2.msra.mxu0 0.0
    %1717 = vmatprep.subr.mxu0 0.0
    %1718 = vmatpush2.msra.mxu0 0.0
    %1719 = vmatprep.subr.mxu0 0.0
    %1720 = vmatpush2.msra.mxu0 0.0
    %1721 = vmatprep.subr.mxu0 0.0
    %1722 = vmatpush2.msra.mxu0 0.0
    %1723 = vmatprep.subr.mxu0 0.0
    %1724 = vmatpush2.msra.mxu0 0.0
    %1725 = vmatprep.mubr.f32.mxu0 0.0
    %1726 = vmatmul.mubr.f32.gmra.mxu0 %v1657
    %v1727 = vpop.f32.mrf.mxu0
    %v1728 = vadd.f32 0.0, %v1727
    %v1729 = vpop.f32.mrf.mxu0
    %1730 = vmatprep.mubr.f32.mxu0 0.0
    %1731 = vmatmul.mubr.f32.gmra.mxu0 %v1658
    %v1732 = vpop.f32.mrf.mxu0
    %v1733 = vadd.f32 0.0, %v1732
    %v1734 = vpop.f32.mrf.mxu0
    %1735 = vmatprep.mubr.f32.mxu0 0.0
    %1736 = vmatmul.mubr.f32.gmra.mxu0 %v1659
    %v1737 = vpop.f32.mrf.mxu0
    %v1738 = vadd.f32 0.0, %v1737
    %v1739 = vpop.f32.mrf.mxu0
    %1740 = vmatprep.mubr.f32.mxu0 0.0
    %1741 = vmatmul.mubr.f32.gmra.mxu0 %v1660
    %v1742 = vpop.f32.mrf.mxu0
    %v1743 = vadd.f32 0.0, %v1742
    %v1744 = vpop.f32.mrf.mxu0
    %1745 = vdwg.mxu0
    %v1746 = vadd.f32 %v1638, %v1728
    %v1747 = vadd.f32 %v1643, %v1733
    %v1748 = vadd.f32 %v1648, %v1738
    %v1749 = vadd.f32 %v1653, %v1743
    %s1750 = scalar_lea.vmem %s11, 96
    %v1751 = vld [vmem:[%s1750] sm:$0xff]
    %v1752 = vld [vmem:[%s1750 + $0x8] sm:$0xff]
    %v1753 = vld [vmem:[%s1750 + $0x10] sm:$0xff]
    %v1754 = vld [vmem:[%s1750 + $0x18] sm:$0xff]
    %1755 = vmatprep.subr.mxu0 0.0
    %1756 = vmatpush1.msra.mxu0 %v1008
    %1757 = vmatprep.subr.mxu0 0.0
    %1758 = vmatpush1.msra.mxu0 %v1002
    %1759 = vmatprep.subr.mxu0 0.0
    %1760 = vmatpush1.msra.mxu0 %v996
    %1761 = vmatprep.subr.mxu0 0.0
    %1762 = vmatpush1.msra.mxu0 %v990
    %1763 = vmatprep.subr.mxu0 0.0
    %1764 = vmatpush1.msra.mxu0 %v984
    %1765 = vmatprep.subr.mxu0 0.0
    %1766 = vmatpush1.msra.mxu0 %v978
    %1767 = vmatprep.subr.mxu0 0.0
    %1768 = vmatpush1.msra.mxu0 %v972
    %1769 = vmatprep.subr.mxu0 0.0
    %1770 = vmatpush1.msra.mxu0 %v966
    %1771 = vmatprep.subr.mxu0 0.0
    %1772 = vmatpush1.msra.mxu0 %v960
    %1773 = vmatprep.subr.mxu0 0.0
    %1774 = vmatpush1.msra.mxu0 %v954
    %1775 = vmatprep.subr.mxu0 0.0
    %1776 = vmatpush1.msra.mxu0 %v948
    %1777 = vmatprep.subr.mxu0 0.0
    %1778 = vmatpush1.msra.mxu0 %v942
    %1779 = vmatprep.subr.mxu0 0.0
    %1780 = vmatpush1.msra.mxu0 %v936
    %1781 = vmatprep.subr.mxu0 0.0
    %1782 = vmatpush1.msra.mxu0 %v930
    %1783 = vmatprep.subr.mxu0 0.0
    %1784 = vmatpush1.msra.mxu0 %v924
    %1785 = vmatprep.subr.mxu0 0.0
    %1786 = vmatpush1.msra.mxu0 %v918
    %1787 = vmatprep.subr.mxu0 0.0
    %1788 = vmatpush2.msra.mxu0 0.0
    %1789 = vmatprep.subr.mxu0 0.0
    %1790 = vmatpush2.msra.mxu0 0.0
    %1791 = vmatprep.subr.mxu0 0.0
    %1792 = vmatpush2.msra.mxu0 0.0
    %1793 = vmatprep.subr.mxu0 0.0
    %1794 = vmatpush2.msra.mxu0 0.0
    %1795 = vmatprep.subr.mxu0 0.0
    %1796 = vmatpush2.msra.mxu0 0.0
    %1797 = vmatprep.subr.mxu0 0.0
    %1798 = vmatpush2.msra.mxu0 0.0
    %1799 = vmatprep.subr.mxu0 0.0
    %1800 = vmatpush2.msra.mxu0 0.0
    %1801 = vmatprep.subr.mxu0 0.0
    %1802 = vmatpush2.msra.mxu0 0.0
    %1803 = vmatprep.subr.mxu0 0.0
    %1804 = vmatpush2.msra.mxu0 0.0
    %1805 = vmatprep.subr.mxu0 0.0
    %1806 = vmatpush2.msra.mxu0 0.0
    %1807 = vmatprep.subr.mxu0 0.0
    %1808 = vmatpush2.msra.mxu0 0.0
    %1809 = vmatprep.subr.mxu0 0.0
    %1810 = vmatpush2.msra.mxu0 0.0
    %1811 = vmatprep.subr.mxu0 0.0
    %1812 = vmatpush2.msra.mxu0 0.0
    %1813 = vmatprep.subr.mxu0 0.0
    %1814 = vmatpush2.msra.mxu0 0.0
    %1815 = vmatprep.subr.mxu0 0.0
    %1816 = vmatpush2.msra.mxu0 0.0
    %1817 = vmatprep.subr.mxu0 0.0
    %1818 = vmatpush2.msra.mxu0 0.0
    %1819 = vmatprep.mubr.f32.mxu0 0.0
    %1820 = vmatmul.mubr.f32.gmra.mxu0 %v1751
    %v1821 = vpop.f32.mrf.mxu0
    %v1822 = vadd.f32 0.0, %v1821
    %v1823 = vpop.f32.mrf.mxu0
    %1824 = vmatprep.mubr.f32.mxu0 0.0
    %1825 = vmatmul.mubr.f32.gmra.mxu0 %v1752
    %v1826 = vpop.f32.mrf.mxu0
    %v1827 = vadd.f32 0.0, %v1826
    %v1828 = vpop.f32.mrf.mxu0
    %1829 = vmatprep.mubr.f32.mxu0 0.0
    %1830 = vmatmul.mubr.f32.gmra.mxu0 %v1753
    %v1831 = vpop.f32.mrf.mxu0
    %v1832 = vadd.f32 0.0, %v1831
    %v1833 = vpop.f32.mrf.mxu0
    %1834 = vmatprep.mubr.f32.mxu0 0.0
    %1835 = vmatmul.mubr.f32.gmra.mxu0 %v1754
    %v1836 = vpop.f32.mrf.mxu0
    %v1837 = vadd.f32 0.0, %v1836
    %v1838 = vpop.f32.mrf.mxu0
    %1839 = vdwg.mxu0
    %v1840 = vadd.f32 %v1746, %v1822
    %v1841 = vadd.f32 %v1747, %v1827
    %v1842 = vadd.f32 %v1748, %v1832
    %v1843 = vadd.f32 %v1749, %v1837
    %s1844 = scalar_lea.vmem %s11, 128
    %v1845 = vld [vmem:[%s1844] sm:$0xff]
    %v1846 = vld [vmem:[%s1844 + $0x8] sm:$0xff]
    %v1847 = vld [vmem:[%s1844 + $0x10] sm:$0xff]
    %v1848 = vld [vmem:[%s1844 + $0x18] sm:$0xff]
    %1849 = vmatprep.subr.mxu0 0.0
    %1850 = vmatpush1.msra.mxu0 %v1167
    %1851 = vmatprep.subr.mxu0 0.0
    %1852 = vmatpush1.msra.mxu0 %v1161
    %1853 = vmatprep.subr.mxu0 0.0
    %1854 = vmatpush1.msra.mxu0 %v1155
    %1855 = vmatprep.subr.mxu0 0.0
    %1856 = vmatpush1.msra.mxu0 %v1149
    %1857 = vmatprep.subr.mxu0 0.0
    %1858 = vmatpush1.msra.mxu0 %v1143
    %1859 = vmatprep.subr.mxu0 0.0
    %1860 = vmatpush1.msra.mxu0 %v1137
    %1861 = vmatprep.subr.mxu0 0.0
    %1862 = vmatpush1.msra.mxu0 %v1131
    %1863 = vmatprep.subr.mxu0 0.0
    %1864 = vmatpush1.msra.mxu0 %v1125
    %1865 = vmatprep.subr.mxu0 0.0
    %1866 = vmatpush1.msra.mxu0 %v1119
    %1867 = vmatprep.subr.mxu0 0.0
    %1868 = vmatpush1.msra.mxu0 %v1113
    %1869 = vmatprep.subr.mxu0 0.0
    %1870 = vmatpush1.msra.mxu0 %v1107
    %1871 = vmatprep.subr.mxu0 0.0
    %1872 = vmatpush1.msra.mxu0 %v1101
    %1873 = vmatprep.subr.mxu0 0.0
    %1874 = vmatpush1.msra.mxu0 %v1095
    %1875 = vmatprep.subr.mxu0 0.0
    %1876 = vmatpush1.msra.mxu0 %v1089
    %1877 = vmatprep.subr.mxu0 0.0
    %1878 = vmatpush1.msra.mxu0 %v1083
    %1879 = vmatprep.subr.mxu0 0.0
    %1880 = vmatpush1.msra.mxu0 %v1077
    %1881 = vmatprep.subr.mxu0 0.0
    %1882 = vmatpush2.msra.mxu0 0.0
    %1883 = vmatprep.subr.mxu0 0.0
    %1884 = vmatpush2.msra.mxu0 0.0
    %1885 = vmatprep.subr.mxu0 0.0
    %1886 = vmatpush2.msra.mxu0 0.0
    %1887 = vmatprep.subr.mxu0 0.0
    %1888 = vmatpush2.msra.mxu0 0.0
    %1889 = vmatprep.subr.mxu0 0.0
    %1890 = vmatpush2.msra.mxu0 0.0
    %1891 = vmatprep.subr.mxu0 0.0
    %1892 = vmatpush2.msra.mxu0 0.0
    %1893 = vmatprep.subr.mxu0 0.0
    %1894 = vmatpush2.msra.mxu0 0.0
    %1895 = vmatprep.subr.mxu0 0.0
    %1896 = vmatpush2.msra.mxu0 0.0
    %1897 = vmatprep.subr.mxu0 0.0
    %1898 = vmatpush2.msra.mxu0 0.0
    %1899 = vmatprep.subr.mxu0 0.0
    %1900 = vmatpush2.msra.mxu0 0.0
    %1901 = vmatprep.subr.mxu0 0.0
    %1902 = vmatpush2.msra.mxu0 0.0
    %1903 = vmatprep.subr.mxu0 0.0
    %1904 = vmatpush2.msra.mxu0 0.0
    %1905 = vmatprep.subr.mxu0 0.0
    %1906 = vmatpush2.msra.mxu0 0.0
    %1907 = vmatprep.subr.mxu0 0.0
    %1908 = vmatpush2.msra.mxu0 0.0
    %1909 = vmatprep.subr.mxu0 0.0
    %1910 = vmatpush2.msra.mxu0 0.0
    %1911 = vmatprep.subr.mxu0 0.0
    %1912 = vmatpush2.msra.mxu0 0.0
    %1913 = vmatprep.mubr.f32.mxu0 0.0
    %1914 = vmatmul.mubr.f32.gmra.mxu0 %v1845
    %v1915 = vpop.f32.mrf.mxu0
    %v1916 = vadd.f32 0.0, %v1915
    %v1917 = vpop.f32.mrf.mxu0
    %1918 = vmatprep.mubr.f32.mxu0 0.0
    %1919 = vmatmul.mubr.f32.gmra.mxu0 %v1846
    %v1920 = vpop.f32.mrf.mxu0
    %v1921 = vadd.f32 0.0, %v1920
    %v1922 = vpop.f32.mrf.mxu0
    %1923 = vmatprep.mubr.f32.mxu0 0.0
    %1924 = vmatmul.mubr.f32.gmra.mxu0 %v1847
    %v1925 = vpop.f32.mrf.mxu0
    %v1926 = vadd.f32 0.0, %v1925
    %v1927 = vpop.f32.mrf.mxu0
    %1928 = vmatprep.mubr.f32.mxu0 0.0
    %1929 = vmatmul.mubr.f32.gmra.mxu0 %v1848
    %v1930 = vpop.f32.mrf.mxu0
    %v1931 = vadd.f32 0.0, %v1930
    %v1932 = vpop.f32.mrf.mxu0
    %1933 = vdwg.mxu0
    %v1934 = vadd.f32 %v1840, %v1916
    %v1935 = vadd.f32 %v1841, %v1921
    %v1936 = vadd.f32 %v1842, %v1926
    %v1937 = vadd.f32 %v1843, %v1931
    %s1938 = scalar_lea.vmem %s11, 160
    %v1939 = vld [vmem:[%s1938] sm:$0xff]
    %v1940 = vld [vmem:[%s1938 + $0x8] sm:$0xff]
    %v1941 = vld [vmem:[%s1938 + $0x10] sm:$0xff]
    %v1942 = vld [vmem:[%s1938 + $0x18] sm:$0xff]
    %1943 = vmatprep.subr.mxu0 0.0
    %1944 = vmatpush1.msra.mxu0 %v1169
    %1945 = vmatprep.subr.mxu0 0.0
    %1946 = vmatpush1.msra.mxu0 %v1163
    %1947 = vmatprep.subr.mxu0 0.0
    %1948 = vmatpush1.msra.mxu0 %v1157
    %1949 = vmatprep.subr.mxu0 0.0
    %1950 = vmatpush1.msra.mxu0 %v1151
    %1951 = vmatprep.subr.mxu0 0.0
    %1952 = vmatpush1.msra.mxu0 %v1145
    %1953 = vmatprep.subr.mxu0 0.0
    %1954 = vmatpush1.msra.mxu0 %v1139
    %1955 = vmatprep.subr.mxu0 0.0
    %1956 = vmatpush1.msra.mxu0 %v1133
    %1957 = vmatprep.subr.mxu0 0.0
    %1958 = vmatpush1.msra.mxu0 %v1127
    %1959 = vmatprep.subr.mxu0 0.0
    %1960 = vmatpush1.msra.mxu0 %v1121
    %1961 = vmatprep.subr.mxu0 0.0
    %1962 = vmatpush1.msra.mxu0 %v1115
    %1963 = vmatprep.subr.mxu0 0.0
    %1964 = vmatpush1.msra.mxu0 %v1109
    %1965 = vmatprep.subr.mxu0 0.0
    %1966 = vmatpush1.msra.mxu0 %v1103
    %1967 = vmatprep.subr.mxu0 0.0
    %1968 = vmatpush1.msra.mxu0 %v1097
    %1969 = vmatprep.subr.mxu0 0.0
    %1970 = vmatpush1.msra.mxu0 %v1091
    %1971 = vmatprep.subr.mxu0 0.0
    %1972 = vmatpush1.msra.mxu0 %v1085
    %1973 = vmatprep.subr.mxu0 0.0
    %1974 = vmatpush1.msra.mxu0 %v1079
    %1975 = vmatprep.subr.mxu0 0.0
    %1976 = vmatpush2.msra.mxu0 0.0
    %1977 = vmatprep.subr.mxu0 0.0
    %1978 = vmatpush2.msra.mxu0 0.0
    %1979 = vmatprep.subr.mxu0 0.0
    %1980 = vmatpush2.msra.mxu0 0.0
    %1981 = vmatprep.subr.mxu0 0.0
    %1982 = vmatpush2.msra.mxu0 0.0
    %1983 = vmatprep.subr.mxu0 0.0
    %1984 = vmatpush2.msra.mxu0 0.0
    %1985 = vmatprep.subr.mxu0 0.0
    %1986 = vmatpush2.msra.mxu0 0.0
    %1987 = vmatprep.subr.mxu0 0.0
    %1988 = vmatpush2.msra.mxu0 0.0
    %1989 = vmatprep.subr.mxu0 0.0
    %1990 = vmatpush2.msra.mxu0 0.0
    %1991 = vmatprep.subr.mxu0 0.0
    %1992 = vmatpush2.msra.mxu0 0.0
    %1993 = vmatprep.subr.mxu0 0.0
    %1994 = vmatpush2.msra.mxu0 0.0
    %1995 = vmatprep.subr.mxu0 0.0
    %1996 = vmatpush2.msra.mxu0 0.0
    %1997 = vmatprep.subr.mxu0 0.0
    %1998 = vmatpush2.msra.mxu0 0.0
    %1999 = vmatprep.subr.mxu0 0.0
    %2000 = vmatpush2.msra.mxu0 0.0
    %2001 = vmatprep.subr.mxu0 0.0
    %2002 = vmatpush2.msra.mxu0 0.0
    %2003 = vmatprep.subr.mxu0 0.0
    %2004 = vmatpush2.msra.mxu0 0.0
    %2005 = vmatprep.subr.mxu0 0.0
    %2006 = vmatpush2.msra.mxu0 0.0
    %2007 = vmatprep.mubr.f32.mxu0 0.0
    %2008 = vmatmul.mubr.f32.gmra.mxu0 %v1939
    %v2009 = vpop.f32.mrf.mxu0
    %v2010 = vadd.f32 0.0, %v2009
    %v2011 = vpop.f32.mrf.mxu0
    %2012 = vmatprep.mubr.f32.mxu0 0.0
    %2013 = vmatmul.mubr.f32.gmra.mxu0 %v1940
    %v2014 = vpop.f32.mrf.mxu0
    %v2015 = vadd.f32 0.0, %v2014
    %v2016 = vpop.f32.mrf.mxu0
    %2017 = vmatprep.mubr.f32.mxu0 0.0
    %2018 = vmatmul.mubr.f32.gmra.mxu0 %v1941
    %v2019 = vpop.f32.mrf.mxu0
    %v2020 = vadd.f32 0.0, %v2019
    %v2021 = vpop.f32.mrf.mxu0
    %2022 = vmatprep.mubr.f32.mxu0 0.0
    %2023 = vmatmul.mubr.f32.gmra.mxu0 %v1942
    %v2024 = vpop.f32.mrf.mxu0
    %v2025 = vadd.f32 0.0, %v2024
    %v2026 = vpop.f32.mrf.mxu0
    %2027 = vdwg.mxu0
    %v2028 = vadd.f32 %v1934, %v2010
    %v2029 = vadd.f32 %v1935, %v2015
    %v2030 = vadd.f32 %v1936, %v2020
    %v2031 = vadd.f32 %v1937, %v2025
    %s2032 = scalar_lea.vmem %s11, 192
    %v2033 = vld [vmem:[%s2032] sm:$0xff]
    %v2034 = vld [vmem:[%s2032 + $0x8] sm:$0xff]
    %v2035 = vld [vmem:[%s2032 + $0x10] sm:$0xff]
    %v2036 = vld [vmem:[%s2032 + $0x18] sm:$0xff]
    %2037 = vmatprep.subr.mxu0 0.0
    %2038 = vmatpush1.msra.mxu0 %v1328
    %2039 = vmatprep.subr.mxu0 0.0
    %2040 = vmatpush1.msra.mxu0 %v1322
    %2041 = vmatprep.subr.mxu0 0.0
    %2042 = vmatpush1.msra.mxu0 %v1316
    %2043 = vmatprep.subr.mxu0 0.0
    %2044 = vmatpush1.msra.mxu0 %v1310
    %2045 = vmatprep.subr.mxu0 0.0
    %2046 = vmatpush1.msra.mxu0 %v1304
    %2047 = vmatprep.subr.mxu0 0.0
    %2048 = vmatpush1.msra.mxu0 %v1298
    %2049 = vmatprep.subr.mxu0 0.0
    %2050 = vmatpush1.msra.mxu0 %v1292
    %2051 = vmatprep.subr.mxu0 0.0
    %2052 = vmatpush1.msra.mxu0 %v1286
    %2053 = vmatprep.subr.mxu0 0.0
    %2054 = vmatpush1.msra.mxu0 %v1280
    %2055 = vmatprep.subr.mxu0 0.0
    %2056 = vmatpush1.msra.mxu0 %v1274
    %2057 = vmatprep.subr.mxu0 0.0
    %2058 = vmatpush1.msra.mxu0 %v1268
    %2059 = vmatprep.subr.mxu0 0.0
    %2060 = vmatpush1.msra.mxu0 %v1262
    %2061 = vmatprep.subr.mxu0 0.0
    %2062 = vmatpush1.msra.mxu0 %v1256
    %2063 = vmatprep.subr.mxu0 0.0
    %2064 = vmatpush1.msra.mxu0 %v1250
    %2065 = vmatprep.subr.mxu0 0.0
    %2066 = vmatpush1.msra.mxu0 %v1244
    %2067 = vmatprep.subr.mxu0 0.0
    %2068 = vmatpush1.msra.mxu0 %v1238
    %2069 = vmatprep.subr.mxu0 0.0
    %2070 = vmatpush2.msra.mxu0 0.0
    %2071 = vmatprep.subr.mxu0 0.0
    %2072 = vmatpush2.msra.mxu0 0.0
    %2073 = vmatprep.subr.mxu0 0.0
    %2074 = vmatpush2.msra.mxu0 0.0
    %2075 = vmatprep.subr.mxu0 0.0
    %2076 = vmatpush2.msra.mxu0 0.0
    %2077 = vmatprep.subr.mxu0 0.0
    %2078 = vmatpush2.msra.mxu0 0.0
    %2079 = vmatprep.subr.mxu0 0.0
    %2080 = vmatpush2.msra.mxu0 0.0
    %2081 = vmatprep.subr.mxu0 0.0
    %2082 = vmatpush2.msra.mxu0 0.0
    %2083 = vmatprep.subr.mxu0 0.0
    %2084 = vmatpush2.msra.mxu0 0.0
    %2085 = vmatprep.subr.mxu0 0.0
    %2086 = vmatpush2.msra.mxu0 0.0
    %2087 = vmatprep.subr.mxu0 0.0
    %2088 = vmatpush2.msra.mxu0 0.0
    %2089 = vmatprep.subr.mxu0 0.0
    %2090 = vmatpush2.msra.mxu0 0.0
    %2091 = vmatprep.subr.mxu0 0.0
    %2092 = vmatpush2.msra.mxu0 0.0
    %2093 = vmatprep.subr.mxu0 0.0
    %2094 = vmatpush2.msra.mxu0 0.0
    %2095 = vmatprep.subr.mxu0 0.0
    %2096 = vmatpush2.msra.mxu0 0.0
    %2097 = vmatprep.subr.mxu0 0.0
    %2098 = vmatpush2.msra.mxu0 0.0
    %2099 = vmatprep.subr.mxu0 0.0
    %2100 = vmatpush2.msra.mxu0 0.0
    %2101 = vmatprep.mubr.f32.mxu0 0.0
    %2102 = vmatmul.mubr.f32.gmra.mxu0 %v2033
    %v2103 = vpop.f32.mrf.mxu0
    %v2104 = vadd.f32 0.0, %v2103
    %v2105 = vpop.f32.mrf.mxu0
    %2106 = vmatprep.mubr.f32.mxu0 0.0
    %2107 = vmatmul.mubr.f32.gmra.mxu0 %v2034
    %v2108 = vpop.f32.mrf.mxu0
    %v2109 = vadd.f32 0.0, %v2108
    %v2110 = vpop.f32.mrf.mxu0
    %2111 = vmatprep.mubr.f32.mxu0 0.0
    %2112 = vmatmul.mubr.f32.gmra.mxu0 %v2035
    %v2113 = vpop.f32.mrf.mxu0
    %v2114 = vadd.f32 0.0, %v2113
    %v2115 = vpop.f32.mrf.mxu0
    %2116 = vmatprep.mubr.f32.mxu0 0.0
    %2117 = vmatmul.mubr.f32.gmra.mxu0 %v2036
    %v2118 = vpop.f32.mrf.mxu0
    %v2119 = vadd.f32 0.0, %v2118
    %v2120 = vpop.f32.mrf.mxu0
    %2121 = vdwg.mxu0
    %v2122 = vadd.f32 %v2028, %v2104
    %v2123 = vadd.f32 %v2029, %v2109
    %v2124 = vadd.f32 %v2030, %v2114
    %v2125 = vadd.f32 %v2031, %v2119
    %s2126 = scalar_lea.vmem %s11, 224
    %v2127 = vld [vmem:[%s2126] sm:$0xff]
    %v2128 = vld [vmem:[%s2126 + $0x8] sm:$0xff]
    %v2129 = vld [vmem:[%s2126 + $0x10] sm:$0xff]
    %v2130 = vld [vmem:[%s2126 + $0x18] sm:$0xff]
    %2131 = vmatprep.subr.mxu0 0.0
    %2132 = vmatpush1.msra.mxu0 %v1330
    %2133 = vmatprep.subr.mxu0 0.0
    %2134 = vmatpush1.msra.mxu0 %v1324
    %2135 = vmatprep.subr.mxu0 0.0
    %2136 = vmatpush1.msra.mxu0 %v1318
    %2137 = vmatprep.subr.mxu0 0.0
    %2138 = vmatpush1.msra.mxu0 %v1312
    %2139 = vmatprep.subr.mxu0 0.0
    %2140 = vmatpush1.msra.mxu0 %v1306
    %2141 = vmatprep.subr.mxu0 0.0
    %2142 = vmatpush1.msra.mxu0 %v1300
    %2143 = vmatprep.subr.mxu0 0.0
    %2144 = vmatpush1.msra.mxu0 %v1294
    %2145 = vmatprep.subr.mxu0 0.0
    %2146 = vmatpush1.msra.mxu0 %v1288
    %2147 = vmatprep.subr.mxu0 0.0
    %2148 = vmatpush1.msra.mxu0 %v1282
    %2149 = vmatprep.subr.mxu0 0.0
    %2150 = vmatpush1.msra.mxu0 %v1276
    %2151 = vmatprep.subr.mxu0 0.0
    %2152 = vmatpush1.msra.mxu0 %v1270
    %2153 = vmatprep.subr.mxu0 0.0
    %2154 = vmatpush1.msra.mxu0 %v1264
    %2155 = vmatprep.subr.mxu0 0.0
    %2156 = vmatpush1.msra.mxu0 %v1258
    %2157 = vmatprep.subr.mxu0 0.0
    %2158 = vmatpush1.msra.mxu0 %v1252
    %2159 = vmatprep.subr.mxu0 0.0
    %2160 = vmatpush1.msra.mxu0 %v1246
    %2161 = vmatprep.subr.mxu0 0.0
    %2162 = vmatpush1.msra.mxu0 %v1240
    %2163 = vmatprep.subr.mxu0 0.0
    %2164 = vmatpush2.msra.mxu0 0.0
    %2165 = vmatprep.subr.mxu0 0.0
    %2166 = vmatpush2.msra.mxu0 0.0
    %2167 = vmatprep.subr.mxu0 0.0
    %2168 = vmatpush2.msra.mxu0 0.0
    %2169 = vmatprep.subr.mxu0 0.0
    %2170 = vmatpush2.msra.mxu0 0.0
    %2171 = vmatprep.subr.mxu0 0.0
    %2172 = vmatpush2.msra.mxu0 0.0
    %2173 = vmatprep.subr.mxu0 0.0
    %2174 = vmatpush2.msra.mxu0 0.0
    %2175 = vmatprep.subr.mxu0 0.0
    %2176 = vmatpush2.msra.mxu0 0.0
    %2177 = vmatprep.subr.mxu0 0.0
    %2178 = vmatpush2.msra.mxu0 0.0
    %2179 = vmatprep.subr.mxu0 0.0
    %2180 = vmatpush2.msra.mxu0 0.0
    %2181 = vmatprep.subr.mxu0 0.0
    %2182 = vmatpush2.msra.mxu0 0.0
    %2183 = vmatprep.subr.mxu0 0.0
    %2184 = vmatpush2.msra.mxu0 0.0
    %2185 = vmatprep.subr.mxu0 0.0
    %2186 = vmatpush2.msra.mxu0 0.0
    %2187 = vmatprep.subr.mxu0 0.0
    %2188 = vmatpush2.msra.mxu0 0.0
    %2189 = vmatprep.subr.mxu0 0.0
    %2190 = vmatpush2.msra.mxu0 0.0
    %2191 = vmatprep.subr.mxu0 0.0
    %2192 = vmatpush2.msra.mxu0 0.0
    %2193 = vmatprep.subr.mxu0 0.0
    %2194 = vmatpush2.msra.mxu0 0.0
    %2195 = vmatprep.mubr.f32.mxu0 0.0
    %2196 = vmatmul.mubr.f32.gmra.mxu0 %v2127
    %v2197 = vpop.f32.mrf.mxu0
    %v2198 = vadd.f32 0.0, %v2197
    %v2199 = vpop.f32.mrf.mxu0
    %2200 = vmatprep.mubr.f32.mxu0 0.0
    %2201 = vmatmul.mubr.f32.gmra.mxu0 %v2128
    %v2202 = vpop.f32.mrf.mxu0
    %v2203 = vadd.f32 0.0, %v2202
    %v2204 = vpop.f32.mrf.mxu0
    %2205 = vmatprep.mubr.f32.mxu0 0.0
    %2206 = vmatmul.mubr.f32.gmra.mxu0 %v2129
    %v2207 = vpop.f32.mrf.mxu0
    %v2208 = vadd.f32 0.0, %v2207
    %v2209 = vpop.f32.mrf.mxu0
    %2210 = vmatprep.mubr.f32.mxu0 0.0
    %2211 = vmatmul.mubr.f32.gmra.mxu0 %v2130
    %v2212 = vpop.f32.mrf.mxu0
    %v2213 = vadd.f32 0.0, %v2212
    %v2214 = vpop.f32.mrf.mxu0
    %2215 = vdwg.mxu0
    %v2216 = vadd.f32 %v2122, %v2198
    %v2217 = vadd.f32 %v2123, %v2203
    %v2218 = vadd.f32 %v2124, %v2208
    %v2219 = vadd.f32 %v2125, %v2213
    %s2220 = scalar_lea.vmem %s11, 256
    %v2221 = vld [vmem:[%s2220] sm:$0xff]
    %v2222 = vld [vmem:[%s2220 + $0x8] sm:$0xff]
    %v2223 = vld [vmem:[%s2220 + $0x10] sm:$0xff]
    %v2224 = vld [vmem:[%s2220 + $0x18] sm:$0xff]
    %2225 = vmatprep.subr.mxu0 0.0
    %2226 = vmatpush1.msra.mxu0 %v1474
    %2227 = vmatprep.subr.mxu0 0.0
    %2228 = vmatpush1.msra.mxu0 %v1469
    %2229 = vmatprep.subr.mxu0 0.0
    %2230 = vmatpush1.msra.mxu0 %v1464
    %2231 = vmatprep.subr.mxu0 0.0
    %2232 = vmatpush1.msra.mxu0 %v1459
    %2233 = vmatprep.subr.mxu0 0.0
    %2234 = vmatpush1.msra.mxu0 %v1454
    %2235 = vmatprep.subr.mxu0 0.0
    %2236 = vmatpush1.msra.mxu0 %v1449
    %2237 = vmatprep.subr.mxu0 0.0
    %2238 = vmatpush1.msra.mxu0 %v1444
    %2239 = vmatprep.subr.mxu0 0.0
    %2240 = vmatpush1.msra.mxu0 %v1439
    %2241 = vmatprep.subr.mxu0 0.0
    %2242 = vmatpush1.msra.mxu0 %v1434
    %2243 = vmatprep.subr.mxu0 0.0
    %2244 = vmatpush1.msra.mxu0 %v1429
    %2245 = vmatprep.subr.mxu0 0.0
    %2246 = vmatpush1.msra.mxu0 %v1424
    %2247 = vmatprep.subr.mxu0 0.0
    %2248 = vmatpush1.msra.mxu0 %v1419
    %2249 = vmatprep.subr.mxu0 0.0
    %2250 = vmatpush1.msra.mxu0 %v1414
    %2251 = vmatprep.subr.mxu0 0.0
    %2252 = vmatpush1.msra.mxu0 %v1409
    %2253 = vmatprep.subr.mxu0 0.0
    %2254 = vmatpush1.msra.mxu0 %v1404
    %2255 = vmatprep.subr.mxu0 0.0
    %2256 = vmatpush1.msra.mxu0 %v1399
    %2257 = vmatprep.subr.mxu0 0.0
    %2258 = vmatpush2.msra.mxu0 0.0
    %2259 = vmatprep.subr.mxu0 0.0
    %2260 = vmatpush2.msra.mxu0 0.0
    %2261 = vmatprep.subr.mxu0 0.0
    %2262 = vmatpush2.msra.mxu0 0.0
    %2263 = vmatprep.subr.mxu0 0.0
    %2264 = vmatpush2.msra.mxu0 0.0
    %2265 = vmatprep.subr.mxu0 0.0
    %2266 = vmatpush2.msra.mxu0 0.0
    %2267 = vmatprep.subr.mxu0 0.0
    %2268 = vmatpush2.msra.mxu0 0.0
    %2269 = vmatprep.subr.mxu0 0.0
    %2270 = vmatpush2.msra.mxu0 0.0
    %2271 = vmatprep.subr.mxu0 0.0
    %2272 = vmatpush2.msra.mxu0 0.0
    %2273 = vmatprep.subr.mxu0 0.0
    %2274 = vmatpush2.msra.mxu0 0.0
    %2275 = vmatprep.subr.mxu0 0.0
    %2276 = vmatpush2.msra.mxu0 0.0
    %2277 = vmatprep.subr.mxu0 0.0
    %2278 = vmatpush2.msra.mxu0 0.0
    %2279 = vmatprep.subr.mxu0 0.0
    %2280 = vmatpush2.msra.mxu0 0.0
    %2281 = vmatprep.subr.mxu0 0.0
    %2282 = vmatpush2.msra.mxu0 0.0
    %2283 = vmatprep.subr.mxu0 0.0
    %2284 = vmatpush2.msra.mxu0 0.0
    %2285 = vmatprep.subr.mxu0 0.0
    %2286 = vmatpush2.msra.mxu0 0.0
    %2287 = vmatprep.subr.mxu0 0.0
    %2288 = vmatpush2.msra.mxu0 0.0
    %2289 = vmatprep.mubr.f32.mxu0 0.0
    %2290 = vmatmul.mubr.f32.gmra.mxu0 %v2221
    %v2291 = vpop.f32.mrf.mxu0
    %v2292 = vadd.f32 0.0, %v2291
    %v2293 = vpop.f32.mrf.mxu0
    %2294 = vmatprep.mubr.f32.mxu0 0.0
    %2295 = vmatmul.mubr.f32.gmra.mxu0 %v2222
    %v2296 = vpop.f32.mrf.mxu0
    %v2297 = vadd.f32 0.0, %v2296
    %v2298 = vpop.f32.mrf.mxu0
    %2299 = vmatprep.mubr.f32.mxu0 0.0
    %2300 = vmatmul.mubr.f32.gmra.mxu0 %v2223
    %v2301 = vpop.f32.mrf.mxu0
    %v2302 = vadd.f32 0.0, %v2301
    %v2303 = vpop.f32.mrf.mxu0
    %2304 = vmatprep.mubr.f32.mxu0 0.0
    %2305 = vmatmul.mubr.f32.gmra.mxu0 %v2224
    %v2306 = vpop.f32.mrf.mxu0
    %v2307 = vadd.f32 0.0, %v2306
    %v2308 = vpop.f32.mrf.mxu0
    %2309 = vdwg.mxu0
    %v2310 = vadd.f32 %v2216, %v2292
    %v2311 = vadd.f32 %v2217, %v2297
    %v2312 = vadd.f32 %v2218, %v2302
    %v2313 = vadd.f32 %v2219, %v2307
    %v2314 = vld [vmem:[#allocation6] sm:$0x1]
    %v2316 = vlaneseq
    %v2317 = vshrl.u32 %v2316, 7
    %v2318 = vsub.s32 0, %v2317
    %v2319 = vrot.slane %v2314, %v2318
    %v2321 = vadd.f32 %v2310, %v2319
    %v2322 = vadd.f32 %v2311, %v2319
    %v2323 = vadd.f32 %v2312, %v2319
    %v2324 = vadd.f32 %v2313, %v2319
    %v2325 = vmax.f32 %v2321, 0.0
    %v2326 = vmax.f32 %v2322, 0.0
    %v2327 = vmax.f32 %v2323, 0.0
    %v2328 = vmax.f32 %v2324, 0.0
    %v2329 = vld [vmem:[%s13] sm:$0xff]
    %v2330 = vld [vmem:[%s13 + $0x8] sm:$0xff]
    %v2331 = vld [vmem:[%s13 + $0x10] sm:$0xff]
    %v2332 = vld [vmem:[%s13 + $0x18] sm:$0xff]
    %v2333 = vld [vmem:[%s13 + $0x20] sm:$0xff]
    %v2334 = vld [vmem:[%s13 + $0x28] sm:$0xff]
    %v2335 = vld [vmem:[%s13 + $0x30] sm:$0xff]
    %v2336 = vld [vmem:[%s13 + $0x38] sm:$0xff]
    %v2337 = vld [vmem:[%s13 + $0x40] sm:$0xff]
    %v2338 = vld [vmem:[%s13 + $0x48] sm:$0xff]
    %v2339 = vld [vmem:[%s13 + $0x50] sm:$0xff]
    %v2340 = vld [vmem:[%s13 + $0x58] sm:$0xff]
    %v2341 = vld [vmem:[%s13 + $0x60] sm:$0xff]
    %v2342 = vld [vmem:[%s13 + $0x68] sm:$0xff]
    %v2343 = vld [vmem:[%s13 + $0x70] sm:$0xff]
    %v2344 = vld [vmem:[%s13 + $0x78] sm:$0xff]
    %v2345 = vld [vmem:[%s13 + $0x80] sm:$0xff]
    %v2346 = vld [vmem:[%s13 + $0x88] sm:$0xff]
    %v2347 = vld [vmem:[%s13 + $0x90] sm:$0xff]
    %v2348 = vld [vmem:[%s13 + $0x98] sm:$0xff]
    %v2349 = vld [vmem:[%s13 + $0xa0] sm:$0xff]
    %v2350 = vld [vmem:[%s13 + $0xa8] sm:$0xff]
    %v2351 = vld [vmem:[%s13 + $0xb0] sm:$0xff]
    %v2352 = vld [vmem:[%s13 + $0xb8] sm:$0xff]
    %v2353 = vld [vmem:[%s13 + $0xc0] sm:$0xff]
    %v2354 = vld [vmem:[%s13 + $0xc8] sm:$0xff]
    %v2355 = vld [vmem:[%s13 + $0xd0] sm:$0xff]
    %v2356 = vld [vmem:[%s13 + $0xd8] sm:$0xff]
    %v2357 = vld [vmem:[%s13 + $0xe0] sm:$0xff]
    %v2358 = vld [vmem:[%s13 + $0xe8] sm:$0xff]
    %v2359 = vld [vmem:[%s13 + $0xf0] sm:$0xff]
    %v2360 = vld [vmem:[%s13 + $0xf8] sm:$0xff]
    %v2361 = vld [vmem:[%s13 + $0x100] sm:$0xff]
    %v2362 = vld [vmem:[%s13 + $0x108] sm:$0xff]
    %v2363 = vld [vmem:[%s13 + $0x110] sm:$0xff]
    %v2364 = vld [vmem:[%s13 + $0x118] sm:$0xff]
    %v2365 = vld [vmem:[%s13 + $0x120] sm:$0xff]
    %v2366 = vld [vmem:[%s13 + $0x128] sm:$0xff]
    %v2367 = vld [vmem:[%s13 + $0x130] sm:$0xff]
    %v2368 = vld [vmem:[%s13 + $0x138] sm:$0xff]
    %v2369 = vld [vmem:[%s13 + $0x140] sm:$0xff]
    %v2370 = vld [vmem:[%s13 + $0x148] sm:$0xff]
    %v2371 = vld [vmem:[%s13 + $0x150] sm:$0xff]
    %v2372 = vld [vmem:[%s13 + $0x158] sm:$0xff]
    %v2373 = vld [vmem:[%s13 + $0x160] sm:$0xff]
    %v2374 = vld [vmem:[%s13 + $0x168] sm:$0xff]
    %v2375 = vld [vmem:[%s13 + $0x170] sm:$0xff]
    %v2376 = vld [vmem:[%s13 + $0x178] sm:$0xff]
    %v2377 = vld [vmem:[%s13 + $0x180] sm:$0xff]
    %v2378 = vld [vmem:[%s13 + $0x188] sm:$0xff]
    %v2379 = vld [vmem:[%s13 + $0x190] sm:$0xff]
    %v2380 = vld [vmem:[%s13 + $0x198] sm:$0xff]
    %v2381 = vld [vmem:[%s13 + $0x1a0] sm:$0xff]
    %v2382 = vld [vmem:[%s13 + $0x1a8] sm:$0xff]
    %v2383 = vld [vmem:[%s13 + $0x1b0] sm:$0xff]
    %v2384 = vld [vmem:[%s13 + $0x1b8] sm:$0xff]
    %v2385 = vld [vmem:[%s13 + $0x1c0] sm:$0xff]
    %v2386 = vld [vmem:[%s13 + $0x1c8] sm:$0xff]
    %v2387 = vld [vmem:[%s13 + $0x1d0] sm:$0xff]
    %v2388 = vld [vmem:[%s13 + $0x1d8] sm:$0xff]
    %v2389 = vld [vmem:[%s13 + $0x1e0] sm:$0xff]
    %v2390 = vld [vmem:[%s13 + $0x1e8] sm:$0xff]
    %v2391 = vld [vmem:[%s13 + $0x1f0] sm:$0xff]
    %v2392 = vld [vmem:[%s13 + $0x1f8] sm:$0xff]
    %v2393 = vld [vmem:[%s13 + $0x200] sm:$0xff]
    %v2394 = vld [vmem:[%s13 + $0x208] sm:$0xff]
    %v2395 = vld [vmem:[%s13 + $0x210] sm:$0xff]
    %v2396 = vld [vmem:[%s13 + $0x218] sm:$0xff]
    %v2397 = vld [vmem:[%s13 + $0x220] sm:$0xff]
    %v2398 = vld [vmem:[%s13 + $0x228] sm:$0xff]
    %v2399 = vld [vmem:[%s13 + $0x230] sm:$0xff]
    %v2400 = vld [vmem:[%s13 + $0x238] sm:$0xff]
    %v2401 = vld [vmem:[%s13 + $0x240] sm:$0xff]
    %v2402 = vld [vmem:[%s13 + $0x248] sm:$0xff]
    %v2403 = vld [vmem:[%s13 + $0x250] sm:$0xff]
    %v2404 = vld [vmem:[%s13 + $0x258] sm:$0xff]
    %v2405 = vld [vmem:[%s13 + $0x260] sm:$0xff]
    %v2406 = vld [vmem:[%s13 + $0x268] sm:$0xff]
    %v2407 = vld [vmem:[%s13 + $0x270] sm:$0xff]
    %v2408 = vld [vmem:[%s13 + $0x278] sm:$0xff]
    %v2409 = vld [vmem:[%s13 + $0x280] sm:$0xff]
    %v2410 = vld [vmem:[%s13 + $0x288] sm:$0xff]
    %v2411 = vld [vmem:[%s13 + $0x290] sm:$0xff]
    %v2412 = vld [vmem:[%s13 + $0x298] sm:$0xff]
    %v2413 = vld [vmem:[%s13 + $0x2a0] sm:$0xff]
    %v2414 = vld [vmem:[%s13 + $0x2a8] sm:$0xff]
    %v2415 = vld [vmem:[%s13 + $0x2b0] sm:$0xff]
    %v2416 = vld [vmem:[%s13 + $0x2b8] sm:$0xff]
    %v2417 = vld [vmem:[%s13 + $0x2c0] sm:$0xff]
    %v2418 = vld [vmem:[%s13 + $0x2c8] sm:$0xff]
    %v2419 = vld [vmem:[%s13 + $0x2d0] sm:$0xff]
    %v2420 = vld [vmem:[%s13 + $0x2d8] sm:$0xff]
    %v2421 = vld [vmem:[%s13 + $0x2e0] sm:$0xff]
    %v2422 = vld [vmem:[%s13 + $0x2e8] sm:$0xff]
    %v2423 = vld [vmem:[%s13 + $0x2f0] sm:$0xff]
    %v2424 = vld [vmem:[%s13 + $0x2f8] sm:$0xff]
    %v2425 = vld [vmem:[%s13 + $0x300] sm:$0xff]
    %v2426 = vld [vmem:[%s13 + $0x308] sm:$0xff]
    %v2427 = vld [vmem:[%s13 + $0x310] sm:$0xff]
    %v2428 = vld [vmem:[%s13 + $0x318] sm:$0xff]
    %v2429 = vld [vmem:[%s13 + $0x320] sm:$0xff]
    %v2430 = vld [vmem:[%s13 + $0x328] sm:$0xff]
    %v2431 = vld [vmem:[%s13 + $0x330] sm:$0xff]
    %v2432 = vld [vmem:[%s13 + $0x338] sm:$0xff]
    %v2433 = vld [vmem:[%s13 + $0x340] sm:$0xff]
    %v2434 = vld [vmem:[%s13 + $0x348] sm:$0xff]
    %v2435 = vld [vmem:[%s13 + $0x350] sm:$0xff]
    %v2436 = vld [vmem:[%s13 + $0x358] sm:$0xff]
    %v2437 = vld [vmem:[%s13 + $0x360] sm:$0xff]
    %v2438 = vld [vmem:[%s13 + $0x368] sm:$0xff]
    %v2439 = vld [vmem:[%s13 + $0x370] sm:$0xff]
    %v2440 = vld [vmem:[%s13 + $0x378] sm:$0xff]
    %v2441 = vld [vmem:[%s13 + $0x380] sm:$0xff]
    %v2442 = vld [vmem:[%s13 + $0x388] sm:$0xff]
    %v2443 = vld [vmem:[%s13 + $0x390] sm:$0xff]
    %v2444 = vld [vmem:[%s13 + $0x398] sm:$0xff]
    %v2445 = vld [vmem:[%s13 + $0x3a0] sm:$0xff]
    %v2446 = vld [vmem:[%s13 + $0x3a8] sm:$0xff]
    %v2447 = vld [vmem:[%s13 + $0x3b0] sm:$0xff]
    %v2448 = vld [vmem:[%s13 + $0x3b8] sm:$0xff]
    %v2449 = vld [vmem:[%s13 + $0x3c0] sm:$0xff]
    %v2450 = vld [vmem:[%s13 + $0x3c8] sm:$0xff]
    %v2451 = vld [vmem:[%s13 + $0x3d0] sm:$0xff]
    %v2452 = vld [vmem:[%s13 + $0x3d8] sm:$0xff]
    %v2453 = vld [vmem:[%s13 + $0x3e0] sm:$0xff]
    %v2454 = vld [vmem:[%s13 + $0x3e8] sm:$0xff]
    %v2455 = vld [vmem:[%s13 + $0x3f0] sm:$0xff]
    %v2456 = vld [vmem:[%s13 + $0x3f8] sm:$0xff]
    %v2457 = vld [vmem:[%s13 + $0x400] sm:$0xff]
    %v2458 = vld [vmem:[%s13 + $0x408] sm:$0xff]
    %v2459 = vld [vmem:[%s13 + $0x410] sm:$0xff]
    %v2460 = vld [vmem:[%s13 + $0x418] sm:$0xff]
    %v2461 = vld [vmem:[%s13 + $0x420] sm:$0xff]
    %v2462 = vld [vmem:[%s13 + $0x428] sm:$0xff]
    %v2463 = vld [vmem:[%s13 + $0x430] sm:$0xff]
    %v2464 = vld [vmem:[%s13 + $0x438] sm:$0xff]
    %v2465 = vld [vmem:[%s13 + $0x440] sm:$0xff]
    %v2466 = vld [vmem:[%s13 + $0x448] sm:$0xff]
    %v2467 = vld [vmem:[%s13 + $0x450] sm:$0xff]
    %v2468 = vld [vmem:[%s13 + $0x458] sm:$0xff]
    %v2469 = vld [vmem:[%s13 + $0x460] sm:$0xff]
    %v2470 = vld [vmem:[%s13 + $0x468] sm:$0xff]
    %v2471 = vld [vmem:[%s13 + $0x470] sm:$0xff]
    %v2472 = vld [vmem:[%s13 + $0x478] sm:$0xff]
    %2473 = vmatprep.subr.mxu0 %v2465
    %2474 = vmatpush1.msra.mxu0 %v2464
    %2475 = vmatprep.subr.mxu0 %v2456
    %2476 = vmatpush1.msra.mxu0 %v2455
    %2477 = vmatprep.subr.mxu0 %v2447
    %2478 = vmatpush1.msra.mxu0 %v2446
    %2479 = vmatprep.subr.mxu0 %v2438
    %2480 = vmatpush1.msra.mxu0 %v2437
    %2481 = vmatprep.subr.mxu0 %v2429
    %2482 = vmatpush1.msra.mxu0 %v2428
    %2483 = vmatprep.subr.mxu0 %v2420
    %2484 = vmatpush1.msra.mxu0 %v2419
    %2485 = vmatprep.subr.mxu0 %v2411
    %2486 = vmatpush1.msra.mxu0 %v2410
    %2487 = vmatprep.subr.mxu0 %v2402
    %2488 = vmatpush1.msra.mxu0 %v2401
    %2489 = vmatprep.subr.mxu0 %v2393
    %2490 = vmatpush1.msra.mxu0 %v2392
    %2491 = vmatprep.subr.mxu0 %v2384
    %2492 = vmatpush1.msra.mxu0 %v2383
    %2493 = vmatprep.subr.mxu0 %v2375
    %2494 = vmatpush1.msra.mxu0 %v2374
    %2495 = vmatprep.subr.mxu0 %v2366
    %2496 = vmatpush1.msra.mxu0 %v2365
    %2497 = vmatprep.subr.mxu0 %v2357
    %2498 = vmatpush1.msra.mxu0 %v2356
    %2499 = vmatprep.subr.mxu0 %v2348
    %2500 = vmatpush1.msra.mxu0 %v2347
    %2501 = vmatprep.subr.mxu0 %v2339
    %2502 = vmatpush1.msra.mxu0 %v2338
    %2503 = vmatprep.subr.mxu0 %v2330
    %2504 = vmatpush1.msra.mxu0 %v2329
    %2505 = vmatprep.subr.mxu0 0.0
    %2506 = vmatpush2.msra.mxu0 0.0
    %2507 = vmatprep.subr.mxu0 0.0
    %2508 = vmatpush2.msra.mxu0 0.0
    %2509 = vmatprep.subr.mxu0 0.0
    %2510 = vmatpush2.msra.mxu0 0.0
    %2511 = vmatprep.subr.mxu0 0.0
    %2512 = vmatpush2.msra.mxu0 0.0
    %2513 = vmatprep.subr.mxu0 0.0
    %2514 = vmatpush2.msra.mxu0 0.0
    %2515 = vmatprep.subr.mxu0 0.0
    %2516 = vmatpush2.msra.mxu0 0.0
    %2517 = vmatprep.subr.mxu0 0.0
    %2518 = vmatpush2.msra.mxu0 0.0
    %2519 = vmatprep.subr.mxu0 0.0
    %2520 = vmatpush2.msra.mxu0 0.0
    %2521 = vmatprep.subr.mxu0 0.0
    %2522 = vmatpush2.msra.mxu0 0.0
    %2523 = vmatprep.subr.mxu0 0.0
    %2524 = vmatpush2.msra.mxu0 0.0
    %2525 = vmatprep.subr.mxu0 0.0
    %2526 = vmatpush2.msra.mxu0 0.0
    %2527 = vmatprep.subr.mxu0 0.0
    %2528 = vmatpush2.msra.mxu0 0.0
    %2529 = vmatprep.subr.mxu0 0.0
    %2530 = vmatpush2.msra.mxu0 0.0
    %2531 = vmatprep.subr.mxu0 0.0
    %2532 = vmatpush2.msra.mxu0 0.0
    %2533 = vmatprep.subr.mxu0 0.0
    %2534 = vmatpush2.msra.mxu0 0.0
    %2535 = vmatprep.subr.mxu0 0.0
    %2536 = vmatpush2.msra.mxu0 0.0
    %2537 = vmatprep.mubr.f32.mxu0 0.0
    %2538 = vmatmul.mubr.f32.gmra.mxu0 %v2325
    %v2539 = vpop.f32.mrf.mxu0
    %v2540 = vadd.f32 0.0, %v2539
    %v2541 = vpop.f32.mrf.mxu0
    %v2542 = vadd.f32 0.0, %v2541
    %2543 = vmatprep.mubr.f32.mxu0 0.0
    %2544 = vmatmul.mubr.f32.gmra.mxu0 %v2326
    %v2545 = vpop.f32.mrf.mxu0
    %v2546 = vadd.f32 0.0, %v2545
    %v2547 = vpop.f32.mrf.mxu0
    %v2548 = vadd.f32 0.0, %v2547
    %2549 = vmatprep.mubr.f32.mxu0 0.0
    %2550 = vmatmul.mubr.f32.gmra.mxu0 %v2327
    %v2551 = vpop.f32.mrf.mxu0
    %v2552 = vadd.f32 0.0, %v2551
    %v2553 = vpop.f32.mrf.mxu0
    %v2554 = vadd.f32 0.0, %v2553
    %2555 = vmatprep.mubr.f32.mxu0 0.0
    %2556 = vmatmul.mubr.f32.gmra.mxu0 %v2328
    %v2557 = vpop.f32.mrf.mxu0
    %v2558 = vadd.f32 0.0, %v2557
    %v2559 = vpop.f32.mrf.mxu0
    %v2560 = vadd.f32 0.0, %v2559
    %2561 = vdwg.mxu0
    %2562 = vmatprep.subr.mxu0 %v2467
    %2563 = vmatpush1.msra.mxu0 %v2466
    %2564 = vmatprep.subr.mxu0 %v2458
    %2565 = vmatpush1.msra.mxu0 %v2457
    %2566 = vmatprep.subr.mxu0 %v2449
    %2567 = vmatpush1.msra.mxu0 %v2448
    %2568 = vmatprep.subr.mxu0 %v2440
    %2569 = vmatpush1.msra.mxu0 %v2439
    %2570 = vmatprep.subr.mxu0 %v2431
    %2571 = vmatpush1.msra.mxu0 %v2430
    %2572 = vmatprep.subr.mxu0 %v2422
    %2573 = vmatpush1.msra.mxu0 %v2421
    %2574 = vmatprep.subr.mxu0 %v2413
    %2575 = vmatpush1.msra.mxu0 %v2412
    %2576 = vmatprep.subr.mxu0 %v2404
    %2577 = vmatpush1.msra.mxu0 %v2403
    %2578 = vmatprep.subr.mxu0 %v2395
    %2579 = vmatpush1.msra.mxu0 %v2394
    %2580 = vmatprep.subr.mxu0 %v2386
    %2581 = vmatpush1.msra.mxu0 %v2385
    %2582 = vmatprep.subr.mxu0 %v2377
    %2583 = vmatpush1.msra.mxu0 %v2376
    %2584 = vmatprep.subr.mxu0 %v2368
    %2585 = vmatpush1.msra.mxu0 %v2367
    %2586 = vmatprep.subr.mxu0 %v2359
    %2587 = vmatpush1.msra.mxu0 %v2358
    %2588 = vmatprep.subr.mxu0 %v2350
    %2589 = vmatpush1.msra.mxu0 %v2349
    %2590 = vmatprep.subr.mxu0 %v2341
    %2591 = vmatpush1.msra.mxu0 %v2340
    %2592 = vmatprep.subr.mxu0 %v2332
    %2593 = vmatpush1.msra.mxu0 %v2331
    %2594 = vmatprep.subr.mxu0 0.0
    %2595 = vmatpush2.msra.mxu0 0.0
    %2596 = vmatprep.subr.mxu0 0.0
    %2597 = vmatpush2.msra.mxu0 0.0
    %2598 = vmatprep.subr.mxu0 0.0
    %2599 = vmatpush2.msra.mxu0 0.0
    %2600 = vmatprep.subr.mxu0 0.0
    %2601 = vmatpush2.msra.mxu0 0.0
    %2602 = vmatprep.subr.mxu0 0.0
    %2603 = vmatpush2.msra.mxu0 0.0
    %2604 = vmatprep.subr.mxu0 0.0
    %2605 = vmatpush2.msra.mxu0 0.0
    %2606 = vmatprep.subr.mxu0 0.0
    %2607 = vmatpush2.msra.mxu0 0.0
    %2608 = vmatprep.subr.mxu0 0.0
    %2609 = vmatpush2.msra.mxu0 0.0
    %2610 = vmatprep.subr.mxu0 0.0
    %2611 = vmatpush2.msra.mxu0 0.0
    %2612 = vmatprep.subr.mxu0 0.0
    %2613 = vmatpush2.msra.mxu0 0.0
    %2614 = vmatprep.subr.mxu0 0.0
    %2615 = vmatpush2.msra.mxu0 0.0
    %2616 = vmatprep.subr.mxu0 0.0
    %2617 = vmatpush2.msra.mxu0 0.0
    %2618 = vmatprep.subr.mxu0 0.0
    %2619 = vmatpush2.msra.mxu0 0.0
    %2620 = vmatprep.subr.mxu0 0.0
    %2621 = vmatpush2.msra.mxu0 0.0
    %2622 = vmatprep.subr.mxu0 0.0
    %2623 = vmatpush2.msra.mxu0 0.0
    %2624 = vmatprep.subr.mxu0 0.0
    %2625 = vmatpush2.msra.mxu0 0.0
    %2626 = vmatprep.mubr.f32.mxu0 0.0
    %2627 = vmatmul.mubr.f32.gmra.mxu0 %v2325
    %v2628 = vpop.f32.mrf.mxu0
    %v2629 = vadd.f32 0.0, %v2628
    %v2630 = vpop.f32.mrf.mxu0
    %v2631 = vadd.f32 0.0, %v2630
    %2632 = vmatprep.mubr.f32.mxu0 0.0
    %2633 = vmatmul.mubr.f32.gmra.mxu0 %v2326
    %v2634 = vpop.f32.mrf.mxu0
    %v2635 = vadd.f32 0.0, %v2634
    %v2636 = vpop.f32.mrf.mxu0
    %v2637 = vadd.f32 0.0, %v2636
    %2638 = vmatprep.mubr.f32.mxu0 0.0
    %2639 = vmatmul.mubr.f32.gmra.mxu0 %v2327
    %v2640 = vpop.f32.mrf.mxu0
    %v2641 = vadd.f32 0.0, %v2640
    %v2642 = vpop.f32.mrf.mxu0
    %v2643 = vadd.f32 0.0, %v2642
    %2644 = vmatprep.mubr.f32.mxu0 0.0
    %2645 = vmatmul.mubr.f32.gmra.mxu0 %v2328
    %v2646 = vpop.f32.mrf.mxu0
    %v2647 = vadd.f32 0.0, %v2646
    %v2648 = vpop.f32.mrf.mxu0
    %v2649 = vadd.f32 0.0, %v2648
    %2650 = vdwg.mxu0
    %2651 = vmatprep.subr.mxu0 %v2469
    %2652 = vmatpush1.msra.mxu0 %v2468
    %2653 = vmatprep.subr.mxu0 %v2460
    %2654 = vmatpush1.msra.mxu0 %v2459
    %2655 = vmatprep.subr.mxu0 %v2451
    %2656 = vmatpush1.msra.mxu0 %v2450
    %2657 = vmatprep.subr.mxu0 %v2442
    %2658 = vmatpush1.msra.mxu0 %v2441
    %2659 = vmatprep.subr.mxu0 %v2433
    %2660 = vmatpush1.msra.mxu0 %v2432
    %2661 = vmatprep.subr.mxu0 %v2424
    %2662 = vmatpush1.msra.mxu0 %v2423
    %2663 = vmatprep.subr.mxu0 %v2415
    %2664 = vmatpush1.msra.mxu0 %v2414
    %2665 = vmatprep.subr.mxu0 %v2406
    %2666 = vmatpush1.msra.mxu0 %v2405
    %2667 = vmatprep.subr.mxu0 %v2397
    %2668 = vmatpush1.msra.mxu0 %v2396
    %2669 = vmatprep.subr.mxu0 %v2388
    %2670 = vmatpush1.msra.mxu0 %v2387
    %2671 = vmatprep.subr.mxu0 %v2379
    %2672 = vmatpush1.msra.mxu0 %v2378
    %2673 = vmatprep.subr.mxu0 %v2370
    %2674 = vmatpush1.msra.mxu0 %v2369
    %2675 = vmatprep.subr.mxu0 %v2361
    %2676 = vmatpush1.msra.mxu0 %v2360
    %2677 = vmatprep.subr.mxu0 %v2352
    %2678 = vmatpush1.msra.mxu0 %v2351
    %2679 = vmatprep.subr.mxu0 %v2343
    %2680 = vmatpush1.msra.mxu0 %v2342
    %2681 = vmatprep.subr.mxu0 %v2334
    %2682 = vmatpush1.msra.mxu0 %v2333
    %2683 = vmatprep.subr.mxu0 0.0
    %2684 = vmatpush2.msra.mxu0 0.0
    %2685 = vmatprep.subr.mxu0 0.0
    %2686 = vmatpush2.msra.mxu0 0.0
    %2687 = vmatprep.subr.mxu0 0.0
    %2688 = vmatpush2.msra.mxu0 0.0
    %2689 = vmatprep.subr.mxu0 0.0
    %2690 = vmatpush2.msra.mxu0 0.0
    %2691 = vmatprep.subr.mxu0 0.0
    %2692 = vmatpush2.msra.mxu0 0.0
    %2693 = vmatprep.subr.mxu0 0.0
    %2694 = vmatpush2.msra.mxu0 0.0
    %2695 = vmatprep.subr.mxu0 0.0
    %2696 = vmatpush2.msra.mxu0 0.0
    %2697 = vmatprep.subr.mxu0 0.0
    %2698 = vmatpush2.msra.mxu0 0.0
    %2699 = vmatprep.subr.mxu0 0.0
    %2700 = vmatpush2.msra.mxu0 0.0
    %2701 = vmatprep.subr.mxu0 0.0
    %2702 = vmatpush2.msra.mxu0 0.0
    %2703 = vmatprep.subr.mxu0 0.0
    %2704 = vmatpush2.msra.mxu0 0.0
    %2705 = vmatprep.subr.mxu0 0.0
    %2706 = vmatpush2.msra.mxu0 0.0
    %2707 = vmatprep.subr.mxu0 0.0
    %2708 = vmatpush2.msra.mxu0 0.0
    %2709 = vmatprep.subr.mxu0 0.0
    %2710 = vmatpush2.msra.mxu0 0.0
    %2711 = vmatprep.subr.mxu0 0.0
    %2712 = vmatpush2.msra.mxu0 0.0
    %2713 = vmatprep.subr.mxu0 0.0
    %2714 = vmatpush2.msra.mxu0 0.0
    %2715 = vmatprep.mubr.f32.mxu0 0.0
    %2716 = vmatmul.mubr.f32.gmra.mxu0 %v2325
    %v2717 = vpop.f32.mrf.mxu0
    %v2718 = vadd.f32 0.0, %v2717
    %v2719 = vpop.f32.mrf.mxu0
    %v2720 = vadd.f32 0.0, %v2719
    %2721 = vmatprep.mubr.f32.mxu0 0.0
    %2722 = vmatmul.mubr.f32.gmra.mxu0 %v2326
    %v2723 = vpop.f32.mrf.mxu0
    %v2724 = vadd.f32 0.0, %v2723
    %v2725 = vpop.f32.mrf.mxu0
    %v2726 = vadd.f32 0.0, %v2725
    %2727 = vmatprep.mubr.f32.mxu0 0.0
    %2728 = vmatmul.mubr.f32.gmra.mxu0 %v2327
    %v2729 = vpop.f32.mrf.mxu0
    %v2730 = vadd.f32 0.0, %v2729
    %v2731 = vpop.f32.mrf.mxu0
    %v2732 = vadd.f32 0.0, %v2731
    %2733 = vmatprep.mubr.f32.mxu0 0.0
    %2734 = vmatmul.mubr.f32.gmra.mxu0 %v2328
    %v2735 = vpop.f32.mrf.mxu0
    %v2736 = vadd.f32 0.0, %v2735
    %v2737 = vpop.f32.mrf.mxu0
    %v2738 = vadd.f32 0.0, %v2737
    %2739 = vdwg.mxu0
    %2740 = vmatprep.subr.mxu0 %v2471
    %2741 = vmatpush1.msra.mxu0 %v2470
    %2742 = vmatprep.subr.mxu0 %v2462
    %2743 = vmatpush1.msra.mxu0 %v2461
    %2744 = vmatprep.subr.mxu0 %v2453
    %2745 = vmatpush1.msra.mxu0 %v2452
    %2746 = vmatprep.subr.mxu0 %v2444
    %2747 = vmatpush1.msra.mxu0 %v2443
    %2748 = vmatprep.subr.mxu0 %v2435
    %2749 = vmatpush1.msra.mxu0 %v2434
    %2750 = vmatprep.subr.mxu0 %v2426
    %2751 = vmatpush1.msra.mxu0 %v2425
    %2752 = vmatprep.subr.mxu0 %v2417
    %2753 = vmatpush1.msra.mxu0 %v2416
    %2754 = vmatprep.subr.mxu0 %v2408
    %2755 = vmatpush1.msra.mxu0 %v2407
    %2756 = vmatprep.subr.mxu0 %v2399
    %2757 = vmatpush1.msra.mxu0 %v2398
    %2758 = vmatprep.subr.mxu0 %v2390
    %2759 = vmatpush1.msra.mxu0 %v2389
    %2760 = vmatprep.subr.mxu0 %v2381
    %2761 = vmatpush1.msra.mxu0 %v2380
    %2762 = vmatprep.subr.mxu0 %v2372
    %2763 = vmatpush1.msra.mxu0 %v2371
    %2764 = vmatprep.subr.mxu0 %v2363
    %2765 = vmatpush1.msra.mxu0 %v2362
    %2766 = vmatprep.subr.mxu0 %v2354
    %2767 = vmatpush1.msra.mxu0 %v2353
    %2768 = vmatprep.subr.mxu0 %v2345
    %2769 = vmatpush1.msra.mxu0 %v2344
    %2770 = vmatprep.subr.mxu0 %v2336
    %2771 = vmatpush1.msra.mxu0 %v2335
    %2772 = vmatprep.subr.mxu0 0.0
    %2773 = vmatpush2.msra.mxu0 0.0
    %2774 = vmatprep.subr.mxu0 0.0
    %2775 = vmatpush2.msra.mxu0 0.0
    %2776 = vmatprep.subr.mxu0 0.0
    %2777 = vmatpush2.msra.mxu0 0.0
    %2778 = vmatprep.subr.mxu0 0.0
    %2779 = vmatpush2.msra.mxu0 0.0
    %2780 = vmatprep.subr.mxu0 0.0
    %2781 = vmatpush2.msra.mxu0 0.0
    %2782 = vmatprep.subr.mxu0 0.0
    %2783 = vmatpush2.msra.mxu0 0.0
    %2784 = vmatprep.subr.mxu0 0.0
    %2785 = vmatpush2.msra.mxu0 0.0
    %2786 = vmatprep.subr.mxu0 0.0
    %2787 = vmatpush2.msra.mxu0 0.0
    %2788 = vmatprep.subr.mxu0 0.0
    %2789 = vmatpush2.msra.mxu0 0.0
    %2790 = vmatprep.subr.mxu0 0.0
    %2791 = vmatpush2.msra.mxu0 0.0
    %2792 = vmatprep.subr.mxu0 0.0
    %2793 = vmatpush2.msra.mxu0 0.0
    %2794 = vmatprep.subr.mxu0 0.0
    %2795 = vmatpush2.msra.mxu0 0.0
    %2796 = vmatprep.subr.mxu0 0.0
    %2797 = vmatpush2.msra.mxu0 0.0
    %2798 = vmatprep.subr.mxu0 0.0
    %2799 = vmatpush2.msra.mxu0 0.0
    %2800 = vmatprep.subr.mxu0 0.0
    %2801 = vmatpush2.msra.mxu0 0.0
    %2802 = vmatprep.subr.mxu0 0.0
    %2803 = vmatpush2.msra.mxu0 0.0
    %2804 = vmatprep.mubr.f32.mxu0 0.0
    %2805 = vmatmul.mubr.f32.gmra.mxu0 %v2325
    %v2806 = vpop.f32.mrf.mxu0
    %v2807 = vadd.f32 0.0, %v2806
    %v2808 = vpop.f32.mrf.mxu0
    %v2809 = vadd.f32 0.0, %v2808
    %2810 = vmatprep.mubr.f32.mxu0 0.0
    %2811 = vmatmul.mubr.f32.gmra.mxu0 %v2326
    %v2812 = vpop.f32.mrf.mxu0
    %v2813 = vadd.f32 0.0, %v2812
    %v2814 = vpop.f32.mrf.mxu0
    %v2815 = vadd.f32 0.0, %v2814
    %2816 = vmatprep.mubr.f32.mxu0 0.0
    %2817 = vmatmul.mubr.f32.gmra.mxu0 %v2327
    %v2818 = vpop.f32.mrf.mxu0
    %v2819 = vadd.f32 0.0, %v2818
    %v2820 = vpop.f32.mrf.mxu0
    %v2821 = vadd.f32 0.0, %v2820
    %2822 = vmatprep.mubr.f32.mxu0 0.0
    %2823 = vmatmul.mubr.f32.gmra.mxu0 %v2328
    %v2824 = vpop.f32.mrf.mxu0
    %v2825 = vadd.f32 0.0, %v2824
    %v2826 = vpop.f32.mrf.mxu0
    %v2827 = vadd.f32 0.0, %v2826
    %2828 = vdwg.mxu0
    %2829 = vmatprep.subr.mxu0 0.0
    %2830 = vmatpush1.msra.mxu0 %v2472
    %2831 = vmatprep.subr.mxu0 0.0
    %2832 = vmatpush1.msra.mxu0 %v2463
    %2833 = vmatprep.subr.mxu0 0.0
    %2834 = vmatpush1.msra.mxu0 %v2454
    %2835 = vmatprep.subr.mxu0 0.0
    %2836 = vmatpush1.msra.mxu0 %v2445
    %2837 = vmatprep.subr.mxu0 0.0
    %2838 = vmatpush1.msra.mxu0 %v2436
    %2839 = vmatprep.subr.mxu0 0.0
    %2840 = vmatpush1.msra.mxu0 %v2427
    %2841 = vmatprep.subr.mxu0 0.0
    %2842 = vmatpush1.msra.mxu0 %v2418
    %2843 = vmatprep.subr.mxu0 0.0
    %2844 = vmatpush1.msra.mxu0 %v2409
    %2845 = vmatprep.subr.mxu0 0.0
    %2846 = vmatpush1.msra.mxu0 %v2400
    %2847 = vmatprep.subr.mxu0 0.0
    %2848 = vmatpush1.msra.mxu0 %v2391
    %2849 = vmatprep.subr.mxu0 0.0
    %2850 = vmatpush1.msra.mxu0 %v2382
    %2851 = vmatprep.subr.mxu0 0.0
    %2852 = vmatpush1.msra.mxu0 %v2373
    %2853 = vmatprep.subr.mxu0 0.0
    %2854 = vmatpush1.msra.mxu0 %v2364
    %2855 = vmatprep.subr.mxu0 0.0
    %2856 = vmatpush1.msra.mxu0 %v2355
    %2857 = vmatprep.subr.mxu0 0.0
    %2858 = vmatpush1.msra.mxu0 %v2346
    %2859 = vmatprep.subr.mxu0 0.0
    %2860 = vmatpush1.msra.mxu0 %v2337
    %2861 = vmatprep.subr.mxu0 0.0
    %2862 = vmatpush2.msra.mxu0 0.0
    %2863 = vmatprep.subr.mxu0 0.0
    %2864 = vmatpush2.msra.mxu0 0.0
    %2865 = vmatprep.subr.mxu0 0.0
    %2866 = vmatpush2.msra.mxu0 0.0
    %2867 = vmatprep.subr.mxu0 0.0
    %2868 = vmatpush2.msra.mxu0 0.0
    %2869 = vmatprep.subr.mxu0 0.0
    %2870 = vmatpush2.msra.mxu0 0.0
    %2871 = vmatprep.subr.mxu0 0.0
    %2872 = vmatpush2.msra.mxu0 0.0
    %2873 = vmatprep.subr.mxu0 0.0
    %2874 = vmatpush2.msra.mxu0 0.0
    %2875 = vmatprep.subr.mxu0 0.0
    %2876 = vmatpush2.msra.mxu0 0.0
    %2877 = vmatprep.subr.mxu0 0.0
    %2878 = vmatpush2.msra.mxu0 0.0
    %2879 = vmatprep.subr.mxu0 0.0
    %2880 = vmatpush2.msra.mxu0 0.0
    %2881 = vmatprep.subr.mxu0 0.0
    %2882 = vmatpush2.msra.mxu0 0.0
    %2883 = vmatprep.subr.mxu0 0.0
    %2884 = vmatpush2.msra.mxu0 0.0
    %2885 = vmatprep.subr.mxu0 0.0
    %2886 = vmatpush2.msra.mxu0 0.0
    %2887 = vmatprep.subr.mxu0 0.0
    %2888 = vmatpush2.msra.mxu0 0.0
    %2889 = vmatprep.subr.mxu0 0.0
    %2890 = vmatpush2.msra.mxu0 0.0
    %2891 = vmatprep.subr.mxu0 0.0
    %2892 = vmatpush2.msra.mxu0 0.0
    %2893 = vmatprep.mubr.f32.mxu0 0.0
    %2894 = vmatmul.mubr.f32.gmra.mxu0 %v2325
    %v2895 = vpop.f32.mrf.mxu0
    %v2896 = vadd.f32 0.0, %v2895
    %v2897 = vpop.f32.mrf.mxu0
    %2898 = vmatprep.mubr.f32.mxu0 0.0
    %2899 = vmatmul.mubr.f32.gmra.mxu0 %v2326
    %v2900 = vpop.f32.mrf.mxu0
    %v2901 = vadd.f32 0.0, %v2900
    %v2902 = vpop.f32.mrf.mxu0
    %2903 = vmatprep.mubr.f32.mxu0 0.0
    %2904 = vmatmul.mubr.f32.gmra.mxu0 %v2327
    %v2905 = vpop.f32.mrf.mxu0
    %v2906 = vadd.f32 0.0, %v2905
    %v2907 = vpop.f32.mrf.mxu0
    %2908 = vmatprep.mubr.f32.mxu0 0.0
    %2909 = vmatmul.mubr.f32.gmra.mxu0 %v2328
    %v2910 = vpop.f32.mrf.mxu0
    %v2911 = vadd.f32 0.0, %v2910
    %v2912 = vpop.f32.mrf.mxu0
    %2913 = vdwg.mxu0
    %v2914 = vld [vmem:[#allocation9] sm:$0xff]
    %s2915 = scalar_lea.vmem [#allocation9], 8
    %v2916 = vld [vmem:[%s2915] sm:$0xff]
    %vm2917 = vcmask 261120
    %v2919 = vsel %vm2917, %v2916, 0
    %2921 = vmatprep.subr.mxu0 0.0
    %2922 = vmatpush1.msra.mxu0 0.0
    %2923 = vmatprep.subr.mxu0 0.0
    %2924 = vmatpush1.msra.mxu0 0.0
    %2925 = vmatprep.subr.mxu0 0.0
    %2926 = vmatpush1.msra.mxu0 0.0
    %2927 = vmatprep.subr.mxu0 0.0
    %2928 = vmatpush1.msra.mxu0 0.0
    %2929 = vmatprep.subr.mxu0 0.0
    %2930 = vmatpush1.msra.mxu0 0.0
    %2931 = vmatprep.subr.mxu0 0.0
    %2932 = vmatpush1.msra.mxu0 0.0
    %2933 = vmatprep.subr.mxu0 0.0
    %2934 = vmatpush1.msra.mxu0 0.0
    %2935 = vmatprep.subr.mxu0 0.0
    %2936 = vmatpush1.msra.mxu0 0.0
    %2937 = vmatprep.subr.mxu0 0.0
    %2938 = vmatpush1.msra.mxu0 0.0
    %2939 = vmatprep.subr.mxu0 0.0
    %2940 = vmatpush1.msra.mxu0 0.0
    %2941 = vmatprep.subr.mxu0 0.0
    %2942 = vmatpush1.msra.mxu0 0.0
    %2943 = vmatprep.subr.mxu0 0.0
    %2944 = vmatpush1.msra.mxu0 0.0
    %2945 = vmatprep.subr.mxu0 0.0
    %2946 = vmatpush1.msra.mxu0 %v2560
    %2947 = vmatprep.subr.mxu0 0.0
    %2948 = vmatpush1.msra.mxu0 %v2554
    %2949 = vmatprep.subr.mxu0 0.0
    %2950 = vmatpush1.msra.mxu0 %v2548
    %2951 = vmatprep.subr.mxu0 0.0
    %2952 = vmatpush1.msra.mxu0 %v2542
    %2953 = vmatprep.subr.mxu0 0.0
    %2954 = vmatpush2.msra.mxu0 0.0
    %2955 = vmatprep.subr.mxu0 0.0
    %2956 = vmatpush2.msra.mxu0 0.0
    %2957 = vmatprep.subr.mxu0 0.0
    %2958 = vmatpush2.msra.mxu0 0.0
    %2959 = vmatprep.subr.mxu0 0.0
    %2960 = vmatpush2.msra.mxu0 0.0
    %2961 = vmatprep.subr.mxu0 0.0
    %2962 = vmatpush2.msra.mxu0 0.0
    %2963 = vmatprep.subr.mxu0 0.0
    %2964 = vmatpush2.msra.mxu0 0.0
    %2965 = vmatprep.subr.mxu0 0.0
    %2966 = vmatpush2.msra.mxu0 0.0
    %2967 = vmatprep.subr.mxu0 0.0
    %2968 = vmatpush2.msra.mxu0 0.0
    %2969 = vmatprep.subr.mxu0 0.0
    %2970 = vmatpush2.msra.mxu0 0.0
    %2971 = vmatprep.subr.mxu0 0.0
    %2972 = vmatpush2.msra.mxu0 0.0
    %2973 = vmatprep.subr.mxu0 0.0
    %2974 = vmatpush2.msra.mxu0 0.0
    %2975 = vmatprep.subr.mxu0 0.0
    %2976 = vmatpush2.msra.mxu0 0.0
    %2977 = vmatprep.subr.mxu0 0.0
    %2978 = vmatpush2.msra.mxu0 0.0
    %2979 = vmatprep.subr.mxu0 0.0
    %2980 = vmatpush2.msra.mxu0 0.0
    %2981 = vmatprep.subr.mxu0 0.0
    %2982 = vmatpush2.msra.mxu0 0.0
    %2983 = vmatprep.subr.mxu0 0.0
    %2984 = vmatpush2.msra.mxu0 0.0
    %2985 = vmatprep.mubr.f32.mxu0 0.0
    %2986 = vmatmul.mubr.f32.gmra.mxu0 %v2919
    %v2987 = vpop.f32.mrf.mxu0
    %v2988 = vadd.f32 0.0, %v2987
    %v2989 = vpop.f32.mrf.mxu0
    %2990 = vdwg.mxu0
    %v2992 = vsel %vm2917, %v2914, 0
    %2994 = vmatprep.subr.mxu0 0.0
    %2995 = vmatpush1.msra.mxu0 0.0
    %2996 = vmatprep.subr.mxu0 0.0
    %2997 = vmatpush1.msra.mxu0 0.0
    %2998 = vmatprep.subr.mxu0 0.0
    %2999 = vmatpush1.msra.mxu0 0.0
    %3000 = vmatprep.subr.mxu0 0.0
    %3001 = vmatpush1.msra.mxu0 0.0
    %3002 = vmatprep.subr.mxu0 0.0
    %3003 = vmatpush1.msra.mxu0 0.0
    %3004 = vmatprep.subr.mxu0 0.0
    %3005 = vmatpush1.msra.mxu0 0.0
    %3006 = vmatprep.subr.mxu0 0.0
    %3007 = vmatpush1.msra.mxu0 0.0
    %3008 = vmatprep.subr.mxu0 0.0
    %3009 = vmatpush1.msra.mxu0 0.0
    %3010 = vmatprep.subr.mxu0 0.0
    %3011 = vmatpush1.msra.mxu0 0.0
    %3012 = vmatprep.subr.mxu0 0.0
    %3013 = vmatpush1.msra.mxu0 0.0
    %3014 = vmatprep.subr.mxu0 0.0
    %3015 = vmatpush1.msra.mxu0 0.0
    %3016 = vmatprep.subr.mxu0 0.0
    %3017 = vmatpush1.msra.mxu0 0.0
    %3018 = vmatprep.subr.mxu0 0.0
    %3019 = vmatpush1.msra.mxu0 %v2558
    %3020 = vmatprep.subr.mxu0 0.0
    %3021 = vmatpush1.msra.mxu0 %v2552
    %3022 = vmatprep.subr.mxu0 0.0
    %3023 = vmatpush1.msra.mxu0 %v2546
    %3024 = vmatprep.subr.mxu0 0.0
    %3025 = vmatpush1.msra.mxu0 %v2540
    %3026 = vmatprep.subr.mxu0 0.0
    %3027 = vmatpush2.msra.mxu0 0.0
    %3028 = vmatprep.subr.mxu0 0.0
    %3029 = vmatpush2.msra.mxu0 0.0
    %3030 = vmatprep.subr.mxu0 0.0
    %3031 = vmatpush2.msra.mxu0 0.0
    %3032 = vmatprep.subr.mxu0 0.0
    %3033 = vmatpush2.msra.mxu0 0.0
    %3034 = vmatprep.subr.mxu0 0.0
    %3035 = vmatpush2.msra.mxu0 0.0
    %3036 = vmatprep.subr.mxu0 0.0
    %3037 = vmatpush2.msra.mxu0 0.0
    %3038 = vmatprep.subr.mxu0 0.0
    %3039 = vmatpush2.msra.mxu0 0.0
    %3040 = vmatprep.subr.mxu0 0.0
    %3041 = vmatpush2.msra.mxu0 0.0
    %3042 = vmatprep.subr.mxu0 0.0
    %3043 = vmatpush2.msra.mxu0 0.0
    %3044 = vmatprep.subr.mxu0 0.0
    %3045 = vmatpush2.msra.mxu0 0.0
    %3046 = vmatprep.subr.mxu0 0.0
    %3047 = vmatpush2.msra.mxu0 0.0
    %3048 = vmatprep.subr.mxu0 0.0
    %3049 = vmatpush2.msra.mxu0 0.0
    %3050 = vmatprep.subr.mxu0 0.0
    %3051 = vmatpush2.msra.mxu0 0.0
    %3052 = vmatprep.subr.mxu0 0.0
    %3053 = vmatpush2.msra.mxu0 0.0
    %3054 = vmatprep.subr.mxu0 0.0
    %3055 = vmatpush2.msra.mxu0 0.0
    %3056 = vmatprep.subr.mxu0 0.0
    %3057 = vmatpush2.msra.mxu0 0.0
    %3058 = vmatprep.mubr.f32.mxu0 0.0
    %3059 = vmatmul.mubr.f32.gmra.mxu0 %v2992
    %v3060 = vpop.f32.mrf.mxu0
    %v3061 = vadd.f32 %v2988, %v3060
    %v3062 = vpop.f32.mrf.mxu0
    %3063 = vdwg.mxu0
    %s3064 = scalar_lea.vmem [#allocation9], 16
    %v3065 = vld [vmem:[%s3064] sm:$0xff]
    %v3067 = vsel %vm2917, %v3065, 0
    %3069 = vmatprep.subr.mxu0 0.0
    %3070 = vmatpush1.msra.mxu0 0.0
    %3071 = vmatprep.subr.mxu0 0.0
    %3072 = vmatpush1.msra.mxu0 0.0
    %3073 = vmatprep.subr.mxu0 0.0
    %3074 = vmatpush1.msra.mxu0 0.0
    %3075 = vmatprep.subr.mxu0 0.0
    %3076 = vmatpush1.msra.mxu0 0.0
    %3077 = vmatprep.subr.mxu0 0.0
    %3078 = vmatpush1.msra.mxu0 0.0
    %3079 = vmatprep.subr.mxu0 0.0
    %3080 = vmatpush1.msra.mxu0 0.0
    %3081 = vmatprep.subr.mxu0 0.0
    %3082 = vmatpush1.msra.mxu0 0.0
    %3083 = vmatprep.subr.mxu0 0.0
    %3084 = vmatpush1.msra.mxu0 0.0
    %3085 = vmatprep.subr.mxu0 0.0
    %3086 = vmatpush1.msra.mxu0 0.0
    %3087 = vmatprep.subr.mxu0 0.0
    %3088 = vmatpush1.msra.mxu0 0.0
    %3089 = vmatprep.subr.mxu0 0.0
    %3090 = vmatpush1.msra.mxu0 0.0
    %3091 = vmatprep.subr.mxu0 0.0
    %3092 = vmatpush1.msra.mxu0 0.0
    %3093 = vmatprep.subr.mxu0 0.0
    %3094 = vmatpush1.msra.mxu0 %v2647
    %3095 = vmatprep.subr.mxu0 0.0
    %3096 = vmatpush1.msra.mxu0 %v2641
    %3097 = vmatprep.subr.mxu0 0.0
    %3098 = vmatpush1.msra.mxu0 %v2635
    %3099 = vmatprep.subr.mxu0 0.0
    %3100 = vmatpush1.msra.mxu0 %v2629
    %3101 = vmatprep.subr.mxu0 0.0
    %3102 = vmatpush2.msra.mxu0 0.0
    %3103 = vmatprep.subr.mxu0 0.0
    %3104 = vmatpush2.msra.mxu0 0.0
    %3105 = vmatprep.subr.mxu0 0.0
    %3106 = vmatpush2.msra.mxu0 0.0
    %3107 = vmatprep.subr.mxu0 0.0
    %3108 = vmatpush2.msra.mxu0 0.0
    %3109 = vmatprep.subr.mxu0 0.0
    %3110 = vmatpush2.msra.mxu0 0.0
    %3111 = vmatprep.subr.mxu0 0.0
    %3112 = vmatpush2.msra.mxu0 0.0
    %3113 = vmatprep.subr.mxu0 0.0
    %3114 = vmatpush2.msra.mxu0 0.0
    %3115 = vmatprep.subr.mxu0 0.0
    %3116 = vmatpush2.msra.mxu0 0.0
    %3117 = vmatprep.subr.mxu0 0.0
    %3118 = vmatpush2.msra.mxu0 0.0
    %3119 = vmatprep.subr.mxu0 0.0
    %3120 = vmatpush2.msra.mxu0 0.0
    %3121 = vmatprep.subr.mxu0 0.0
    %3122 = vmatpush2.msra.mxu0 0.0
    %3123 = vmatprep.subr.mxu0 0.0
    %3124 = vmatpush2.msra.mxu0 0.0
    %3125 = vmatprep.subr.mxu0 0.0
    %3126 = vmatpush2.msra.mxu0 0.0
    %3127 = vmatprep.subr.mxu0 0.0
    %3128 = vmatpush2.msra.mxu0 0.0
    %3129 = vmatprep.subr.mxu0 0.0
    %3130 = vmatpush2.msra.mxu0 0.0
    %3131 = vmatprep.subr.mxu0 0.0
    %3132 = vmatpush2.msra.mxu0 0.0
    %3133 = vmatprep.mubr.f32.mxu0 0.0
    %3134 = vmatmul.mubr.f32.gmra.mxu0 %v3067
    %v3135 = vpop.f32.mrf.mxu0
    %v3136 = vadd.f32 0.0, %v3135
    %v3137 = vpop.f32.mrf.mxu0
    %3138 = vdwg.mxu0
    %v3139 = vadd.f32 %v3061, %v3136
    %s3140 = scalar_lea.vmem [#allocation9], 24
    %v3141 = vld [vmem:[%s3140] sm:$0xff]
    %v3143 = vsel %vm2917, %v3141, 0
    %3145 = vmatprep.subr.mxu0 0.0
    %3146 = vmatpush1.msra.mxu0 0.0
    %3147 = vmatprep.subr.mxu0 0.0
    %3148 = vmatpush1.msra.mxu0 0.0
    %3149 = vmatprep.subr.mxu0 0.0
    %3150 = vmatpush1.msra.mxu0 0.0
    %3151 = vmatprep.subr.mxu0 0.0
    %3152 = vmatpush1.msra.mxu0 0.0
    %3153 = vmatprep.subr.mxu0 0.0
    %3154 = vmatpush1.msra.mxu0 0.0
    %3155 = vmatprep.subr.mxu0 0.0
    %3156 = vmatpush1.msra.mxu0 0.0
    %3157 = vmatprep.subr.mxu0 0.0
    %3158 = vmatpush1.msra.mxu0 0.0
    %3159 = vmatprep.subr.mxu0 0.0
    %3160 = vmatpush1.msra.mxu0 0.0
    %3161 = vmatprep.subr.mxu0 0.0
    %3162 = vmatpush1.msra.mxu0 0.0
    %3163 = vmatprep.subr.mxu0 0.0
    %3164 = vmatpush1.msra.mxu0 0.0
    %3165 = vmatprep.subr.mxu0 0.0
    %3166 = vmatpush1.msra.mxu0 0.0
    %3167 = vmatprep.subr.mxu0 0.0
    %3168 = vmatpush1.msra.mxu0 0.0
    %3169 = vmatprep.subr.mxu0 0.0
    %3170 = vmatpush1.msra.mxu0 %v2649
    %3171 = vmatprep.subr.mxu0 0.0
    %3172 = vmatpush1.msra.mxu0 %v2643
    %3173 = vmatprep.subr.mxu0 0.0
    %3174 = vmatpush1.msra.mxu0 %v2637
    %3175 = vmatprep.subr.mxu0 0.0
    %3176 = vmatpush1.msra.mxu0 %v2631
    %3177 = vmatprep.subr.mxu0 0.0
    %3178 = vmatpush2.msra.mxu0 0.0
    %3179 = vmatprep.subr.mxu0 0.0
    %3180 = vmatpush2.msra.mxu0 0.0
    %3181 = vmatprep.subr.mxu0 0.0
    %3182 = vmatpush2.msra.mxu0 0.0
    %3183 = vmatprep.subr.mxu0 0.0
    %3184 = vmatpush2.msra.mxu0 0.0
    %3185 = vmatprep.subr.mxu0 0.0
    %3186 = vmatpush2.msra.mxu0 0.0
    %3187 = vmatprep.subr.mxu0 0.0
    %3188 = vmatpush2.msra.mxu0 0.0
    %3189 = vmatprep.subr.mxu0 0.0
    %3190 = vmatpush2.msra.mxu0 0.0
    %3191 = vmatprep.subr.mxu0 0.0
    %3192 = vmatpush2.msra.mxu0 0.0
    %3193 = vmatprep.subr.mxu0 0.0
    %3194 = vmatpush2.msra.mxu0 0.0
    %3195 = vmatprep.subr.mxu0 0.0
    %3196 = vmatpush2.msra.mxu0 0.0
    %3197 = vmatprep.subr.mxu0 0.0
    %3198 = vmatpush2.msra.mxu0 0.0
    %3199 = vmatprep.subr.mxu0 0.0
    %3200 = vmatpush2.msra.mxu0 0.0
    %3201 = vmatprep.subr.mxu0 0.0
    %3202 = vmatpush2.msra.mxu0 0.0
    %3203 = vmatprep.subr.mxu0 0.0
    %3204 = vmatpush2.msra.mxu0 0.0
    %3205 = vmatprep.subr.mxu0 0.0
    %3206 = vmatpush2.msra.mxu0 0.0
    %3207 = vmatprep.subr.mxu0 0.0
    %3208 = vmatpush2.msra.mxu0 0.0
    %3209 = vmatprep.mubr.f32.mxu0 0.0
    %3210 = vmatmul.mubr.f32.gmra.mxu0 %v3143
    %v3211 = vpop.f32.mrf.mxu0
    %v3212 = vadd.f32 0.0, %v3211
    %v3213 = vpop.f32.mrf.mxu0
    %3214 = vdwg.mxu0
    %v3215 = vadd.f32 %v3139, %v3212
    %s3216 = scalar_lea.vmem [#allocation9], 32
    %v3217 = vld [vmem:[%s3216] sm:$0xff]
    %v3219 = vsel %vm2917, %v3217, 0
    %3221 = vmatprep.subr.mxu0 0.0
    %3222 = vmatpush1.msra.mxu0 0.0
    %3223 = vmatprep.subr.mxu0 0.0
    %3224 = vmatpush1.msra.mxu0 0.0
    %3225 = vmatprep.subr.mxu0 0.0
    %3226 = vmatpush1.msra.mxu0 0.0
    %3227 = vmatprep.subr.mxu0 0.0
    %3228 = vmatpush1.msra.mxu0 0.0
    %3229 = vmatprep.subr.mxu0 0.0
    %3230 = vmatpush1.msra.mxu0 0.0
    %3231 = vmatprep.subr.mxu0 0.0
    %3232 = vmatpush1.msra.mxu0 0.0
    %3233 = vmatprep.subr.mxu0 0.0
    %3234 = vmatpush1.msra.mxu0 0.0
    %3235 = vmatprep.subr.mxu0 0.0
    %3236 = vmatpush1.msra.mxu0 0.0
    %3237 = vmatprep.subr.mxu0 0.0
    %3238 = vmatpush1.msra.mxu0 0.0
    %3239 = vmatprep.subr.mxu0 0.0
    %3240 = vmatpush1.msra.mxu0 0.0
    %3241 = vmatprep.subr.mxu0 0.0
    %3242 = vmatpush1.msra.mxu0 0.0
    %3243 = vmatprep.subr.mxu0 0.0
    %3244 = vmatpush1.msra.mxu0 0.0
    %3245 = vmatprep.subr.mxu0 0.0
    %3246 = vmatpush1.msra.mxu0 %v2736
    %3247 = vmatprep.subr.mxu0 0.0
    %3248 = vmatpush1.msra.mxu0 %v2730
    %3249 = vmatprep.subr.mxu0 0.0
    %3250 = vmatpush1.msra.mxu0 %v2724
    %3251 = vmatprep.subr.mxu0 0.0
    %3252 = vmatpush1.msra.mxu0 %v2718
    %3253 = vmatprep.subr.mxu0 0.0
    %3254 = vmatpush2.msra.mxu0 0.0
    %3255 = vmatprep.subr.mxu0 0.0
    %3256 = vmatpush2.msra.mxu0 0.0
    %3257 = vmatprep.subr.mxu0 0.0
    %3258 = vmatpush2.msra.mxu0 0.0
    %3259 = vmatprep.subr.mxu0 0.0
    %3260 = vmatpush2.msra.mxu0 0.0
    %3261 = vmatprep.subr.mxu0 0.0
    %3262 = vmatpush2.msra.mxu0 0.0
    %3263 = vmatprep.subr.mxu0 0.0
    %3264 = vmatpush2.msra.mxu0 0.0
    %3265 = vmatprep.subr.mxu0 0.0
    %3266 = vmatpush2.msra.mxu0 0.0
    %3267 = vmatprep.subr.mxu0 0.0
    %3268 = vmatpush2.msra.mxu0 0.0
    %3269 = vmatprep.subr.mxu0 0.0
    %3270 = vmatpush2.msra.mxu0 0.0
    %3271 = vmatprep.subr.mxu0 0.0
    %3272 = vmatpush2.msra.mxu0 0.0
    %3273 = vmatprep.subr.mxu0 0.0
    %3274 = vmatpush2.msra.mxu0 0.0
    %3275 = vmatprep.subr.mxu0 0.0
    %3276 = vmatpush2.msra.mxu0 0.0
    %3277 = vmatprep.subr.mxu0 0.0
    %3278 = vmatpush2.msra.mxu0 0.0
    %3279 = vmatprep.subr.mxu0 0.0
    %3280 = vmatpush2.msra.mxu0 0.0
    %3281 = vmatprep.subr.mxu0 0.0
    %3282 = vmatpush2.msra.mxu0 0.0
    %3283 = vmatprep.subr.mxu0 0.0
    %3284 = vmatpush2.msra.mxu0 0.0
    %3285 = vmatprep.mubr.f32.mxu0 0.0
    %3286 = vmatmul.mubr.f32.gmra.mxu0 %v3219
    %v3287 = vpop.f32.mrf.mxu0
    %v3288 = vadd.f32 0.0, %v3287
    %v3289 = vpop.f32.mrf.mxu0
    %3290 = vdwg.mxu0
    %v3291 = vadd.f32 %v3215, %v3288
    %s3292 = scalar_lea.vmem [#allocation9], 40
    %v3293 = vld [vmem:[%s3292] sm:$0xff]
    %v3295 = vsel %vm2917, %v3293, 0
    %3297 = vmatprep.subr.mxu0 0.0
    %3298 = vmatpush1.msra.mxu0 0.0
    %3299 = vmatprep.subr.mxu0 0.0
    %3300 = vmatpush1.msra.mxu0 0.0
    %3301 = vmatprep.subr.mxu0 0.0
    %3302 = vmatpush1.msra.mxu0 0.0
    %3303 = vmatprep.subr.mxu0 0.0
    %3304 = vmatpush1.msra.mxu0 0.0
    %3305 = vmatprep.subr.mxu0 0.0
    %3306 = vmatpush1.msra.mxu0 0.0
    %3307 = vmatprep.subr.mxu0 0.0
    %3308 = vmatpush1.msra.mxu0 0.0
    %3309 = vmatprep.subr.mxu0 0.0
    %3310 = vmatpush1.msra.mxu0 0.0
    %3311 = vmatprep.subr.mxu0 0.0
    %3312 = vmatpush1.msra.mxu0 0.0
    %3313 = vmatprep.subr.mxu0 0.0
    %3314 = vmatpush1.msra.mxu0 0.0
    %3315 = vmatprep.subr.mxu0 0.0
    %3316 = vmatpush1.msra.mxu0 0.0
    %3317 = vmatprep.subr.mxu0 0.0
    %3318 = vmatpush1.msra.mxu0 0.0
    %3319 = vmatprep.subr.mxu0 0.0
    %3320 = vmatpush1.msra.mxu0 0.0
    %3321 = vmatprep.subr.mxu0 0.0
    %3322 = vmatpush1.msra.mxu0 %v2738
    %3323 = vmatprep.subr.mxu0 0.0
    %3324 = vmatpush1.msra.mxu0 %v2732
    %3325 = vmatprep.subr.mxu0 0.0
    %3326 = vmatpush1.msra.mxu0 %v2726
    %3327 = vmatprep.subr.mxu0 0.0
    %3328 = vmatpush1.msra.mxu0 %v2720
    %3329 = vmatprep.subr.mxu0 0.0
    %3330 = vmatpush2.msra.mxu0 0.0
    %3331 = vmatprep.subr.mxu0 0.0
    %3332 = vmatpush2.msra.mxu0 0.0
    %3333 = vmatprep.subr.mxu0 0.0
    %3334 = vmatpush2.msra.mxu0 0.0
    %3335 = vmatprep.subr.mxu0 0.0
    %3336 = vmatpush2.msra.mxu0 0.0
    %3337 = vmatprep.subr.mxu0 0.0
    %3338 = vmatpush2.msra.mxu0 0.0
    %3339 = vmatprep.subr.mxu0 0.0
    %3340 = vmatpush2.msra.mxu0 0.0
    %3341 = vmatprep.subr.mxu0 0.0
    %3342 = vmatpush2.msra.mxu0 0.0
    %3343 = vmatprep.subr.mxu0 0.0
    %3344 = vmatpush2.msra.mxu0 0.0
    %3345 = vmatprep.subr.mxu0 0.0
    %3346 = vmatpush2.msra.mxu0 0.0
    %3347 = vmatprep.subr.mxu0 0.0
    %3348 = vmatpush2.msra.mxu0 0.0
    %3349 = vmatprep.subr.mxu0 0.0
    %3350 = vmatpush2.msra.mxu0 0.0
    %3351 = vmatprep.subr.mxu0 0.0
    %3352 = vmatpush2.msra.mxu0 0.0
    %3353 = vmatprep.subr.mxu0 0.0
    %3354 = vmatpush2.msra.mxu0 0.0
    %3355 = vmatprep.subr.mxu0 0.0
    %3356 = vmatpush2.msra.mxu0 0.0
    %3357 = vmatprep.subr.mxu0 0.0
    %3358 = vmatpush2.msra.mxu0 0.0
    %3359 = vmatprep.subr.mxu0 0.0
    %3360 = vmatpush2.msra.mxu0 0.0
    %3361 = vmatprep.mubr.f32.mxu0 0.0
    %3362 = vmatmul.mubr.f32.gmra.mxu0 %v3295
    %v3363 = vpop.f32.mrf.mxu0
    %v3364 = vadd.f32 0.0, %v3363
    %v3365 = vpop.f32.mrf.mxu0
    %3366 = vdwg.mxu0
    %v3367 = vadd.f32 %v3291, %v3364
    %s3368 = scalar_lea.vmem [#allocation9], 48
    %v3369 = vld [vmem:[%s3368] sm:$0xff]
    %v3371 = vsel %vm2917, %v3369, 0
    %3373 = vmatprep.subr.mxu0 0.0
    %3374 = vmatpush1.msra.mxu0 0.0
    %3375 = vmatprep.subr.mxu0 0.0
    %3376 = vmatpush1.msra.mxu0 0.0
    %3377 = vmatprep.subr.mxu0 0.0
    %3378 = vmatpush1.msra.mxu0 0.0
    %3379 = vmatprep.subr.mxu0 0.0
    %3380 = vmatpush1.msra.mxu0 0.0
    %3381 = vmatprep.subr.mxu0 0.0
    %3382 = vmatpush1.msra.mxu0 0.0
    %3383 = vmatprep.subr.mxu0 0.0
    %3384 = vmatpush1.msra.mxu0 0.0
    %3385 = vmatprep.subr.mxu0 0.0
    %3386 = vmatpush1.msra.mxu0 0.0
    %3387 = vmatprep.subr.mxu0 0.0
    %3388 = vmatpush1.msra.mxu0 0.0
    %3389 = vmatprep.subr.mxu0 0.0
    %3390 = vmatpush1.msra.mxu0 0.0
    %3391 = vmatprep.subr.mxu0 0.0
    %3392 = vmatpush1.msra.mxu0 0.0
    %3393 = vmatprep.subr.mxu0 0.0
    %3394 = vmatpush1.msra.mxu0 0.0
    %3395 = vmatprep.subr.mxu0 0.0
    %3396 = vmatpush1.msra.mxu0 0.0
    %3397 = vmatprep.subr.mxu0 0.0
    %3398 = vmatpush1.msra.mxu0 %v2825
    %3399 = vmatprep.subr.mxu0 0.0
    %3400 = vmatpush1.msra.mxu0 %v2819
    %3401 = vmatprep.subr.mxu0 0.0
    %3402 = vmatpush1.msra.mxu0 %v2813
    %3403 = vmatprep.subr.mxu0 0.0
    %3404 = vmatpush1.msra.mxu0 %v2807
    %3405 = vmatprep.subr.mxu0 0.0
    %3406 = vmatpush2.msra.mxu0 0.0
    %3407 = vmatprep.subr.mxu0 0.0
    %3408 = vmatpush2.msra.mxu0 0.0
    %3409 = vmatprep.subr.mxu0 0.0
    %3410 = vmatpush2.msra.mxu0 0.0
    %3411 = vmatprep.subr.mxu0 0.0
    %3412 = vmatpush2.msra.mxu0 0.0
    %3413 = vmatprep.subr.mxu0 0.0
    %3414 = vmatpush2.msra.mxu0 0.0
    %3415 = vmatprep.subr.mxu0 0.0
    %3416 = vmatpush2.msra.mxu0 0.0
    %3417 = vmatprep.subr.mxu0 0.0
    %3418 = vmatpush2.msra.mxu0 0.0
    %3419 = vmatprep.subr.mxu0 0.0
    %3420 = vmatpush2.msra.mxu0 0.0
    %3421 = vmatprep.subr.mxu0 0.0
    %3422 = vmatpush2.msra.mxu0 0.0
    %3423 = vmatprep.subr.mxu0 0.0
    %3424 = vmatpush2.msra.mxu0 0.0
    %3425 = vmatprep.subr.mxu0 0.0
    %3426 = vmatpush2.msra.mxu0 0.0
    %3427 = vmatprep.subr.mxu0 0.0
    %3428 = vmatpush2.msra.mxu0 0.0
    %3429 = vmatprep.subr.mxu0 0.0
    %3430 = vmatpush2.msra.mxu0 0.0
    %3431 = vmatprep.subr.mxu0 0.0
    %3432 = vmatpush2.msra.mxu0 0.0
    %3433 = vmatprep.subr.mxu0 0.0
    %3434 = vmatpush2.msra.mxu0 0.0
    %3435 = vmatprep.subr.mxu0 0.0
    %3436 = vmatpush2.msra.mxu0 0.0
    %3437 = vmatprep.mubr.f32.mxu0 0.0
    %3438 = vmatmul.mubr.f32.gmra.mxu0 %v3371
    %v3439 = vpop.f32.mrf.mxu0
    %v3440 = vadd.f32 0.0, %v3439
    %v3441 = vpop.f32.mrf.mxu0
    %3442 = vdwg.mxu0
    %v3443 = vadd.f32 %v3367, %v3440
    %s3444 = scalar_lea.vmem [#allocation9], 56
    %v3445 = vld [vmem:[%s3444] sm:$0xff]
    %v3447 = vsel %vm2917, %v3445, 0
    %3449 = vmatprep.subr.mxu0 0.0
    %3450 = vmatpush1.msra.mxu0 0.0
    %3451 = vmatprep.subr.mxu0 0.0
    %3452 = vmatpush1.msra.mxu0 0.0
    %3453 = vmatprep.subr.mxu0 0.0
    %3454 = vmatpush1.msra.mxu0 0.0
    %3455 = vmatprep.subr.mxu0 0.0
    %3456 = vmatpush1.msra.mxu0 0.0
    %3457 = vmatprep.subr.mxu0 0.0
    %3458 = vmatpush1.msra.mxu0 0.0
    %3459 = vmatprep.subr.mxu0 0.0
    %3460 = vmatpush1.msra.mxu0 0.0
    %3461 = vmatprep.subr.mxu0 0.0
    %3462 = vmatpush1.msra.mxu0 0.0
    %3463 = vmatprep.subr.mxu0 0.0
    %3464 = vmatpush1.msra.mxu0 0.0
    %3465 = vmatprep.subr.mxu0 0.0
    %3466 = vmatpush1.msra.mxu0 0.0
    %3467 = vmatprep.subr.mxu0 0.0
    %3468 = vmatpush1.msra.mxu0 0.0
    %3469 = vmatprep.subr.mxu0 0.0
    %3470 = vmatpush1.msra.mxu0 0.0
    %3471 = vmatprep.subr.mxu0 0.0
    %3472 = vmatpush1.msra.mxu0 0.0
    %3473 = vmatprep.subr.mxu0 0.0
    %3474 = vmatpush1.msra.mxu0 %v2827
    %3475 = vmatprep.subr.mxu0 0.0
    %3476 = vmatpush1.msra.mxu0 %v2821
    %3477 = vmatprep.subr.mxu0 0.0
    %3478 = vmatpush1.msra.mxu0 %v2815
    %3479 = vmatprep.subr.mxu0 0.0
    %3480 = vmatpush1.msra.mxu0 %v2809
    %3481 = vmatprep.subr.mxu0 0.0
    %3482 = vmatpush2.msra.mxu0 0.0
    %3483 = vmatprep.subr.mxu0 0.0
    %3484 = vmatpush2.msra.mxu0 0.0
    %3485 = vmatprep.subr.mxu0 0.0
    %3486 = vmatpush2.msra.mxu0 0.0
    %3487 = vmatprep.subr.mxu0 0.0
    %3488 = vmatpush2.msra.mxu0 0.0
    %3489 = vmatprep.subr.mxu0 0.0
    %3490 = vmatpush2.msra.mxu0 0.0
    %3491 = vmatprep.subr.mxu0 0.0
    %3492 = vmatpush2.msra.mxu0 0.0
    %3493 = vmatprep.subr.mxu0 0.0
    %3494 = vmatpush2.msra.mxu0 0.0
    %3495 = vmatprep.subr.mxu0 0.0
    %3496 = vmatpush2.msra.mxu0 0.0
    %3497 = vmatprep.subr.mxu0 0.0
    %3498 = vmatpush2.msra.mxu0 0.0
    %3499 = vmatprep.subr.mxu0 0.0
    %3500 = vmatpush2.msra.mxu0 0.0
    %3501 = vmatprep.subr.mxu0 0.0
    %3502 = vmatpush2.msra.mxu0 0.0
    %3503 = vmatprep.subr.mxu0 0.0
    %3504 = vmatpush2.msra.mxu0 0.0
    %3505 = vmatprep.subr.mxu0 0.0
    %3506 = vmatpush2.msra.mxu0 0.0
    %3507 = vmatprep.subr.mxu0 0.0
    %3508 = vmatpush2.msra.mxu0 0.0
    %3509 = vmatprep.subr.mxu0 0.0
    %3510 = vmatpush2.msra.mxu0 0.0
    %3511 = vmatprep.subr.mxu0 0.0
    %3512 = vmatpush2.msra.mxu0 0.0
    %3513 = vmatprep.mubr.f32.mxu0 0.0
    %3514 = vmatmul.mubr.f32.gmra.mxu0 %v3447
    %v3515 = vpop.f32.mrf.mxu0
    %v3516 = vadd.f32 0.0, %v3515
    %v3517 = vpop.f32.mrf.mxu0
    %3518 = vdwg.mxu0
    %v3519 = vadd.f32 %v3443, %v3516
    %s3520 = scalar_lea.vmem [#allocation9], 64
    %v3521 = vld [vmem:[%s3520] sm:$0xff]
    %v3523 = vsel %vm2917, %v3521, 0
    %3525 = vmatprep.subr.mxu0 0.0
    %3526 = vmatpush1.msra.mxu0 0.0
    %3527 = vmatprep.subr.mxu0 0.0
    %3528 = vmatpush1.msra.mxu0 0.0
    %3529 = vmatprep.subr.mxu0 0.0
    %3530 = vmatpush1.msra.mxu0 0.0
    %3531 = vmatprep.subr.mxu0 0.0
    %3532 = vmatpush1.msra.mxu0 0.0
    %3533 = vmatprep.subr.mxu0 0.0
    %3534 = vmatpush1.msra.mxu0 0.0
    %3535 = vmatprep.subr.mxu0 0.0
    %3536 = vmatpush1.msra.mxu0 0.0
    %3537 = vmatprep.subr.mxu0 0.0
    %3538 = vmatpush1.msra.mxu0 0.0
    %3539 = vmatprep.subr.mxu0 0.0
    %3540 = vmatpush1.msra.mxu0 0.0
    %3541 = vmatprep.subr.mxu0 0.0
    %3542 = vmatpush1.msra.mxu0 0.0
    %3543 = vmatprep.subr.mxu0 0.0
    %3544 = vmatpush1.msra.mxu0 0.0
    %3545 = vmatprep.subr.mxu0 0.0
    %3546 = vmatpush1.msra.mxu0 0.0
    %3547 = vmatprep.subr.mxu0 0.0
    %3548 = vmatpush1.msra.mxu0 0.0
    %3549 = vmatprep.subr.mxu0 0.0
    %3550 = vmatpush1.msra.mxu0 %v2911
    %3551 = vmatprep.subr.mxu0 0.0
    %3552 = vmatpush1.msra.mxu0 %v2906
    %3553 = vmatprep.subr.mxu0 0.0
    %3554 = vmatpush1.msra.mxu0 %v2901
    %3555 = vmatprep.subr.mxu0 0.0
    %3556 = vmatpush1.msra.mxu0 %v2896
    %3557 = vmatprep.subr.mxu0 0.0
    %3558 = vmatpush2.msra.mxu0 0.0
    %3559 = vmatprep.subr.mxu0 0.0
    %3560 = vmatpush2.msra.mxu0 0.0
    %3561 = vmatprep.subr.mxu0 0.0
    %3562 = vmatpush2.msra.mxu0 0.0
    %3563 = vmatprep.subr.mxu0 0.0
    %3564 = vmatpush2.msra.mxu0 0.0
    %3565 = vmatprep.subr.mxu0 0.0
    %3566 = vmatpush2.msra.mxu0 0.0
    %3567 = vmatprep.subr.mxu0 0.0
    %3568 = vmatpush2.msra.mxu0 0.0
    %3569 = vmatprep.subr.mxu0 0.0
    %3570 = vmatpush2.msra.mxu0 0.0
    %3571 = vmatprep.subr.mxu0 0.0
    %3572 = vmatpush2.msra.mxu0 0.0
    %3573 = vmatprep.subr.mxu0 0.0
    %3574 = vmatpush2.msra.mxu0 0.0
    %3575 = vmatprep.subr.mxu0 0.0
    %3576 = vmatpush2.msra.mxu0 0.0
    %3577 = vmatprep.subr.mxu0 0.0
    %3578 = vmatpush2.msra.mxu0 0.0
    %3579 = vmatprep.subr.mxu0 0.0
    %3580 = vmatpush2.msra.mxu0 0.0
    %3581 = vmatprep.subr.mxu0 0.0
    %3582 = vmatpush2.msra.mxu0 0.0
    %3583 = vmatprep.subr.mxu0 0.0
    %3584 = vmatpush2.msra.mxu0 0.0
    %3585 = vmatprep.subr.mxu0 0.0
    %3586 = vmatpush2.msra.mxu0 0.0
    %3587 = vmatprep.subr.mxu0 0.0
    %3588 = vmatpush2.msra.mxu0 0.0
    %3589 = vmatprep.mubr.f32.mxu0 0.0
    %3590 = vmatmul.mubr.f32.gmra.mxu0 %v3523
    %v3591 = vpop.f32.mrf.mxu0
    %v3592 = vadd.f32 0.0, %v3591
    %v3593 = vpop.f32.mrf.mxu0
    %3594 = vdwg.mxu0
    %v3595 = vadd.f32 %v3519, %v3592
    %v3596 = vld [vmem:[#allocation7] sm:$0x1]
    %v3598 = vlaneseq
    %v3599 = vshrl.u32 %v3598, 7
    %v3600 = vsub.s32 0, %v3599
    %v3601 = vrot.slane %v3596, %v3600
    %v3603 = vadd.f32 %v3595, %v3601
    %v3604 = vmax.f32 %v3603, 0.0
    %v3605 = vld [vmem:[%s19] sm:$0xff]
    %v3606 = vld [vmem:[%s19 + $0x8] sm:$0xff]
    %v3607 = vld [vmem:[%s19 + $0x10] sm:$0xff]
    %v3608 = vld [vmem:[%s19 + $0x18] sm:$0xff]
    %v3609 = vld [vmem:[%s19 + $0x20] sm:$0xff]
    %v3610 = vld [vmem:[%s19 + $0x28] sm:$0xff]
    %v3611 = vld [vmem:[%s19 + $0x30] sm:$0xff]
    %v3612 = vld [vmem:[%s19 + $0x38] sm:$0xff]
    %v3613 = vld [vmem:[%s19 + $0x40] sm:$0xff]
    %v3614 = vld [vmem:[%s19 + $0x48] sm:$0xff]
    %v3615 = vld [vmem:[%s19 + $0x50] sm:$0xff]
    %v3616 = vld [vmem:[%s19 + $0x58] sm:$0xff]
    %v3617 = vld [vmem:[%s19 + $0x60] sm:$0xff]
    %v3618 = vld [vmem:[%s19 + $0x68] sm:$0xff]
    %v3619 = vld [vmem:[%s19 + $0x70] sm:$0xff]
    %v3620 = vld [vmem:[%s19 + $0x78] sm:$0xff]
    %v3621 = vld [vmem:[%s19 + $0x80] sm:$0xff]
    %v3622 = vld [vmem:[%s19 + $0x88] sm:$0xff]
    %v3623 = vld [vmem:[%s19 + $0x90] sm:$0xff]
    %v3624 = vld [vmem:[%s19 + $0x98] sm:$0xff]
    %v3625 = vld [vmem:[%s19 + $0xa0] sm:$0xff]
    %v3626 = vld [vmem:[%s19 + $0xa8] sm:$0xff]
    %v3627 = vld [vmem:[%s19 + $0xb0] sm:$0xff]
    %v3628 = vld [vmem:[%s19 + $0xb8] sm:$0xff]
    %v3629 = vld [vmem:[%s19 + $0xc0] sm:$0xff]
    %v3630 = vld [vmem:[%s19 + $0xc8] sm:$0xff]
    %v3631 = vld [vmem:[%s19 + $0xd0] sm:$0xff]
    %v3632 = vld [vmem:[%s19 + $0xd8] sm:$0xff]
    %v3633 = vld [vmem:[%s19 + $0xe0] sm:$0xff]
    %v3634 = vld [vmem:[%s19 + $0xe8] sm:$0xff]
    %v3635 = vld [vmem:[%s19 + $0xf0] sm:$0xff]
    %v3636 = vld [vmem:[%s19 + $0xf8] sm:$0xff]
    %v3637 = vld [vmem:[%s19 + $0x100] sm:$0xff]
    %v3638 = vld [vmem:[%s19 + $0x108] sm:$0xff]
    %v3639 = vld [vmem:[%s19 + $0x110] sm:$0xff]
    %v3640 = vld [vmem:[%s19 + $0x118] sm:$0xff]
    %v3641 = vld [vmem:[%s19 + $0x120] sm:$0xff]
    %v3642 = vld [vmem:[%s19 + $0x128] sm:$0xff]
    %v3643 = vld [vmem:[%s19 + $0x130] sm:$0xff]
    %v3644 = vld [vmem:[%s19 + $0x138] sm:$0xff]
    %v3645 = vld [vmem:[%s19 + $0x140] sm:$0xff]
    %v3646 = vld [vmem:[%s19 + $0x148] sm:$0xff]
    %v3647 = vld [vmem:[%s19 + $0x150] sm:$0xff]
    %v3648 = vld [vmem:[%s19 + $0x158] sm:$0xff]
    %v3649 = vld [vmem:[%s19 + $0x160] sm:$0xff]
    %v3650 = vld [vmem:[%s19 + $0x168] sm:$0xff]
    %v3651 = vld [vmem:[%s19 + $0x170] sm:$0xff]
    %v3652 = vld [vmem:[%s19 + $0x178] sm:$0xff]
    %v3653 = vld [vmem:[%s19 + $0x180] sm:$0xff]
    %v3654 = vld [vmem:[%s19 + $0x188] sm:$0xff]
    %v3655 = vld [vmem:[%s19 + $0x190] sm:$0xff]
    %v3656 = vld [vmem:[%s19 + $0x198] sm:$0xff]
    %v3657 = vld [vmem:[%s19 + $0x1a0] sm:$0xff]
    %v3658 = vld [vmem:[%s19 + $0x1a8] sm:$0xff]
    %v3659 = vld [vmem:[%s19 + $0x1b0] sm:$0xff]
    %v3660 = vld [vmem:[%s19 + $0x1b8] sm:$0xff]
    %v3661 = vld [vmem:[%s19 + $0x1c0] sm:$0xff]
    %v3662 = vld [vmem:[%s19 + $0x1c8] sm:$0xff]
    %v3663 = vld [vmem:[%s19 + $0x1d0] sm:$0xff]
    %v3664 = vld [vmem:[%s19 + $0x1d8] sm:$0xff]
    %v3665 = vld [vmem:[%s19 + $0x1e0] sm:$0xff]
    %v3666 = vld [vmem:[%s19 + $0x1e8] sm:$0xff]
    %v3667 = vld [vmem:[%s19 + $0x1f0] sm:$0xff]
    %v3668 = vld [vmem:[%s19 + $0x1f8] sm:$0xff]
    %v3669 = vld [vmem:[%s19 + $0x200] sm:$0xff]
    %v3670 = vld [vmem:[%s19 + $0x208] sm:$0xff]
    %v3671 = vld [vmem:[%s19 + $0x210] sm:$0xff]
    %v3672 = vld [vmem:[%s19 + $0x218] sm:$0xff]
    %v3673 = vld [vmem:[%s19 + $0x220] sm:$0xff]
    %v3674 = vld [vmem:[%s19 + $0x228] sm:$0xff]
    %v3675 = vld [vmem:[%s19 + $0x230] sm:$0xff]
    %v3676 = vld [vmem:[%s19 + $0x238] sm:$0xff]
    %v3677 = vld [vmem:[%s19 + $0x240] sm:$0xff]
    %v3678 = vld [vmem:[%s19 + $0x248] sm:$0xff]
    %v3679 = vld [vmem:[%s19 + $0x250] sm:$0xff]
    %v3680 = vld [vmem:[%s19 + $0x258] sm:$0xff]
    %v3681 = vld [vmem:[%s19 + $0x260] sm:$0xff]
    %v3682 = vld [vmem:[%s19 + $0x268] sm:$0xff]
    %v3683 = vld [vmem:[%s19 + $0x270] sm:$0xff]
    %v3684 = vld [vmem:[%s19 + $0x278] sm:$0xff]
    %v3685 = vld [vmem:[%s19 + $0x280] sm:$0xff]
    %v3686 = vld [vmem:[%s19 + $0x288] sm:$0xff]
    %v3687 = vld [vmem:[%s19 + $0x290] sm:$0xff]
    %v3688 = vld [vmem:[%s19 + $0x298] sm:$0xff]
    %v3689 = vld [vmem:[%s19 + $0x2a0] sm:$0xff]
    %v3690 = vld [vmem:[%s19 + $0x2a8] sm:$0xff]
    %v3691 = vld [vmem:[%s19 + $0x2b0] sm:$0xff]
    %v3692 = vld [vmem:[%s19 + $0x2b8] sm:$0xff]
    %v3693 = vld [vmem:[%s19 + $0x2c0] sm:$0xff]
    %v3694 = vld [vmem:[%s19 + $0x2c8] sm:$0xff]
    %v3695 = vld [vmem:[%s19 + $0x2d0] sm:$0xff]
    %v3696 = vld [vmem:[%s19 + $0x2d8] sm:$0xff]
    %v3697 = vld [vmem:[%s19 + $0x2e0] sm:$0xff]
    %v3698 = vld [vmem:[%s19 + $0x2e8] sm:$0xff]
    %v3699 = vld [vmem:[%s19 + $0x2f0] sm:$0xff]
    %v3700 = vld [vmem:[%s19 + $0x2f8] sm:$0xff]
    %v3701 = vld [vmem:[%s19 + $0x300] sm:$0xff]
    %v3702 = vld [vmem:[%s19 + $0x308] sm:$0xff]
    %v3703 = vld [vmem:[%s19 + $0x310] sm:$0xff]
    %v3704 = vld [vmem:[%s19 + $0x318] sm:$0xff]
    %v3705 = vld [vmem:[%s19 + $0x320] sm:$0xff]
    %v3706 = vld [vmem:[%s19 + $0x328] sm:$0xff]
    %v3707 = vld [vmem:[%s19 + $0x330] sm:$0xff]
    %v3708 = vld [vmem:[%s19 + $0x338] sm:$0xff]
    %v3709 = vld [vmem:[%s19 + $0x340] sm:$0xff]
    %v3710 = vld [vmem:[%s19 + $0x348] sm:$0xff]
    %v3711 = vld [vmem:[%s19 + $0x350] sm:$0xff]
    %v3712 = vld [vmem:[%s19 + $0x358] sm:$0xff]
    %v3713 = vld [vmem:[%s19 + $0x360] sm:$0xff]
    %v3714 = vld [vmem:[%s19 + $0x368] sm:$0xff]
    %v3715 = vld [vmem:[%s19 + $0x370] sm:$0xff]
    %v3716 = vld [vmem:[%s19 + $0x378] sm:$0xff]
    %v3717 = vld [vmem:[%s19 + $0x380] sm:$0xff]
    %v3718 = vld [vmem:[%s19 + $0x388] sm:$0xff]
    %v3719 = vld [vmem:[%s19 + $0x390] sm:$0xff]
    %v3720 = vld [vmem:[%s19 + $0x398] sm:$0xff]
    %v3721 = vld [vmem:[%s19 + $0x3a0] sm:$0xff]
    %v3722 = vld [vmem:[%s19 + $0x3a8] sm:$0xff]
    %v3723 = vld [vmem:[%s19 + $0x3b0] sm:$0xff]
    %v3724 = vld [vmem:[%s19 + $0x3b8] sm:$0xff]
    %v3725 = vld [vmem:[%s19 + $0x3c0] sm:$0xff]
    %v3726 = vld [vmem:[%s19 + $0x3c8] sm:$0xff]
    %v3727 = vld [vmem:[%s19 + $0x3d0] sm:$0xff]
    %v3728 = vld [vmem:[%s19 + $0x3d8] sm:$0xff]
    %v3729 = vld [vmem:[%s19 + $0x3e0] sm:$0xff]
    %v3730 = vld [vmem:[%s19 + $0x3e8] sm:$0xff]
    %v3731 = vld [vmem:[%s19 + $0x3f0] sm:$0xff]
    %v3732 = vld [vmem:[%s19 + $0x3f8] sm:$0xff]
    %v3733 = vld [vmem:[%s19 + $0x400] sm:$0xff]
    %v3734 = vld [vmem:[%s19 + $0x408] sm:$0xff]
    %v3735 = vld [vmem:[%s19 + $0x410] sm:$0xff]
    %v3736 = vld [vmem:[%s19 + $0x418] sm:$0xff]
    %v3737 = vld [vmem:[%s19 + $0x420] sm:$0xff]
    %v3738 = vld [vmem:[%s19 + $0x428] sm:$0xff]
    %v3739 = vld [vmem:[%s19 + $0x430] sm:$0xff]
    %v3740 = vld [vmem:[%s19 + $0x438] sm:$0xff]
    %v3741 = vld [vmem:[%s19 + $0x440] sm:$0xff]
    %v3742 = vld [vmem:[%s19 + $0x448] sm:$0xff]
    %v3743 = vld [vmem:[%s19 + $0x450] sm:$0xff]
    %v3744 = vld [vmem:[%s19 + $0x458] sm:$0xff]
    %v3745 = vld [vmem:[%s19 + $0x460] sm:$0xff]
    %v3746 = vld [vmem:[%s19 + $0x468] sm:$0xff]
    %v3747 = vld [vmem:[%s19 + $0x470] sm:$0xff]
    %v3748 = vld [vmem:[%s19 + $0x478] sm:$0xff]
    %3749 = vmatprep.subr.mxu0 %v3741
    %3750 = vmatpush1.msra.mxu0 %v3740
    %3751 = vmatprep.subr.mxu0 %v3732
    %3752 = vmatpush1.msra.mxu0 %v3731
    %3753 = vmatprep.subr.mxu0 %v3723
    %3754 = vmatpush1.msra.mxu0 %v3722
    %3755 = vmatprep.subr.mxu0 %v3714
    %3756 = vmatpush1.msra.mxu0 %v3713
    %3757 = vmatprep.subr.mxu0 %v3705
    %3758 = vmatpush1.msra.mxu0 %v3704
    %3759 = vmatprep.subr.mxu0 %v3696
    %3760 = vmatpush1.msra.mxu0 %v3695
    %3761 = vmatprep.subr.mxu0 %v3687
    %3762 = vmatpush1.msra.mxu0 %v3686
    %3763 = vmatprep.subr.mxu0 %v3678
    %3764 = vmatpush1.msra.mxu0 %v3677
    %3765 = vmatprep.subr.mxu0 %v3669
    %3766 = vmatpush1.msra.mxu0 %v3668
    %3767 = vmatprep.subr.mxu0 %v3660
    %3768 = vmatpush1.msra.mxu0 %v3659
    %3769 = vmatprep.subr.mxu0 %v3651
    %3770 = vmatpush1.msra.mxu0 %v3650
    %3771 = vmatprep.subr.mxu0 %v3642
    %3772 = vmatpush1.msra.mxu0 %v3641
    %3773 = vmatprep.subr.mxu0 %v3633
    %3774 = vmatpush1.msra.mxu0 %v3632
    %3775 = vmatprep.subr.mxu0 %v3624
    %3776 = vmatpush1.msra.mxu0 %v3623
    %3777 = vmatprep.subr.mxu0 %v3615
    %3778 = vmatpush1.msra.mxu0 %v3614
    %3779 = vmatprep.subr.mxu0 %v3606
    %3780 = vmatpush1.msra.mxu0 %v3605
    %3781 = vmatprep.subr.mxu0 0.0
    %3782 = vmatpush2.msra.mxu0 0.0
    %3783 = vmatprep.subr.mxu0 0.0
    %3784 = vmatpush2.msra.mxu0 0.0
    %3785 = vmatprep.subr.mxu0 0.0
    %3786 = vmatpush2.msra.mxu0 0.0
    %3787 = vmatprep.subr.mxu0 0.0
    %3788 = vmatpush2.msra.mxu0 0.0
    %3789 = vmatprep.subr.mxu0 0.0
    %3790 = vmatpush2.msra.mxu0 0.0
    %3791 = vmatprep.subr.mxu0 0.0
    %3792 = vmatpush2.msra.mxu0 0.0
    %3793 = vmatprep.subr.mxu0 0.0
    %3794 = vmatpush2.msra.mxu0 0.0
    %3795 = vmatprep.subr.mxu0 0.0
    %3796 = vmatpush2.msra.mxu0 0.0
    %3797 = vmatprep.subr.mxu0 0.0
    %3798 = vmatpush2.msra.mxu0 0.0
    %3799 = vmatprep.subr.mxu0 0.0
    %3800 = vmatpush2.msra.mxu0 0.0
    %3801 = vmatprep.subr.mxu0 0.0
    %3802 = vmatpush2.msra.mxu0 0.0
    %3803 = vmatprep.subr.mxu0 0.0
    %3804 = vmatpush2.msra.mxu0 0.0
    %3805 = vmatprep.subr.mxu0 0.0
    %3806 = vmatpush2.msra.mxu0 0.0
    %3807 = vmatprep.subr.mxu0 0.0
    %3808 = vmatpush2.msra.mxu0 0.0
    %3809 = vmatprep.subr.mxu0 0.0
    %3810 = vmatpush2.msra.mxu0 0.0
    %3811 = vmatprep.subr.mxu0 0.0
    %3812 = vmatpush2.msra.mxu0 0.0
    %3813 = vmatprep.mubr.f32.mxu0 0.0
    %3814 = vmatmul.mubr.f32.gmra.mxu0 %v3604
    %v3815 = vpop.f32.mrf.mxu0
    %v3816 = vadd.f32 0.0, %v3815
    %v3817 = vpop.f32.mrf.mxu0
    %v3818 = vadd.f32 0.0, %v3817
    %3819 = vdwg.mxu0
    %3820 = vmatprep.subr.mxu0 %v3743
    %3821 = vmatpush1.msra.mxu0 %v3742
    %3822 = vmatprep.subr.mxu0 %v3734
    %3823 = vmatpush1.msra.mxu0 %v3733
    %3824 = vmatprep.subr.mxu0 %v3725
    %3825 = vmatpush1.msra.mxu0 %v3724
    %3826 = vmatprep.subr.mxu0 %v3716
    %3827 = vmatpush1.msra.mxu0 %v3715
    %3828 = vmatprep.subr.mxu0 %v3707
    %3829 = vmatpush1.msra.mxu0 %v3706
    %3830 = vmatprep.subr.mxu0 %v3698
    %3831 = vmatpush1.msra.mxu0 %v3697
    %3832 = vmatprep.subr.mxu0 %v3689
    %3833 = vmatpush1.msra.mxu0 %v3688
    %3834 = vmatprep.subr.mxu0 %v3680
    %3835 = vmatpush1.msra.mxu0 %v3679
    %3836 = vmatprep.subr.mxu0 %v3671
    %3837 = vmatpush1.msra.mxu0 %v3670
    %3838 = vmatprep.subr.mxu0 %v3662
    %3839 = vmatpush1.msra.mxu0 %v3661
    %3840 = vmatprep.subr.mxu0 %v3653
    %3841 = vmatpush1.msra.mxu0 %v3652
    %3842 = vmatprep.subr.mxu0 %v3644
    %3843 = vmatpush1.msra.mxu0 %v3643
    %3844 = vmatprep.subr.mxu0 %v3635
    %3845 = vmatpush1.msra.mxu0 %v3634
    %3846 = vmatprep.subr.mxu0 %v3626
    %3847 = vmatpush1.msra.mxu0 %v3625
    %3848 = vmatprep.subr.mxu0 %v3617
    %3849 = vmatpush1.msra.mxu0 %v3616
    %3850 = vmatprep.subr.mxu0 %v3608
    %3851 = vmatpush1.msra.mxu0 %v3607
    %3852 = vmatprep.subr.mxu0 0.0
    %3853 = vmatpush2.msra.mxu0 0.0
    %3854 = vmatprep.subr.mxu0 0.0
    %3855 = vmatpush2.msra.mxu0 0.0
    %3856 = vmatprep.subr.mxu0 0.0
    %3857 = vmatpush2.msra.mxu0 0.0
    %3858 = vmatprep.subr.mxu0 0.0
    %3859 = vmatpush2.msra.mxu0 0.0
    %3860 = vmatprep.subr.mxu0 0.0
    %3861 = vmatpush2.msra.mxu0 0.0
    %3862 = vmatprep.subr.mxu0 0.0
    %3863 = vmatpush2.msra.mxu0 0.0
    %3864 = vmatprep.subr.mxu0 0.0
    %3865 = vmatpush2.msra.mxu0 0.0
    %3866 = vmatprep.subr.mxu0 0.0
    %3867 = vmatpush2.msra.mxu0 0.0
    %3868 = vmatprep.subr.mxu0 0.0
    %3869 = vmatpush2.msra.mxu0 0.0
    %3870 = vmatprep.subr.mxu0 0.0
    %3871 = vmatpush2.msra.mxu0 0.0
    %3872 = vmatprep.subr.mxu0 0.0
    %3873 = vmatpush2.msra.mxu0 0.0
    %3874 = vmatprep.subr.mxu0 0.0
    %3875 = vmatpush2.msra.mxu0 0.0
    %3876 = vmatprep.subr.mxu0 0.0
    %3877 = vmatpush2.msra.mxu0 0.0
    %3878 = vmatprep.subr.mxu0 0.0
    %3879 = vmatpush2.msra.mxu0 0.0
    %3880 = vmatprep.subr.mxu0 0.0
    %3881 = vmatpush2.msra.mxu0 0.0
    %3882 = vmatprep.subr.mxu0 0.0
    %3883 = vmatpush2.msra.mxu0 0.0
    %3884 = vmatprep.mubr.f32.mxu0 0.0
    %3885 = vmatmul.mubr.f32.gmra.mxu0 %v3604
    %v3886 = vpop.f32.mrf.mxu0
    %v3887 = vadd.f32 0.0, %v3886
    %v3888 = vpop.f32.mrf.mxu0
    %v3889 = vadd.f32 0.0, %v3888
    %3890 = vdwg.mxu0
    %3891 = vmatprep.subr.mxu0 %v3745
    %3892 = vmatpush1.msra.mxu0 %v3744
    %3893 = vmatprep.subr.mxu0 %v3736
    %3894 = vmatpush1.msra.mxu0 %v3735
    %3895 = vmatprep.subr.mxu0 %v3727
    %3896 = vmatpush1.msra.mxu0 %v3726
    %3897 = vmatprep.subr.mxu0 %v3718
    %3898 = vmatpush1.msra.mxu0 %v3717
    %3899 = vmatprep.subr.mxu0 %v3709
    %3900 = vmatpush1.msra.mxu0 %v3708
    %3901 = vmatprep.subr.mxu0 %v3700
    %3902 = vmatpush1.msra.mxu0 %v3699
    %3903 = vmatprep.subr.mxu0 %v3691
    %3904 = vmatpush1.msra.mxu0 %v3690
    %3905 = vmatprep.subr.mxu0 %v3682
    %3906 = vmatpush1.msra.mxu0 %v3681
    %3907 = vmatprep.subr.mxu0 %v3673
    %3908 = vmatpush1.msra.mxu0 %v3672
    %3909 = vmatprep.subr.mxu0 %v3664
    %3910 = vmatpush1.msra.mxu0 %v3663
    %3911 = vmatprep.subr.mxu0 %v3655
    %3912 = vmatpush1.msra.mxu0 %v3654
    %3913 = vmatprep.subr.mxu0 %v3646
    %3914 = vmatpush1.msra.mxu0 %v3645
    %3915 = vmatprep.subr.mxu0 %v3637
    %3916 = vmatpush1.msra.mxu0 %v3636
    %3917 = vmatprep.subr.mxu0 %v3628
    %3918 = vmatpush1.msra.mxu0 %v3627
    %3919 = vmatprep.subr.mxu0 %v3619
    %3920 = vmatpush1.msra.mxu0 %v3618
    %3921 = vmatprep.subr.mxu0 %v3610
    %3922 = vmatpush1.msra.mxu0 %v3609
    %3923 = vmatprep.subr.mxu0 0.0
    %3924 = vmatpush2.msra.mxu0 0.0
    %3925 = vmatprep.subr.mxu0 0.0
    %3926 = vmatpush2.msra.mxu0 0.0
    %3927 = vmatprep.subr.mxu0 0.0
    %3928 = vmatpush2.msra.mxu0 0.0
    %3929 = vmatprep.subr.mxu0 0.0
    %3930 = vmatpush2.msra.mxu0 0.0
    %3931 = vmatprep.subr.mxu0 0.0
    %3932 = vmatpush2.msra.mxu0 0.0
    %3933 = vmatprep.subr.mxu0 0.0
    %3934 = vmatpush2.msra.mxu0 0.0
    %3935 = vmatprep.subr.mxu0 0.0
    %3936 = vmatpush2.msra.mxu0 0.0
    %3937 = vmatprep.subr.mxu0 0.0
    %3938 = vmatpush2.msra.mxu0 0.0
    %3939 = vmatprep.subr.mxu0 0.0
    %3940 = vmatpush2.msra.mxu0 0.0
    %3941 = vmatprep.subr.mxu0 0.0
    %3942 = vmatpush2.msra.mxu0 0.0
    %3943 = vmatprep.subr.mxu0 0.0
    %3944 = vmatpush2.msra.mxu0 0.0
    %3945 = vmatprep.subr.mxu0 0.0
    %3946 = vmatpush2.msra.mxu0 0.0
    %3947 = vmatprep.subr.mxu0 0.0
    %3948 = vmatpush2.msra.mxu0 0.0
    %3949 = vmatprep.subr.mxu0 0.0
    %3950 = vmatpush2.msra.mxu0 0.0
    %3951 = vmatprep.subr.mxu0 0.0
    %3952 = vmatpush2.msra.mxu0 0.0
    %3953 = vmatprep.subr.mxu0 0.0
    %3954 = vmatpush2.msra.mxu0 0.0
    %3955 = vmatprep.mubr.f32.mxu0 0.0
    %3956 = vmatmul.mubr.f32.gmra.mxu0 %v3604
    %v3957 = vpop.f32.mrf.mxu0
    %v3958 = vadd.f32 0.0, %v3957
    %v3959 = vpop.f32.mrf.mxu0
    %v3960 = vadd.f32 0.0, %v3959
    %3961 = vdwg.mxu0
    %3962 = vmatprep.subr.mxu0 %v3747
    %3963 = vmatpush1.msra.mxu0 %v3746
    %3964 = vmatprep.subr.mxu0 %v3738
    %3965 = vmatpush1.msra.mxu0 %v3737
    %3966 = vmatprep.subr.mxu0 %v3729
    %3967 = vmatpush1.msra.mxu0 %v3728
    %3968 = vmatprep.subr.mxu0 %v3720
    %3969 = vmatpush1.msra.mxu0 %v3719
    %3970 = vmatprep.subr.mxu0 %v3711
    %3971 = vmatpush1.msra.mxu0 %v3710
    %3972 = vmatprep.subr.mxu0 %v3702
    %3973 = vmatpush1.msra.mxu0 %v3701
    %3974 = vmatprep.subr.mxu0 %v3693
    %3975 = vmatpush1.msra.mxu0 %v3692
    %3976 = vmatprep.subr.mxu0 %v3684
    %3977 = vmatpush1.msra.mxu0 %v3683
    %3978 = vmatprep.subr.mxu0 %v3675
    %3979 = vmatpush1.msra.mxu0 %v3674
    %3980 = vmatprep.subr.mxu0 %v3666
    %3981 = vmatpush1.msra.mxu0 %v3665
    %3982 = vmatprep.subr.mxu0 %v3657
    %3983 = vmatpush1.msra.mxu0 %v3656
    %3984 = vmatprep.subr.mxu0 %v3648
    %3985 = vmatpush1.msra.mxu0 %v3647
    %3986 = vmatprep.subr.mxu0 %v3639
    %3987 = vmatpush1.msra.mxu0 %v3638
    %3988 = vmatprep.subr.mxu0 %v3630
    %3989 = vmatpush1.msra.mxu0 %v3629
    %3990 = vmatprep.subr.mxu0 %v3621
    %3991 = vmatpush1.msra.mxu0 %v3620
    %3992 = vmatprep.subr.mxu0 %v3612
    %3993 = vmatpush1.msra.mxu0 %v3611
    %3994 = vmatprep.subr.mxu0 0.0
    %3995 = vmatpush2.msra.mxu0 0.0
    %3996 = vmatprep.subr.mxu0 0.0
    %3997 = vmatpush2.msra.mxu0 0.0
    %3998 = vmatprep.subr.mxu0 0.0
    %3999 = vmatpush2.msra.mxu0 0.0
    %4000 = vmatprep.subr.mxu0 0.0
    %4001 = vmatpush2.msra.mxu0 0.0
    %4002 = vmatprep.subr.mxu0 0.0
    %4003 = vmatpush2.msra.mxu0 0.0
    %4004 = vmatprep.subr.mxu0 0.0
    %4005 = vmatpush2.msra.mxu0 0.0
    %4006 = vmatprep.subr.mxu0 0.0
    %4007 = vmatpush2.msra.mxu0 0.0
    %4008 = vmatprep.subr.mxu0 0.0
    %4009 = vmatpush2.msra.mxu0 0.0
    %4010 = vmatprep.subr.mxu0 0.0
    %4011 = vmatpush2.msra.mxu0 0.0
    %4012 = vmatprep.subr.mxu0 0.0
    %4013 = vmatpush2.msra.mxu0 0.0
    %4014 = vmatprep.subr.mxu0 0.0
    %4015 = vmatpush2.msra.mxu0 0.0
    %4016 = vmatprep.subr.mxu0 0.0
    %4017 = vmatpush2.msra.mxu0 0.0
    %4018 = vmatprep.subr.mxu0 0.0
    %4019 = vmatpush2.msra.mxu0 0.0
    %4020 = vmatprep.subr.mxu0 0.0
    %4021 = vmatpush2.msra.mxu0 0.0
    %4022 = vmatprep.subr.mxu0 0.0
    %4023 = vmatpush2.msra.mxu0 0.0
    %4024 = vmatprep.subr.mxu0 0.0
    %4025 = vmatpush2.msra.mxu0 0.0
    %4026 = vmatprep.mubr.f32.mxu0 0.0
    %4027 = vmatmul.mubr.f32.gmra.mxu0 %v3604
    %v4028 = vpop.f32.mrf.mxu0
    %v4029 = vadd.f32 0.0, %v4028
    %v4030 = vpop.f32.mrf.mxu0
    %v4031 = vadd.f32 0.0, %v4030
    %4032 = vdwg.mxu0
    %4033 = vmatprep.subr.mxu0 0.0
    %4034 = vmatpush1.msra.mxu0 %v3748
    %4035 = vmatprep.subr.mxu0 0.0
    %4036 = vmatpush1.msra.mxu0 %v3739
    %4037 = vmatprep.subr.mxu0 0.0
    %4038 = vmatpush1.msra.mxu0 %v3730
    %4039 = vmatprep.subr.mxu0 0.0
    %4040 = vmatpush1.msra.mxu0 %v3721
    %4041 = vmatprep.subr.mxu0 0.0
    %4042 = vmatpush1.msra.mxu0 %v3712
    %4043 = vmatprep.subr.mxu0 0.0
    %4044 = vmatpush1.msra.mxu0 %v3703
    %4045 = vmatprep.subr.mxu0 0.0
    %4046 = vmatpush1.msra.mxu0 %v3694
    %4047 = vmatprep.subr.mxu0 0.0
    %4048 = vmatpush1.msra.mxu0 %v3685
    %4049 = vmatprep.subr.mxu0 0.0
    %4050 = vmatpush1.msra.mxu0 %v3676
    %4051 = vmatprep.subr.mxu0 0.0
    %4052 = vmatpush1.msra.mxu0 %v3667
    %4053 = vmatprep.subr.mxu0 0.0
    %4054 = vmatpush1.msra.mxu0 %v3658
    %4055 = vmatprep.subr.mxu0 0.0
    %4056 = vmatpush1.msra.mxu0 %v3649
    %4057 = vmatprep.subr.mxu0 0.0
    %4058 = vmatpush1.msra.mxu0 %v3640
    %4059 = vmatprep.subr.mxu0 0.0
    %4060 = vmatpush1.msra.mxu0 %v3631
    %4061 = vmatprep.subr.mxu0 0.0
    %4062 = vmatpush1.msra.mxu0 %v3622
    %4063 = vmatprep.subr.mxu0 0.0
    %4064 = vmatpush1.msra.mxu0 %v3613
    %4065 = vmatprep.subr.mxu0 0.0
    %4066 = vmatpush2.msra.mxu0 0.0
    %4067 = vmatprep.subr.mxu0 0.0
    %4068 = vmatpush2.msra.mxu0 0.0
    %4069 = vmatprep.subr.mxu0 0.0
    %4070 = vmatpush2.msra.mxu0 0.0
    %4071 = vmatprep.subr.mxu0 0.0
    %4072 = vmatpush2.msra.mxu0 0.0
    %4073 = vmatprep.subr.mxu0 0.0
    %4074 = vmatpush2.msra.mxu0 0.0
    %4075 = vmatprep.subr.mxu0 0.0
    %4076 = vmatpush2.msra.mxu0 0.0
    %4077 = vmatprep.subr.mxu0 0.0
    %4078 = vmatpush2.msra.mxu0 0.0
    %4079 = vmatprep.subr.mxu0 0.0
    %4080 = vmatpush2.msra.mxu0 0.0
    %4081 = vmatprep.subr.mxu0 0.0
    %4082 = vmatpush2.msra.mxu0 0.0
    %4083 = vmatprep.subr.mxu0 0.0
    %4084 = vmatpush2.msra.mxu0 0.0
    %4085 = vmatprep.subr.mxu0 0.0
    %4086 = vmatpush2.msra.mxu0 0.0
    %4087 = vmatprep.subr.mxu0 0.0
    %4088 = vmatpush2.msra.mxu0 0.0
    %4089 = vmatprep.subr.mxu0 0.0
    %4090 = vmatpush2.msra.mxu0 0.0
    %4091 = vmatprep.subr.mxu0 0.0
    %4092 = vmatpush2.msra.mxu0 0.0
    %4093 = vmatprep.subr.mxu0 0.0
    %4094 = vmatpush2.msra.mxu0 0.0
    %4095 = vmatprep.subr.mxu0 0.0
    %4096 = vmatpush2.msra.mxu0 0.0
    %4097 = vmatprep.mubr.f32.mxu0 0.0
    %4098 = vmatmul.mubr.f32.gmra.mxu0 %v3604
    %v4099 = vpop.f32.mrf.mxu0
    %v4100 = vadd.f32 0.0, %v4099
    %v4101 = vpop.f32.mrf.mxu0
    %4102 = vdwg.mxu0
    %v4103 = vld [vmem:[%s23] sm:$0x3]
    %s4104 = scalar_lea.vmem %s23, 2
    %v4105 = vld [vmem:[%s4104] sm:$0x3]
    %vm4106 = vcmask 64512
    %v4108 = vsel %vm4106, %v4105, 0
    %4110 = vmatprep.subr.mxu0 0.0
    %4111 = vmatpush1.msra.mxu0 0.0
    %4112 = vmatprep.subr.mxu0 0.0
    %4113 = vmatpush1.msra.mxu0 0.0
    %4114 = vmatprep.subr.mxu0 0.0
    %4115 = vmatpush1.msra.mxu0 0.0
    %4116 = vmatprep.subr.mxu0 0.0
    %4117 = vmatpush1.msra.mxu0 0.0
    %4118 = vmatprep.subr.mxu0 0.0
    %4119 = vmatpush1.msra.mxu0 0.0
    %4120 = vmatprep.subr.mxu0 0.0
    %4121 = vmatpush1.msra.mxu0 0.0
    %4122 = vmatprep.subr.mxu0 0.0
    %4123 = vmatpush1.msra.mxu0 0.0
    %4124 = vmatprep.subr.mxu0 0.0
    %4125 = vmatpush1.msra.mxu0 0.0
    %4126 = vmatprep.subr.mxu0 0.0
    %4127 = vmatpush1.msra.mxu0 0.0
    %4128 = vmatprep.subr.mxu0 0.0
    %4129 = vmatpush1.msra.mxu0 0.0
    %4130 = vmatprep.subr.mxu0 0.0
    %4131 = vmatpush1.msra.mxu0 0.0
    %4132 = vmatprep.subr.mxu0 0.0
    %4133 = vmatpush1.msra.mxu0 0.0
    %4134 = vmatprep.subr.mxu0 0.0
    %4135 = vmatpush1.msra.mxu0 0.0
    %4136 = vmatprep.subr.mxu0 0.0
    %4137 = vmatpush1.msra.mxu0 0.0
    %4138 = vmatprep.subr.mxu0 0.0
    %4139 = vmatpush1.msra.mxu0 0.0
    %4140 = vmatprep.subr.mxu0 0.0
    %4141 = vmatpush1.msra.mxu0 %v3818
    %4142 = vmatprep.subr.mxu0 0.0
    %4143 = vmatpush2.msra.mxu0 0.0
    %4144 = vmatprep.subr.mxu0 0.0
    %4145 = vmatpush2.msra.mxu0 0.0
    %4146 = vmatprep.subr.mxu0 0.0
    %4147 = vmatpush2.msra.mxu0 0.0
    %4148 = vmatprep.subr.mxu0 0.0
    %4149 = vmatpush2.msra.mxu0 0.0
    %4150 = vmatprep.subr.mxu0 0.0
    %4151 = vmatpush2.msra.mxu0 0.0
    %4152 = vmatprep.subr.mxu0 0.0
    %4153 = vmatpush2.msra.mxu0 0.0
    %4154 = vmatprep.subr.mxu0 0.0
    %4155 = vmatpush2.msra.mxu0 0.0
    %4156 = vmatprep.subr.mxu0 0.0
    %4157 = vmatpush2.msra.mxu0 0.0
    %4158 = vmatprep.subr.mxu0 0.0
    %4159 = vmatpush2.msra.mxu0 0.0
    %4160 = vmatprep.subr.mxu0 0.0
    %4161 = vmatpush2.msra.mxu0 0.0
    %4162 = vmatprep.subr.mxu0 0.0
    %4163 = vmatpush2.msra.mxu0 0.0
    %4164 = vmatprep.subr.mxu0 0.0
    %4165 = vmatpush2.msra.mxu0 0.0
    %4166 = vmatprep.subr.mxu0 0.0
    %4167 = vmatpush2.msra.mxu0 0.0
    %4168 = vmatprep.subr.mxu0 0.0
    %4169 = vmatpush2.msra.mxu0 0.0
    %4170 = vmatprep.subr.mxu0 0.0
    %4171 = vmatpush2.msra.mxu0 0.0
    %4172 = vmatprep.subr.mxu0 0.0
    %4173 = vmatpush2.msra.mxu0 0.0
    %4174 = vmatprep.mubr.f32.mxu0 0.0
    %4175 = vmatmul.mubr.f32.gmra.mxu0 %v4108
    %v4176 = vpop.f32.mrf.mxu0
    %v4177 = vadd.f32 0.0, %v4176
    %v4178 = vpop.f32.mrf.mxu0
    %4179 = vdwg.mxu0
    %v4181 = vsel %vm4106, %v4103, 0
    %4183 = vmatprep.subr.mxu0 0.0
    %4184 = vmatpush1.msra.mxu0 0.0
    %4185 = vmatprep.subr.mxu0 0.0
    %4186 = vmatpush1.msra.mxu0 0.0
    %4187 = vmatprep.subr.mxu0 0.0
    %4188 = vmatpush1.msra.mxu0 0.0
    %4189 = vmatprep.subr.mxu0 0.0
    %4190 = vmatpush1.msra.mxu0 0.0
    %4191 = vmatprep.subr.mxu0 0.0
    %4192 = vmatpush1.msra.mxu0 0.0
    %4193 = vmatprep.subr.mxu0 0.0
    %4194 = vmatpush1.msra.mxu0 0.0
    %4195 = vmatprep.subr.mxu0 0.0
    %4196 = vmatpush1.msra.mxu0 0.0
    %4197 = vmatprep.subr.mxu0 0.0
    %4198 = vmatpush1.msra.mxu0 0.0
    %4199 = vmatprep.subr.mxu0 0.0
    %4200 = vmatpush1.msra.mxu0 0.0
    %4201 = vmatprep.subr.mxu0 0.0
    %4202 = vmatpush1.msra.mxu0 0.0
    %4203 = vmatprep.subr.mxu0 0.0
    %4204 = vmatpush1.msra.mxu0 0.0
    %4205 = vmatprep.subr.mxu0 0.0
    %4206 = vmatpush1.msra.mxu0 0.0
    %4207 = vmatprep.subr.mxu0 0.0
    %4208 = vmatpush1.msra.mxu0 0.0
    %4209 = vmatprep.subr.mxu0 0.0
    %4210 = vmatpush1.msra.mxu0 0.0
    %4211 = vmatprep.subr.mxu0 0.0
    %4212 = vmatpush1.msra.mxu0 0.0
    %4213 = vmatprep.subr.mxu0 0.0
    %4214 = vmatpush1.msra.mxu0 %v3816
    %4215 = vmatprep.subr.mxu0 0.0
    %4216 = vmatpush2.msra.mxu0 0.0
    %4217 = vmatprep.subr.mxu0 0.0
    %4218 = vmatpush2.msra.mxu0 0.0
    %4219 = vmatprep.subr.mxu0 0.0
    %4220 = vmatpush2.msra.mxu0 0.0
    %4221 = vmatprep.subr.mxu0 0.0
    %4222 = vmatpush2.msra.mxu0 0.0
    %4223 = vmatprep.subr.mxu0 0.0
    %4224 = vmatpush2.msra.mxu0 0.0
    %4225 = vmatprep.subr.mxu0 0.0
    %4226 = vmatpush2.msra.mxu0 0.0
    %4227 = vmatprep.subr.mxu0 0.0
    %4228 = vmatpush2.msra.mxu0 0.0
    %4229 = vmatprep.subr.mxu0 0.0
    %4230 = vmatpush2.msra.mxu0 0.0
    %4231 = vmatprep.subr.mxu0 0.0
    %4232 = vmatpush2.msra.mxu0 0.0
    %4233 = vmatprep.subr.mxu0 0.0
    %4234 = vmatpush2.msra.mxu0 0.0
    %4235 = vmatprep.subr.mxu0 0.0
    %4236 = vmatpush2.msra.mxu0 0.0
    %4237 = vmatprep.subr.mxu0 0.0
    %4238 = vmatpush2.msra.mxu0 0.0
    %4239 = vmatprep.subr.mxu0 0.0
    %4240 = vmatpush2.msra.mxu0 0.0
    %4241 = vmatprep.subr.mxu0 0.0
    %4242 = vmatpush2.msra.mxu0 0.0
    %4243 = vmatprep.subr.mxu0 0.0
    %4244 = vmatpush2.msra.mxu0 0.0
    %4245 = vmatprep.subr.mxu0 0.0
    %4246 = vmatpush2.msra.mxu0 0.0
    %4247 = vmatprep.mubr.f32.mxu0 0.0
    %4248 = vmatmul.mubr.f32.gmra.mxu0 %v4181
    %v4249 = vpop.f32.mrf.mxu0
    %v4250 = vadd.f32 %v4177, %v4249
    %v4251 = vpop.f32.mrf.mxu0
    %4252 = vdwg.mxu0
    %s4253 = scalar_lea.vmem %s23, 4
    %v4254 = vld [vmem:[%s4253] sm:$0x3]
    %v4256 = vsel %vm4106, %v4254, 0
    %4258 = vmatprep.subr.mxu0 0.0
    %4259 = vmatpush1.msra.mxu0 0.0
    %4260 = vmatprep.subr.mxu0 0.0
    %4261 = vmatpush1.msra.mxu0 0.0
    %4262 = vmatprep.subr.mxu0 0.0
    %4263 = vmatpush1.msra.mxu0 0.0
    %4264 = vmatprep.subr.mxu0 0.0
    %4265 = vmatpush1.msra.mxu0 0.0
    %4266 = vmatprep.subr.mxu0 0.0
    %4267 = vmatpush1.msra.mxu0 0.0
    %4268 = vmatprep.subr.mxu0 0.0
    %4269 = vmatpush1.msra.mxu0 0.0
    %4270 = vmatprep.subr.mxu0 0.0
    %4271 = vmatpush1.msra.mxu0 0.0
    %4272 = vmatprep.subr.mxu0 0.0
    %4273 = vmatpush1.msra.mxu0 0.0
    %4274 = vmatprep.subr.mxu0 0.0
    %4275 = vmatpush1.msra.mxu0 0.0
    %4276 = vmatprep.subr.mxu0 0.0
    %4277 = vmatpush1.msra.mxu0 0.0
    %4278 = vmatprep.subr.mxu0 0.0
    %4279 = vmatpush1.msra.mxu0 0.0
    %4280 = vmatprep.subr.mxu0 0.0
    %4281 = vmatpush1.msra.mxu0 0.0
    %4282 = vmatprep.subr.mxu0 0.0
    %4283 = vmatpush1.msra.mxu0 0.0
    %4284 = vmatprep.subr.mxu0 0.0
    %4285 = vmatpush1.msra.mxu0 0.0
    %4286 = vmatprep.subr.mxu0 0.0
    %4287 = vmatpush1.msra.mxu0 0.0
    %4288 = vmatprep.subr.mxu0 0.0
    %4289 = vmatpush1.msra.mxu0 %v3887
    %4290 = vmatprep.subr.mxu0 0.0
    %4291 = vmatpush2.msra.mxu0 0.0
    %4292 = vmatprep.subr.mxu0 0.0
    %4293 = vmatpush2.msra.mxu0 0.0
    %4294 = vmatprep.subr.mxu0 0.0
    %4295 = vmatpush2.msra.mxu0 0.0
    %4296 = vmatprep.subr.mxu0 0.0
    %4297 = vmatpush2.msra.mxu0 0.0
    %4298 = vmatprep.subr.mxu0 0.0
    %4299 = vmatpush2.msra.mxu0 0.0
    %4300 = vmatprep.subr.mxu0 0.0
    %4301 = vmatpush2.msra.mxu0 0.0
    %4302 = vmatprep.subr.mxu0 0.0
    %4303 = vmatpush2.msra.mxu0 0.0
    %4304 = vmatprep.subr.mxu0 0.0
    %4305 = vmatpush2.msra.mxu0 0.0
    %4306 = vmatprep.subr.mxu0 0.0
    %4307 = vmatpush2.msra.mxu0 0.0
    %4308 = vmatprep.subr.mxu0 0.0
    %4309 = vmatpush2.msra.mxu0 0.0
    %4310 = vmatprep.subr.mxu0 0.0
    %4311 = vmatpush2.msra.mxu0 0.0
    %4312 = vmatprep.subr.mxu0 0.0
    %4313 = vmatpush2.msra.mxu0 0.0
    %4314 = vmatprep.subr.mxu0 0.0
    %4315 = vmatpush2.msra.mxu0 0.0
    %4316 = vmatprep.subr.mxu0 0.0
    %4317 = vmatpush2.msra.mxu0 0.0
    %4318 = vmatprep.subr.mxu0 0.0
    %4319 = vmatpush2.msra.mxu0 0.0
    %4320 = vmatprep.subr.mxu0 0.0
    %4321 = vmatpush2.msra.mxu0 0.0
    %4322 = vmatprep.mubr.f32.mxu0 0.0
    %4323 = vmatmul.mubr.f32.gmra.mxu0 %v4256
    %v4324 = vpop.f32.mrf.mxu0
    %v4325 = vadd.f32 0.0, %v4324
    %v4326 = vpop.f32.mrf.mxu0
    %4327 = vdwg.mxu0
    %v4328 = vadd.f32 %v4250, %v4325
    %s4329 = scalar_lea.vmem %s23, 6
    %v4330 = vld [vmem:[%s4329] sm:$0x3]
    %v4332 = vsel %vm4106, %v4330, 0
    %4334 = vmatprep.subr.mxu0 0.0
    %4335 = vmatpush1.msra.mxu0 0.0
    %4336 = vmatprep.subr.mxu0 0.0
    %4337 = vmatpush1.msra.mxu0 0.0
    %4338 = vmatprep.subr.mxu0 0.0
    %4339 = vmatpush1.msra.mxu0 0.0
    %4340 = vmatprep.subr.mxu0 0.0
    %4341 = vmatpush1.msra.mxu0 0.0
    %4342 = vmatprep.subr.mxu0 0.0
    %4343 = vmatpush1.msra.mxu0 0.0
    %4344 = vmatprep.subr.mxu0 0.0
    %4345 = vmatpush1.msra.mxu0 0.0
    %4346 = vmatprep.subr.mxu0 0.0
    %4347 = vmatpush1.msra.mxu0 0.0
    %4348 = vmatprep.subr.mxu0 0.0
    %4349 = vmatpush1.msra.mxu0 0.0
    %4350 = vmatprep.subr.mxu0 0.0
    %4351 = vmatpush1.msra.mxu0 0.0
    %4352 = vmatprep.subr.mxu0 0.0
    %4353 = vmatpush1.msra.mxu0 0.0
    %4354 = vmatprep.subr.mxu0 0.0
    %4355 = vmatpush1.msra.mxu0 0.0
    %4356 = vmatprep.subr.mxu0 0.0
    %4357 = vmatpush1.msra.mxu0 0.0
    %4358 = vmatprep.subr.mxu0 0.0
    %4359 = vmatpush1.msra.mxu0 0.0
    %4360 = vmatprep.subr.mxu0 0.0
    %4361 = vmatpush1.msra.mxu0 0.0
    %4362 = vmatprep.subr.mxu0 0.0
    %4363 = vmatpush1.msra.mxu0 0.0
    %4364 = vmatprep.subr.mxu0 0.0
    %4365 = vmatpush1.msra.mxu0 %v3889
    %4366 = vmatprep.subr.mxu0 0.0
    %4367 = vmatpush2.msra.mxu0 0.0
    %4368 = vmatprep.subr.mxu0 0.0
    %4369 = vmatpush2.msra.mxu0 0.0
    %4370 = vmatprep.subr.mxu0 0.0
    %4371 = vmatpush2.msra.mxu0 0.0
    %4372 = vmatprep.subr.mxu0 0.0
    %4373 = vmatpush2.msra.mxu0 0.0
    %4374 = vmatprep.subr.mxu0 0.0
    %4375 = vmatpush2.msra.mxu0 0.0
    %4376 = vmatprep.subr.mxu0 0.0
    %4377 = vmatpush2.msra.mxu0 0.0
    %4378 = vmatprep.subr.mxu0 0.0
    %4379 = vmatpush2.msra.mxu0 0.0
    %4380 = vmatprep.subr.mxu0 0.0
    %4381 = vmatpush2.msra.mxu0 0.0
    %4382 = vmatprep.subr.mxu0 0.0
    %4383 = vmatpush2.msra.mxu0 0.0
    %4384 = vmatprep.subr.mxu0 0.0
    %4385 = vmatpush2.msra.mxu0 0.0
    %4386 = vmatprep.subr.mxu0 0.0
    %4387 = vmatpush2.msra.mxu0 0.0
    %4388 = vmatprep.subr.mxu0 0.0
    %4389 = vmatpush2.msra.mxu0 0.0
    %4390 = vmatprep.subr.mxu0 0.0
    %4391 = vmatpush2.msra.mxu0 0.0
    %4392 = vmatprep.subr.mxu0 0.0
    %4393 = vmatpush2.msra.mxu0 0.0
    %4394 = vmatprep.subr.mxu0 0.0
    %4395 = vmatpush2.msra.mxu0 0.0
    %4396 = vmatprep.subr.mxu0 0.0
    %4397 = vmatpush2.msra.mxu0 0.0
    %4398 = vmatprep.mubr.f32.mxu0 0.0
    %4399 = vmatmul.mubr.f32.gmra.mxu0 %v4332
    %v4400 = vpop.f32.mrf.mxu0
    %v4401 = vadd.f32 0.0, %v4400
    %v4402 = vpop.f32.mrf.mxu0
    %4403 = vdwg.mxu0
    %v4404 = vadd.f32 %v4328, %v4401
    %s4405 = scalar_lea.vmem %s23, 8
    %v4406 = vld [vmem:[%s4405] sm:$0x3]
    %v4408 = vsel %vm4106, %v4406, 0
    %4410 = vmatprep.subr.mxu0 0.0
    %4411 = vmatpush1.msra.mxu0 0.0
    %4412 = vmatprep.subr.mxu0 0.0
    %4413 = vmatpush1.msra.mxu0 0.0
    %4414 = vmatprep.subr.mxu0 0.0
    %4415 = vmatpush1.msra.mxu0 0.0
    %4416 = vmatprep.subr.mxu0 0.0
    %4417 = vmatpush1.msra.mxu0 0.0
    %4418 = vmatprep.subr.mxu0 0.0
    %4419 = vmatpush1.msra.mxu0 0.0
    %4420 = vmatprep.subr.mxu0 0.0
    %4421 = vmatpush1.msra.mxu0 0.0
    %4422 = vmatprep.subr.mxu0 0.0
    %4423 = vmatpush1.msra.mxu0 0.0
    %4424 = vmatprep.subr.mxu0 0.0
    %4425 = vmatpush1.msra.mxu0 0.0
    %4426 = vmatprep.subr.mxu0 0.0
    %4427 = vmatpush1.msra.mxu0 0.0
    %4428 = vmatprep.subr.mxu0 0.0
    %4429 = vmatpush1.msra.mxu0 0.0
    %4430 = vmatprep.subr.mxu0 0.0
    %4431 = vmatpush1.msra.mxu0 0.0
    %4432 = vmatprep.subr.mxu0 0.0
    %4433 = vmatpush1.msra.mxu0 0.0
    %4434 = vmatprep.subr.mxu0 0.0
    %4435 = vmatpush1.msra.mxu0 0.0
    %4436 = vmatprep.subr.mxu0 0.0
    %4437 = vmatpush1.msra.mxu0 0.0
    %4438 = vmatprep.subr.mxu0 0.0
    %4439 = vmatpush1.msra.mxu0 0.0
    %4440 = vmatprep.subr.mxu0 0.0
    %4441 = vmatpush1.msra.mxu0 %v3958
    %4442 = vmatprep.subr.mxu0 0.0
    %4443 = vmatpush2.msra.mxu0 0.0
    %4444 = vmatprep.subr.mxu0 0.0
    %4445 = vmatpush2.msra.mxu0 0.0
    %4446 = vmatprep.subr.mxu0 0.0
    %4447 = vmatpush2.msra.mxu0 0.0
    %4448 = vmatprep.subr.mxu0 0.0
    %4449 = vmatpush2.msra.mxu0 0.0
    %4450 = vmatprep.subr.mxu0 0.0
    %4451 = vmatpush2.msra.mxu0 0.0
    %4452 = vmatprep.subr.mxu0 0.0
    %4453 = vmatpush2.msra.mxu0 0.0
    %4454 = vmatprep.subr.mxu0 0.0
    %4455 = vmatpush2.msra.mxu0 0.0
    %4456 = vmatprep.subr.mxu0 0.0
    %4457 = vmatpush2.msra.mxu0 0.0
    %4458 = vmatprep.subr.mxu0 0.0
    %4459 = vmatpush2.msra.mxu0 0.0
    %4460 = vmatprep.subr.mxu0 0.0
    %4461 = vmatpush2.msra.mxu0 0.0
    %4462 = vmatprep.subr.mxu0 0.0
    %4463 = vmatpush2.msra.mxu0 0.0
    %4464 = vmatprep.subr.mxu0 0.0
    %4465 = vmatpush2.msra.mxu0 0.0
    %4466 = vmatprep.subr.mxu0 0.0
    %4467 = vmatpush2.msra.mxu0 0.0
    %4468 = vmatprep.subr.mxu0 0.0
    %4469 = vmatpush2.msra.mxu0 0.0
    %4470 = vmatprep.subr.mxu0 0.0
    %4471 = vmatpush2.msra.mxu0 0.0
    %4472 = vmatprep.subr.mxu0 0.0
    %4473 = vmatpush2.msra.mxu0 0.0
    %4474 = vmatprep.mubr.f32.mxu0 0.0
    %4475 = vmatmul.mubr.f32.gmra.mxu0 %v4408
    %v4476 = vpop.f32.mrf.mxu0
    %v4477 = vadd.f32 0.0, %v4476
    %v4478 = vpop.f32.mrf.mxu0
    %4479 = vdwg.mxu0
    %v4480 = vadd.f32 %v4404, %v4477
    %s4481 = scalar_lea.vmem %s23, 10
    %v4482 = vld [vmem:[%s4481] sm:$0x3]
    %v4484 = vsel %vm4106, %v4482, 0
    %4486 = vmatprep.subr.mxu0 0.0
    %4487 = vmatpush1.msra.mxu0 0.0
    %4488 = vmatprep.subr.mxu0 0.0
    %4489 = vmatpush1.msra.mxu0 0.0
    %4490 = vmatprep.subr.mxu0 0.0
    %4491 = vmatpush1.msra.mxu0 0.0
    %4492 = vmatprep.subr.mxu0 0.0
    %4493 = vmatpush1.msra.mxu0 0.0
    %4494 = vmatprep.subr.mxu0 0.0
    %4495 = vmatpush1.msra.mxu0 0.0
    %4496 = vmatprep.subr.mxu0 0.0
    %4497 = vmatpush1.msra.mxu0 0.0
    %4498 = vmatprep.subr.mxu0 0.0
    %4499 = vmatpush1.msra.mxu0 0.0
    %4500 = vmatprep.subr.mxu0 0.0
    %4501 = vmatpush1.msra.mxu0 0.0
    %4502 = vmatprep.subr.mxu0 0.0
    %4503 = vmatpush1.msra.mxu0 0.0
    %4504 = vmatprep.subr.mxu0 0.0
    %4505 = vmatpush1.msra.mxu0 0.0
    %4506 = vmatprep.subr.mxu0 0.0
    %4507 = vmatpush1.msra.mxu0 0.0
    %4508 = vmatprep.subr.mxu0 0.0
    %4509 = vmatpush1.msra.mxu0 0.0
    %4510 = vmatprep.subr.mxu0 0.0
    %4511 = vmatpush1.msra.mxu0 0.0
    %4512 = vmatprep.subr.mxu0 0.0
    %4513 = vmatpush1.msra.mxu0 0.0
    %4514 = vmatprep.subr.mxu0 0.0
    %4515 = vmatpush1.msra.mxu0 0.0
    %4516 = vmatprep.subr.mxu0 0.0
    %4517 = vmatpush1.msra.mxu0 %v3960
    %4518 = vmatprep.subr.mxu0 0.0
    %4519 = vmatpush2.msra.mxu0 0.0
    %4520 = vmatprep.subr.mxu0 0.0
    %4521 = vmatpush2.msra.mxu0 0.0
    %4522 = vmatprep.subr.mxu0 0.0
    %4523 = vmatpush2.msra.mxu0 0.0
    %4524 = vmatprep.subr.mxu0 0.0
    %4525 = vmatpush2.msra.mxu0 0.0
    %4526 = vmatprep.subr.mxu0 0.0
    %4527 = vmatpush2.msra.mxu0 0.0
    %4528 = vmatprep.subr.mxu0 0.0
    %4529 = vmatpush2.msra.mxu0 0.0
    %4530 = vmatprep.subr.mxu0 0.0
    %4531 = vmatpush2.msra.mxu0 0.0
    %4532 = vmatprep.subr.mxu0 0.0
    %4533 = vmatpush2.msra.mxu0 0.0
    %4534 = vmatprep.subr.mxu0 0.0
    %4535 = vmatpush2.msra.mxu0 0.0
    %4536 = vmatprep.subr.mxu0 0.0
    %4537 = vmatpush2.msra.mxu0 0.0
    %4538 = vmatprep.subr.mxu0 0.0
    %4539 = vmatpush2.msra.mxu0 0.0
    %4540 = vmatprep.subr.mxu0 0.0
    %4541 = vmatpush2.msra.mxu0 0.0
    %4542 = vmatprep.subr.mxu0 0.0
    %4543 = vmatpush2.msra.mxu0 0.0
    %4544 = vmatprep.subr.mxu0 0.0
    %4545 = vmatpush2.msra.mxu0 0.0
    %4546 = vmatprep.subr.mxu0 0.0
    %4547 = vmatpush2.msra.mxu0 0.0
    %4548 = vmatprep.subr.mxu0 0.0
    %4549 = vmatpush2.msra.mxu0 0.0
    %4550 = vmatprep.mubr.f32.mxu0 0.0
    %4551 = vmatmul.mubr.f32.gmra.mxu0 %v4484
    %v4552 = vpop.f32.mrf.mxu0
    %v4553 = vadd.f32 0.0, %v4552
    %v4554 = vpop.f32.mrf.mxu0
    %4555 = vdwg.mxu0
    %v4556 = vadd.f32 %v4480, %v4553
    %s4557 = scalar_lea.vmem %s23, 12
    %v4558 = vld [vmem:[%s4557] sm:$0x3]
    %v4560 = vsel %vm4106, %v4558, 0
    %4562 = vmatprep.subr.mxu0 0.0
    %4563 = vmatpush1.msra.mxu0 0.0
    %4564 = vmatprep.subr.mxu0 0.0
    %4565 = vmatpush1.msra.mxu0 0.0
    %4566 = vmatprep.subr.mxu0 0.0
    %4567 = vmatpush1.msra.mxu0 0.0
    %4568 = vmatprep.subr.mxu0 0.0
    %4569 = vmatpush1.msra.mxu0 0.0
    %4570 = vmatprep.subr.mxu0 0.0
    %4571 = vmatpush1.msra.mxu0 0.0
    %4572 = vmatprep.subr.mxu0 0.0
    %4573 = vmatpush1.msra.mxu0 0.0
    %4574 = vmatprep.subr.mxu0 0.0
    %4575 = vmatpush1.msra.mxu0 0.0
    %4576 = vmatprep.subr.mxu0 0.0
    %4577 = vmatpush1.msra.mxu0 0.0
    %4578 = vmatprep.subr.mxu0 0.0
    %4579 = vmatpush1.msra.mxu0 0.0
    %4580 = vmatprep.subr.mxu0 0.0
    %4581 = vmatpush1.msra.mxu0 0.0
    %4582 = vmatprep.subr.mxu0 0.0
    %4583 = vmatpush1.msra.mxu0 0.0
    %4584 = vmatprep.subr.mxu0 0.0
    %4585 = vmatpush1.msra.mxu0 0.0
    %4586 = vmatprep.subr.mxu0 0.0
    %4587 = vmatpush1.msra.mxu0 0.0
    %4588 = vmatprep.subr.mxu0 0.0
    %4589 = vmatpush1.msra.mxu0 0.0
    %4590 = vmatprep.subr.mxu0 0.0
    %4591 = vmatpush1.msra.mxu0 0.0
    %4592 = vmatprep.subr.mxu0 0.0
    %4593 = vmatpush1.msra.mxu0 %v4029
    %4594 = vmatprep.subr.mxu0 0.0
    %4595 = vmatpush2.msra.mxu0 0.0
    %4596 = vmatprep.subr.mxu0 0.0
    %4597 = vmatpush2.msra.mxu0 0.0
    %4598 = vmatprep.subr.mxu0 0.0
    %4599 = vmatpush2.msra.mxu0 0.0
    %4600 = vmatprep.subr.mxu0 0.0
    %4601 = vmatpush2.msra.mxu0 0.0
    %4602 = vmatprep.subr.mxu0 0.0
    %4603 = vmatpush2.msra.mxu0 0.0
    %4604 = vmatprep.subr.mxu0 0.0
    %4605 = vmatpush2.msra.mxu0 0.0
    %4606 = vmatprep.subr.mxu0 0.0
    %4607 = vmatpush2.msra.mxu0 0.0
    %4608 = vmatprep.subr.mxu0 0.0
    %4609 = vmatpush2.msra.mxu0 0.0
    %4610 = vmatprep.subr.mxu0 0.0
    %4611 = vmatpush2.msra.mxu0 0.0
    %4612 = vmatprep.subr.mxu0 0.0
    %4613 = vmatpush2.msra.mxu0 0.0
    %4614 = vmatprep.subr.mxu0 0.0
    %4615 = vmatpush2.msra.mxu0 0.0
    %4616 = vmatprep.subr.mxu0 0.0
    %4617 = vmatpush2.msra.mxu0 0.0
    %4618 = vmatprep.subr.mxu0 0.0
    %4619 = vmatpush2.msra.mxu0 0.0
    %4620 = vmatprep.subr.mxu0 0.0
    %4621 = vmatpush2.msra.mxu0 0.0
    %4622 = vmatprep.subr.mxu0 0.0
    %4623 = vmatpush2.msra.mxu0 0.0
    %4624 = vmatprep.subr.mxu0 0.0
    %4625 = vmatpush2.msra.mxu0 0.0
    %4626 = vmatprep.mubr.f32.mxu0 0.0
    %4627 = vmatmul.mubr.f32.gmra.mxu0 %v4560
    %v4628 = vpop.f32.mrf.mxu0
    %v4629 = vadd.f32 0.0, %v4628
    %v4630 = vpop.f32.mrf.mxu0
    %4631 = vdwg.mxu0
    %v4632 = vadd.f32 %v4556, %v4629
    %s4633 = scalar_lea.vmem %s23, 14
    %v4634 = vld [vmem:[%s4633] sm:$0x3]
    %v4636 = vsel %vm4106, %v4634, 0
    %4638 = vmatprep.subr.mxu0 0.0
    %4639 = vmatpush1.msra.mxu0 0.0
    %4640 = vmatprep.subr.mxu0 0.0
    %4641 = vmatpush1.msra.mxu0 0.0
    %4642 = vmatprep.subr.mxu0 0.0
    %4643 = vmatpush1.msra.mxu0 0.0
    %4644 = vmatprep.subr.mxu0 0.0
    %4645 = vmatpush1.msra.mxu0 0.0
    %4646 = vmatprep.subr.mxu0 0.0
    %4647 = vmatpush1.msra.mxu0 0.0
    %4648 = vmatprep.subr.mxu0 0.0
    %4649 = vmatpush1.msra.mxu0 0.0
    %4650 = vmatprep.subr.mxu0 0.0
    %4651 = vmatpush1.msra.mxu0 0.0
    %4652 = vmatprep.subr.mxu0 0.0
    %4653 = vmatpush1.msra.mxu0 0.0
    %4654 = vmatprep.subr.mxu0 0.0
    %4655 = vmatpush1.msra.mxu0 0.0
    %4656 = vmatprep.subr.mxu0 0.0
    %4657 = vmatpush1.msra.mxu0 0.0
    %4658 = vmatprep.subr.mxu0 0.0
    %4659 = vmatpush1.msra.mxu0 0.0
    %4660 = vmatprep.subr.mxu0 0.0
    %4661 = vmatpush1.msra.mxu0 0.0
    %4662 = vmatprep.subr.mxu0 0.0
    %4663 = vmatpush1.msra.mxu0 0.0
    %4664 = vmatprep.subr.mxu0 0.0
    %4665 = vmatpush1.msra.mxu0 0.0
    %4666 = vmatprep.subr.mxu0 0.0
    %4667 = vmatpush1.msra.mxu0 0.0
    %4668 = vmatprep.subr.mxu0 0.0
    %4669 = vmatpush1.msra.mxu0 %v4031
    %4670 = vmatprep.subr.mxu0 0.0
    %4671 = vmatpush2.msra.mxu0 0.0
    %4672 = vmatprep.subr.mxu0 0.0
    %4673 = vmatpush2.msra.mxu0 0.0
    %4674 = vmatprep.subr.mxu0 0.0
    %4675 = vmatpush2.msra.mxu0 0.0
    %4676 = vmatprep.subr.mxu0 0.0
    %4677 = vmatpush2.msra.mxu0 0.0
    %4678 = vmatprep.subr.mxu0 0.0
    %4679 = vmatpush2.msra.mxu0 0.0
    %4680 = vmatprep.subr.mxu0 0.0
    %4681 = vmatpush2.msra.mxu0 0.0
    %4682 = vmatprep.subr.mxu0 0.0
    %4683 = vmatpush2.msra.mxu0 0.0
    %4684 = vmatprep.subr.mxu0 0.0
    %4685 = vmatpush2.msra.mxu0 0.0
    %4686 = vmatprep.subr.mxu0 0.0
    %4687 = vmatpush2.msra.mxu0 0.0
    %4688 = vmatprep.subr.mxu0 0.0
    %4689 = vmatpush2.msra.mxu0 0.0
    %4690 = vmatprep.subr.mxu0 0.0
    %4691 = vmatpush2.msra.mxu0 0.0
    %4692 = vmatprep.subr.mxu0 0.0
    %4693 = vmatpush2.msra.mxu0 0.0
    %4694 = vmatprep.subr.mxu0 0.0
    %4695 = vmatpush2.msra.mxu0 0.0
    %4696 = vmatprep.subr.mxu0 0.0
    %4697 = vmatpush2.msra.mxu0 0.0
    %4698 = vmatprep.subr.mxu0 0.0
    %4699 = vmatpush2.msra.mxu0 0.0
    %4700 = vmatprep.subr.mxu0 0.0
    %4701 = vmatpush2.msra.mxu0 0.0
    %4702 = vmatprep.mubr.f32.mxu0 0.0
    %4703 = vmatmul.mubr.f32.gmra.mxu0 %v4636
    %v4704 = vpop.f32.mrf.mxu0
    %v4705 = vadd.f32 0.0, %v4704
    %v4706 = vpop.f32.mrf.mxu0
    %4707 = vdwg.mxu0
    %v4708 = vadd.f32 %v4632, %v4705
    %s4709 = scalar_lea.vmem %s23, 16
    %v4710 = vld [vmem:[%s4709] sm:$0x3]
    %v4712 = vsel %vm4106, %v4710, 0
    %4714 = vmatprep.subr.mxu0 0.0
    %4715 = vmatpush1.msra.mxu0 0.0
    %4716 = vmatprep.subr.mxu0 0.0
    %4717 = vmatpush1.msra.mxu0 0.0
    %4718 = vmatprep.subr.mxu0 0.0
    %4719 = vmatpush1.msra.mxu0 0.0
    %4720 = vmatprep.subr.mxu0 0.0
    %4721 = vmatpush1.msra.mxu0 0.0
    %4722 = vmatprep.subr.mxu0 0.0
    %4723 = vmatpush1.msra.mxu0 0.0
    %4724 = vmatprep.subr.mxu0 0.0
    %4725 = vmatpush1.msra.mxu0 0.0
    %4726 = vmatprep.subr.mxu0 0.0
    %4727 = vmatpush1.msra.mxu0 0.0
    %4728 = vmatprep.subr.mxu0 0.0
    %4729 = vmatpush1.msra.mxu0 0.0
    %4730 = vmatprep.subr.mxu0 0.0
    %4731 = vmatpush1.msra.mxu0 0.0
    %4732 = vmatprep.subr.mxu0 0.0
    %4733 = vmatpush1.msra.mxu0 0.0
    %4734 = vmatprep.subr.mxu0 0.0
    %4735 = vmatpush1.msra.mxu0 0.0
    %4736 = vmatprep.subr.mxu0 0.0
    %4737 = vmatpush1.msra.mxu0 0.0
    %4738 = vmatprep.subr.mxu0 0.0
    %4739 = vmatpush1.msra.mxu0 0.0
    %4740 = vmatprep.subr.mxu0 0.0
    %4741 = vmatpush1.msra.mxu0 0.0
    %4742 = vmatprep.subr.mxu0 0.0
    %4743 = vmatpush1.msra.mxu0 0.0
    %4744 = vmatprep.subr.mxu0 0.0
    %4745 = vmatpush1.msra.mxu0 %v4100
    %4746 = vmatprep.subr.mxu0 0.0
    %4747 = vmatpush2.msra.mxu0 0.0
    %4748 = vmatprep.subr.mxu0 0.0
    %4749 = vmatpush2.msra.mxu0 0.0
    %4750 = vmatprep.subr.mxu0 0.0
    %4751 = vmatpush2.msra.mxu0 0.0
    %4752 = vmatprep.subr.mxu0 0.0
    %4753 = vmatpush2.msra.mxu0 0.0
    %4754 = vmatprep.subr.mxu0 0.0
    %4755 = vmatpush2.msra.mxu0 0.0
    %4756 = vmatprep.subr.mxu0 0.0
    %4757 = vmatpush2.msra.mxu0 0.0
    %4758 = vmatprep.subr.mxu0 0.0
    %4759 = vmatpush2.msra.mxu0 0.0
    %4760 = vmatprep.subr.mxu0 0.0
    %4761 = vmatpush2.msra.mxu0 0.0
    %4762 = vmatprep.subr.mxu0 0.0
    %4763 = vmatpush2.msra.mxu0 0.0
    %4764 = vmatprep.subr.mxu0 0.0
    %4765 = vmatpush2.msra.mxu0 0.0
    %4766 = vmatprep.subr.mxu0 0.0
    %4767 = vmatpush2.msra.mxu0 0.0
    %4768 = vmatprep.subr.mxu0 0.0
    %4769 = vmatpush2.msra.mxu0 0.0
    %4770 = vmatprep.subr.mxu0 0.0
    %4771 = vmatpush2.msra.mxu0 0.0
    %4772 = vmatprep.subr.mxu0 0.0
    %4773 = vmatpush2.msra.mxu0 0.0
    %4774 = vmatprep.subr.mxu0 0.0
    %4775 = vmatpush2.msra.mxu0 0.0
    %4776 = vmatprep.subr.mxu0 0.0
    %4777 = vmatpush2.msra.mxu0 0.0
    %4778 = vmatprep.mubr.f32.mxu0 0.0
    %4779 = vmatmul.mubr.f32.gmra.mxu0 %v4712
    %v4780 = vpop.f32.mrf.mxu0
    %v4781 = vadd.f32 0.0, %v4780
    %v4782 = vpop.f32.mrf.mxu0
    %4783 = vdwg.mxu0
    %v4784 = vadd.f32 %v4708, %v4781
    %v4785 = vld [vmem:[#allocation10] sm:$0x1]
    %v4787 = vlaneseq
    %v4788 = vshrl.u32 %v4787, 7
    %v4789 = vsub.s32 0, %v4788
    %v4790 = vrot.slane %v4785, %v4789
    %v4792 = vadd.f32 %v4784, %v4790
    %v4793 = vmax.f32 %v4792, 0.0
    %v4794 = vld [vmem:[#allocation12] sm:$0xff]
    %v4795 = vld [vmem:[#allocation12 + $0x8] sm:$0xff]
    %v4796 = vld [vmem:[#allocation12 + $0x10] sm:$0xff]
    %v4797 = vld [vmem:[#allocation12 + $0x18] sm:$0xff]
    %v4798 = vld [vmem:[#allocation12 + $0x20] sm:$0xff]
    %v4799 = vld [vmem:[#allocation12 + $0x28] sm:$0xff]
    %v4800 = vld [vmem:[#allocation12 + $0x30] sm:$0xff]
    %v4801 = vld [vmem:[#allocation12 + $0x38] sm:$0xff]
    %v4802 = vld [vmem:[#allocation12 + $0x40] sm:$0xff]
    %v4803 = vld [vmem:[#allocation12 + $0x48] sm:$0xff]
    %v4804 = vld [vmem:[#allocation12 + $0x50] sm:$0xff]
    %v4805 = vld [vmem:[#allocation12 + $0x58] sm:$0xff]
    %v4806 = vld [vmem:[#allocation12 + $0x60] sm:$0xff]
    %v4807 = vld [vmem:[#allocation12 + $0x68] sm:$0xff]
    %v4808 = vld [vmem:[#allocation12 + $0x70] sm:$0xff]
    %v4809 = vld [vmem:[#allocation12 + $0x78] sm:$0xff]
    %v4810 = vld [vmem:[#allocation13] sm:$0x1]
    %v4812 = vlaneseq
    %v4813 = vshrl.u32 %v4812, 7
    %v4814 = vsub.s32 0, %v4813
    %v4815 = vrot.slane %v4810, %v4814
    %4817 = vmatprep.subr.mxu0 0.0
    %4818 = vmatpush1.msra.mxu0 %v4809
    %4819 = vmatprep.subr.mxu0 0.0
    %4820 = vmatpush1.msra.mxu0 %v4808
    %4821 = vmatprep.subr.mxu0 0.0
    %4822 = vmatpush1.msra.mxu0 %v4807
    %4823 = vmatprep.subr.mxu0 0.0
    %4824 = vmatpush1.msra.mxu0 %v4806
    %4825 = vmatprep.subr.mxu0 0.0
    %4826 = vmatpush1.msra.mxu0 %v4805
    %4827 = vmatprep.subr.mxu0 0.0
    %4828 = vmatpush1.msra.mxu0 %v4804
    %4829 = vmatprep.subr.mxu0 0.0
    %4830 = vmatpush1.msra.mxu0 %v4803
    %4831 = vmatprep.subr.mxu0 0.0
    %4832 = vmatpush1.msra.mxu0 %v4802
    %4833 = vmatprep.subr.mxu0 0.0
    %4834 = vmatpush1.msra.mxu0 %v4801
    %4835 = vmatprep.subr.mxu0 0.0
    %4836 = vmatpush1.msra.mxu0 %v4800
    %4837 = vmatprep.subr.mxu0 0.0
    %4838 = vmatpush1.msra.mxu0 %v4799
    %4839 = vmatprep.subr.mxu0 0.0
    %4840 = vmatpush1.msra.mxu0 %v4798
    %4841 = vmatprep.subr.mxu0 0.0
    %4842 = vmatpush1.msra.mxu0 %v4797
    %4843 = vmatprep.subr.mxu0 0.0
    %4844 = vmatpush1.msra.mxu0 %v4796
    %4845 = vmatprep.subr.mxu0 0.0
    %4846 = vmatpush1.msra.mxu0 %v4795
    %4847 = vmatprep.subr.mxu0 0.0
    %4848 = vmatpush1.msra.mxu0 %v4794
    %4849 = vmatprep.subr.mxu0 0.0
    %4850 = vmatpush2.msra.mxu0 0.0
    %4851 = vmatprep.subr.mxu0 0.0
    %4852 = vmatpush2.msra.mxu0 0.0
    %4853 = vmatprep.subr.mxu0 0.0
    %4854 = vmatpush2.msra.mxu0 0.0
    %4855 = vmatprep.subr.mxu0 0.0
    %4856 = vmatpush2.msra.mxu0 0.0
    %4857 = vmatprep.subr.mxu0 0.0
    %4858 = vmatpush2.msra.mxu0 0.0
    %4859 = vmatprep.subr.mxu0 0.0
    %4860 = vmatpush2.msra.mxu0 0.0
    %4861 = vmatprep.subr.mxu0 0.0
    %4862 = vmatpush2.msra.mxu0 0.0
    %4863 = vmatprep.subr.mxu0 0.0
    %4864 = vmatpush2.msra.mxu0 0.0
    %4865 = vmatprep.subr.mxu0 0.0
    %4866 = vmatpush2.msra.mxu0 0.0
    %4867 = vmatprep.subr.mxu0 0.0
    %4868 = vmatpush2.msra.mxu0 0.0
    %4869 = vmatprep.subr.mxu0 0.0
    %4870 = vmatpush2.msra.mxu0 0.0
    %4871 = vmatprep.subr.mxu0 0.0
    %4872 = vmatpush2.msra.mxu0 0.0
    %4873 = vmatprep.subr.mxu0 0.0
    %4874 = vmatpush2.msra.mxu0 0.0
    %4875 = vmatprep.subr.mxu0 0.0
    %4876 = vmatpush2.msra.mxu0 0.0
    %4877 = vmatprep.subr.mxu0 0.0
    %4878 = vmatpush2.msra.mxu0 0.0
    %4879 = vmatprep.subr.mxu0 0.0
    %4880 = vmatpush2.msra.mxu0 0.0
    %4881 = vmatprep.mubr.f32.mxu0 0.0
    %4882 = vmatmul.mubr.f32.gmra.mxu0 %v4793
    %v4883 = vpop.f32.mrf.mxu0
    %v4884 = vadd.f32 %v4815, %v4883
    %v4885 = vpop.f32.mrf.mxu0
    %4886 = vdwg.mxu0
    %v4887 = vmax.f32 %v4884, 0.0
    %v4888 = vld [vmem:[%s29] sm:$0xff]
    %v4889 = vld [vmem:[%s29 + $0x8] sm:$0xff]
    %v4890 = vld [vmem:[%s29 + $0x10] sm:$0xff]
    %v4891 = vld [vmem:[%s29 + $0x18] sm:$0xff]
    %v4892 = vld [vmem:[%s29 + $0x20] sm:$0xff]
    %v4893 = vld [vmem:[%s29 + $0x28] sm:$0xff]
    %v4894 = vld [vmem:[%s29 + $0x30] sm:$0xff]
    %v4895 = vld [vmem:[%s29 + $0x38] sm:$0xff]
    %v4896 = vld [vmem:[%s29 + $0x40] sm:$0xff]
    %v4897 = vld [vmem:[%s29 + $0x48] sm:$0xff]
    %v4898 = vld [vmem:[%s29 + $0x50] sm:$0xff]
    %v4899 = vld [vmem:[%s29 + $0x58] sm:$0xff]
    %v4900 = vld [vmem:[%s29 + $0x60] sm:$0xff]
    %v4901 = vld [vmem:[%s29 + $0x68] sm:$0xff]
    %v4902 = vld [vmem:[%s29 + $0x70] sm:$0xff]
    %v4903 = vld [vmem:[%s29 + $0x78] sm:$0xff]
    %v4904 = vld [vmem:[%s29 + $0x80] sm:$0xff]
    %v4905 = vld [vmem:[%s29 + $0x88] sm:$0xff]
    %v4906 = vld [vmem:[%s29 + $0x90] sm:$0xff]
    %v4907 = vld [vmem:[%s29 + $0x98] sm:$0xff]
    %v4908 = vld [vmem:[%s29 + $0xa0] sm:$0xff]
    %v4909 = vld [vmem:[%s29 + $0xa8] sm:$0xff]
    %v4910 = vld [vmem:[%s29 + $0xb0] sm:$0xff]
    %v4911 = vld [vmem:[%s29 + $0xb8] sm:$0xff]
    %v4912 = vld [vmem:[%s29 + $0xc0] sm:$0xff]
    %v4913 = vld [vmem:[%s29 + $0xc8] sm:$0xff]
    %v4914 = vld [vmem:[%s29 + $0xd0] sm:$0xff]
    %v4915 = vld [vmem:[%s29 + $0xd8] sm:$0xff]
    %v4916 = vld [vmem:[%s29 + $0xe0] sm:$0xff]
    %v4917 = vld [vmem:[%s29 + $0xe8] sm:$0xff]
    %v4918 = vld [vmem:[%s29 + $0xf0] sm:$0xff]
    %v4919 = vld [vmem:[%s29 + $0xf8] sm:$0xff]
    %v4920 = vld [vmem:[%s31] sm:$0x3]
    %v4922 = vlaneseq
    %v4923 = vshrl.u32 %v4922, 7
    %v4924 = vsub.s32 0, %v4923
    %v4925 = vrot.slane %v4920, %v4924
    %v4926 = vlaneseq
    %v4927 = vshrl.u32 %v4926, 7
    %v4928 = vsub.s32 1, %v4927
    %v4929 = vrot.slane %v4920, %v4928
    %4932 = vmatprep.subr.mxu0 %v4919
    %4933 = vmatpush1.msra.mxu0 %v4918
    %4934 = vmatprep.subr.mxu0 %v4917
    %4935 = vmatpush1.msra.mxu0 %v4916
    %4936 = vmatprep.subr.mxu0 %v4915
    %4937 = vmatpush1.msra.mxu0 %v4914
    %4938 = vmatprep.subr.mxu0 %v4913
    %4939 = vmatpush1.msra.mxu0 %v4912
    %4940 = vmatprep.subr.mxu0 %v4911
    %4941 = vmatpush1.msra.mxu0 %v4910
    %4942 = vmatprep.subr.mxu0 %v4909
    %4943 = vmatpush1.msra.mxu0 %v4908
    %4944 = vmatprep.subr.mxu0 %v4907
    %4945 = vmatpush1.msra.mxu0 %v4906
    %4946 = vmatprep.subr.mxu0 %v4905
    %4947 = vmatpush1.msra.mxu0 %v4904
    %4948 = vmatprep.subr.mxu0 %v4903
    %4949 = vmatpush1.msra.mxu0 %v4902
    %4950 = vmatprep.subr.mxu0 %v4901
    %4951 = vmatpush1.msra.mxu0 %v4900
    %4952 = vmatprep.subr.mxu0 %v4899
    %4953 = vmatpush1.msra.mxu0 %v4898
    %4954 = vmatprep.subr.mxu0 %v4897
    %4955 = vmatpush1.msra.mxu0 %v4896
    %4956 = vmatprep.subr.mxu0 %v4895
    %4957 = vmatpush1.msra.mxu0 %v4894
    %4958 = vmatprep.subr.mxu0 %v4893
    %4959 = vmatpush1.msra.mxu0 %v4892
    %4960 = vmatprep.subr.mxu0 %v4891
    %4961 = vmatpush1.msra.mxu0 %v4890
    %4962 = vmatprep.subr.mxu0 %v4889
    %4963 = vmatpush1.msra.mxu0 %v4888
    %4964 = vmatprep.subr.mxu0 0.0
    %4965 = vmatpush2.msra.mxu0 0.0
    %4966 = vmatprep.subr.mxu0 0.0
    %4967 = vmatpush2.msra.mxu0 0.0
    %4968 = vmatprep.subr.mxu0 0.0
    %4969 = vmatpush2.msra.mxu0 0.0
    %4970 = vmatprep.subr.mxu0 0.0
    %4971 = vmatpush2.msra.mxu0 0.0
    %4972 = vmatprep.subr.mxu0 0.0
    %4973 = vmatpush2.msra.mxu0 0.0
    %4974 = vmatprep.subr.mxu0 0.0
    %4975 = vmatpush2.msra.mxu0 0.0
    %4976 = vmatprep.subr.mxu0 0.0
    %4977 = vmatpush2.msra.mxu0 0.0
    %4978 = vmatprep.subr.mxu0 0.0
    %4979 = vmatpush2.msra.mxu0 0.0
    %4980 = vmatprep.subr.mxu0 0.0
    %4981 = vmatpush2.msra.mxu0 0.0
    %4982 = vmatprep.subr.mxu0 0.0
    %4983 = vmatpush2.msra.mxu0 0.0
    %4984 = vmatprep.subr.mxu0 0.0
    %4985 = vmatpush2.msra.mxu0 0.0
    %4986 = vmatprep.subr.mxu0 0.0
    %4987 = vmatpush2.msra.mxu0 0.0
    %4988 = vmatprep.subr.mxu0 0.0
    %4989 = vmatpush2.msra.mxu0 0.0
    %4990 = vmatprep.subr.mxu0 0.0
    %4991 = vmatpush2.msra.mxu0 0.0
    %4992 = vmatprep.subr.mxu0 0.0
    %4993 = vmatpush2.msra.mxu0 0.0
    %4994 = vmatprep.subr.mxu0 0.0
    %4995 = vmatpush2.msra.mxu0 0.0
    %4996 = vmatprep.mubr.f32.mxu0 0.0
    %4997 = vmatmul.mubr.f32.gmra.mxu0 %v4887
    %v4998 = vpop.f32.mrf.mxu0
    %v4999 = vadd.f32 %v4925, %v4998
    %v5000 = vpop.f32.mrf.mxu0
    %v5001 = vadd.f32 %v4929, %v5000
    %5002 = vdwg.mxu0
    %v5003 = vmax.f32 %v4999, 0.0
    %v5004 = vmax.f32 %v5001, 0.0
    %v5005 = vld [vmem:[%s39] sm:$0xff]
    %v5006 = vld [vmem:[%s39 + $0x8] sm:$0xff]
    %v5007 = vld [vmem:[%s39 + $0x10] sm:$0xff]
    %v5008 = vld [vmem:[%s39 + $0x18] sm:$0xff]
    %v5009 = vld [vmem:[%s39 + $0x20] sm:$0xff]
    %v5010 = vld [vmem:[%s39 + $0x28] sm:$0xff]
    %v5011 = vld [vmem:[%s39 + $0x30] sm:$0xff]
    %v5012 = vld [vmem:[%s39 + $0x38] sm:$0xff]
    %v5013 = vld [vmem:[%s39 + $0x40] sm:$0xff]
    %v5014 = vld [vmem:[%s39 + $0x48] sm:$0xff]
    %v5015 = vld [vmem:[%s39 + $0x50] sm:$0xff]
    %v5016 = vld [vmem:[%s39 + $0x58] sm:$0xff]
    %v5017 = vld [vmem:[%s39 + $0x60] sm:$0xff]
    %v5018 = vld [vmem:[%s39 + $0x68] sm:$0xff]
    %v5019 = vld [vmem:[%s39 + $0x70] sm:$0xff]
    %v5020 = vld [vmem:[%s39 + $0x78] sm:$0xff]
    %v5021 = vld [vmem:[%s39 + $0x80] sm:$0xff]
    %v5022 = vld [vmem:[%s39 + $0x88] sm:$0xff]
    %v5023 = vld [vmem:[%s39 + $0x90] sm:$0xff]
    %v5024 = vld [vmem:[%s39 + $0x98] sm:$0xff]
    %v5025 = vld [vmem:[%s39 + $0xa0] sm:$0xff]
    %v5026 = vld [vmem:[%s39 + $0xa8] sm:$0xff]
    %v5027 = vld [vmem:[%s39 + $0xb0] sm:$0xff]
    %v5028 = vld [vmem:[%s39 + $0xb8] sm:$0xff]
    %v5029 = vld [vmem:[%s39 + $0xc0] sm:$0xff]
    %v5030 = vld [vmem:[%s39 + $0xc8] sm:$0xff]
    %v5031 = vld [vmem:[%s39 + $0xd0] sm:$0xff]
    %v5032 = vld [vmem:[%s39 + $0xd8] sm:$0xff]
    %v5033 = vld [vmem:[%s39 + $0xe0] sm:$0xff]
    %v5034 = vld [vmem:[%s39 + $0xe8] sm:$0xff]
    %v5035 = vld [vmem:[%s39 + $0xf0] sm:$0xff]
    %v5036 = vld [vmem:[%s39 + $0xf8] sm:$0xff]
    %v5037 = vld [vmem:[%s39 + $0x100] sm:$0xff]
    %v5038 = vld [vmem:[%s39 + $0x108] sm:$0xff]
    %v5039 = vld [vmem:[%s39 + $0x110] sm:$0xff]
    %v5040 = vld [vmem:[%s39 + $0x118] sm:$0xff]
    %v5041 = vld [vmem:[%s39 + $0x120] sm:$0xff]
    %v5042 = vld [vmem:[%s39 + $0x128] sm:$0xff]
    %v5043 = vld [vmem:[%s39 + $0x130] sm:$0xff]
    %v5044 = vld [vmem:[%s39 + $0x138] sm:$0xff]
    %v5045 = vld [vmem:[%s39 + $0x140] sm:$0xff]
    %v5046 = vld [vmem:[%s39 + $0x148] sm:$0xff]
    %v5047 = vld [vmem:[%s39 + $0x150] sm:$0xff]
    %v5048 = vld [vmem:[%s39 + $0x158] sm:$0xff]
    %v5049 = vld [vmem:[%s39 + $0x160] sm:$0xff]
    %v5050 = vld [vmem:[%s39 + $0x168] sm:$0xff]
    %v5051 = vld [vmem:[%s39 + $0x170] sm:$0xff]
    %v5052 = vld [vmem:[%s39 + $0x178] sm:$0xff]
    %v5053 = vld [vmem:[%s39 + $0x180] sm:$0xff]
    %v5054 = vld [vmem:[%s39 + $0x188] sm:$0xff]
    %v5055 = vld [vmem:[%s39 + $0x190] sm:$0xff]
    %v5056 = vld [vmem:[%s39 + $0x198] sm:$0xff]
    %v5057 = vld [vmem:[%s39 + $0x1a0] sm:$0xff]
    %v5058 = vld [vmem:[%s39 + $0x1a8] sm:$0xff]
    %v5059 = vld [vmem:[%s39 + $0x1b0] sm:$0xff]
    %v5060 = vld [vmem:[%s39 + $0x1b8] sm:$0xff]
    %v5061 = vld [vmem:[%s39 + $0x1c0] sm:$0xff]
    %v5062 = vld [vmem:[%s39 + $0x1c8] sm:$0xff]
    %v5063 = vld [vmem:[%s39 + $0x1d0] sm:$0xff]
    %v5064 = vld [vmem:[%s39 + $0x1d8] sm:$0xff]
    %v5065 = vld [vmem:[%s39 + $0x1e0] sm:$0xff]
    %v5066 = vld [vmem:[%s39 + $0x1e8] sm:$0xff]
    %v5067 = vld [vmem:[%s39 + $0x1f0] sm:$0xff]
    %v5068 = vld [vmem:[%s39 + $0x1f8] sm:$0xff]
    %v5069 = vld [vmem:[%s39 + $0x200] sm:$0xff]
    %v5070 = vld [vmem:[%s39 + $0x208] sm:$0xff]
    %v5071 = vld [vmem:[%s39 + $0x210] sm:$0xff]
    %v5072 = vld [vmem:[%s39 + $0x218] sm:$0xff]
    %v5073 = vld [vmem:[%s39 + $0x220] sm:$0xff]
    %v5074 = vld [vmem:[%s39 + $0x228] sm:$0xff]
    %v5075 = vld [vmem:[%s39 + $0x230] sm:$0xff]
    %v5076 = vld [vmem:[%s39 + $0x238] sm:$0xff]
    %v5077 = vld [vmem:[%s39 + $0x240] sm:$0xff]
    %v5078 = vld [vmem:[%s39 + $0x248] sm:$0xff]
    %v5079 = vld [vmem:[%s39 + $0x250] sm:$0xff]
    %v5080 = vld [vmem:[%s39 + $0x258] sm:$0xff]
    %v5081 = vld [vmem:[%s39 + $0x260] sm:$0xff]
    %v5082 = vld [vmem:[%s39 + $0x268] sm:$0xff]
    %v5083 = vld [vmem:[%s39 + $0x270] sm:$0xff]
    %v5084 = vld [vmem:[%s39 + $0x278] sm:$0xff]
    %v5085 = vld [vmem:[%s39 + $0x280] sm:$0xff]
    %v5086 = vld [vmem:[%s39 + $0x288] sm:$0xff]
    %v5087 = vld [vmem:[%s39 + $0x290] sm:$0xff]
    %v5088 = vld [vmem:[%s39 + $0x298] sm:$0xff]
    %v5089 = vld [vmem:[%s39 + $0x2a0] sm:$0xff]
    %v5090 = vld [vmem:[%s39 + $0x2a8] sm:$0xff]
    %v5091 = vld [vmem:[%s39 + $0x2b0] sm:$0xff]
    %v5092 = vld [vmem:[%s39 + $0x2b8] sm:$0xff]
    %v5093 = vld [vmem:[%s39 + $0x2c0] sm:$0xff]
    %v5094 = vld [vmem:[%s39 + $0x2c8] sm:$0xff]
    %v5095 = vld [vmem:[%s39 + $0x2d0] sm:$0xff]
    %v5096 = vld [vmem:[%s39 + $0x2d8] sm:$0xff]
    %v5097 = vld [vmem:[%s39 + $0x2e0] sm:$0xff]
    %v5098 = vld [vmem:[%s39 + $0x2e8] sm:$0xff]
    %v5099 = vld [vmem:[%s39 + $0x2f0] sm:$0xff]
    %v5100 = vld [vmem:[%s39 + $0x2f8] sm:$0xff]
    %v5101 = vld [vmem:[%s39 + $0x300] sm:$0xff]
    %v5102 = vld [vmem:[%s39 + $0x308] sm:$0xff]
    %v5103 = vld [vmem:[%s39 + $0x310] sm:$0xff]
    %v5104 = vld [vmem:[%s39 + $0x318] sm:$0xff]
    %v5105 = vld [vmem:[%s39 + $0x320] sm:$0xff]
    %v5106 = vld [vmem:[%s39 + $0x328] sm:$0xff]
    %v5107 = vld [vmem:[%s39 + $0x330] sm:$0xff]
    %v5108 = vld [vmem:[%s39 + $0x338] sm:$0xff]
    %v5109 = vld [vmem:[%s39 + $0x340] sm:$0xff]
    %v5110 = vld [vmem:[%s39 + $0x348] sm:$0xff]
    %v5111 = vld [vmem:[%s39 + $0x350] sm:$0xff]
    %v5112 = vld [vmem:[%s39 + $0x358] sm:$0xff]
    %v5113 = vld [vmem:[%s39 + $0x360] sm:$0xff]
    %v5114 = vld [vmem:[%s39 + $0x368] sm:$0xff]
    %v5115 = vld [vmem:[%s39 + $0x370] sm:$0xff]
    %v5116 = vld [vmem:[%s39 + $0x378] sm:$0xff]
    %v5117 = vld [vmem:[%s39 + $0x380] sm:$0xff]
    %v5118 = vld [vmem:[%s39 + $0x388] sm:$0xff]
    %v5119 = vld [vmem:[%s39 + $0x390] sm:$0xff]
    %v5120 = vld [vmem:[%s39 + $0x398] sm:$0xff]
    %v5121 = vld [vmem:[%s39 + $0x3a0] sm:$0xff]
    %v5122 = vld [vmem:[%s39 + $0x3a8] sm:$0xff]
    %v5123 = vld [vmem:[%s39 + $0x3b0] sm:$0xff]
    %v5124 = vld [vmem:[%s39 + $0x3b8] sm:$0xff]
    %v5125 = vld [vmem:[%s39 + $0x3c0] sm:$0xff]
    %v5126 = vld [vmem:[%s39 + $0x3c8] sm:$0xff]
    %v5127 = vld [vmem:[%s39 + $0x3d0] sm:$0xff]
    %v5128 = vld [vmem:[%s39 + $0x3d8] sm:$0xff]
    %v5129 = vld [vmem:[%s39 + $0x3e0] sm:$0xff]
    %v5130 = vld [vmem:[%s39 + $0x3e8] sm:$0xff]
    %v5131 = vld [vmem:[%s39 + $0x3f0] sm:$0xff]
    %v5132 = vld [vmem:[%s39 + $0x3f8] sm:$0xff]
    %v5133 = vld [vmem:[%s39 + $0x400] sm:$0xff]
    %v5134 = vld [vmem:[%s39 + $0x408] sm:$0xff]
    %v5135 = vld [vmem:[%s39 + $0x410] sm:$0xff]
    %v5136 = vld [vmem:[%s39 + $0x418] sm:$0xff]
    %v5137 = vld [vmem:[%s39 + $0x420] sm:$0xff]
    %v5138 = vld [vmem:[%s39 + $0x428] sm:$0xff]
    %v5139 = vld [vmem:[%s39 + $0x430] sm:$0xff]
    %v5140 = vld [vmem:[%s39 + $0x438] sm:$0xff]
    %v5141 = vld [vmem:[%s39 + $0x440] sm:$0xff]
    %v5142 = vld [vmem:[%s39 + $0x448] sm:$0xff]
    %v5143 = vld [vmem:[%s39 + $0x450] sm:$0xff]
    %v5144 = vld [vmem:[%s39 + $0x458] sm:$0xff]
    %v5145 = vld [vmem:[%s39 + $0x460] sm:$0xff]
    %v5146 = vld [vmem:[%s39 + $0x468] sm:$0xff]
    %v5147 = vld [vmem:[%s39 + $0x470] sm:$0xff]
    %v5148 = vld [vmem:[%s39 + $0x478] sm:$0xff]
    %v5149 = vld [vmem:[%s39 + $0x480] sm:$0xff]
    %v5150 = vld [vmem:[%s39 + $0x488] sm:$0xff]
    %v5151 = vld [vmem:[%s39 + $0x490] sm:$0xff]
    %v5152 = vld [vmem:[%s39 + $0x498] sm:$0xff]
    %v5153 = vld [vmem:[%s39 + $0x4a0] sm:$0xff]
    %v5154 = vld [vmem:[%s39 + $0x4a8] sm:$0xff]
    %v5155 = vld [vmem:[%s39 + $0x4b0] sm:$0xff]
    %v5156 = vld [vmem:[%s39 + $0x4b8] sm:$0xff]
    %v5157 = vld [vmem:[%s39 + $0x4c0] sm:$0xff]
    %v5158 = vld [vmem:[%s39 + $0x4c8] sm:$0xff]
    %v5159 = vld [vmem:[%s39 + $0x4d0] sm:$0xff]
    %v5160 = vld [vmem:[%s39 + $0x4d8] sm:$0xff]
    %v5161 = vld [vmem:[%s39 + $0x4e0] sm:$0xff]
    %v5162 = vld [vmem:[%s39 + $0x4e8] sm:$0xff]
    %v5163 = vld [vmem:[%s39 + $0x4f0] sm:$0xff]
    %v5164 = vld [vmem:[%s39 + $0x4f8] sm:$0xff]
    %v5165 = vld [vmem:[%s39 + $0x500] sm:$0xff]
    %v5166 = vld [vmem:[%s39 + $0x508] sm:$0xff]
    %v5167 = vld [vmem:[%s39 + $0x510] sm:$0xff]
    %v5168 = vld [vmem:[%s39 + $0x518] sm:$0xff]
    %v5169 = vld [vmem:[%s39 + $0x520] sm:$0xff]
    %v5170 = vld [vmem:[%s39 + $0x528] sm:$0xff]
    %v5171 = vld [vmem:[%s39 + $0x530] sm:$0xff]
    %v5172 = vld [vmem:[%s39 + $0x538] sm:$0xff]
    %v5173 = vld [vmem:[%s39 + $0x540] sm:$0xff]
    %v5174 = vld [vmem:[%s39 + $0x548] sm:$0xff]
    %v5175 = vld [vmem:[%s39 + $0x550] sm:$0xff]
    %v5176 = vld [vmem:[%s39 + $0x558] sm:$0xff]
    %v5177 = vld [vmem:[%s39 + $0x560] sm:$0xff]
    %v5178 = vld [vmem:[%s39 + $0x568] sm:$0xff]
    %v5179 = vld [vmem:[%s39 + $0x570] sm:$0xff]
    %v5180 = vld [vmem:[%s39 + $0x578] sm:$0xff]
    %v5181 = vld [vmem:[%s39 + $0x580] sm:$0xff]
    %v5182 = vld [vmem:[%s39 + $0x588] sm:$0xff]
    %v5183 = vld [vmem:[%s39 + $0x590] sm:$0xff]
    %v5184 = vld [vmem:[%s39 + $0x598] sm:$0xff]
    %v5185 = vld [vmem:[%s39 + $0x5a0] sm:$0xff]
    %v5186 = vld [vmem:[%s39 + $0x5a8] sm:$0xff]
    %v5187 = vld [vmem:[%s39 + $0x5b0] sm:$0xff]
    %v5188 = vld [vmem:[%s39 + $0x5b8] sm:$0xff]
    %v5189 = vld [vmem:[%s39 + $0x5c0] sm:$0xff]
    %v5190 = vld [vmem:[%s39 + $0x5c8] sm:$0xff]
    %v5191 = vld [vmem:[%s39 + $0x5d0] sm:$0xff]
    %v5192 = vld [vmem:[%s39 + $0x5d8] sm:$0xff]
    %v5193 = vld [vmem:[%s39 + $0x5e0] sm:$0xff]
    %v5194 = vld [vmem:[%s39 + $0x5e8] sm:$0xff]
    %v5195 = vld [vmem:[%s39 + $0x5f0] sm:$0xff]
    %v5196 = vld [vmem:[%s39 + $0x5f8] sm:$0xff]
    %v5197 = vld [vmem:[#allocation16] sm:$0x3f]
    %v5199 = vlaneseq
    %v5200 = vshrl.u32 %v5199, 7
    %v5201 = vsub.s32 0, %v5200
    %v5202 = vrot.slane %v5197, %v5201
    %v5203 = vlaneseq
    %v5204 = vshrl.u32 %v5203, 7
    %v5205 = vsub.s32 1, %v5204
    %v5206 = vrot.slane %v5197, %v5205
    %v5207 = vlaneseq
    %v5208 = vshrl.u32 %v5207, 7
    %v5209 = vsub.s32 2, %v5208
    %v5210 = vrot.slane %v5197, %v5209
    %v5211 = vlaneseq
    %v5212 = vshrl.u32 %v5211, 7
    %v5213 = vsub.s32 3, %v5212
    %v5214 = vrot.slane %v5197, %v5213
    %v5215 = vlaneseq
    %v5216 = vshrl.u32 %v5215, 7
    %v5217 = vsub.s32 4, %v5216
    %v5218 = vrot.slane %v5197, %v5217
    %v5219 = vlaneseq
    %v5220 = vshrl.u32 %v5219, 7
    %v5221 = vsub.s32 5, %v5220
    %v5222 = vrot.slane %v5197, %v5221
    %5229 = vmatprep.subr.mxu0 %v5096
    %5230 = vmatpush1.msra.mxu0 %v5095
    %5231 = vmatprep.subr.mxu0 %v5090
    %5232 = vmatpush1.msra.mxu0 %v5089
    %5233 = vmatprep.subr.mxu0 %v5084
    %5234 = vmatpush1.msra.mxu0 %v5083
    %5235 = vmatprep.subr.mxu0 %v5078
    %5236 = vmatpush1.msra.mxu0 %v5077
    %5237 = vmatprep.subr.mxu0 %v5072
    %5238 = vmatpush1.msra.mxu0 %v5071
    %5239 = vmatprep.subr.mxu0 %v5066
    %5240 = vmatpush1.msra.mxu0 %v5065
    %5241 = vmatprep.subr.mxu0 %v5060
    %5242 = vmatpush1.msra.mxu0 %v5059
    %5243 = vmatprep.subr.mxu0 %v5054
    %5244 = vmatpush1.msra.mxu0 %v5053
    %5245 = vmatprep.subr.mxu0 %v5048
    %5246 = vmatpush1.msra.mxu0 %v5047
    %5247 = vmatprep.subr.mxu0 %v5042
    %5248 = vmatpush1.msra.mxu0 %v5041
    %5249 = vmatprep.subr.mxu0 %v5036
    %5250 = vmatpush1.msra.mxu0 %v5035
    %5251 = vmatprep.subr.mxu0 %v5030
    %5252 = vmatpush1.msra.mxu0 %v5029
    %5253 = vmatprep.subr.mxu0 %v5024
    %5254 = vmatpush1.msra.mxu0 %v5023
    %5255 = vmatprep.subr.mxu0 %v5018
    %5256 = vmatpush1.msra.mxu0 %v5017
    %5257 = vmatprep.subr.mxu0 %v5012
    %5258 = vmatpush1.msra.mxu0 %v5011
    %5259 = vmatprep.subr.mxu0 %v5006
    %5260 = vmatpush1.msra.mxu0 %v5005
    %5261 = vmatprep.subr.mxu0 %v5192
    %5262 = vmatpush2.msra.mxu0 %v5191
    %5263 = vmatprep.subr.mxu0 %v5186
    %5264 = vmatpush2.msra.mxu0 %v5185
    %5265 = vmatprep.subr.mxu0 %v5180
    %5266 = vmatpush2.msra.mxu0 %v5179
    %5267 = vmatprep.subr.mxu0 %v5174
    %5268 = vmatpush2.msra.mxu0 %v5173
    %5269 = vmatprep.subr.mxu0 %v5168
    %5270 = vmatpush2.msra.mxu0 %v5167
    %5271 = vmatprep.subr.mxu0 %v5162
    %5272 = vmatpush2.msra.mxu0 %v5161
    %5273 = vmatprep.subr.mxu0 %v5156
    %5274 = vmatpush2.msra.mxu0 %v5155
    %5275 = vmatprep.subr.mxu0 %v5150
    %5276 = vmatpush2.msra.mxu0 %v5149
    %5277 = vmatprep.subr.mxu0 %v5144
    %5278 = vmatpush2.msra.mxu0 %v5143
    %5279 = vmatprep.subr.mxu0 %v5138
    %5280 = vmatpush2.msra.mxu0 %v5137
    %5281 = vmatprep.subr.mxu0 %v5132
    %5282 = vmatpush2.msra.mxu0 %v5131
    %5283 = vmatprep.subr.mxu0 %v5126
    %5284 = vmatpush2.msra.mxu0 %v5125
    %5285 = vmatprep.subr.mxu0 %v5120
    %5286 = vmatpush2.msra.mxu0 %v5119
    %5287 = vmatprep.subr.mxu0 %v5114
    %5288 = vmatpush2.msra.mxu0 %v5113
    %5289 = vmatprep.subr.mxu0 %v5108
    %5290 = vmatpush2.msra.mxu0 %v5107
    %5291 = vmatprep.subr.mxu0 %v5102
    %5292 = vmatpush2.msra.mxu0 %v5101
    %5293 = vmatprep.mubr.f32.mxu0 %v5004
    %5294 = vmatmul.mubr.f32.gmra.mxu0 %v5003
    %v5295 = vpop.f32.mrf.mxu0
    %v5296 = vadd.f32 %v5202, %v5295
    %v5297 = vpop.f32.mrf.mxu0
    %v5298 = vadd.f32 %v5206, %v5297
    %5299 = vdwg.mxu0
    %5300 = vmatprep.subr.mxu0 %v5098
    %5301 = vmatpush1.msra.mxu0 %v5097
    %5302 = vmatprep.subr.mxu0 %v5092
    %5303 = vmatpush1.msra.mxu0 %v5091
    %5304 = vmatprep.subr.mxu0 %v5086
    %5305 = vmatpush1.msra.mxu0 %v5085
    %5306 = vmatprep.subr.mxu0 %v5080
    %5307 = vmatpush1.msra.mxu0 %v5079
    %5308 = vmatprep.subr.mxu0 %v5074
    %5309 = vmatpush1.msra.mxu0 %v5073
    %5310 = vmatprep.subr.mxu0 %v5068
    %5311 = vmatpush1.msra.mxu0 %v5067
    %5312 = vmatprep.subr.mxu0 %v5062
    %5313 = vmatpush1.msra.mxu0 %v5061
    %5314 = vmatprep.subr.mxu0 %v5056
    %5315 = vmatpush1.msra.mxu0 %v5055
    %5316 = vmatprep.subr.mxu0 %v5050
    %5317 = vmatpush1.msra.mxu0 %v5049
    %5318 = vmatprep.subr.mxu0 %v5044
    %5319 = vmatpush1.msra.mxu0 %v5043
    %5320 = vmatprep.subr.mxu0 %v5038
    %5321 = vmatpush1.msra.mxu0 %v5037
    %5322 = vmatprep.subr.mxu0 %v5032
    %5323 = vmatpush1.msra.mxu0 %v5031
    %5324 = vmatprep.subr.mxu0 %v5026
    %5325 = vmatpush1.msra.mxu0 %v5025
    %5326 = vmatprep.subr.mxu0 %v5020
    %5327 = vmatpush1.msra.mxu0 %v5019
    %5328 = vmatprep.subr.mxu0 %v5014
    %5329 = vmatpush1.msra.mxu0 %v5013
    %5330 = vmatprep.subr.mxu0 %v5008
    %5331 = vmatpush1.msra.mxu0 %v5007
    %5332 = vmatprep.subr.mxu0 %v5194
    %5333 = vmatpush2.msra.mxu0 %v5193
    %5334 = vmatprep.subr.mxu0 %v5188
    %5335 = vmatpush2.msra.mxu0 %v5187
    %5336 = vmatprep.subr.mxu0 %v5182
    %5337 = vmatpush2.msra.mxu0 %v5181
    %5338 = vmatprep.subr.mxu0 %v5176
    %5339 = vmatpush2.msra.mxu0 %v5175
    %5340 = vmatprep.subr.mxu0 %v5170
    %5341 = vmatpush2.msra.mxu0 %v5169
    %5342 = vmatprep.subr.mxu0 %v5164
    %5343 = vmatpush2.msra.mxu0 %v5163
    %5344 = vmatprep.subr.mxu0 %v5158
    %5345 = vmatpush2.msra.mxu0 %v5157
    %5346 = vmatprep.subr.mxu0 %v5152
    %5347 = vmatpush2.msra.mxu0 %v5151
    %5348 = vmatprep.subr.mxu0 %v5146
    %5349 = vmatpush2.msra.mxu0 %v5145
    %5350 = vmatprep.subr.mxu0 %v5140
    %5351 = vmatpush2.msra.mxu0 %v5139
    %5352 = vmatprep.subr.mxu0 %v5134
    %5353 = vmatpush2.msra.mxu0 %v5133
    %5354 = vmatprep.subr.mxu0 %v5128
    %5355 = vmatpush2.msra.mxu0 %v5127
    %5356 = vmatprep.subr.mxu0 %v5122
    %5357 = vmatpush2.msra.mxu0 %v5121
    %5358 = vmatprep.subr.mxu0 %v5116
    %5359 = vmatpush2.msra.mxu0 %v5115
    %5360 = vmatprep.subr.mxu0 %v5110
    %5361 = vmatpush2.msra.mxu0 %v5109
    %5362 = vmatprep.subr.mxu0 %v5104
    %5363 = vmatpush2.msra.mxu0 %v5103
    %5364 = vmatprep.mubr.f32.mxu0 %v5004
    %5365 = vmatmul.mubr.f32.gmra.mxu0 %v5003
    %v5366 = vpop.f32.mrf.mxu0
    %v5367 = vadd.f32 %v5210, %v5366
    %v5368 = vpop.f32.mrf.mxu0
    %v5369 = vadd.f32 %v5214, %v5368
    %5370 = vdwg.mxu0
    %5371 = vmatprep.subr.mxu0 %v5100
    %5372 = vmatpush1.msra.mxu0 %v5099
    %5373 = vmatprep.subr.mxu0 %v5094
    %5374 = vmatpush1.msra.mxu0 %v5093
    %5375 = vmatprep.subr.mxu0 %v5088
    %5376 = vmatpush1.msra.mxu0 %v5087
    %5377 = vmatprep.subr.mxu0 %v5082
    %5378 = vmatpush1.msra.mxu0 %v5081
    %5379 = vmatprep.subr.mxu0 %v5076
    %5380 = vmatpush1.msra.mxu0 %v5075
    %5381 = vmatprep.subr.mxu0 %v5070
    %5382 = vmatpush1.msra.mxu0 %v5069
    %5383 = vmatprep.subr.mxu0 %v5064
    %5384 = vmatpush1.msra.mxu0 %v5063
    %5385 = vmatprep.subr.mxu0 %v5058
    %5386 = vmatpush1.msra.mxu0 %v5057
    %5387 = vmatprep.subr.mxu0 %v5052
    %5388 = vmatpush1.msra.mxu0 %v5051
    %5389 = vmatprep.subr.mxu0 %v5046
    %5390 = vmatpush1.msra.mxu0 %v5045
    %5391 = vmatprep.subr.mxu0 %v5040
    %5392 = vmatpush1.msra.mxu0 %v5039
    %5393 = vmatprep.subr.mxu0 %v5034
    %5394 = vmatpush1.msra.mxu0 %v5033
    %5395 = vmatprep.subr.mxu0 %v5028
    %5396 = vmatpush1.msra.mxu0 %v5027
    %5397 = vmatprep.subr.mxu0 %v5022
    %5398 = vmatpush1.msra.mxu0 %v5021
    %5399 = vmatprep.subr.mxu0 %v5016
    %5400 = vmatpush1.msra.mxu0 %v5015
    %5401 = vmatprep.subr.mxu0 %v5010
    %5402 = vmatpush1.msra.mxu0 %v5009
    %5403 = vmatprep.subr.mxu0 %v5196
    %5404 = vmatpush2.msra.mxu0 %v5195
    %5405 = vmatprep.subr.mxu0 %v5190
    %5406 = vmatpush2.msra.mxu0 %v5189
    %5407 = vmatprep.subr.mxu0 %v5184
    %5408 = vmatpush2.msra.mxu0 %v5183
    %5409 = vmatprep.subr.mxu0 %v5178
    %5410 = vmatpush2.msra.mxu0 %v5177
    %5411 = vmatprep.subr.mxu0 %v5172
    %5412 = vmatpush2.msra.mxu0 %v5171
    %5413 = vmatprep.subr.mxu0 %v5166
    %5414 = vmatpush2.msra.mxu0 %v5165
    %5415 = vmatprep.subr.mxu0 %v5160
    %5416 = vmatpush2.msra.mxu0 %v5159
    %5417 = vmatprep.subr.mxu0 %v5154
    %5418 = vmatpush2.msra.mxu0 %v5153
    %5419 = vmatprep.subr.mxu0 %v5148
    %5420 = vmatpush2.msra.mxu0 %v5147
    %5421 = vmatprep.subr.mxu0 %v5142
    %5422 = vmatpush2.msra.mxu0 %v5141
    %5423 = vmatprep.subr.mxu0 %v5136
    %5424 = vmatpush2.msra.mxu0 %v5135
    %5425 = vmatprep.subr.mxu0 %v5130
    %5426 = vmatpush2.msra.mxu0 %v5129
    %5427 = vmatprep.subr.mxu0 %v5124
    %5428 = vmatpush2.msra.mxu0 %v5123
    %5429 = vmatprep.subr.mxu0 %v5118
    %5430 = vmatpush2.msra.mxu0 %v5117
    %5431 = vmatprep.subr.mxu0 %v5112
    %5432 = vmatpush2.msra.mxu0 %v5111
    %5433 = vmatprep.subr.mxu0 %v5106
    %5434 = vmatpush2.msra.mxu0 %v5105
    %5435 = vmatprep.mubr.f32.mxu0 %v5004
    %5436 = vmatmul.mubr.f32.gmra.mxu0 %v5003
    %v5437 = vpop.f32.mrf.mxu0
    %v5438 = vadd.f32 %v5218, %v5437
    %v5439 = vpop.f32.mrf.mxu0
    %v5440 = vadd.f32 %v5222, %v5439
    %5441 = vdwg.mxu0
    %v5442 = vmul.f32 %v5296, 0.5
    %v5443 = vmul.f32 %v5298, 0.5
    %v5444 = vtanh.pop %v5442
    %v5445 = vtanh.pop %v5443
    %v5446 = vadd.f32 %v5444, 1.0
    %v5447 = vadd.f32 %v5445, 1.0
    %v5448 = vmul.f32 %v5446, 0.5
    %v5449 = vmul.f32 %v5447, 0.5
    %v5450 = vtanh.pop %v5367
    %v5451 = vtanh.pop %v5369
    %v5452 = vmul.f32 %v5438, 0.5
    %v5453 = vmul.f32 %v5440, 0.5
    %v5454 = vtanh.pop %v5452
    %v5455 = vtanh.pop %v5453
    %v5456 = vadd.f32 %v5454, 1.0
    %v5457 = vadd.f32 %v5455, 1.0
    %v5458 = vmul.f32 %v5456, 0.5
    %v5459 = vmul.f32 %v5457, 0.5
    %v5460 = vmul.f32 %v5448, %v5450
    %v5461 = vmul.f32 %v5449, %v5451
    %v5462 = vtanh.pop %v5460
    %v5463 = vtanh.pop %v5461
    %v5464 = vmul.f32 %v5458, %v5462
    %v5465 = vmul.f32 %v5459, %v5463
    %v5466 = vld [vmem:[%s33] sm:$0x3]
    %v5467 = vld [vmem:[%s35] sm:$0xff]
    %v5468 = vld [vmem:[%s35 + $0x8] sm:$0xff]
    %v5469 = vld [vmem:[%s35 + $0x10] sm:$0xff]
    %v5470 = vld [vmem:[%s35 + $0x18] sm:$0xff]
    %v5471 = vld [vmem:[%s35 + $0x20] sm:$0xff]
    %v5472 = vld [vmem:[%s35 + $0x28] sm:$0xff]
    %v5473 = vld [vmem:[%s35 + $0x30] sm:$0xff]
    %v5474 = vld [vmem:[%s35 + $0x38] sm:$0xff]
    %v5475 = vld [vmem:[%s35 + $0x40] sm:$0xff]
    %v5476 = vld [vmem:[%s35 + $0x48] sm:$0xff]
    %v5477 = vld [vmem:[%s35 + $0x50] sm:$0xff]
    %v5478 = vld [vmem:[%s35 + $0x58] sm:$0xff]
    %v5479 = vld [vmem:[%s35 + $0x60] sm:$0xff]
    %v5480 = vld [vmem:[%s35 + $0x68] sm:$0xff]
    %v5481 = vld [vmem:[%s35 + $0x70] sm:$0xff]
    %v5482 = vld [vmem:[%s35 + $0x78] sm:$0xff]
    %v5483 = vld [vmem:[%s35 + $0x80] sm:$0xff]
    %v5484 = vld [vmem:[%s35 + $0x88] sm:$0xff]
    %v5485 = vld [vmem:[%s35 + $0x90] sm:$0xff]
    %v5486 = vld [vmem:[%s35 + $0x98] sm:$0xff]
    %v5487 = vld [vmem:[%s35 + $0xa0] sm:$0xff]
    %v5488 = vld [vmem:[%s35 + $0xa8] sm:$0xff]
    %v5489 = vld [vmem:[%s35 + $0xb0] sm:$0xff]
    %v5490 = vld [vmem:[%s35 + $0xb8] sm:$0xff]
    %v5491 = vld [vmem:[%s35 + $0xc0] sm:$0xff]
    %v5492 = vld [vmem:[%s35 + $0xc8] sm:$0xff]
    %v5493 = vld [vmem:[%s35 + $0xd0] sm:$0xff]
    %v5494 = vld [vmem:[%s35 + $0xd8] sm:$0xff]
    %v5495 = vld [vmem:[%s35 + $0xe0] sm:$0xff]
    %v5496 = vld [vmem:[%s35 + $0xe8] sm:$0xff]
    %v5497 = vld [vmem:[%s35 + $0xf0] sm:$0xff]
    %v5498 = vld [vmem:[%s35 + $0xf8] sm:$0xff]
    %v5499 = vld [vmem:[#allocation15] sm:$0x3]
    %v5501 = vlaneseq
    %v5502 = vshrl.u32 %v5501, 7
    %v5503 = vsub.s32 0, %v5502
    %v5504 = vrot.slane %v5499, %v5503
    %v5505 = vlaneseq
    %v5506 = vshrl.u32 %v5505, 7
    %v5507 = vsub.s32 1, %v5506
    %v5508 = vrot.slane %v5499, %v5507
    %5511 = vmatprep.subr.mxu0 %v5498
    %5512 = vmatpush1.msra.mxu0 %v5497
    %5513 = vmatprep.subr.mxu0 %v5496
    %5514 = vmatpush1.msra.mxu0 %v5495
    %5515 = vmatprep.subr.mxu0 %v5494
    %5516 = vmatpush1.msra.mxu0 %v5493
    %5517 = vmatprep.subr.mxu0 %v5492
    %5518 = vmatpush1.msra.mxu0 %v5491
    %5519 = vmatprep.subr.mxu0 %v5490
    %5520 = vmatpush1.msra.mxu0 %v5489
    %5521 = vmatprep.subr.mxu0 %v5488
    %5522 = vmatpush1.msra.mxu0 %v5487
    %5523 = vmatprep.subr.mxu0 %v5486
    %5524 = vmatpush1.msra.mxu0 %v5485
    %5525 = vmatprep.subr.mxu0 %v5484
    %5526 = vmatpush1.msra.mxu0 %v5483
    %5527 = vmatprep.subr.mxu0 %v5482
    %5528 = vmatpush1.msra.mxu0 %v5481
    %5529 = vmatprep.subr.mxu0 %v5480
    %5530 = vmatpush1.msra.mxu0 %v5479
    %5531 = vmatprep.subr.mxu0 %v5478
    %5532 = vmatpush1.msra.mxu0 %v5477
    %5533 = vmatprep.subr.mxu0 %v5476
    %5534 = vmatpush1.msra.mxu0 %v5475
    %5535 = vmatprep.subr.mxu0 %v5474
    %5536 = vmatpush1.msra.mxu0 %v5473
    %5537 = vmatprep.subr.mxu0 %v5472
    %5538 = vmatpush1.msra.mxu0 %v5471
    %5539 = vmatprep.subr.mxu0 %v5470
    %5540 = vmatpush1.msra.mxu0 %v5469
    %5541 = vmatprep.subr.mxu0 %v5468
    %5542 = vmatpush1.msra.mxu0 %v5467
    %5543 = vmatprep.subr.mxu0 0.0
    %5544 = vmatpush2.msra.mxu0 0.0
    %5545 = vmatprep.subr.mxu0 0.0
    %5546 = vmatpush2.msra.mxu0 0.0
    %5547 = vmatprep.subr.mxu0 0.0
    %5548 = vmatpush2.msra.mxu0 0.0
    %5549 = vmatprep.subr.mxu0 0.0
    %5550 = vmatpush2.msra.mxu0 0.0
    %5551 = vmatprep.subr.mxu0 0.0
    %5552 = vmatpush2.msra.mxu0 0.0
    %5553 = vmatprep.subr.mxu0 0.0
    %5554 = vmatpush2.msra.mxu0 0.0
    %5555 = vmatprep.subr.mxu0 0.0
    %5556 = vmatpush2.msra.mxu0 0.0
    %5557 = vmatprep.subr.mxu0 0.0
    %5558 = vmatpush2.msra.mxu0 0.0
    %5559 = vmatprep.subr.mxu0 0.0
    %5560 = vmatpush2.msra.mxu0 0.0
    %5561 = vmatprep.subr.mxu0 0.0
    %5562 = vmatpush2.msra.mxu0 0.0
    %5563 = vmatprep.subr.mxu0 0.0
    %5564 = vmatpush2.msra.mxu0 0.0
    %5565 = vmatprep.subr.mxu0 0.0
    %5566 = vmatpush2.msra.mxu0 0.0
    %5567 = vmatprep.subr.mxu0 0.0
    %5568 = vmatpush2.msra.mxu0 0.0
    %5569 = vmatprep.subr.mxu0 0.0
    %5570 = vmatpush2.msra.mxu0 0.0
    %5571 = vmatprep.subr.mxu0 0.0
    %5572 = vmatpush2.msra.mxu0 0.0
    %5573 = vmatprep.subr.mxu0 0.0
    %5574 = vmatpush2.msra.mxu0 0.0
    %5575 = vmatprep.mubr.f32.mxu0 0.0
    %5576 = vmatmul.mubr.f32.gmra.mxu0 %v5466
    %v5577 = vpop.f32.mrf.mxu0
    %v5578 = vadd.f32 %v5504, %v5577
    %v5579 = vpop.f32.mrf.mxu0
    %v5580 = vadd.f32 %v5508, %v5579
    %5581 = vdwg.mxu0
    %v5582 = vmul.f32 %v5578, 0.5
    %v5583 = vmul.f32 %v5580, 0.5
    %v5584 = vtanh.pop %v5582
    %v5585 = vtanh.pop %v5583
    %v5586 = vadd.f32 %v5584, 1.0
    %v5587 = vadd.f32 %v5585, 1.0
    %v5588 = vmul.f32 %v5586, 0.5
    %v5589 = vmul.f32 %v5587, 0.5
    %v5590 = vmul.f32 %v5464, %v5588
    %v5591 = vmul.f32 %v5465, %v5589
    %v5592 = vld [vmem:[#allocation18] sm:$0xff]
    %v5593 = vld [vmem:[#allocation18 + $0x8] sm:$0xff]
    %v5594 = vld [vmem:[#allocation18 + $0x10] sm:$0xff]
    %v5595 = vld [vmem:[#allocation18 + $0x18] sm:$0xff]
    %v5596 = vld [vmem:[#allocation18 + $0x20] sm:$0xff]
    %v5597 = vld [vmem:[#allocation18 + $0x28] sm:$0xff]
    %v5598 = vld [vmem:[#allocation18 + $0x30] sm:$0xff]
    %v5599 = vld [vmem:[#allocation18 + $0x38] sm:$0xff]
    %v5600 = vld [vmem:[#allocation18 + $0x40] sm:$0xff]
    %v5601 = vld [vmem:[#allocation18 + $0x48] sm:$0xff]
    %v5602 = vld [vmem:[#allocation18 + $0x50] sm:$0xff]
    %v5603 = vld [vmem:[#allocation18 + $0x58] sm:$0xff]
    %v5604 = vld [vmem:[#allocation18 + $0x60] sm:$0xff]
    %v5605 = vld [vmem:[#allocation18 + $0x68] sm:$0xff]
    %v5606 = vld [vmem:[#allocation18 + $0x70] sm:$0xff]
    %v5607 = vld [vmem:[#allocation18 + $0x78] sm:$0xff]
    %v5608 = vld [vmem:[#allocation18 + $0x80] sm:$0xff]
    %v5609 = vld [vmem:[#allocation18 + $0x88] sm:$0xff]
    %v5610 = vld [vmem:[#allocation18 + $0x90] sm:$0xff]
    %v5611 = vld [vmem:[#allocation18 + $0x98] sm:$0xff]
    %v5612 = vld [vmem:[#allocation18 + $0xa0] sm:$0xff]
    %v5613 = vld [vmem:[#allocation18 + $0xa8] sm:$0xff]
    %v5614 = vld [vmem:[#allocation18 + $0xb0] sm:$0xff]
    %v5615 = vld [vmem:[#allocation18 + $0xb8] sm:$0xff]
    %v5616 = vld [vmem:[#allocation18 + $0xc0] sm:$0xff]
    %v5617 = vld [vmem:[#allocation18 + $0xc8] sm:$0xff]
    %v5618 = vld [vmem:[#allocation18 + $0xd0] sm:$0xff]
    %v5619 = vld [vmem:[#allocation18 + $0xd8] sm:$0xff]
    %v5620 = vld [vmem:[#allocation18 + $0xe0] sm:$0xff]
    %v5621 = vld [vmem:[#allocation18 + $0xe8] sm:$0xff]
    %v5622 = vld [vmem:[#allocation18 + $0xf0] sm:$0xff]
    %v5623 = vld [vmem:[#allocation18 + $0xf8] sm:$0xff]
    %v5624 = vld [vmem:[#allocation19] sm:$0x1]
    %v5626 = vlaneseq
    %v5627 = vshrl.u32 %v5626, 7
    %v5628 = vsub.s32 0, %v5627
    %v5629 = vrot.slane %v5624, %v5628
    %5631 = vmatprep.subr.mxu0 0.0
    %5632 = vmatpush1.msra.mxu0 %v5607
    %5633 = vmatprep.subr.mxu0 0.0
    %5634 = vmatpush1.msra.mxu0 %v5606
    %5635 = vmatprep.subr.mxu0 0.0
    %5636 = vmatpush1.msra.mxu0 %v5605
    %5637 = vmatprep.subr.mxu0 0.0
    %5638 = vmatpush1.msra.mxu0 %v5604
    %5639 = vmatprep.subr.mxu0 0.0
    %5640 = vmatpush1.msra.mxu0 %v5603
    %5641 = vmatprep.subr.mxu0 0.0
    %5642 = vmatpush1.msra.mxu0 %v5602
    %5643 = vmatprep.subr.mxu0 0.0
    %5644 = vmatpush1.msra.mxu0 %v5601
    %5645 = vmatprep.subr.mxu0 0.0
    %5646 = vmatpush1.msra.mxu0 %v5600
    %5647 = vmatprep.subr.mxu0 0.0
    %5648 = vmatpush1.msra.mxu0 %v5599
    %5649 = vmatprep.subr.mxu0 0.0
    %5650 = vmatpush1.msra.mxu0 %v5598
    %5651 = vmatprep.subr.mxu0 0.0
    %5652 = vmatpush1.msra.mxu0 %v5597
    %5653 = vmatprep.subr.mxu0 0.0
    %5654 = vmatpush1.msra.mxu0 %v5596
    %5655 = vmatprep.subr.mxu0 0.0
    %5656 = vmatpush1.msra.mxu0 %v5595
    %5657 = vmatprep.subr.mxu0 0.0
    %5658 = vmatpush1.msra.mxu0 %v5594
    %5659 = vmatprep.subr.mxu0 0.0
    %5660 = vmatpush1.msra.mxu0 %v5593
    %5661 = vmatprep.subr.mxu0 0.0
    %5662 = vmatpush1.msra.mxu0 %v5592
    %5663 = vmatprep.subr.mxu0 0.0
    %5664 = vmatpush2.msra.mxu0 %v5623
    %5665 = vmatprep.subr.mxu0 0.0
    %5666 = vmatpush2.msra.mxu0 %v5622
    %5667 = vmatprep.subr.mxu0 0.0
    %5668 = vmatpush2.msra.mxu0 %v5621
    %5669 = vmatprep.subr.mxu0 0.0
    %5670 = vmatpush2.msra.mxu0 %v5620
    %5671 = vmatprep.subr.mxu0 0.0
    %5672 = vmatpush2.msra.mxu0 %v5619
    %5673 = vmatprep.subr.mxu0 0.0
    %5674 = vmatpush2.msra.mxu0 %v5618
    %5675 = vmatprep.subr.mxu0 0.0
    %5676 = vmatpush2.msra.mxu0 %v5617
    %5677 = vmatprep.subr.mxu0 0.0
    %5678 = vmatpush2.msra.mxu0 %v5616
    %5679 = vmatprep.subr.mxu0 0.0
    %5680 = vmatpush2.msra.mxu0 %v5615
    %5681 = vmatprep.subr.mxu0 0.0
    %5682 = vmatpush2.msra.mxu0 %v5614
    %5683 = vmatprep.subr.mxu0 0.0
    %5684 = vmatpush2.msra.mxu0 %v5613
    %5685 = vmatprep.subr.mxu0 0.0
    %5686 = vmatpush2.msra.mxu0 %v5612
    %5687 = vmatprep.subr.mxu0 0.0
    %5688 = vmatpush2.msra.mxu0 %v5611
    %5689 = vmatprep.subr.mxu0 0.0
    %5690 = vmatpush2.msra.mxu0 %v5610
    %5691 = vmatprep.subr.mxu0 0.0
    %5692 = vmatpush2.msra.mxu0 %v5609
    %5693 = vmatprep.subr.mxu0 0.0
    %5694 = vmatpush2.msra.mxu0 %v5608
    %5695 = vmatprep.mubr.f32.mxu0 %v5591
    %5696 = vmatmul.mubr.f32.gmra.mxu0 %v5590
    %v5697 = vpop.f32.mrf.mxu0
    %v5698 = vadd.f32 %v5629, %v5697
    %v5699 = vpop.f32.mrf.mxu0
    %5700 = vdwg.mxu0
    %v5701 = vmax.f32 %v5698, 0.0
    %v5702 = vld [vmem:[#allocation21] sm:$0xff]
    %v5703 = vld [vmem:[#allocation21 + $0x8] sm:$0xff]
    %v5704 = vld [vmem:[#allocation21 + $0x10] sm:$0xff]
    %v5705 = vld [vmem:[#allocation21 + $0x18] sm:$0xff]
    %v5706 = vld [vmem:[#allocation21 + $0x20] sm:$0xff]
    %v5707 = vld [vmem:[#allocation21 + $0x28] sm:$0xff]
    %v5708 = vld [vmem:[#allocation21 + $0x30] sm:$0xff]
    %v5709 = vld [vmem:[#allocation21 + $0x38] sm:$0xff]
    %v5710 = vld [vmem:[#allocation21 + $0x40] sm:$0xff]
    %v5711 = vld [vmem:[#allocation21 + $0x48] sm:$0xff]
    %v5712 = vld [vmem:[#allocation21 + $0x50] sm:$0xff]
    %v5713 = vld [vmem:[#allocation21 + $0x58] sm:$0xff]
    %v5714 = vld [vmem:[#allocation21 + $0x60] sm:$0xff]
    %v5715 = vld [vmem:[#allocation21 + $0x68] sm:$0xff]
    %v5716 = vld [vmem:[#allocation21 + $0x70] sm:$0xff]
    %v5717 = vld [vmem:[#allocation21 + $0x78] sm:$0xff]
    %v5718 = vld [vmem:[#allocation22] sm:$0x1]
    %v5720 = vlaneseq
    %v5721 = vshrl.u32 %v5720, 7
    %v5722 = vsub.s32 0, %v5721
    %v5723 = vrot.slane %v5718, %v5722
    %5725 = vmatprep.subr.mxu0 0.0
    %5726 = vmatpush1.msra.mxu0 %v5717
    %5727 = vmatprep.subr.mxu0 0.0
    %5728 = vmatpush1.msra.mxu0 %v5716
    %5729 = vmatprep.subr.mxu0 0.0
    %5730 = vmatpush1.msra.mxu0 %v5715
    %5731 = vmatprep.subr.mxu0 0.0
    %5732 = vmatpush1.msra.mxu0 %v5714
    %5733 = vmatprep.subr.mxu0 0.0
    %5734 = vmatpush1.msra.mxu0 %v5713
    %5735 = vmatprep.subr.mxu0 0.0
    %5736 = vmatpush1.msra.mxu0 %v5712
    %5737 = vmatprep.subr.mxu0 0.0
    %5738 = vmatpush1.msra.mxu0 %v5711
    %5739 = vmatprep.subr.mxu0 0.0
    %5740 = vmatpush1.msra.mxu0 %v5710
    %5741 = vmatprep.subr.mxu0 0.0
    %5742 = vmatpush1.msra.mxu0 %v5709
    %5743 = vmatprep.subr.mxu0 0.0
    %5744 = vmatpush1.msra.mxu0 %v5708
    %5745 = vmatprep.subr.mxu0 0.0
    %5746 = vmatpush1.msra.mxu0 %v5707
    %5747 = vmatprep.subr.mxu0 0.0
    %5748 = vmatpush1.msra.mxu0 %v5706
    %5749 = vmatprep.subr.mxu0 0.0
    %5750 = vmatpush1.msra.mxu0 %v5705
    %5751 = vmatprep.subr.mxu0 0.0
    %5752 = vmatpush1.msra.mxu0 %v5704
    %5753 = vmatprep.subr.mxu0 0.0
    %5754 = vmatpush1.msra.mxu0 %v5703
    %5755 = vmatprep.subr.mxu0 0.0
    %5756 = vmatpush1.msra.mxu0 %v5702
    %5757 = vmatprep.subr.mxu0 0.0
    %5758 = vmatpush2.msra.mxu0 0.0
    %5759 = vmatprep.subr.mxu0 0.0
    %5760 = vmatpush2.msra.mxu0 0.0
    %5761 = vmatprep.subr.mxu0 0.0
    %5762 = vmatpush2.msra.mxu0 0.0
    %5763 = vmatprep.subr.mxu0 0.0
    %5764 = vmatpush2.msra.mxu0 0.0
    %5765 = vmatprep.subr.mxu0 0.0
    %5766 = vmatpush2.msra.mxu0 0.0
    %5767 = vmatprep.subr.mxu0 0.0
    %5768 = vmatpush2.msra.mxu0 0.0
    %5769 = vmatprep.subr.mxu0 0.0
    %5770 = vmatpush2.msra.mxu0 0.0
    %5771 = vmatprep.subr.mxu0 0.0
    %5772 = vmatpush2.msra.mxu0 0.0
    %5773 = vmatprep.subr.mxu0 0.0
    %5774 = vmatpush2.msra.mxu0 0.0
    %5775 = vmatprep.subr.mxu0 0.0
    %5776 = vmatpush2.msra.mxu0 0.0
    %5777 = vmatprep.subr.mxu0 0.0
    %5778 = vmatpush2.msra.mxu0 0.0
    %5779 = vmatprep.subr.mxu0 0.0
    %5780 = vmatpush2.msra.mxu0 0.0
    %5781 = vmatprep.subr.mxu0 0.0
    %5782 = vmatpush2.msra.mxu0 0.0
    %5783 = vmatprep.subr.mxu0 0.0
    %5784 = vmatpush2.msra.mxu0 0.0
    %5785 = vmatprep.subr.mxu0 0.0
    %5786 = vmatpush2.msra.mxu0 0.0
    %5787 = vmatprep.subr.mxu0 0.0
    %5788 = vmatpush2.msra.mxu0 0.0
    %5789 = vmatprep.mubr.f32.mxu0 0.0
    %5790 = vmatmul.mubr.f32.gmra.mxu0 %v5701
    %v5791 = vpop.f32.mrf.mxu0
    %v5792 = vadd.f32 %v5723, %v5791
    %v5793 = vpop.f32.mrf.mxu0
    %5794 = vdwg.mxu0
    %v5795 = vmax.f32 %v5792, 0.0
    %v5796 = vld [vmem:[#allocation24] sm:$0xff]
    %v5797 = vld [vmem:[#allocation24 + $0x8] sm:$0xff]
    %v5798 = vld [vmem:[#allocation24 + $0x10] sm:$0xff]
    %v5799 = vld [vmem:[#allocation24 + $0x18] sm:$0xff]
    %v5800 = vld [vmem:[#allocation24 + $0x20] sm:$0xff]
    %v5801 = vld [vmem:[#allocation24 + $0x28] sm:$0xff]
    %v5802 = vld [vmem:[#allocation24 + $0x30] sm:$0xff]
    %v5803 = vld [vmem:[#allocation24 + $0x38] sm:$0xff]
    %v5804 = vld [vmem:[#allocation24 + $0x40] sm:$0xff]
    %v5805 = vld [vmem:[#allocation24 + $0x48] sm:$0xff]
    %v5806 = vld [vmem:[#allocation24 + $0x50] sm:$0xff]
    %v5807 = vld [vmem:[#allocation24 + $0x58] sm:$0xff]
    %v5808 = vld [vmem:[#allocation24 + $0x60] sm:$0xff]
    %v5809 = vld [vmem:[#allocation24 + $0x68] sm:$0xff]
    %v5810 = vld [vmem:[#allocation24 + $0x70] sm:$0xff]
    %v5811 = vld [vmem:[#allocation24 + $0x78] sm:$0xff]
    %v5812 = vld [vmem:[#allocation25] sm:$0x1]
    %v5814 = vlaneseq
    %v5815 = vshrl.u32 %v5814, 7
    %v5816 = vsub.s32 0, %v5815
    %v5817 = vrot.slane %v5812, %v5816
    %5819 = vmatprep.subr.mxu0 0.0
    %5820 = vmatpush1.msra.mxu0 %v5811
    %5821 = vmatprep.subr.mxu0 0.0
    %5822 = vmatpush1.msra.mxu0 %v5810
    %5823 = vmatprep.subr.mxu0 0.0
    %5824 = vmatpush1.msra.mxu0 %v5809
    %5825 = vmatprep.subr.mxu0 0.0
    %5826 = vmatpush1.msra.mxu0 %v5808
    %5827 = vmatprep.subr.mxu0 0.0
    %5828 = vmatpush1.msra.mxu0 %v5807
    %5829 = vmatprep.subr.mxu0 0.0
    %5830 = vmatpush1.msra.mxu0 %v5806
    %5831 = vmatprep.subr.mxu0 0.0
    %5832 = vmatpush1.msra.mxu0 %v5805
    %5833 = vmatprep.subr.mxu0 0.0
    %5834 = vmatpush1.msra.mxu0 %v5804
    %5835 = vmatprep.subr.mxu0 0.0
    %5836 = vmatpush1.msra.mxu0 %v5803
    %5837 = vmatprep.subr.mxu0 0.0
    %5838 = vmatpush1.msra.mxu0 %v5802
    %5839 = vmatprep.subr.mxu0 0.0
    %5840 = vmatpush1.msra.mxu0 %v5801
    %5841 = vmatprep.subr.mxu0 0.0
    %5842 = vmatpush1.msra.mxu0 %v5800
    %5843 = vmatprep.subr.mxu0 0.0
    %5844 = vmatpush1.msra.mxu0 %v5799
    %5845 = vmatprep.subr.mxu0 0.0
    %5846 = vmatpush1.msra.mxu0 %v5798
    %5847 = vmatprep.subr.mxu0 0.0
    %5848 = vmatpush1.msra.mxu0 %v5797
    %5849 = vmatprep.subr.mxu0 0.0
    %5850 = vmatpush1.msra.mxu0 %v5796
    %5851 = vmatprep.subr.mxu0 0.0
    %5852 = vmatpush2.msra.mxu0 0.0
    %5853 = vmatprep.subr.mxu0 0.0
    %5854 = vmatpush2.msra.mxu0 0.0
    %5855 = vmatprep.subr.mxu0 0.0
    %5856 = vmatpush2.msra.mxu0 0.0
    %5857 = vmatprep.subr.mxu0 0.0
    %5858 = vmatpush2.msra.mxu0 0.0
    %5859 = vmatprep.subr.mxu0 0.0
    %5860 = vmatpush2.msra.mxu0 0.0
    %5861 = vmatprep.subr.mxu0 0.0
    %5862 = vmatpush2.msra.mxu0 0.0
    %5863 = vmatprep.subr.mxu0 0.0
    %5864 = vmatpush2.msra.mxu0 0.0
    %5865 = vmatprep.subr.mxu0 0.0
    %5866 = vmatpush2.msra.mxu0 0.0
    %5867 = vmatprep.subr.mxu0 0.0
    %5868 = vmatpush2.msra.mxu0 0.0
    %5869 = vmatprep.subr.mxu0 0.0
    %5870 = vmatpush2.msra.mxu0 0.0
    %5871 = vmatprep.subr.mxu0 0.0
    %5872 = vmatpush2.msra.mxu0 0.0
    %5873 = vmatprep.subr.mxu0 0.0
    %5874 = vmatpush2.msra.mxu0 0.0
    %5875 = vmatprep.subr.mxu0 0.0
    %5876 = vmatpush2.msra.mxu0 0.0
    %5877 = vmatprep.subr.mxu0 0.0
    %5878 = vmatpush2.msra.mxu0 0.0
    %5879 = vmatprep.subr.mxu0 0.0
    %5880 = vmatpush2.msra.mxu0 0.0
    %5881 = vmatprep.subr.mxu0 0.0
    %5882 = vmatpush2.msra.mxu0 0.0
    %5883 = vmatprep.mubr.f32.mxu0 0.0
    %5884 = vmatmul.mubr.f32.gmra.mxu0 %v5795
    %v5885 = vpop.f32.mrf.mxu0
    %v5886 = vadd.f32 %v5817, %v5885
    %v5887 = vpop.f32.mrf.mxu0
    %5888 = vdwg.mxu0
    %v5889 = vmax.f32 %v5886, 0.0
    %v5890 = vld [vmem:[#allocation27] sm:$0xff]
    %v5891 = vld [vmem:[#allocation27 + $0x8] sm:$0xff]
    %v5892 = vld [vmem:[#allocation27 + $0x10] sm:$0xff]
    %v5893 = vld [vmem:[#allocation27 + $0x18] sm:$0xff]
    %v5894 = vld [vmem:[#allocation27 + $0x20] sm:$0xff]
    %v5895 = vld [vmem:[#allocation27 + $0x28] sm:$0xff]
    %v5896 = vld [vmem:[#allocation27 + $0x30] sm:$0xff]
    %v5897 = vld [vmem:[#allocation27 + $0x38] sm:$0xff]
    %v5898 = vld [vmem:[#allocation27 + $0x40] sm:$0xff]
    %v5899 = vld [vmem:[#allocation27 + $0x48] sm:$0xff]
    %v5900 = vld [vmem:[#allocation27 + $0x50] sm:$0xff]
    %v5901 = vld [vmem:[#allocation27 + $0x58] sm:$0xff]
    %v5902 = vld [vmem:[#allocation27 + $0x60] sm:$0xff]
    %v5903 = vld [vmem:[#allocation27 + $0x68] sm:$0xff]
    %v5904 = vld [vmem:[#allocation27 + $0x70] sm:$0xff]
    %v5905 = vld [vmem:[#allocation27 + $0x78] sm:$0xff]
    %v5906 = vld [vmem:[#allocation28] sm:$0x1]
    %v5908 = vlaneseq
    %v5909 = vshrl.u32 %v5908, 7
    %v5910 = vsub.s32 0, %v5909
    %v5911 = vrot.slane %v5906, %v5910
    %5913 = vmatprep.subr.mxu0 0.0
    %5914 = vmatpush1.msra.mxu0 %v5905
    %5915 = vmatprep.subr.mxu0 0.0
    %5916 = vmatpush1.msra.mxu0 %v5904
    %5917 = vmatprep.subr.mxu0 0.0
    %5918 = vmatpush1.msra.mxu0 %v5903
    %5919 = vmatprep.subr.mxu0 0.0
    %5920 = vmatpush1.msra.mxu0 %v5902
    %5921 = vmatprep.subr.mxu0 0.0
    %5922 = vmatpush1.msra.mxu0 %v5901
    %5923 = vmatprep.subr.mxu0 0.0
    %5924 = vmatpush1.msra.mxu0 %v5900
    %5925 = vmatprep.subr.mxu0 0.0
    %5926 = vmatpush1.msra.mxu0 %v5899
    %5927 = vmatprep.subr.mxu0 0.0
    %5928 = vmatpush1.msra.mxu0 %v5898
    %5929 = vmatprep.subr.mxu0 0.0
    %5930 = vmatpush1.msra.mxu0 %v5897
    %5931 = vmatprep.subr.mxu0 0.0
    %5932 = vmatpush1.msra.mxu0 %v5896
    %5933 = vmatprep.subr.mxu0 0.0
    %5934 = vmatpush1.msra.mxu0 %v5895
    %5935 = vmatprep.subr.mxu0 0.0
    %5936 = vmatpush1.msra.mxu0 %v5894
    %5937 = vmatprep.subr.mxu0 0.0
    %5938 = vmatpush1.msra.mxu0 %v5893
    %5939 = vmatprep.subr.mxu0 0.0
    %5940 = vmatpush1.msra.mxu0 %v5892
    %5941 = vmatprep.subr.mxu0 0.0
    %5942 = vmatpush1.msra.mxu0 %v5891
    %5943 = vmatprep.subr.mxu0 0.0
    %5944 = vmatpush1.msra.mxu0 %v5890
    %5945 = vmatprep.subr.mxu0 0.0
    %5946 = vmatpush2.msra.mxu0 0.0
    %5947 = vmatprep.subr.mxu0 0.0
    %5948 = vmatpush2.msra.mxu0 0.0
    %5949 = vmatprep.subr.mxu0 0.0
    %5950 = vmatpush2.msra.mxu0 0.0
    %5951 = vmatprep.subr.mxu0 0.0
    %5952 = vmatpush2.msra.mxu0 0.0
    %5953 = vmatprep.subr.mxu0 0.0
    %5954 = vmatpush2.msra.mxu0 0.0
    %5955 = vmatprep.subr.mxu0 0.0
    %5956 = vmatpush2.msra.mxu0 0.0
    %5957 = vmatprep.subr.mxu0 0.0
    %5958 = vmatpush2.msra.mxu0 0.0
    %5959 = vmatprep.subr.mxu0 0.0
    %5960 = vmatpush2.msra.mxu0 0.0
    %5961 = vmatprep.subr.mxu0 0.0
    %5962 = vmatpush2.msra.mxu0 0.0
    %5963 = vmatprep.subr.mxu0 0.0
    %5964 = vmatpush2.msra.mxu0 0.0
    %5965 = vmatprep.subr.mxu0 0.0
    %5966 = vmatpush2.msra.mxu0 0.0
    %5967 = vmatprep.subr.mxu0 0.0
    %5968 = vmatpush2.msra.mxu0 0.0
    %5969 = vmatprep.subr.mxu0 0.0
    %5970 = vmatpush2.msra.mxu0 0.0
    %5971 = vmatprep.subr.mxu0 0.0
    %5972 = vmatpush2.msra.mxu0 0.0
    %5973 = vmatprep.subr.mxu0 0.0
    %5974 = vmatpush2.msra.mxu0 0.0
    %5975 = vmatprep.subr.mxu0 0.0
    %5976 = vmatpush2.msra.mxu0 0.0
    %5977 = vmatprep.mubr.f32.mxu0 0.0
    %5978 = vmatmul.mubr.f32.gmra.mxu0 %v5889
    %v5979 = vpop.f32.mrf.mxu0
    %v5980 = vadd.f32 %v5911, %v5979
    %v5981 = vpop.f32.mrf.mxu0
    %5982 = vdwg.mxu0
    %v5983 = vtanh.pop %v5980
    %5984 = vst [vmem:[%s59] sm:$0x3] %v5983
    // Predicated region
    $region190: #{tinycar_combo_lstm.1} parent=1 // pred_check
      _
    $region191: #{tinycar_combo_lstm.1} parent=1 // pred_check_branch
      %5986 = sbr.rel (0) target = $region193
    $region192: #{tinycar_combo_lstm.1} parent=1 // pred_region
      _
    $region193: #{tinycar_combo_lstm.1} parent=1 // pred_fallthru
      _
    // Predicated region
    $region194: #{tinycar_combo_lstm.1} parent=1 // pred_check
      _
    $region195: #{tinycar_combo_lstm.1} parent=1 // pred_check_branch
      %5988 = sbr.rel (0) target = $region197
    $region196: #{tinycar_combo_lstm.1} parent=1 // pred_region
      _
    $region197: #{tinycar_combo_lstm.1} parent=1 // pred_fallthru
      _
    %5989 = vsyncpa [#allocation3], 1
    %5990 = vsyncpa [#allocation5], 1
    %5991 = vsyncpa [#allocation8], 1
    %5992 = vsyncpa [#allocation11], 1
    %5993 = vsyncpa [#allocation14], 1
    %5994 = vsyncpa [#allocation17], 1
    %5995 = vsyncpa [#allocation20], 1
    %5996 = vsyncpa [#allocation23], 1
    %5997 = vsyncpa [#allocation26], 1
    %5998 = vsyncpa [#allocation29], 1

</llo_original>
